<compile_context>
chip_gen: v6e
topology: v6e:2x2x1
jax: 0.10.0
libtpu: 0.0.40
codegen_flags: <defaults>
</compile_context>

<pallas_src>
import functools
import math

import jax
import jax.numpy as jnp
import numpy as np
from jax import lax
from jax.experimental import pallas as pl
from jax.experimental.pallas import tpu as pltpu

ENC_HIGHWAY_DILATIONS = (1, 3, 9, 27, 1, 3, 9, 27, 3, 3)
DEC_HIGHWAY_DILATIONS = (1, 3, 9, 27, 1, 1)

SQRT_HALF = math.sqrt(0.5)
PAD_ROWS = 56                     # >= 2*max(dilation)=54, multiple of 8 sublanes
VMEM_LIMIT = 32 * 1024 * 1024     # safe on v5e/v6e/v7x (<= every gen's physical VMEM)


def _bf16(w):
    return w.astype(jnp.bfloat16)


# --------------------------- in-kernel helpers ---------------------------

def _mxu(a, b):
    """bf16 MXU matmul with f32 accumulation."""
    return jnp.dot(a.astype(jnp.bfloat16), b.astype(jnp.bfloat16),
                   preferred_element_type=jnp.float32)


def _mxu_nt(a, b):
    """a @ b.T on the MXU (contract last dims), f32 accumulation."""
    return lax.dot_general(a.astype(jnp.bfloat16), b.astype(jnp.bfloat16),
                           (((1,), (1,)), ((), ())),
                           preferred_element_type=jnp.float32)


def _softmax(s):
    m = jnp.max(s, axis=-1, keepdims=True)
    e = jnp.exp(s - m)
    # EUP reciprocal: normalization divide is effectively free.
    return e * pl.reciprocal(jnp.sum(e, axis=-1, keepdims=True), approx=True)


def _causal_highway(x, pad_ref, w, b, dilation, T, D):
    """One HighwayConv1d layer (k=3, causal, dilated) on a (T, D) activation.

    Causality is handled entirely in VMEM: the activation is written into a
    zero-prefixed scratch buffer and the three taps read shifted windows of it.
    No padded activation copy ever touches HBM.
    """
    shifts = (2 * dilation, dilation, 0)        # tap j multiplies x[t - shifts[j]]
    need_pad = any(0 < s < T for s in shifts)
    xp = None
    if need_pad:
        pad_ref[PAD_ROWS:PAD_ROWS + T, :] = x   # rows [0, PAD_ROWS) stay zero
        xp = pad_ref[...]
    acc = None
    for j, s in enumerate(shifts):
        if s >= T:                              # window lies entirely in the zeros
            continue
        xj = x if s == 0 else xp[PAD_ROWS - s:PAD_ROWS - s + T, :]
        term = jnp.dot(xj.astype(jnp.bfloat16), w[j * D:(j + 1) * D, :],
                       preferred_element_type=jnp.float32)
        acc = term if acc is None else acc + term
    y = acc + b                                 # bias added once, at the end
    h1 = y[:, :D]
    gate = jax.nn.sigmoid(y[:, D:])
    return gate * h1 + (1.0 - gate) * x


# --------------------------- fused Pallas kernels ---------------------------

def _encoder_stack_kernel(x_ref, w1_ref, b1_ref, w2_ref, b2_ref, w3_ref, b3_ref,
                          whw_ref, bhw_ref, q_ref, pad_ref, *, T, D, dilations):
    pad_ref[...] = jnp.zeros_like(pad_ref)
    x = x_ref[0]                                               # (T, F)
    x = jnp.maximum(_mxu(x, w1_ref[...]) + b1_ref[...], 0.0)
    x = jnp.maximum(_mxu(x, w2_ref[...]) + b2_ref[...], 0.0)
    x = _mxu(x, w3_ref[...]) + b3_ref[...]
    for l, dil in enumerate(dilations):
        x = _causal_highway(x, pad_ref, whw_ref[l], bhw_ref[l], dil, T, D)
    q_ref[0] = x.astype(q_ref.dtype)


def _dual_attention_kernel(q_ref, fpos_ref, kf_ref, kfpos_ref, vf_ref,
                           kt_ref, ktpos_ref, vt_ref,
                           wq1_ref, bq1_ref, wo1_ref, bo1_ref,
                           wq2a_ref, wq2b_ref, bq2_ref, wk2_ref, bk2_ref,
                           wv2_ref, bv2_ref, wo2_ref, bo2_ref,
                           ra_ref, rb_ref, at_ref, af_ref, *, D):
    # query with frame-position embedding fused in (never hits HBM)
    xq = q_ref[0] + fpos_ref[0]                                # (Tq, D) f32

    # ---- face attention: key/value projections disabled -> skipped entirely ----
    kf = kf_ref[0] + kfpos_ref[0]                              # (Tv, D)
    qp1 = _mxu(xq, wq1_ref[...]) + bq1_ref[...]
    p1 = _softmax(_mxu_nt(qp1, kf))                            # (Tq, Tv)
    af_ref[0] = p1.astype(af_ref.dtype)
    ctx1 = _mxu(p1, vf_ref[0])
    # sqrt(Tv)*sqrt(0.5) folded into Wo/bo at parameter-prep time
    rf = _mxu(ctx1, wo1_ref[...]) + bo1_ref[...] + xq * SQRT_HALF

    # ---- text attention: query = concat([xq, rf]) realised by splitting Wq ----
    ktp = _mxu(kt_ref[0] + ktpos_ref[0], wk2_ref[...]) + bk2_ref[...]
    vtp = _mxu(vt_ref[0], wv2_ref[...]) + bv2_ref[...]
    qp2 = _mxu(xq, wq2a_ref[...]) + _mxu(rf, wq2b_ref[...]) + bq2_ref[...]
    p2 = _softmax(_mxu_nt(qp2, ktp))                           # (Tq, Tt)
    at_ref[0] = p2.astype(at_ref.dtype)
    ctx2 = _mxu(p2, vtp)
    out2 = _mxu(ctx2, wo2_ref[...]) + bo2_ref[...]             # (Tq, 2D)
    ra_ref[0] = (out2[:, :D] + xq * SQRT_HALF).astype(ra_ref.dtype)
    rb_ref[0] = (out2[:, D:] + rf * SQRT_HALF).astype(rb_ref.dtype)


def _decoder_stack_kernel(ra_ref, rb_ref, q_ref, w0a_ref, w0b_ref, w0c_ref, b0_ref,
                          whw_ref, bhw_ref, wrc_ref, brc_ref, wl_ref, bl_ref,
                          wfc_ref, bfc_ref, out_ref, done_ref, st_ref, pad_ref,
                          *, T, D, dilations):
    pad_ref[...] = jnp.zeros_like(pad_ref)
    # dec_conv0 on Rd = [Ra, Rb, Q] with split weights (no 3D-channel concat)
    x = (_mxu(ra_ref[0], w0a_ref[...]) + _mxu(rb_ref[0], w0b_ref[...])
         + _mxu(q_ref[0], w0c_ref[...]) + b0_ref[...])
    for l, dil in enumerate(dilations):
        x = _causal_highway(x, pad_ref, whw_ref[l], bhw_ref[l], dil, T, D)
    for l in range(3):
        x = jnp.maximum(_mxu(x, wrc_ref[l]) + brc_ref[l], 0.0)
    st_ref[0] = x.astype(st_ref.dtype)                         # decoder_states
    pre = _mxu(x, wl_ref[...]) + bl_ref[...]                   # (T, F) pre-sigmoid
    out_ref[0] = jax.nn.sigmoid(pre).astype(out_ref.dtype)
    done = jax.nn.sigmoid(_mxu(pre, wfc_ref[...]) + bfc_ref[...])
    done_ref[0] = done.astype(done_ref.dtype)


# --------------------------- pallas_call wrappers ---------------------------

def _vspec(T, C):
    return pl.BlockSpec((1, T, C), lambda i: (i, 0, 0))


def _wspec(shape):
    if len(shape) == 2:
        return pl.BlockSpec(shape, lambda i: (0, 0))
    return pl.BlockSpec(shape, lambda i: (0, 0, 0))


def encoder_stack(x, w1, b1, w2, b2, w3, b3, whw, bhw, *, dilations):
    B, T, Cin = x.shape
    D = w1.shape[1]
    L = whw.shape[0]
    kern = functools.partial(_encoder_stack_kernel, T=T, D=D, dilations=dilations)
    return pl.pallas_call(
        kern,
        out_shape=jax.ShapeDtypeStruct((B, T, D), jnp.float32),
        grid=(B,),
        in_specs=[_vspec(T, Cin),
                  _wspec((Cin, D)), _wspec((1, D)),
                  _wspec((D, D)), _wspec((1, D)),
                  _wspec((D, D)), _wspec((1, D)),
                  _wspec((L, 3 * D, 2 * D)), _wspec((L, 1, 2 * D))],
        out_specs=pl.BlockSpec((1, T, D), lambda i: (i, 0, 0)),
        scratch_shapes=[pltpu.VMEM((PAD_ROWS + T, D), jnp.float32)],
        compiler_params=pltpu.CompilerParams(
            dimension_semantics=("parallel",), vmem_limit_bytes=VMEM_LIMIT),
    )(x, w1, b1, w2, b2, w3, b3, whw, bhw)


def dual_attention(Q, fpos, keys_f, kfpos, values_f, keys_t, ktpos, values_t,
                   wq1, bq1, wo1, bo1, wq2a, wq2b, bq2, wk2, bk2, wv2, bv2, wo2, bo2):
    B, Tq, D = Q.shape
    Tv = keys_f.shape[1]
    Tt = keys_t.shape[1]
    kern = functools.partial(_dual_attention_kernel, D=D)
    return pl.pallas_call(
        kern,
        out_shape=(jax.ShapeDtypeStruct((B, Tq, D), jnp.float32),
                   jax.ShapeDtypeStruct((B, Tq, D), jnp.float32),
                   jax.ShapeDtypeStruct((B, Tq, Tt), jnp.float32),
                   jax.ShapeDtypeStruct((B, Tq, Tv), jnp.float32)),
        grid=(B,),
        in_specs=[_vspec(Tq, D), _vspec(Tq, D),
                  _vspec(Tv, D), _vspec(Tv, D), _vspec(Tv, D),
                  _vspec(Tt, D), _vspec(Tt, D), _vspec(Tt, D),
                  _wspec((D, D)), _wspec((1, D)), _wspec((D, D)), _wspec((1, D)),
                  _wspec((D, D)), _wspec((D, D)), _wspec((1, D)),
                  _wspec((D, D)), _wspec((1, D)), _wspec((D, D)), _wspec((1, D)),
                  _wspec((D, 2 * D)), _wspec((1, 2 * D))],
        out_specs=(pl.BlockSpec((1, Tq, D), lambda i: (i, 0, 0)),
                   pl.BlockSpec((1, Tq, D), lambda i: (i, 0, 0)),
                   pl.BlockSpec((1, Tq, Tt), lambda i: (i, 0, 0)),
                   pl.BlockSpec((1, Tq, Tv), lambda i: (i, 0, 0))),
        compiler_params=pltpu.CompilerParams(
            dimension_semantics=("parallel",), vmem_limit_bytes=VMEM_LIMIT),
    )(Q, fpos, keys_f, kfpos, values_f, keys_t, ktpos, values_t,
      wq1, bq1, wo1, bo1, wq2a, wq2b, bq2, wk2, bk2, wv2, bv2, wo2, bo2)


def decoder_stack(Ra, Rb, Q, w0a, w0b, w0c, b0, whw, bhw, wrc, brc,
                  wl, bl, wfc, bfc, *, dilations):
    B, T, D = Q.shape
    L = whw.shape[0]
    Fdim = wl.shape[1]
    kern = functools.partial(_decoder_stack_kernel, T=T, D=D, dilations=dilations)
    return pl.pallas_call(
        kern,
        out_shape=(jax.ShapeDtypeStruct((B, T, Fdim), jnp.float32),
                   jax.ShapeDtypeStruct((B, T, 1), jnp.float32),
                   jax.ShapeDtypeStruct((B, T, D), jnp.float32)),
        grid=(B,),
        in_specs=[_vspec(T, D), _vspec(T, D), _vspec(T, D),
                  _wspec((D, D)), _wspec((D, D)), _wspec((D, D)), _wspec((1, D)),
                  _wspec((L, 3 * D, 2 * D)), _wspec((L, 1, 2 * D)),
                  _wspec((3, D, D)), _wspec((3, 1, D)),
                  _wspec((D, Fdim)), _wspec((1, Fdim)),
                  _wspec((Fdim, 1)), _wspec((1, 1))],
        out_specs=(pl.BlockSpec((1, T, Fdim), lambda i: (i, 0, 0)),
                   pl.BlockSpec((1, T, 1), lambda i: (i, 0, 0)),
                   pl.BlockSpec((1, T, D), lambda i: (i, 0, 0))),
        scratch_shapes=[pltpu.VMEM((PAD_ROWS + T, D), jnp.float32)],
        compiler_params=pltpu.CompilerParams(
            dimension_semantics=("parallel",), vmem_limit_bytes=VMEM_LIMIT),
    )(Ra, Rb, Q, w0a, w0b, w0c, b0, whw, bhw, wrc, brc, wl, bl, wfc, bfc)


# --------------------------- parameter setup ---------------------------

def _linear_params(key, cin, cout, dropout=0.1):
    std = math.sqrt((1.0 - dropout) / cin)
    W = jax.random.normal(key, (cin, cout), jnp.float32) * std
    return W, jnp.zeros((1, cout), jnp.float32)


def _conv1x1_params(key, cin, cout, std_mul, dropout=0.1):
    std = math.sqrt((std_mul * (1.0 - dropout)) / cin)
    W = jax.random.normal(key, (cin, cout), jnp.float32) * std
    return W, jnp.zeros((1, cout), jnp.float32)


def _highway_params(key, d, std_mul=1.0, dropout=0.1):
    std = math.sqrt((std_mul * (1.0 - dropout)) / (3 * d))
    W = jax.random.normal(key, (3 * d, 2 * d), jnp.float32) * std   # [tap0; tap1; tap2]
    return W, jnp.zeros((1, 2 * d), jnp.float32)


def _attention_params(key, conv_channels, embed_dim, key_projection, value_projection):
    ks = jax.random.split(key, 4)
    d = {}
    d["Wq"], d["bq"] = _linear_params(ks[0], conv_channels, embed_dim)
    if key_projection:
        d["Wk"], d["bk"] = _linear_params(ks[1], embed_dim, embed_dim)
    if value_projection:
        d["Wv"], d["bv"] = _linear_params(ks[2], embed_dim, embed_dim)
    d["Wo"], d["bo"] = _linear_params(ks[3], embed_dim, conv_channels)
    return d


def position_encoding_init(n_position, d, position_rate=1.0):
    pe = np.zeros((n_position, d), dtype=np.float32)
    pos = np.arange(1, n_position, dtype=np.float32)[:, None]
    i = np.arange(d, dtype=np.float32)[None, :]
    angle = position_rate * pos / np.power(10000.0, 2.0 * np.floor(i / 2.0) / d)
    pe[1:, 0::2] = np.sin(angle[:, 0::2])
    pe[1:, 1::2] = np.cos(angle[:, 1::2])
    return jnp.asarray(pe)          # row 0 stays zero (padding position)


def init_decoder_params(key, in_dim, r, D, max_positions=512,
                        query_position_rate=1.0, key_position_rate=1.29, dropout=0.1):
    F_ = in_dim * r
    ks = iter(jax.random.split(key, 32))
    p = {}
    p["enc_conv"] = [_conv1x1_params(next(ks), F_, D, 1.0, dropout),
                     _conv1x1_params(next(ks), D, D, 2.0, dropout),
                     _conv1x1_params(next(ks), D, D, 2.0, dropout)]
    enc_hw = [_highway_params(next(ks), D, 1.0, dropout) for _ in ENC_HIGHWAY_DILATIONS]
    p["enc_hw_W"] = jnp.stack([w for w, _ in enc_hw])          # (10, 3D, 2D)
    p["enc_hw_b"] = jnp.stack([b for _, b in enc_hw])          # (10, 1, 2D)
    p["attn"] = _attention_params(next(ks), D, D, key_projection=False, value_projection=False)
    p["attn_cat"] = _attention_params(next(ks), 2 * D, D, key_projection=True, value_projection=True)
    p["dec_conv0"] = _conv1x1_params(next(ks), 3 * D, D, 1.0, dropout)
    dec_hw = [_highway_params(next(ks), D, 1.0, dropout) for _ in DEC_HIGHWAY_DILATIONS]
    p["dec_hw_W"] = jnp.stack([w for w, _ in dec_hw])          # (6, 3D, 2D)
    p["dec_hw_b"] = jnp.stack([b for _, b in dec_hw])          # (6, 1, 2D)
    dec_conv = [_conv1x1_params(next(ks), D, D, 1.0, dropout),
                _conv1x1_params(next(ks), D, D, 2.0, dropout),
                _conv1x1_params(next(ks), D, D, 2.0, dropout)]
    p["dec_conv_W"] = jnp.stack([w for w, _ in dec_conv])      # (3, D, D)
    p["dec_conv_b"] = jnp.stack([b for _, b in dec_conv])      # (3, 1, D)
    p["last_conv"] = _conv1x1_params(next(ks), D, F_, 2.0, dropout)
    p["fc"] = _linear_params(next(ks), F_, 1)
    p["embed_query_pos"] = position_encoding_init(max_positions, D, query_position_rate)
    p["embed_keys_pos"] = position_encoding_init(max_positions, D, key_position_rate)
    return p


# --------------------------- Decoder.forward ---------------------------

def decoder_forward(p, encoder_out, face_encoder_out, inputs,
                    text_positions, frame_positions, vid_positions, in_dim, r):
    keys_t, values_t = encoder_out            # (B, Tt, D)
    keys_f, values_f = face_encoder_out       # (B, Tv, D)
    B = inputs.shape[0]
    if inputs.shape[-1] == in_dim:
        inputs = inputs.reshape(B, inputs.shape[1] // r, in_dim * r)
    assert inputs.shape[-1] == in_dim * r

    D = keys_t.shape[-1]
    Tt = keys_t.shape[1]
    Tv = keys_f.shape[1]

    # positional-embedding gathers (tiny XLA glue); the adds are fused in-kernel
    ktpos = p["embed_keys_pos"][text_positions]
    kfpos = p["embed_keys_pos"][vid_positions]
    fpos = p["embed_query_pos"][frame_positions]

    # ---- fused audio encoder: prenet convs + 10 highway layers -> Q ----
    (W1, b1), (W2, b2), (W3, b3) = p["enc_conv"]
    Q = encoder_stack(inputs, _bf16(W1), b1, _bf16(W2), b2, _bf16(W3), b3,
                      _bf16(p["enc_hw_W"]), p["enc_hw_b"],
                      dilations=ENC_HIGHWAY_DILATIONS)

    # ---- fused dual attention (face attention + concat text attention) ----
    a1, a2 = p["attn"], p["attn_cat"]
    # fold the s*sqrt(1/s)==sqrt(Tk) scale and the sqrt(0.5) residual scale
    wo1 = _bf16(a1["Wo"] * (math.sqrt(Tv) * SQRT_HALF)); bo1 = a1["bo"] * SQRT_HALF
    wo2 = _bf16(a2["Wo"] * (math.sqrt(Tt) * SQRT_HALF)); bo2 = a2["bo"] * SQRT_HALF
    Ra, Rb, alignments, alignments_f = dual_attention(
        Q, fpos, keys_f, kfpos, values_f, keys_t, ktpos, values_t,
        _bf16(a1["Wq"]), a1["bq"], wo1, bo1,
        _bf16(a2["Wq"][:D]), _bf16(a2["Wq"][D:]), a2["bq"],
        _bf16(a2["Wk"]), a2["bk"], _bf16(a2["Wv"]), a2["bv"], wo2, bo2)

    # ---- fused audio decoder: conv0 + highways + convs + last_conv + done ----
    W0, b0 = p["dec_conv0"]
    Wl, bl = p["last_conv"]
    Wfc, bfc = p["fc"]
    outputs, done, decoder_states = decoder_stack(
        Ra, Rb, Q,
        _bf16(W0[:D]), _bf16(W0[D:2 * D]), _bf16(W0[2 * D:]), b0,
        _bf16(p["dec_hw_W"]), p["dec_hw_b"],
        _bf16(p["dec_conv_W"]), p["dec_conv_b"],
        _bf16(Wl), bl, _bf16(Wfc), bfc,
        dilations=DEC_HIGHWAY_DILATIONS)

    return (outputs, alignments[None, ...], done, decoder_states,
            alignments_f[None, ...])


# --------------------------------- main ---------------------------------

if __name__ == "__main__":
    B, D = 2, 32
    in_dim, r = 8, 2
    F_ = in_dim * r
    T_dec, T_text, T_vid = 8, 8, 6
    max_positions = 32

    root = jax.random.PRNGKey(0)
    kp, k1, k2, k3, k4, k5 = jax.random.split(root, 6)
    params = init_decoder_params(kp, in_dim, r, D, max_positions=max_positions)

    inputs = jax.random.normal(k1, (B, T_dec, F_), jnp.float32)     # grouped frames
    keys_t = jax.random.normal(k2, (B, T_text, D), jnp.float32)
    values_t = jax.random.normal(k3, (B, T_text, D), jnp.float32)
    keys_f = jax.random.normal(k4, (B, T_vid, D), jnp.float32)
    values_f = jax.random.normal(k5, (B, T_vid, D), jnp.float32)

    text_positions = jnp.tile(jnp.arange(1, T_text + 1, dtype=jnp.int32)[None], (B, 1))
    vid_positions = jnp.tile(jnp.arange(1, T_vid + 1, dtype=jnp.int32)[None], (B, 1))
    frame_positions = jnp.tile(jnp.arange(1, T_dec + 1, dtype=jnp.int32)[None], (B, 1))

    fwd = jax.jit(decoder_forward, static_argnums=(7, 8))
    outs = fwd(params, (keys_t, values_t), (keys_f, values_f),
               inputs, text_positions, frame_positions, vid_positions,
               in_dim, r)
    outs = jax.block_until_ready(outs)
    outputs, alignments, done, decoder_states, alignments_f = outs
    assert outputs.shape == (B, T_dec, F_)
    assert alignments.shape == (1, B, T_dec, T_text)
    assert done.shape == (B, T_dec, 1)
    assert decoder_states.shape == (B, T_dec, D)
    assert alignments_f.shape == (1, B, T_dec, T_vid)
    print("KERNEL_OK")
</pallas_src>

<mosaic_0001>
module attributes {stable_mosaic.version = 11 : i64} {
  func.func @_encoder_stack_kernel(%arg0: i32, %arg1: memref<1x8x16xf32, #tpu.memory_space<vmem>>, %arg2: memref<16x32xbf16, #tpu.memory_space<vmem>>, %arg3: memref<1x32xf32, #tpu.memory_space<vmem>>, %arg4: memref<32x32xbf16, #tpu.memory_space<vmem>>, %arg5: memref<1x32xf32, #tpu.memory_space<vmem>>, %arg6: memref<32x32xbf16, #tpu.memory_space<vmem>>, %arg7: memref<1x32xf32, #tpu.memory_space<vmem>>, %arg8: memref<10x96x64xbf16, #tpu.memory_space<vmem>>, %arg9: memref<10x1x64xf32, #tpu.memory_space<vmem>>, %arg10: memref<1x8x32xf32, #tpu.memory_space<vmem>>, %arg11: memref<64x32xf32, #tpu.memory_space<vmem>>) attributes {dimension_semantics = [#tpu.dimension_semantics<parallel>], iteration_bounds = array<i64: 2>, scalar_prefetch = 0 : i64, scratch_operands = 1 : i64, tpu.core_type = #tpu.core_type<tc>, window_params = [{transform_indices = @transform_0, window_bounds = array<i64: 1, 8, 16>}, {pipeline_mode = #tpu.pipeline_mode<synchronous>, transform_indices = @transform_1, window_bounds = array<i64: 16, 32>}, {pipeline_mode = #tpu.pipeline_mode<synchronous>, transform_indices = @transform_2, window_bounds = array<i64: 1, 32>}, {pipeline_mode = #tpu.pipeline_mode<synchronous>, transform_indices = @transform_3, window_bounds = array<i64: 32, 32>}, {pipeline_mode = #tpu.pipeline_mode<synchronous>, transform_indices = @transform_4, window_bounds = array<i64: 1, 32>}, {pipeline_mode = #tpu.pipeline_mode<synchronous>, transform_indices = @transform_5, window_bounds = array<i64: 32, 32>}, {pipeline_mode = #tpu.pipeline_mode<synchronous>, transform_indices = @transform_6, window_bounds = array<i64: 1, 32>}, {pipeline_mode = #tpu.pipeline_mode<synchronous>, transform_indices = @transform_7, window_bounds = array<i64: 10, 96, 64>}, {pipeline_mode = #tpu.pipeline_mode<synchronous>, transform_indices = @transform_8, window_bounds = array<i64: 10, 1, 64>}, {transform_indices = @transform_9, window_bounds = array<i64: 1, 8, 32>}]} {
    %cst = arith.constant 0.000000e+00 : f32
    %0 = vector.broadcast %cst : f32 to vector<64x32xf32>
    %c0 = arith.constant 0 : index
    %c0_0 = arith.constant 0 : index
    %1 = vector.load %arg11[%c0, %c0_0] : memref<64x32xf32, #tpu.memory_space<vmem>>, vector<64x32xf32>
    tpu.vector_store %arg11[%c0, %c0_0], %0 {strides = array<i32>} : memref<64x32xf32, #tpu.memory_space<vmem>>, vector<64x32xf32>,
    %c0_1 = arith.constant 0 : index
    %c0_2 = arith.constant 0 : index
    %c0_3 = arith.constant 0 : index
    %2 = vector.load %arg1[%c0_1, %c0_2, %c0_3] : memref<1x8x16xf32, #tpu.memory_space<vmem>>, vector<1x8x16xf32>
    %3 = vector.shape_cast %2 : vector<1x8x16xf32> to vector<8x16xf32>
    %c0_4 = arith.constant 0 : index
    %c0_5 = arith.constant 0 : index
    %4 = vector.load %arg2[%c0_4, %c0_5] : memref<16x32xbf16, #tpu.memory_space<vmem>>, vector<16x32xbf16>
    %5 = arith.truncf %3 : vector<8x16xf32> to vector<8x16xbf16>
    %cst_6 = arith.constant dense<0.000000e+00> : vector<8x32xf32>
    %6 = tpu.matmul %5, %4, %cst_6 {dimension_numbers = #tpu.dot_dimension_numbers<[1], [0], [0], [1], [0, 0, 1, 1], [], []>} : vector<8x16xbf16>, vector<16x32xbf16>, vector<8x32xf32> -> vector<8x32xf32>
    %c0_7 = arith.constant 0 : index
    %c0_8 = arith.constant 0 : index
    %7 = vector.load %arg3[%c0_7, %c0_8] : memref<1x32xf32, #tpu.memory_space<vmem>>, vector<1x32xf32>
    %8 = vector.broadcast %7 : vector<1x32xf32> to vector<8x32xf32>
    %9 = arith.addf %6, %8 : vector<8x32xf32>
    %cst_9 = arith.constant 0.000000e+00 : f32
    %10 = vector.broadcast %cst_9 : f32 to vector<8x32xf32>
    %11 = arith.maximumf %9, %10 : vector<8x32xf32>
    %c0_10 = arith.constant 0 : index
    %c0_11 = arith.constant 0 : index
    %12 = vector.load %arg4[%c0_10, %c0_11] : memref<32x32xbf16, #tpu.memory_space<vmem>>, vector<32x32xbf16>
    %13 = arith.truncf %11 : vector<8x32xf32> to vector<8x32xbf16>
    %cst_12 = arith.constant dense<0.000000e+00> : vector<8x32xf32>
    %14 = tpu.matmul %13, %12, %cst_12 {dimension_numbers = #tpu.dot_dimension_numbers<[1], [0], [0], [1], [0, 0, 1, 1], [], []>} : vector<8x32xbf16>, vector<32x32xbf16>, vector<8x32xf32> -> vector<8x32xf32>
    %c0_13 = arith.constant 0 : index
    %c0_14 = arith.constant 0 : index
    %15 = vector.load %arg5[%c0_13, %c0_14] : memref<1x32xf32, #tpu.memory_space<vmem>>, vector<1x32xf32>
    %16 = vector.broadcast %15 : vector<1x32xf32> to vector<8x32xf32>
    %17 = arith.addf %14, %16 : vector<8x32xf32>
    %cst_15 = arith.constant 0.000000e+00 : f32
    %18 = vector.broadcast %cst_15 : f32 to vector<8x32xf32>
    %19 = arith.maximumf %17, %18 : vector<8x32xf32>
    %c0_16 = arith.constant 0 : index
    %c0_17 = arith.constant 0 : index
    %20 = vector.load %arg6[%c0_16, %c0_17] : memref<32x32xbf16, #tpu.memory_space<vmem>>, vector<32x32xbf16>
    %21 = arith.truncf %19 : vector<8x32xf32> to vector<8x32xbf16>
    %cst_18 = arith.constant dense<0.000000e+00> : vector<8x32xf32>
    %22 = tpu.matmul %21, %20, %cst_18 {dimension_numbers = #tpu.dot_dimension_numbers<[1], [0], [0], [1], [0, 0, 1, 1], [], []>} : vector<8x32xbf16>, vector<32x32xbf16>, vector<8x32xf32> -> vector<8x32xf32>
    %c0_19 = arith.constant 0 : index
    %c0_20 = arith.constant 0 : index
    %23 = vector.load %arg7[%c0_19, %c0_20] : memref<1x32xf32, #tpu.memory_space<vmem>>, vector<1x32xf32>
    %24 = vector.broadcast %23 : vector<1x32xf32> to vector<8x32xf32>
    %25 = arith.addf %22, %24 : vector<8x32xf32>
    %c0_21 = arith.constant 0 : index
    %c0_22 = arith.constant 0 : index
    %c0_23 = arith.constant 0 : index
    %26 = vector.load %arg8[%c0_21, %c0_22, %c0_23] : memref<10x96x64xbf16, #tpu.memory_space<vmem>>, vector<1x96x64xbf16>
    %27 = vector.shape_cast %26 : vector<1x96x64xbf16> to vector<96x64xbf16>
    %c0_24 = arith.constant 0 : index
    %c0_25 = arith.constant 0 : index
    %c0_26 = arith.constant 0 : index
    %28 = vector.load %arg9[%c0_24, %c0_25, %c0_26] : memref<10x1x64xf32, #tpu.memory_space<vmem>>, vector<1x1x64xf32>
    %29 = vector.shape_cast %28 : vector<1x1x64xf32> to vector<1x64xf32>
    %c56 = arith.constant 56 : index
    %c0_27 = arith.constant 0 : index
    %30 = vector.load %arg11[%c56, %c0_27] : memref<64x32xf32, #tpu.memory_space<vmem>>, vector<8x32xf32>
    tpu.vector_store %arg11[%c56, %c0_27], %25 {strides = array<i32>} : memref<64x32xf32, #tpu.memory_space<vmem>>, vector<8x32xf32>,
    %c0_28 = arith.constant 0 : index
    %c0_29 = arith.constant 0 : index
    %31 = vector.load %arg11[%c0_28, %c0_29] : memref<64x32xf32, #tpu.memory_space<vmem>>, vector<64x32xf32>
    %32 = vector.extract_strided_slice %31 {offsets = [54, 0], sizes = [8, 32], strides = [1, 1]} : vector<64x32xf32> to vector<8x32xf32>
    %33 = arith.truncf %32 : vector<8x32xf32> to vector<8x32xbf16>
    %34 = vector.extract_strided_slice %27 {offsets = [0, 0], sizes = [32, 64], strides = [1, 1]} : vector<96x64xbf16> to vector<32x64xbf16>
    %cst_30 = arith.constant dense<0.000000e+00> : vector<8x64xf32>
    %35 = tpu.matmul %33, %34, %cst_30 {dimension_numbers = #tpu.dot_dimension_numbers<[1], [0], [0], [1], [0, 0, 1, 1], [], []>} : vector<8x32xbf16>, vector<32x64xbf16>, vector<8x64xf32> -> vector<8x64xf32>
    %36 = vector.extract_strided_slice %31 {offsets = [55, 0], sizes = [8, 32], strides = [1, 1]} : vector<64x32xf32> to vector<8x32xf32>
    %37 = arith.truncf %36 : vector<8x32xf32> to vector<8x32xbf16>
    %38 = vector.extract_strided_slice %27 {offsets = [32, 0], sizes = [32, 64], strides = [1, 1]} : vector<96x64xbf16> to vector<32x64xbf16>
    %cst_31 = arith.constant dense<0.000000e+00> : vector<8x64xf32>
    %39 = tpu.matmul %37, %38, %cst_31 {dimension_numbers = #tpu.dot_dimension_numbers<[1], [0], [0], [1], [0, 0, 1, 1], [], []>} : vector<8x32xbf16>, vector<32x64xbf16>, vector<8x64xf32> -> vector<8x64xf32>
    %40 = arith.addf %35, %39 : vector<8x64xf32>
    %41 = arith.truncf %25 : vector<8x32xf32> to vector<8x32xbf16>
    %42 = vector.extract_strided_slice %27 {offsets = [64, 0], sizes = [32, 64], strides = [1, 1]} : vector<96x64xbf16> to vector<32x64xbf16>
    %cst_32 = arith.constant dense<0.000000e+00> : vector<8x64xf32>
    %43 = tpu.matmul %41, %42, %cst_32 {dimension_numbers = #tpu.dot_dimension_numbers<[1], [0], [0], [1], [0, 0, 1, 1], [], []>} : vector<8x32xbf16>, vector<32x64xbf16>, vector<8x64xf32> -> vector<8x64xf32>
    %44 = arith.addf %40, %43 : vector<8x64xf32>
    %45 = vector.broadcast %29 : vector<1x64xf32> to vector<8x64xf32>
    %46 = arith.addf %44, %45 : vector<8x64xf32>
    %47 = vector.extract_strided_slice %46 {offsets = [0, 0], sizes = [8, 32], strides = [1, 1]} : vector<8x64xf32> to vector<8x32xf32>
    %48 = vector.extract_strided_slice %46 {offsets = [0, 32], sizes = [8, 32], strides = [1, 1]} : vector<8x64xf32> to vector<8x32xf32>
    %49 = arith.negf %48 : vector<8x32xf32>
    %50 = math.exp %49 : vector<8x32xf32>
    %cst_33 = arith.constant 1.000000e+00 : f32
    %51 = vector.broadcast %cst_33 : f32 to vector<8x32xf32>
    %52 = arith.addf %51, %50 : vector<8x32xf32>
    %53 = arith.divf %51, %52 : vector<8x32xf32>
    %54 = arith.mulf %53, %47 : vector<8x32xf32>
    %cst_34 = arith.constant 1.000000e+00 : f32
    %55 = vector.broadcast %cst_34 : f32 to vector<8x32xf32>
    %56 = arith.subf %55, %53 : vector<8x32xf32>
    %57 = arith.mulf %56, %25 : vector<8x32xf32>
    %58 = arith.addf %54, %57 : vector<8x32xf32>
    %c1 = arith.constant 1 : index
    %c0_35 = arith.constant 0 : index
    %c0_36 = arith.constant 0 : index
    %59 = vector.load %arg8[%c1, %c0_35, %c0_36] : memref<10x96x64xbf16, #tpu.memory_space<vmem>>, vector<1x96x64xbf16>
    %60 = vector.shape_cast %59 : vector<1x96x64xbf16> to vector<96x64xbf16>
    %c1_37 = arith.constant 1 : index
    %c0_38 = arith.constant 0 : index
    %c0_39 = arith.constant 0 : index
    %61 = vector.load %arg9[%c1_37, %c0_38, %c0_39] : memref<10x1x64xf32, #tpu.memory_space<vmem>>, vector<1x1x64xf32>
    %62 = vector.shape_cast %61 : vector<1x1x64xf32> to vector<1x64xf32>
    %c56_40 = arith.constant 56 : index
    %c0_41 = arith.constant 0 : index
    %63 = vector.load %arg11[%c56_40, %c0_41] : memref<64x32xf32, #tpu.memory_space<vmem>>, vector<8x32xf32>
    tpu.vector_store %arg11[%c56_40, %c0_41], %58 {strides = array<i32>} : memref<64x32xf32, #tpu.memory_space<vmem>>, vector<8x32xf32>,
    %c0_42 = arith.constant 0 : index
    %c0_43 = arith.constant 0 : index
    %64 = vector.load %arg11[%c0_42, %c0_43] : memref<64x32xf32, #tpu.memory_space<vmem>>, vector<64x32xf32>
    %65 = vector.extract_strided_slice %64 {offsets = [50, 0], sizes = [8, 32], strides = [1, 1]} : vector<64x32xf32> to vector<8x32xf32>
    %66 = arith.truncf %65 : vector<8x32xf32> to vector<8x32xbf16>
    %67 = vector.extract_strided_slice %60 {offsets = [0, 0], sizes = [32, 64], strides = [1, 1]} : vector<96x64xbf16> to vector<32x64xbf16>
    %cst_44 = arith.constant dense<0.000000e+00> : vector<8x64xf32>
    %68 = tpu.matmul %66, %67, %cst_44 {dimension_numbers = #tpu.dot_dimension_numbers<[1], [0], [0], [1], [0, 0, 1, 1], [], []>} : vector<8x32xbf16>, vector<32x64xbf16>, vector<8x64xf32> -> vector<8x64xf32>
    %69 = vector.extract_strided_slice %64 {offsets = [53, 0], sizes = [8, 32], strides = [1, 1]} : vector<64x32xf32> to vector<8x32xf32>
    %70 = arith.truncf %69 : vector<8x32xf32> to vector<8x32xbf16>
    %71 = vector.extract_strided_slice %60 {offsets = [32, 0], sizes = [32, 64], strides = [1, 1]} : vector<96x64xbf16> to vector<32x64xbf16>
    %cst_45 = arith.constant dense<0.000000e+00> : vector<8x64xf32>
    %72 = tpu.matmul %70, %71, %cst_45 {dimension_numbers = #tpu.dot_dimension_numbers<[1], [0], [0], [1], [0, 0, 1, 1], [], []>} : vector<8x32xbf16>, vector<32x64xbf16>, vector<8x64xf32> -> vector<8x64xf32>
    %73 = arith.addf %68, %72 : vector<8x64xf32>
    %74 = arith.truncf %58 : vector<8x32xf32> to vector<8x32xbf16>
    %75 = vector.extract_strided_slice %60 {offsets = [64, 0], sizes = [32, 64], strides = [1, 1]} : vector<96x64xbf16> to vector<32x64xbf16>
    %cst_46 = arith.constant dense<0.000000e+00> : vector<8x64xf32>
    %76 = tpu.matmul %74, %75, %cst_46 {dimension_numbers = #tpu.dot_dimension_numbers<[1], [0], [0], [1], [0, 0, 1, 1], [], []>} : vector<8x32xbf16>, vector<32x64xbf16>, vector<8x64xf32> -> vector<8x64xf32>
    %77 = arith.addf %73, %76 : vector<8x64xf32>
    %78 = vector.broadcast %62 : vector<1x64xf32> to vector<8x64xf32>
    %79 = arith.addf %77, %78 : vector<8x64xf32>
    %80 = vector.extract_strided_slice %79 {offsets = [0, 0], sizes = [8, 32], strides = [1, 1]} : vector<8x64xf32> to vector<8x32xf32>
    %81 = vector.extract_strided_slice %79 {offsets = [0, 32], sizes = [8, 32], strides = [1, 1]} : vector<8x64xf32> to vector<8x32xf32>
    %82 = arith.negf %81 : vector<8x32xf32>
    %83 = math.exp %82 : vector<8x32xf32>
    %cst_47 = arith.constant 1.000000e+00 : f32
    %84 = vector.broadcast %cst_47 : f32 to vector<8x32xf32>
    %85 = arith.addf %84, %83 : vector<8x32xf32>
    %86 = arith.divf %84, %85 : vector<8x32xf32>
    %87 = arith.mulf %86, %80 : vector<8x32xf32>
    %cst_48 = arith.constant 1.000000e+00 : f32
    %88 = vector.broadcast %cst_48 : f32 to vector<8x32xf32>
    %89 = arith.subf %88, %86 : vector<8x32xf32>
    %90 = arith.mulf %89, %58 : vector<8x32xf32>
    %91 = arith.addf %87, %90 : vector<8x32xf32>
    %c2 = arith.constant 2 : index
    %c0_49 = arith.constant 0 : index
    %c0_50 = arith.constant 0 : index
    %92 = vector.load %arg8[%c2, %c0_49, %c0_50] : memref<10x96x64xbf16, #tpu.memory_space<vmem>>, vector<1x96x64xbf16>
    %93 = vector.shape_cast %92 : vector<1x96x64xbf16> to vector<96x64xbf16>
    %c2_51 = arith.constant 2 : index
    %c0_52 = arith.constant 0 : index
    %c0_53 = arith.constant 0 : index
    %94 = vector.load %arg9[%c2_51, %c0_52, %c0_53] : memref<10x1x64xf32, #tpu.memory_space<vmem>>, vector<1x1x64xf32>
    %95 = vector.shape_cast %94 : vector<1x1x64xf32> to vector<1x64xf32>
    %96 = arith.truncf %91 : vector<8x32xf32> to vector<8x32xbf16>
    %97 = vector.extract_strided_slice %93 {offsets = [64, 0], sizes = [32, 64], strides = [1, 1]} : vector<96x64xbf16> to vector<32x64xbf16>
    %cst_54 = arith.constant dense<0.000000e+00> : vector<8x64xf32>
    %98 = tpu.matmul %96, %97, %cst_54 {dimension_numbers = #tpu.dot_dimension_numbers<[1], [0], [0], [1], [0, 0, 1, 1], [], []>} : vector<8x32xbf16>, vector<32x64xbf16>, vector<8x64xf32> -> vector<8x64xf32>
    %99 = vector.broadcast %95 : vector<1x64xf32> to vector<8x64xf32>
    %100 = arith.addf %98, %99 : vector<8x64xf32>
    %101 = vector.extract_strided_slice %100 {offsets = [0, 0], sizes = [8, 32], strides = [1, 1]} : vector<8x64xf32> to vector<8x32xf32>
    %102 = vector.extract_strided_slice %100 {offsets = [0, 32], sizes = [8, 32], strides = [1, 1]} : vector<8x64xf32> to vector<8x32xf32>
    %103 = arith.negf %102 : vector<8x32xf32>
    %104 = math.exp %103 : vector<8x32xf32>
    %cst_55 = arith.constant 1.000000e+00 : f32
    %105 = vector.broadcast %cst_55 : f32 to vector<8x32xf32>
    %106 = arith.addf %105, %104 : vector<8x32xf32>
    %107 = arith.divf %105, %106 : vector<8x32xf32>
    %108 = arith.mulf %107, %101 : vector<8x32xf32>
    %cst_56 = arith.constant 1.000000e+00 : f32
    %109 = vector.broadcast %cst_56 : f32 to vector<8x32xf32>
    %110 = arith.subf %109, %107 : vector<8x32xf32>
    %111 = arith.mulf %110, %91 : vector<8x32xf32>
    %112 = arith.addf %108, %111 : vector<8x32xf32>
    %c3 = arith.constant 3 : index
    %c0_57 = arith.constant 0 : index
    %c0_58 = arith.constant 0 : index
    %113 = vector.load %arg8[%c3, %c0_57, %c0_58] : memref<10x96x64xbf16, #tpu.memory_space<vmem>>, vector<1x96x64xbf16>
    %114 = vector.shape_cast %113 : vector<1x96x64xbf16> to vector<96x64xbf16>
    %c3_59 = arith.constant 3 : index
    %c0_60 = arith.constant 0 : index
    %c0_61 = arith.constant 0 : index
    %115 = vector.load %arg9[%c3_59, %c0_60, %c0_61] : memref<10x1x64xf32, #tpu.memory_space<vmem>>, vector<1x1x64xf32>
    %116 = vector.shape_cast %115 : vector<1x1x64xf32> to vector<1x64xf32>
    %117 = arith.truncf %112 : vector<8x32xf32> to vector<8x32xbf16>
    %118 = vector.extract_strided_slice %114 {offsets = [64, 0], sizes = [32, 64], strides = [1, 1]} : vector<96x64xbf16> to vector<32x64xbf16>
    %cst_62 = arith.constant dense<0.000000e+00> : vector<8x64xf32>
    %119 = tpu.matmul %117, %118, %cst_62 {dimension_numbers = #tpu.dot_dimension_numbers<[1], [0], [0], [1], [0, 0, 1, 1], [], []>} : vector<8x32xbf16>, vector<32x64xbf16>, vector<8x64xf32> -> vector<8x64xf32>
    %120 = vector.broadcast %116 : vector<1x64xf32> to vector<8x64xf32>
    %121 = arith.addf %119, %120 : vector<8x64xf32>
    %122 = vector.extract_strided_slice %121 {offsets = [0, 0], sizes = [8, 32], strides = [1, 1]} : vector<8x64xf32> to vector<8x32xf32>
    %123 = vector.extract_strided_slice %121 {offsets = [0, 32], sizes = [8, 32], strides = [1, 1]} : vector<8x64xf32> to vector<8x32xf32>
    %124 = arith.negf %123 : vector<8x32xf32>
    %125 = math.exp %124 : vector<8x32xf32>
    %cst_63 = arith.constant 1.000000e+00 : f32
    %126 = vector.broadcast %cst_63 : f32 to vector<8x32xf32>
    %127 = arith.addf %126, %125 : vector<8x32xf32>
    %128 = arith.divf %126, %127 : vector<8x32xf32>
    %129 = arith.mulf %128, %122 : vector<8x32xf32>
    %cst_64 = arith.constant 1.000000e+00 : f32
    %130 = vector.broadcast %cst_64 : f32 to vector<8x32xf32>
    %131 = arith.subf %130, %128 : vector<8x32xf32>
    %132 = arith.mulf %131, %112 : vector<8x32xf32>
    %133 = arith.addf %129, %132 : vector<8x32xf32>
    %c4 = arith.constant 4 : index
    %c0_65 = arith.constant 0 : index
    %c0_66 = arith.constant 0 : index
    %134 = vector.load %arg8[%c4, %c0_65, %c0_66] : memref<10x96x64xbf16, #tpu.memory_space<vmem>>, vector<1x96x64xbf16>
    %135 = vector.shape_cast %134 : vector<1x96x64xbf16> to vector<96x64xbf16>
    %c4_67 = arith.constant 4 : index
    %c0_68 = arith.constant 0 : index
    %c0_69 = arith.constant 0 : index
    %136 = vector.load %arg9[%c4_67, %c0_68, %c0_69] : memref<10x1x64xf32, #tpu.memory_space<vmem>>, vector<1x1x64xf32>
    %137 = vector.shape_cast %136 : vector<1x1x64xf32> to vector<1x64xf32>
    %c56_70 = arith.constant 56 : index
    %c0_71 = arith.constant 0 : index
    %138 = vector.load %arg11[%c56_70, %c0_71] : memref<64x32xf32, #tpu.memory_space<vmem>>, vector<8x32xf32>
    tpu.vector_store %arg11[%c56_70, %c0_71], %133 {strides = array<i32>} : memref<64x32xf32, #tpu.memory_space<vmem>>, vector<8x32xf32>,
    %c0_72 = arith.constant 0 : index
    %c0_73 = arith.constant 0 : index
    %139 = vector.load %arg11[%c0_72, %c0_73] : memref<64x32xf32, #tpu.memory_space<vmem>>, vector<64x32xf32>
    %140 = vector.extract_strided_slice %139 {offsets = [54, 0], sizes = [8, 32], strides = [1, 1]} : vector<64x32xf32> to vector<8x32xf32>
    %141 = arith.truncf %140 : vector<8x32xf32> to vector<8x32xbf16>
    %142 = vector.extract_strided_slice %135 {offsets = [0, 0], sizes = [32, 64], strides = [1, 1]} : vector<96x64xbf16> to vector<32x64xbf16>
    %cst_74 = arith.constant dense<0.000000e+00> : vector<8x64xf32>
    %143 = tpu.matmul %141, %142, %cst_74 {dimension_numbers = #tpu.dot_dimension_numbers<[1], [0], [0], [1], [0, 0, 1, 1], [], []>} : vector<8x32xbf16>, vector<32x64xbf16>, vector<8x64xf32> -> vector<8x64xf32>
    %144 = vector.extract_strided_slice %139 {offsets = [55, 0], sizes = [8, 32], strides = [1, 1]} : vector<64x32xf32> to vector<8x32xf32>
    %145 = arith.truncf %144 : vector<8x32xf32> to vector<8x32xbf16>
    %146 = vector.extract_strided_slice %135 {offsets = [32, 0], sizes = [32, 64], strides = [1, 1]} : vector<96x64xbf16> to vector<32x64xbf16>
    %cst_75 = arith.constant dense<0.000000e+00> : vector<8x64xf32>
    %147 = tpu.matmul %145, %146, %cst_75 {dimension_numbers = #tpu.dot_dimension_numbers<[1], [0], [0], [1], [0, 0, 1, 1], [], []>} : vector<8x32xbf16>, vector<32x64xbf16>, vector<8x64xf32> -> vector<8x64xf32>
    %148 = arith.addf %143, %147 : vector<8x64xf32>
    %149 = arith.truncf %133 : vector<8x32xf32> to vector<8x32xbf16>
    %150 = vector.extract_strided_slice %135 {offsets = [64, 0], sizes = [32, 64], strides = [1, 1]} : vector<96x64xbf16> to vector<32x64xbf16>
    %cst_76 = arith.constant dense<0.000000e+00> : vector<8x64xf32>
    %151 = tpu.matmul %149, %150, %cst_76 {dimension_numbers = #tpu.dot_dimension_numbers<[1], [0], [0], [1], [0, 0, 1, 1], [], []>} : vector<8x32xbf16>, vector<32x64xbf16>, vector<8x64xf32> -> vector<8x64xf32>
    %152 = arith.addf %148, %151 : vector<8x64xf32>
    %153 = vector.broadcast %137 : vector<1x64xf32> to vector<8x64xf32>
    %154 = arith.addf %152, %153 : vector<8x64xf32>
    %155 = vector.extract_strided_slice %154 {offsets = [0, 0], sizes = [8, 32], strides = [1, 1]} : vector<8x64xf32> to vector<8x32xf32>
    %156 = vector.extract_strided_slice %154 {offsets = [0, 32], sizes = [8, 32], strides = [1, 1]} : vector<8x64xf32> to vector<8x32xf32>
    %157 = arith.negf %156 : vector<8x32xf32>
    %158 = math.exp %157 : vector<8x32xf32>
    %cst_77 = arith.constant 1.000000e+00 : f32
    %159 = vector.broadcast %cst_77 : f32 to vector<8x32xf32>
    %160 = arith.addf %159, %158 : vector<8x32xf32>
    %161 = arith.divf %159, %160 : vector<8x32xf32>
    %162 = arith.mulf %161, %155 : vector<8x32xf32>
    %cst_78 = arith.constant 1.000000e+00 : f32
    %163 = vector.broadcast %cst_78 : f32 to vector<8x32xf32>
    %164 = arith.subf %163, %161 : vector<8x32xf32>
    %165 = arith.mulf %164, %133 : vector<8x32xf32>
    %166 = arith.addf %162, %165 : vector<8x32xf32>
    %c5 = arith.constant 5 : index
    %c0_79 = arith.constant 0 : index
    %c0_80 = arith.constant 0 : index
    %167 = vector.load %arg8[%c5, %c0_79, %c0_80] : memref<10x96x64xbf16, #tpu.memory_space<vmem>>, vector<1x96x64xbf16>
    %168 = vector.shape_cast %167 : vector<1x96x64xbf16> to vector<96x64xbf16>
    %c5_81 = arith.constant 5 : index
    %c0_82 = arith.constant 0 : index
    %c0_83 = arith.constant 0 : index
    %169 = vector.load %arg9[%c5_81, %c0_82, %c0_83] : memref<10x1x64xf32, #tpu.memory_space<vmem>>, vector<1x1x64xf32>
    %170 = vector.shape_cast %169 : vector<1x1x64xf32> to vector<1x64xf32>
    %c56_84 = arith.constant 56 : index
    %c0_85 = arith.constant 0 : index
    %171 = vector.load %arg11[%c56_84, %c0_85] : memref<64x32xf32, #tpu.memory_space<vmem>>, vector<8x32xf32>
    tpu.vector_store %arg11[%c56_84, %c0_85], %166 {strides = array<i32>} : memref<64x32xf32, #tpu.memory_space<vmem>>, vector<8x32xf32>,
    %c0_86 = arith.constant 0 : index
    %c0_87 = arith.constant 0 : index
    %172 = vector.load %arg11[%c0_86, %c0_87] : memref<64x32xf32, #tpu.memory_space<vmem>>, vector<64x32xf32>
    %173 = vector.extract_strided_slice %172 {offsets = [50, 0], sizes = [8, 32], strides = [1, 1]} : vector<64x32xf32> to vector<8x32xf32>
    %174 = arith.truncf %173 : vector<8x32xf32> to vector<8x32xbf16>
    %175 = vector.extract_strided_slice %168 {offsets = [0, 0], sizes = [32, 64], strides = [1, 1]} : vector<96x64xbf16> to vector<32x64xbf16>
    %cst_88 = arith.constant dense<0.000000e+00> : vector<8x64xf32>
    %176 = tpu.matmul %174, %175, %cst_88 {dimension_numbers = #tpu.dot_dimension_numbers<[1], [0], [0], [1], [0, 0, 1, 1], [], []>} : vector<8x32xbf16>, vector<32x64xbf16>, vector<8x64xf32> -> vector<8x64xf32>
    %177 = vector.extract_strided_slice %172 {offsets = [53, 0], sizes = [8, 32], strides = [1, 1]} : vector<64x32xf32> to vector<8x32xf32>
    %178 = arith.truncf %177 : vector<8x32xf32> to vector<8x32xbf16>
    %179 = vector.extract_strided_slice %168 {offsets = [32, 0], sizes = [32, 64], strides = [1, 1]} : vector<96x64xbf16> to vector<32x64xbf16>
    %cst_89 = arith.constant dense<0.000000e+00> : vector<8x64xf32>
    %180 = tpu.matmul %178, %179, %cst_89 {dimension_numbers = #tpu.dot_dimension_numbers<[1], [0], [0], [1], [0, 0, 1, 1], [], []>} : vector<8x32xbf16>, vector<32x64xbf16>, vector<8x64xf32> -> vector<8x64xf32>
    %181 = arith.addf %176, %180 : vector<8x64xf32>
    %182 = arith.truncf %166 : vector<8x32xf32> to vector<8x32xbf16>
    %183 = vector.extract_strided_slice %168 {offsets = [64, 0], sizes = [32, 64], strides = [1, 1]} : vector<96x64xbf16> to vector<32x64xbf16>
    %cst_90 = arith.constant dense<0.000000e+00> : vector<8x64xf32>
    %184 = tpu.matmul %182, %183, %cst_90 {dimension_numbers = #tpu.dot_dimension_numbers<[1], [0], [0], [1], [0, 0, 1, 1], [], []>} : vector<8x32xbf16>, vector<32x64xbf16>, vector<8x64xf32> -> vector<8x64xf32>
    %185 = arith.addf %181, %184 : vector<8x64xf32>
    %186 = vector.broadcast %170 : vector<1x64xf32> to vector<8x64xf32>
    %187 = arith.addf %185, %186 : vector<8x64xf32>
    %188 = vector.extract_strided_slice %187 {offsets = [0, 0], sizes = [8, 32], strides = [1, 1]} : vector<8x64xf32> to vector<8x32xf32>
    %189 = vector.extract_strided_slice %187 {offsets = [0, 32], sizes = [8, 32], strides = [1, 1]} : vector<8x64xf32> to vector<8x32xf32>
    %190 = arith.negf %189 : vector<8x32xf32>
    %191 = math.exp %190 : vector<8x32xf32>
    %cst_91 = arith.constant 1.000000e+00 : f32
    %192 = vector.broadcast %cst_91 : f32 to vector<8x32xf32>
    %193 = arith.addf %192, %191 : vector<8x32xf32>
    %194 = arith.divf %192, %193 : vector<8x32xf32>
    %195 = arith.mulf %194, %188 : vector<8x32xf32>
    %cst_92 = arith.constant 1.000000e+00 : f32
    %196 = vector.broadcast %cst_92 : f32 to vector<8x32xf32>
    %197 = arith.subf %196, %194 : vector<8x32xf32>
    %198 = arith.mulf %197, %166 : vector<8x32xf32>
    %199 = arith.addf %195, %198 : vector<8x32xf32>
    %c6 = arith.constant 6 : index
    %c0_93 = arith.constant 0 : index
    %c0_94 = arith.constant 0 : index
    %200 = vector.load %arg8[%c6, %c0_93, %c0_94] : memref<10x96x64xbf16, #tpu.memory_space<vmem>>, vector<1x96x64xbf16>
    %201 = vector.shape_cast %200 : vector<1x96x64xbf16> to vector<96x64xbf16>
    %c6_95 = arith.constant 6 : index
    %c0_96 = arith.constant 0 : index
    %c0_97 = arith.constant 0 : index
    %202 = vector.load %arg9[%c6_95, %c0_96, %c0_97] : memref<10x1x64xf32, #tpu.memory_space<vmem>>, vector<1x1x64xf32>
    %203 = vector.shape_cast %202 : vector<1x1x64xf32> to vector<1x64xf32>
    %204 = arith.truncf %199 : vector<8x32xf32> to vector<8x32xbf16>
    %205 = vector.extract_strided_slice %201 {offsets = [64, 0], sizes = [32, 64], strides = [1, 1]} : vector<96x64xbf16> to vector<32x64xbf16>
    %cst_98 = arith.constant dense<0.000000e+00> : vector<8x64xf32>
    %206 = tpu.matmul %204, %205, %cst_98 {dimension_numbers = #tpu.dot_dimension_numbers<[1], [0], [0], [1], [0, 0, 1, 1], [], []>} : vector<8x32xbf16>, vector<32x64xbf16>, vector<8x64xf32> -> vector<8x64xf32>
    %207 = vector.broadcast %203 : vector<1x64xf32> to vector<8x64xf32>
    %208 = arith.addf %206, %207 : vector<8x64xf32>
    %209 = vector.extract_strided_slice %208 {offsets = [0, 0], sizes = [8, 32], strides = [1, 1]} : vector<8x64xf32> to vector<8x32xf32>
    %210 = vector.extract_strided_slice %208 {offsets = [0, 32], sizes = [8, 32], strides = [1, 1]} : vector<8x64xf32> to vector<8x32xf32>
    %211 = arith.negf %210 : vector<8x32xf32>
    %212 = math.exp %211 : vector<8x32xf32>
    %cst_99 = arith.constant 1.000000e+00 : f32
    %213 = vector.broadcast %cst_99 : f32 to vector<8x32xf32>
    %214 = arith.addf %213, %212 : vector<8x32xf32>
    %215 = arith.divf %213, %214 : vector<8x32xf32>
    %216 = arith.mulf %215, %209 : vector<8x32xf32>
    %cst_100 = arith.constant 1.000000e+00 : f32
    %217 = vector.broadcast %cst_100 : f32 to vector<8x32xf32>
    %218 = arith.subf %217, %215 : vector<8x32xf32>
    %219 = arith.mulf %218, %199 : vector<8x32xf32>
    %220 = arith.addf %216, %219 : vector<8x32xf32>
    %c7 = arith.constant 7 : index
    %c0_101 = arith.constant 0 : index
    %c0_102 = arith.constant 0 : index
    %221 = vector.load %arg8[%c7, %c0_101, %c0_102] : memref<10x96x64xbf16, #tpu.memory_space<vmem>>, vector<1x96x64xbf16>
    %222 = vector.shape_cast %221 : vector<1x96x64xbf16> to vector<96x64xbf16>
    %c7_103 = arith.constant 7 : index
    %c0_104 = arith.constant 0 : index
    %c0_105 = arith.constant 0 : index
    %223 = vector.load %arg9[%c7_103, %c0_104, %c0_105] : memref<10x1x64xf32, #tpu.memory_space<vmem>>, vector<1x1x64xf32>
    %224 = vector.shape_cast %223 : vector<1x1x64xf32> to vector<1x64xf32>
    %225 = arith.truncf %220 : vector<8x32xf32> to vector<8x32xbf16>
    %226 = vector.extract_strided_slice %222 {offsets = [64, 0], sizes = [32, 64], strides = [1, 1]} : vector<96x64xbf16> to vector<32x64xbf16>
    %cst_106 = arith.constant dense<0.000000e+00> : vector<8x64xf32>
    %227 = tpu.matmul %225, %226, %cst_106 {dimension_numbers = #tpu.dot_dimension_numbers<[1], [0], [0], [1], [0, 0, 1, 1], [], []>} : vector<8x32xbf16>, vector<32x64xbf16>, vector<8x64xf32> -> vector<8x64xf32>
    %228 = vector.broadcast %224 : vector<1x64xf32> to vector<8x64xf32>
    %229 = arith.addf %227, %228 : vector<8x64xf32>
    %230 = vector.extract_strided_slice %229 {offsets = [0, 0], sizes = [8, 32], strides = [1, 1]} : vector<8x64xf32> to vector<8x32xf32>
    %231 = vector.extract_strided_slice %229 {offsets = [0, 32], sizes = [8, 32], strides = [1, 1]} : vector<8x64xf32> to vector<8x32xf32>
    %232 = arith.negf %231 : vector<8x32xf32>
    %233 = math.exp %232 : vector<8x32xf32>
    %cst_107 = arith.constant 1.000000e+00 : f32
    %234 = vector.broadcast %cst_107 : f32 to vector<8x32xf32>
    %235 = arith.addf %234, %233 : vector<8x32xf32>
    %236 = arith.divf %234, %235 : vector<8x32xf32>
    %237 = arith.mulf %236, %230 : vector<8x32xf32>
    %cst_108 = arith.constant 1.000000e+00 : f32
    %238 = vector.broadcast %cst_108 : f32 to vector<8x32xf32>
    %239 = arith.subf %238, %236 : vector<8x32xf32>
    %240 = arith.mulf %239, %220 : vector<8x32xf32>
    %241 = arith.addf %237, %240 : vector<8x32xf32>
    %c8 = arith.constant 8 : index
    %c0_109 = arith.constant 0 : index
    %c0_110 = arith.constant 0 : index
    %242 = vector.load %arg8[%c8, %c0_109, %c0_110] : memref<10x96x64xbf16, #tpu.memory_space<vmem>>, vector<1x96x64xbf16>
    %243 = vector.shape_cast %242 : vector<1x96x64xbf16> to vector<96x64xbf16>
    %c8_111 = arith.constant 8 : index
    %c0_112 = arith.constant 0 : index
    %c0_113 = arith.constant 0 : index
    %244 = vector.load %arg9[%c8_111, %c0_112, %c0_113] : memref<10x1x64xf32, #tpu.memory_space<vmem>>, vector<1x1x64xf32>
    %245 = vector.shape_cast %244 : vector<1x1x64xf32> to vector<1x64xf32>
    %c56_114 = arith.constant 56 : index
    %c0_115 = arith.constant 0 : index
    %246 = vector.load %arg11[%c56_114, %c0_115] : memref<64x32xf32, #tpu.memory_space<vmem>>, vector<8x32xf32>
    tpu.vector_store %arg11[%c56_114, %c0_115], %241 {strides = array<i32>} : memref<64x32xf32, #tpu.memory_space<vmem>>, vector<8x32xf32>,
    %c0_116 = arith.constant 0 : index
    %c0_117 = arith.constant 0 : index
    %247 = vector.load %arg11[%c0_116, %c0_117] : memref<64x32xf32, #tpu.memory_space<vmem>>, vector<64x32xf32>
    %248 = vector.extract_strided_slice %247 {offsets = [50, 0], sizes = [8, 32], strides = [1, 1]} : vector<64x32xf32> to vector<8x32xf32>
    %249 = arith.truncf %248 : vector<8x32xf32> to vector<8x32xbf16>
    %250 = vector.extract_strided_slice %243 {offsets = [0, 0], sizes = [32, 64], strides = [1, 1]} : vector<96x64xbf16> to vector<32x64xbf16>
    %cst_118 = arith.constant dense<0.000000e+00> : vector<8x64xf32>
    %251 = tpu.matmul %249, %250, %cst_118 {dimension_numbers = #tpu.dot_dimension_numbers<[1], [0], [0], [1], [0, 0, 1, 1], [], []>} : vector<8x32xbf16>, vector<32x64xbf16>, vector<8x64xf32> -> vector<8x64xf32>
    %252 = vector.extract_strided_slice %247 {offsets = [53, 0], sizes = [8, 32], strides = [1, 1]} : vector<64x32xf32> to vector<8x32xf32>
    %253 = arith.truncf %252 : vector<8x32xf32> to vector<8x32xbf16>
    %254 = vector.extract_strided_slice %243 {offsets = [32, 0], sizes = [32, 64], strides = [1, 1]} : vector<96x64xbf16> to vector<32x64xbf16>
    %cst_119 = arith.constant dense<0.000000e+00> : vector<8x64xf32>
    %255 = tpu.matmul %253, %254, %cst_119 {dimension_numbers = #tpu.dot_dimension_numbers<[1], [0], [0], [1], [0, 0, 1, 1], [], []>} : vector<8x32xbf16>, vector<32x64xbf16>, vector<8x64xf32> -> vector<8x64xf32>
    %256 = arith.addf %251, %255 : vector<8x64xf32>
    %257 = arith.truncf %241 : vector<8x32xf32> to vector<8x32xbf16>
    %258 = vector.extract_strided_slice %243 {offsets = [64, 0], sizes = [32, 64], strides = [1, 1]} : vector<96x64xbf16> to vector<32x64xbf16>
    %cst_120 = arith.constant dense<0.000000e+00> : vector<8x64xf32>
    %259 = tpu.matmul %257, %258, %cst_120 {dimension_numbers = #tpu.dot_dimension_numbers<[1], [0], [0], [1], [0, 0, 1, 1], [], []>} : vector<8x32xbf16>, vector<32x64xbf16>, vector<8x64xf32> -> vector<8x64xf32>
    %260 = arith.addf %256, %259 : vector<8x64xf32>
    %261 = vector.broadcast %245 : vector<1x64xf32> to vector<8x64xf32>
    %262 = arith.addf %260, %261 : vector<8x64xf32>
    %263 = vector.extract_strided_slice %262 {offsets = [0, 0], sizes = [8, 32], strides = [1, 1]} : vector<8x64xf32> to vector<8x32xf32>
    %264 = vector.extract_strided_slice %262 {offsets = [0, 32], sizes = [8, 32], strides = [1, 1]} : vector<8x64xf32> to vector<8x32xf32>
    %265 = arith.negf %264 : vector<8x32xf32>
    %266 = math.exp %265 : vector<8x32xf32>
    %cst_121 = arith.constant 1.000000e+00 : f32
    %267 = vector.broadcast %cst_121 : f32 to vector<8x32xf32>
    %268 = arith.addf %267, %266 : vector<8x32xf32>
    %269 = arith.divf %267, %268 : vector<8x32xf32>
    %270 = arith.mulf %269, %263 : vector<8x32xf32>
    %cst_122 = arith.constant 1.000000e+00 : f32
    %271 = vector.broadcast %cst_122 : f32 to vector<8x32xf32>
    %272 = arith.subf %271, %269 : vector<8x32xf32>
    %273 = arith.mulf %272, %241 : vector<8x32xf32>
    %274 = arith.addf %270, %273 : vector<8x32xf32>
    %c9 = arith.constant 9 : index
    %c0_123 = arith.constant 0 : index
    %c0_124 = arith.constant 0 : index
    %275 = vector.load %arg8[%c9, %c0_123, %c0_124] : memref<10x96x64xbf16, #tpu.memory_space<vmem>>, vector<1x96x64xbf16>
    %276 = vector.shape_cast %275 : vector<1x96x64xbf16> to vector<96x64xbf16>
    %c9_125 = arith.constant 9 : index
    %c0_126 = arith.constant 0 : index
    %c0_127 = arith.constant 0 : index
    %277 = vector.load %arg9[%c9_125, %c0_126, %c0_127] : memref<10x1x64xf32, #tpu.memory_space<vmem>>, vector<1x1x64xf32>
    %278 = vector.shape_cast %277 : vector<1x1x64xf32> to vector<1x64xf32>
    %c56_128 = arith.constant 56 : index
    %c0_129 = arith.constant 0 : index
    %279 = vector.load %arg11[%c56_128, %c0_129] : memref<64x32xf32, #tpu.memory_space<vmem>>, vector<8x32xf32>
    tpu.vector_store %arg11[%c56_128, %c0_129], %274 {strides = array<i32>} : memref<64x32xf32, #tpu.memory_space<vmem>>, vector<8x32xf32>,
    %c0_130 = arith.constant 0 : index
    %c0_131 = arith.constant 0 : index
    %280 = vector.load %arg11[%c0_130, %c0_131] : memref<64x32xf32, #tpu.memory_space<vmem>>, vector<64x32xf32>
    %281 = vector.extract_strided_slice %280 {offsets = [50, 0], sizes = [8, 32], strides = [1, 1]} : vector<64x32xf32> to vector<8x32xf32>
    %282 = arith.truncf %281 : vector<8x32xf32> to vector<8x32xbf16>
    %283 = vector.extract_strided_slice %276 {offsets = [0, 0], sizes = [32, 64], strides = [1, 1]} : vector<96x64xbf16> to vector<32x64xbf16>
    %cst_132 = arith.constant dense<0.000000e+00> : vector<8x64xf32>
    %284 = tpu.matmul %282, %283, %cst_132 {dimension_numbers = #tpu.dot_dimension_numbers<[1], [0], [0], [1], [0, 0, 1, 1], [], []>} : vector<8x32xbf16>, vector<32x64xbf16>, vector<8x64xf32> -> vector<8x64xf32>
    %285 = vector.extract_strided_slice %280 {offsets = [53, 0], sizes = [8, 32], strides = [1, 1]} : vector<64x32xf32> to vector<8x32xf32>
    %286 = arith.truncf %285 : vector<8x32xf32> to vector<8x32xbf16>
    %287 = vector.extract_strided_slice %276 {offsets = [32, 0], sizes = [32, 64], strides = [1, 1]} : vector<96x64xbf16> to vector<32x64xbf16>
    %cst_133 = arith.constant dense<0.000000e+00> : vector<8x64xf32>
    %288 = tpu.matmul %286, %287, %cst_133 {dimension_numbers = #tpu.dot_dimension_numbers<[1], [0], [0], [1], [0, 0, 1, 1], [], []>} : vector<8x32xbf16>, vector<32x64xbf16>, vector<8x64xf32> -> vector<8x64xf32>
    %289 = arith.addf %284, %288 : vector<8x64xf32>
    %290 = arith.truncf %274 : vector<8x32xf32> to vector<8x32xbf16>
    %291 = vector.extract_strided_slice %276 {offsets = [64, 0], sizes = [32, 64], strides = [1, 1]} : vector<96x64xbf16> to vector<32x64xbf16>
    %cst_134 = arith.constant dense<0.000000e+00> : vector<8x64xf32>
    %292 = tpu.matmul %290, %291, %cst_134 {dimension_numbers = #tpu.dot_dimension_numbers<[1], [0], [0], [1], [0, 0, 1, 1], [], []>} : vector<8x32xbf16>, vector<32x64xbf16>, vector<8x64xf32> -> vector<8x64xf32>
    %293 = arith.addf %289, %292 : vector<8x64xf32>
    %294 = vector.broadcast %278 : vector<1x64xf32> to vector<8x64xf32>
    %295 = arith.addf %293, %294 : vector<8x64xf32>
    %296 = vector.extract_strided_slice %295 {offsets = [0, 0], sizes = [8, 32], strides = [1, 1]} : vector<8x64xf32> to vector<8x32xf32>
    %297 = vector.extract_strided_slice %295 {offsets = [0, 32], sizes = [8, 32], strides = [1, 1]} : vector<8x64xf32> to vector<8x32xf32>
    %298 = arith.negf %297 : vector<8x32xf32>
    %299 = math.exp %298 : vector<8x32xf32>
    %cst_135 = arith.constant 1.000000e+00 : f32
    %300 = vector.broadcast %cst_135 : f32 to vector<8x32xf32>
    %301 = arith.addf %300, %299 : vector<8x32xf32>
    %302 = arith.divf %300, %301 : vector<8x32xf32>
    %303 = arith.mulf %302, %296 : vector<8x32xf32>
    %cst_136 = arith.constant 1.000000e+00 : f32
    %304 = vector.broadcast %cst_136 : f32 to vector<8x32xf32>
    %305 = arith.subf %304, %302 : vector<8x32xf32>
    %306 = arith.mulf %305, %274 : vector<8x32xf32>
    %307 = arith.addf %303, %306 : vector<8x32xf32>
    %c0_137 = arith.constant 0 : index
    %c0_138 = arith.constant 0 : index
    %c0_139 = arith.constant 0 : index
    %308 = vector.load %arg10[%c0_137, %c0_138, %c0_139] : memref<1x8x32xf32, #tpu.memory_space<vmem>>, vector<1x8x32xf32>
    %309 = vector.shape_cast %308 : vector<1x8x32xf32> to vector<8x32xf32>
    %310 = vector.shape_cast %307 : vector<8x32xf32> to vector<1x8x32xf32>
    tpu.vector_store %arg10[%c0_137, %c0_138, %c0_139], %310 {strides = array<i32>} : memref<1x8x32xf32, #tpu.memory_space<vmem>>, vector<1x8x32xf32>,
    return
  }
  func.func @transform_0(%arg0: i32) -> (i32, i32, i32) {
    %c0_i32 = arith.constant 0 : i32
    %c0_i32_0 = arith.constant 0 : i32
    %c0_i32_1 = arith.constant 0 : i32
    return %arg0, %c0_i32, %c0_i32_0 : i32, i32, i32
  }
  func.func @transform_1(%arg0: i32) -> (i32, i32) {
    %c0_i32 = arith.constant 0 : i32
    %c0_i32_0 = arith.constant 0 : i32
    %c0_i32_1 = arith.constant 0 : i32
    return %c0_i32, %c0_i32_0 : i32, i32
  }
  func.func @transform_2(%arg0: i32) -> (i32, i32) {
    %c0_i32 = arith.constant 0 : i32
    %c0_i32_0 = arith.constant 0 : i32
    %c0_i32_1 = arith.constant 0 : i32
    return %c0_i32, %c0_i32_0 : i32, i32
  }
  func.func @transform_3(%arg0: i32) -> (i32, i32) {
    %c0_i32 = arith.constant 0 : i32
    %c0_i32_0 = arith.constant 0 : i32
    %c0_i32_1 = arith.constant 0 : i32
    return %c0_i32, %c0_i32_0 : i32, i32
  }
  func.func @transform_4(%arg0: i32) -> (i32, i32) {
    %c0_i32 = arith.constant 0 : i32
    %c0_i32_0 = arith.constant 0 : i32
    %c0_i32_1 = arith.constant 0 : i32
    return %c0_i32, %c0_i32_0 : i32, i32
  }
  func.func @transform_5(%arg0: i32) -> (i32, i32) {
    %c0_i32 = arith.constant 0 : i32
    %c0_i32_0 = arith.constant 0 : i32
    %c0_i32_1 = arith.constant 0 : i32
    return %c0_i32, %c0_i32_0 : i32, i32
  }
  func.func @transform_6(%arg0: i32) -> (i32, i32) {
    %c0_i32 = arith.constant 0 : i32
    %c0_i32_0 = arith.constant 0 : i32
    %c0_i32_1 = arith.constant 0 : i32
    return %c0_i32, %c0_i32_0 : i32, i32
  }
  func.func @transform_7(%arg0: i32) -> (i32, i32, i32) {
    %c0_i32 = arith.constant 0 : i32
    %c0_i32_0 = arith.constant 0 : i32
    %c0_i32_1 = arith.constant 0 : i32
    %c0_i32_2 = arith.constant 0 : i32
    return %c0_i32, %c0_i32_0, %c0_i32_1 : i32, i32, i32
  }
  func.func @transform_8(%arg0: i32) -> (i32, i32, i32) {
    %c0_i32 = arith.constant 0 : i32
    %c0_i32_0 = arith.constant 0 : i32
    %c0_i32_1 = arith.constant 0 : i32
    %c0_i32_2 = arith.constant 0 : i32
    return %c0_i32, %c0_i32_0, %c0_i32_1 : i32, i32, i32
  }
  func.func @transform_9(%arg0: i32) -> (i32, i32, i32) {
    %c0_i32 = arith.constant 0 : i32
    %c0_i32_0 = arith.constant 0 : i32
    %c0_i32_1 = arith.constant 0 : i32
    return %arg0, %c0_i32, %c0_i32_0 : i32, i32, i32
  }
}

module attributes {stable_mosaic.version = 11 : i64} {
  func.func @_dual_attention_kernel(%arg0: i32, %arg1: memref<1x8x32xf32, #tpu.memory_space<vmem>>, %arg2: memref<1x8x32xf32, #tpu.memory_space<vmem>>, %arg3: memref<1x6x32xf32, #tpu.memory_space<vmem>>, %arg4: memref<1x6x32xf32, #tpu.memory_space<vmem>>, %arg5: memref<1x6x32xf32, #tpu.memory_space<vmem>>, %arg6: memref<1x8x32xf32, #tpu.memory_space<vmem>>, %arg7: memref<1x8x32xf32, #tpu.memory_space<vmem>>, %arg8: memref<1x8x32xf32, #tpu.memory_space<vmem>>, %arg9: memref<32x32xbf16, #tpu.memory_space<vmem>>, %arg10: memref<1x32xf32, #tpu.memory_space<vmem>>, %arg11: memref<32x32xbf16, #tpu.memory_space<vmem>>, %arg12: memref<1x32xf32, #tpu.memory_space<vmem>>, %arg13: memref<32x32xbf16, #tpu.memory_space<vmem>>, %arg14: memref<32x32xbf16, #tpu.memory_space<vmem>>, %arg15: memref<1x32xf32, #tpu.memory_space<vmem>>, %arg16: memref<32x32xbf16, #tpu.memory_space<vmem>>, %arg17: memref<1x32xf32, #tpu.memory_space<vmem>>, %arg18: memref<32x32xbf16, #tpu.memory_space<vmem>>, %arg19: memref<1x32xf32, #tpu.memory_space<vmem>>, %arg20: memref<32x64xbf16, #tpu.memory_space<vmem>>, %arg21: memref<1x64xf32, #tpu.memory_space<vmem>>, %arg22: memref<1x8x32xf32, #tpu.memory_space<vmem>>, %arg23: memref<1x8x32xf32, #tpu.memory_space<vmem>>, %arg24: memref<1x8x8xf32, #tpu.memory_space<vmem>>, %arg25: memref<1x8x6xf32, #tpu.memory_space<vmem>>) attributes {dimension_semantics = [#tpu.dimension_semantics<parallel>], iteration_bounds = array<i64: 2>, scalar_prefetch = 0 : i64, scratch_operands = 0 : i64, tpu.core_type = #tpu.core_type<tc>, window_params = [{transform_indices = @transform_0, window_bounds = array<i64: 1, 8, 32>}, {transform_indices = @transform_1, window_bounds = array<i64: 1, 8, 32>}, {transform_indices = @transform_2, window_bounds = array<i64: 1, 6, 32>}, {transform_indices = @transform_3, window_bounds = array<i64: 1, 6, 32>}, {transform_indices = @transform_4, window_bounds = array<i64: 1, 6, 32>}, {transform_indices = @transform_5, window_bounds = array<i64: 1, 8, 32>}, {transform_indices = @transform_6, window_bounds = array<i64: 1, 8, 32>}, {transform_indices = @transform_7, window_bounds = array<i64: 1, 8, 32>}, {pipeline_mode = #tpu.pipeline_mode<synchronous>, transform_indices = @transform_8, window_bounds = array<i64: 32, 32>}, {pipeline_mode = #tpu.pipeline_mode<synchronous>, transform_indices = @transform_9, window_bounds = array<i64: 1, 32>}, {pipeline_mode = #tpu.pipeline_mode<synchronous>, transform_indices = @transform_10, window_bounds = array<i64: 32, 32>}, {pipeline_mode = #tpu.pipeline_mode<synchronous>, transform_indices = @transform_11, window_bounds = array<i64: 1, 32>}, {pipeline_mode = #tpu.pipeline_mode<synchronous>, transform_indices = @transform_12, window_bounds = array<i64: 32, 32>}, {pipeline_mode = #tpu.pipeline_mode<synchronous>, transform_indices = @transform_13, window_bounds = array<i64: 32, 32>}, {pipeline_mode = #tpu.pipeline_mode<synchronous>, transform_indices = @transform_14, window_bounds = array<i64: 1, 32>}, {pipeline_mode = #tpu.pipeline_mode<synchronous>, transform_indices = @transform_15, window_bounds = array<i64: 32, 32>}, {pipeline_mode = #tpu.pipeline_mode<synchronous>, transform_indices = @transform_16, window_bounds = array<i64: 1, 32>}, {pipeline_mode = #tpu.pipeline_mode<synchronous>, transform_indices = @transform_17, window_bounds = array<i64: 32, 32>}, {pipeline_mode = #tpu.pipeline_mode<synchronous>, transform_indices = @transform_18, window_bounds = array<i64: 1, 32>}, {pipeline_mode = #tpu.pipeline_mode<synchronous>, transform_indices = @transform_19, window_bounds = array<i64: 32, 64>}, {pipeline_mode = #tpu.pipeline_mode<synchronous>, transform_indices = @transform_20, window_bounds = array<i64: 1, 64>}, {transform_indices = @transform_21, window_bounds = array<i64: 1, 8, 32>}, {transform_indices = @transform_22, window_bounds = array<i64: 1, 8, 32>}, {transform_indices = @transform_23, window_bounds = array<i64: 1, 8, 8>}, {transform_indices = @transform_24, window_bounds = array<i64: 1, 8, 6>}]} {
    %c0 = arith.constant 0 : index
    %c0_0 = arith.constant 0 : index
    %c0_1 = arith.constant 0 : index
    %0 = vector.load %arg1[%c0, %c0_0, %c0_1] : memref<1x8x32xf32, #tpu.memory_space<vmem>>, vector<1x8x32xf32>
    %1 = vector.shape_cast %0 : vector<1x8x32xf32> to vector<8x32xf32>
    %c0_2 = arith.constant 0 : index
    %c0_3 = arith.constant 0 : index
    %c0_4 = arith.constant 0 : index
    %2 = vector.load %arg2[%c0_2, %c0_3, %c0_4] : memref<1x8x32xf32, #tpu.memory_space<vmem>>, vector<1x8x32xf32>
    %3 = vector.shape_cast %2 : vector<1x8x32xf32> to vector<8x32xf32>
    %4 = arith.addf %1, %3 : vector<8x32xf32>
    %c0_5 = arith.constant 0 : index
    %c0_6 = arith.constant 0 : index
    %c0_7 = arith.constant 0 : index
    %5 = vector.load %arg3[%c0_5, %c0_6, %c0_7] : memref<1x6x32xf32, #tpu.memory_space<vmem>>, vector<1x6x32xf32>
    %6 = vector.shape_cast %5 : vector<1x6x32xf32> to vector<6x32xf32>
    %c0_8 = arith.constant 0 : index
    %c0_9 = arith.constant 0 : index
    %c0_10 = arith.constant 0 : index
    %7 = vector.load %arg4[%c0_8, %c0_9, %c0_10] : memref<1x6x32xf32, #tpu.memory_space<vmem>>, vector<1x6x32xf32>
    %8 = vector.shape_cast %7 : vector<1x6x32xf32> to vector<6x32xf32>
    %9 = arith.addf %6, %8 : vector<6x32xf32>
    %c0_11 = arith.constant 0 : index
    %c0_12 = arith.constant 0 : index
    %10 = vector.load %arg9[%c0_11, %c0_12] : memref<32x32xbf16, #tpu.memory_space<vmem>>, vector<32x32xbf16>
    %11 = arith.truncf %4 : vector<8x32xf32> to vector<8x32xbf16>
    %cst = arith.constant dense<0.000000e+00> : vector<8x32xf32>
    %12 = tpu.matmul %11, %10, %cst {dimension_numbers = #tpu.dot_dimension_numbers<[1], [0], [0], [1], [0, 0, 1, 1], [], []>} : vector<8x32xbf16>, vector<32x32xbf16>, vector<8x32xf32> -> vector<8x32xf32>
    %c0_13 = arith.constant 0 : index
    %c0_14 = arith.constant 0 : index
    %13 = vector.load %arg10[%c0_13, %c0_14] : memref<1x32xf32, #tpu.memory_space<vmem>>, vector<1x32xf32>
    %14 = vector.broadcast %13 : vector<1x32xf32> to vector<8x32xf32>
    %15 = arith.addf %12, %14 : vector<8x32xf32>
    %16 = arith.truncf %15 : vector<8x32xf32> to vector<8x32xbf16>
    %17 = arith.truncf %9 : vector<6x32xf32> to vector<6x32xbf16>
    %cst_15 = arith.constant dense<0.000000e+00> : vector<8x6xf32>
    %18 = tpu.matmul %16, %17, %cst_15 {dimension_numbers = #tpu.dot_dimension_numbers<[1], [1], [0], [0], [0, 0, 1, 0], [], []>} : vector<8x32xbf16>, vector<6x32xbf16>, vector<8x6xf32> -> vector<8x6xf32>
    %cst_16 = arith.constant dense<0xFF800000> : vector<8xf32>
    %19 = vector.multi_reduction <maximumf>, %18, %cst_16 [1] : vector<8x6xf32> to vector<8xf32>
    %20 = vector.shape_cast %19 : vector<8xf32> to vector<8x1xf32>
    %21 = vector.broadcast %20 : vector<8x1xf32> to vector<8x6xf32>
    %22 = arith.subf %18, %21 : vector<8x6xf32>
    %23 = math.exp %22 : vector<8x6xf32>
    %cst_17 = arith.constant dense<0.000000e+00> : vector<8xf32>
    %24 = vector.multi_reduction <add>, %23, %cst_17 [1] : vector<8x6xf32> to vector<8xf32>
    %25 = vector.shape_cast %24 : vector<8xf32> to vector<8x1xf32>
    %26 = tpu.reciprocal %25 {approx = true} : vector<8x1xf32> -> vector<8x1xf32>
    %27 = vector.broadcast %26 : vector<8x1xf32> to vector<8x6xf32>
    %28 = arith.mulf %23, %27 : vector<8x6xf32>
    %c0_18 = arith.constant 0 : index
    %c0_19 = arith.constant 0 : index
    %c0_20 = arith.constant 0 : index
    %29 = vector.load %arg25[%c0_18, %c0_19, %c0_20] : memref<1x8x6xf32, #tpu.memory_space<vmem>>, vector<1x8x6xf32>
    %30 = vector.shape_cast %29 : vector<1x8x6xf32> to vector<8x6xf32>
    %31 = vector.shape_cast %28 : vector<8x6xf32> to vector<1x8x6xf32>
    tpu.vector_store %arg25[%c0_18, %c0_19, %c0_20], %31 {strides = array<i32>} : memref<1x8x6xf32, #tpu.memory_space<vmem>>, vector<1x8x6xf32>,
    %c0_21 = arith.constant 0 : index
    %c0_22 = arith.constant 0 : index
    %c0_23 = arith.constant 0 : index
    %32 = vector.load %arg5[%c0_21, %c0_22, %c0_23] : memref<1x6x32xf32, #tpu.memory_space<vmem>>, vector<1x6x32xf32>
    %33 = vector.shape_cast %32 : vector<1x6x32xf32> to vector<6x32xf32>
    %34 = arith.truncf %28 : vector<8x6xf32> to vector<8x6xbf16>
    %35 = arith.truncf %33 : vector<6x32xf32> to vector<6x32xbf16>
    %cst_24 = arith.constant dense<0.000000e+00> : vector<8x32xf32>
    %36 = tpu.matmul %34, %35, %cst_24 {dimension_numbers = #tpu.dot_dimension_numbers<[1], [0], [0], [1], [0, 0, 1, 1], [], []>} : vector<8x6xbf16>, vector<6x32xbf16>, vector<8x32xf32> -> vector<8x32xf32>
    %c0_25 = arith.constant 0 : index
    %c0_26 = arith.constant 0 : index
    %37 = vector.load %arg11[%c0_25, %c0_26] : memref<32x32xbf16, #tpu.memory_space<vmem>>, vector<32x32xbf16>
    %38 = arith.truncf %36 : vector<8x32xf32> to vector<8x32xbf16>
    %cst_27 = arith.constant dense<0.000000e+00> : vector<8x32xf32>
    %39 = tpu.matmul %38, %37, %cst_27 {dimension_numbers = #tpu.dot_dimension_numbers<[1], [0], [0], [1], [0, 0, 1, 1], [], []>} : vector<8x32xbf16>, vector<32x32xbf16>, vector<8x32xf32> -> vector<8x32xf32>
    %c0_28 = arith.constant 0 : index
    %c0_29 = arith.constant 0 : index
    %40 = vector.load %arg12[%c0_28, %c0_29] : memref<1x32xf32, #tpu.memory_space<vmem>>, vector<1x32xf32>
    %41 = vector.broadcast %40 : vector<1x32xf32> to vector<8x32xf32>
    %42 = arith.addf %39, %41 : vector<8x32xf32>
    %cst_30 = arith.constant 0.707106769 : f32
    %43 = vector.broadcast %cst_30 : f32 to vector<8x32xf32>
    %44 = arith.mulf %4, %43 : vector<8x32xf32>
    %45 = arith.addf %42, %44 : vector<8x32xf32>
    %c0_31 = arith.constant 0 : index
    %c0_32 = arith.constant 0 : index
    %c0_33 = arith.constant 0 : index
    %46 = vector.load %arg6[%c0_31, %c0_32, %c0_33] : memref<1x8x32xf32, #tpu.memory_space<vmem>>, vector<1x8x32xf32>
    %47 = vector.shape_cast %46 : vector<1x8x32xf32> to vector<8x32xf32>
    %c0_34 = arith.constant 0 : index
    %c0_35 = arith.constant 0 : index
    %c0_36 = arith.constant 0 : index
    %48 = vector.load %arg7[%c0_34, %c0_35, %c0_36] : memref<1x8x32xf32, #tpu.memory_space<vmem>>, vector<1x8x32xf32>
    %49 = vector.shape_cast %48 : vector<1x8x32xf32> to vector<8x32xf32>
    %50 = arith.addf %47, %49 : vector<8x32xf32>
    %c0_37 = arith.constant 0 : index
    %c0_38 = arith.constant 0 : index
    %51 = vector.load %arg16[%c0_37, %c0_38] : memref<32x32xbf16, #tpu.memory_space<vmem>>, vector<32x32xbf16>
    %52 = arith.truncf %50 : vector<8x32xf32> to vector<8x32xbf16>
    %cst_39 = arith.constant dense<0.000000e+00> : vector<8x32xf32>
    %53 = tpu.matmul %52, %51, %cst_39 {dimension_numbers = #tpu.dot_dimension_numbers<[1], [0], [0], [1], [0, 0, 1, 1], [], []>} : vector<8x32xbf16>, vector<32x32xbf16>, vector<8x32xf32> -> vector<8x32xf32>
    %c0_40 = arith.constant 0 : index
    %c0_41 = arith.constant 0 : index
    %54 = vector.load %arg17[%c0_40, %c0_41] : memref<1x32xf32, #tpu.memory_space<vmem>>, vector<1x32xf32>
    %55 = vector.broadcast %54 : vector<1x32xf32> to vector<8x32xf32>
    %56 = arith.addf %53, %55 : vector<8x32xf32>
    %c0_42 = arith.constant 0 : index
    %c0_43 = arith.constant 0 : index
    %c0_44 = arith.constant 0 : index
    %57 = vector.load %arg8[%c0_42, %c0_43, %c0_44] : memref<1x8x32xf32, #tpu.memory_space<vmem>>, vector<1x8x32xf32>
    %58 = vector.shape_cast %57 : vector<1x8x32xf32> to vector<8x32xf32>
    %c0_45 = arith.constant 0 : index
    %c0_46 = arith.constant 0 : index
    %59 = vector.load %arg18[%c0_45, %c0_46] : memref<32x32xbf16, #tpu.memory_space<vmem>>, vector<32x32xbf16>
    %60 = arith.truncf %58 : vector<8x32xf32> to vector<8x32xbf16>
    %cst_47 = arith.constant dense<0.000000e+00> : vector<8x32xf32>
    %61 = tpu.matmul %60, %59, %cst_47 {dimension_numbers = #tpu.dot_dimension_numbers<[1], [0], [0], [1], [0, 0, 1, 1], [], []>} : vector<8x32xbf16>, vector<32x32xbf16>, vector<8x32xf32> -> vector<8x32xf32>
    %c0_48 = arith.constant 0 : index
    %c0_49 = arith.constant 0 : index
    %62 = vector.load %arg19[%c0_48, %c0_49] : memref<1x32xf32, #tpu.memory_space<vmem>>, vector<1x32xf32>
    %63 = vector.broadcast %62 : vector<1x32xf32> to vector<8x32xf32>
    %64 = arith.addf %61, %63 : vector<8x32xf32>
    %c0_50 = arith.constant 0 : index
    %c0_51 = arith.constant 0 : index
    %65 = vector.load %arg13[%c0_50, %c0_51] : memref<32x32xbf16, #tpu.memory_space<vmem>>, vector<32x32xbf16>
    %66 = arith.truncf %4 : vector<8x32xf32> to vector<8x32xbf16>
    %cst_52 = arith.constant dense<0.000000e+00> : vector<8x32xf32>
    %67 = tpu.matmul %66, %65, %cst_52 {dimension_numbers = #tpu.dot_dimension_numbers<[1], [0], [0], [1], [0, 0, 1, 1], [], []>} : vector<8x32xbf16>, vector<32x32xbf16>, vector<8x32xf32> -> vector<8x32xf32>
    %c0_53 = arith.constant 0 : index
    %c0_54 = arith.constant 0 : index
    %68 = vector.load %arg14[%c0_53, %c0_54] : memref<32x32xbf16, #tpu.memory_space<vmem>>, vector<32x32xbf16>
    %69 = arith.truncf %45 : vector<8x32xf32> to vector<8x32xbf16>
    %cst_55 = arith.constant dense<0.000000e+00> : vector<8x32xf32>
    %70 = tpu.matmul %69, %68, %cst_55 {dimension_numbers = #tpu.dot_dimension_numbers<[1], [0], [0], [1], [0, 0, 1, 1], [], []>} : vector<8x32xbf16>, vector<32x32xbf16>, vector<8x32xf32> -> vector<8x32xf32>
    %71 = arith.addf %67, %70 : vector<8x32xf32>
    %c0_56 = arith.constant 0 : index
    %c0_57 = arith.constant 0 : index
    %72 = vector.load %arg15[%c0_56, %c0_57] : memref<1x32xf32, #tpu.memory_space<vmem>>, vector<1x32xf32>
    %73 = vector.broadcast %72 : vector<1x32xf32> to vector<8x32xf32>
    %74 = arith.addf %71, %73 : vector<8x32xf32>
    %75 = arith.truncf %74 : vector<8x32xf32> to vector<8x32xbf16>
    %76 = arith.truncf %56 : vector<8x32xf32> to vector<8x32xbf16>
    %cst_58 = arith.constant dense<0.000000e+00> : vector<8x8xf32>
    %77 = tpu.matmul %75, %76, %cst_58 {dimension_numbers = #tpu.dot_dimension_numbers<[1], [1], [0], [0], [0, 0, 1, 0], [], []>} : vector<8x32xbf16>, vector<8x32xbf16>, vector<8x8xf32> -> vector<8x8xf32>
    %cst_59 = arith.constant dense<0xFF800000> : vector<8xf32>
    %78 = vector.multi_reduction <maximumf>, %77, %cst_59 [1] : vector<8x8xf32> to vector<8xf32>
    %79 = vector.shape_cast %78 : vector<8xf32> to vector<8x1xf32>
    %80 = vector.broadcast %79 : vector<8x1xf32> to vector<8x8xf32>
    %81 = arith.subf %77, %80 : vector<8x8xf32>
    %82 = math.exp %81 : vector<8x8xf32>
    %cst_60 = arith.constant dense<0.000000e+00> : vector<8xf32>
    %83 = vector.multi_reduction <add>, %82, %cst_60 [1] : vector<8x8xf32> to vector<8xf32>
    %84 = vector.shape_cast %83 : vector<8xf32> to vector<8x1xf32>
    %85 = tpu.reciprocal %84 {approx = true} : vector<8x1xf32> -> vector<8x1xf32>
    %86 = vector.broadcast %85 : vector<8x1xf32> to vector<8x8xf32>
    %87 = arith.mulf %82, %86 : vector<8x8xf32>
    %c0_61 = arith.constant 0 : index
    %c0_62 = arith.constant 0 : index
    %c0_63 = arith.constant 0 : index
    %88 = vector.load %arg24[%c0_61, %c0_62, %c0_63] : memref<1x8x8xf32, #tpu.memory_space<vmem>>, vector<1x8x8xf32>
    %89 = vector.shape_cast %88 : vector<1x8x8xf32> to vector<8x8xf32>
    %90 = vector.shape_cast %87 : vector<8x8xf32> to vector<1x8x8xf32>
    tpu.vector_store %arg24[%c0_61, %c0_62, %c0_63], %90 {strides = array<i32>} : memref<1x8x8xf32, #tpu.memory_space<vmem>>, vector<1x8x8xf32>,
    %91 = arith.truncf %87 : vector<8x8xf32> to vector<8x8xbf16>
    %92 = arith.truncf %64 : vector<8x32xf32> to vector<8x32xbf16>
    %cst_64 = arith.constant dense<0.000000e+00> : vector<8x32xf32>
    %93 = tpu.matmul %91, %92, %cst_64 {dimension_numbers = #tpu.dot_dimension_numbers<[1], [0], [0], [1], [0, 0, 1, 1], [], []>} : vector<8x8xbf16>, vector<8x32xbf16>, vector<8x32xf32> -> vector<8x32xf32>
    %c0_65 = arith.constant 0 : index
    %c0_66 = arith.constant 0 : index
    %94 = vector.load %arg20[%c0_65, %c0_66] : memref<32x64xbf16, #tpu.memory_space<vmem>>, vector<32x64xbf16>
    %95 = arith.truncf %93 : vector<8x32xf32> to vector<8x32xbf16>
    %cst_67 = arith.constant dense<0.000000e+00> : vector<8x64xf32>
    %96 = tpu.matmul %95, %94, %cst_67 {dimension_numbers = #tpu.dot_dimension_numbers<[1], [0], [0], [1], [0, 0, 1, 1], [], []>} : vector<8x32xbf16>, vector<32x64xbf16>, vector<8x64xf32> -> vector<8x64xf32>
    %c0_68 = arith.constant 0 : index
    %c0_69 = arith.constant 0 : index
    %97 = vector.load %arg21[%c0_68, %c0_69] : memref<1x64xf32, #tpu.memory_space<vmem>>, vector<1x64xf32>
    %98 = vector.broadcast %97 : vector<1x64xf32> to vector<8x64xf32>
    %99 = arith.addf %96, %98 : vector<8x64xf32>
    %100 = vector.extract_strided_slice %99 {offsets = [0, 0], sizes = [8, 32], strides = [1, 1]} : vector<8x64xf32> to vector<8x32xf32>
    %cst_70 = arith.constant 0.707106769 : f32
    %101 = vector.broadcast %cst_70 : f32 to vector<8x32xf32>
    %102 = arith.mulf %4, %101 : vector<8x32xf32>
    %103 = arith.addf %100, %102 : vector<8x32xf32>
    %c0_71 = arith.constant 0 : index
    %c0_72 = arith.constant 0 : index
    %c0_73 = arith.constant 0 : index
    %104 = vector.load %arg22[%c0_71, %c0_72, %c0_73] : memref<1x8x32xf32, #tpu.memory_space<vmem>>, vector<1x8x32xf32>
    %105 = vector.shape_cast %104 : vector<1x8x32xf32> to vector<8x32xf32>
    %106 = vector.shape_cast %103 : vector<8x32xf32> to vector<1x8x32xf32>
    tpu.vector_store %arg22[%c0_71, %c0_72, %c0_73], %106 {strides = array<i32>} : memref<1x8x32xf32, #tpu.memory_space<vmem>>, vector<1x8x32xf32>,
    %107 = vector.extract_strided_slice %99 {offsets = [0, 32], sizes = [8, 32], strides = [1, 1]} : vector<8x64xf32> to vector<8x32xf32>
    %cst_74 = arith.constant 0.707106769 : f32
    %108 = vector.broadcast %cst_74 : f32 to vector<8x32xf32>
    %109 = arith.mulf %45, %108 : vector<8x32xf32>
    %110 = arith.addf %107, %109 : vector<8x32xf32>
    %c0_75 = arith.constant 0 : index
    %c0_76 = arith.constant 0 : index
    %c0_77 = arith.constant 0 : index
    %111 = vector.load %arg23[%c0_75, %c0_76, %c0_77] : memref<1x8x32xf32, #tpu.memory_space<vmem>>, vector<1x8x32xf32>
    %112 = vector.shape_cast %111 : vector<1x8x32xf32> to vector<8x32xf32>
    %113 = vector.shape_cast %110 : vector<8x32xf32> to vector<1x8x32xf32>
    tpu.vector_store %arg23[%c0_75, %c0_76, %c0_77], %113 {strides = array<i32>} : memref<1x8x32xf32, #tpu.memory_space<vmem>>, vector<1x8x32xf32>,
    return
  }
  func.func @transform_0(%arg0: i32) -> (i32, i32, i32) {
    %c0_i32 = arith.constant 0 : i32
    %c0_i32_0 = arith.constant 0 : i32
    %c0_i32_1 = arith.constant 0 : i32
    return %arg0, %c0_i32, %c0_i32_0 : i32, i32, i32
  }
  func.func @transform_1(%arg0: i32) -> (i32, i32, i32) {
    %c0_i32 = arith.constant 0 : i32
    %c0_i32_0 = arith.constant 0 : i32
    %c0_i32_1 = arith.constant 0 : i32
    return %arg0, %c0_i32, %c0_i32_0 : i32, i32, i32
  }
  func.func @transform_2(%arg0: i32) -> (i32, i32, i32) {
    %c0_i32 = arith.constant 0 : i32
    %c0_i32_0 = arith.constant 0 : i32
    %c0_i32_1 = arith.constant 0 : i32
    return %arg0, %c0_i32, %c0_i32_0 : i32, i32, i32
  }
  func.func @transform_3(%arg0: i32) -> (i32, i32, i32) {
    %c0_i32 = arith.constant 0 : i32
    %c0_i32_0 = arith.constant 0 : i32
    %c0_i32_1 = arith.constant 0 : i32
    return %arg0, %c0_i32, %c0_i32_0 : i32, i32, i32
  }
  func.func @transform_4(%arg0: i32) -> (i32, i32, i32) {
    %c0_i32 = arith.constant 0 : i32
    %c0_i32_0 = arith.constant 0 : i32
    %c0_i32_1 = arith.constant 0 : i32
    return %arg0, %c0_i32, %c0_i32_0 : i32, i32, i32
  }
  func.func @transform_5(%arg0: i32) -> (i32, i32, i32) {
    %c0_i32 = arith.constant 0 : i32
    %c0_i32_0 = arith.constant 0 : i32
    %c0_i32_1 = arith.constant 0 : i32
    return %arg0, %c0_i32, %c0_i32_0 : i32, i32, i32
  }
  func.func @transform_6(%arg0: i32) -> (i32, i32, i32) {
    %c0_i32 = arith.constant 0 : i32
    %c0_i32_0 = arith.constant 0 : i32
    %c0_i32_1 = arith.constant 0 : i32
    return %arg0, %c0_i32, %c0_i32_0 : i32, i32, i32
  }
  func.func @transform_7(%arg0: i32) -> (i32, i32, i32) {
    %c0_i32 = arith.constant 0 : i32
    %c0_i32_0 = arith.constant 0 : i32
    %c0_i32_1 = arith.constant 0 : i32
    return %arg0, %c0_i32, %c0_i32_0 : i32, i32, i32
  }
  func.func @transform_8(%arg0: i32) -> (i32, i32) {
    %c0_i32 = arith.constant 0 : i32
    %c0_i32_0 = arith.constant 0 : i32
    %c0_i32_1 = arith.constant 0 : i32
    return %c0_i32, %c0_i32_0 : i32, i32
  }
  func.func @transform_9(%arg0: i32) -> (i32, i32) {
    %c0_i32 = arith.constant 0 : i32
    %c0_i32_0 = arith.constant 0 : i32
    %c0_i32_1 = arith.constant 0 : i32
    return %c0_i32, %c0_i32_0 : i32, i32
  }
  func.func @transform_10(%arg0: i32) -> (i32, i32) {
    %c0_i32 = arith.constant 0 : i32
    %c0_i32_0 = arith.constant 0 : i32
    %c0_i32_1 = arith.constant 0 : i32
    return %c0_i32, %c0_i32_0 : i32, i32
  }
  func.func @transform_11(%arg0: i32) -> (i32, i32) {
    %c0_i32 = arith.constant 0 : i32
    %c0_i32_0 = arith.constant 0 : i32
    %c0_i32_1 = arith.constant 0 : i32
    return %c0_i32, %c0_i32_0 : i32, i32
  }
  func.func @transform_12(%arg0: i32) -> (i32, i32) {
    %c0_i32 = arith.constant 0 : i32
    %c0_i32_0 = arith.constant 0 : i32
    %c0_i32_1 = arith.constant 0 : i32
    return %c0_i32, %c0_i32_0 : i32, i32
  }
  func.func @transform_13(%arg0: i32) -> (i32, i32) {
    %c0_i32 = arith.constant 0 : i32
    %c0_i32_0 = arith.constant 0 : i32
    %c0_i32_1 = arith.constant 0 : i32
    return %c0_i32, %c0_i32_0 : i32, i32
  }
  func.func @transform_14(%arg0: i32) -> (i32, i32) {
    %c0_i32 = arith.constant 0 : i32
    %c0_i32_0 = arith.constant 0 : i32
    %c0_i32_1 = arith.constant 0 : i32
    return %c0_i32, %c0_i32_0 : i32, i32
  }
  func.func @transform_15(%arg0: i32) -> (i32, i32) {
    %c0_i32 = arith.constant 0 : i32
    %c0_i32_0 = arith.constant 0 : i32
    %c0_i32_1 = arith.constant 0 : i32
    return %c0_i32, %c0_i32_0 : i32, i32
  }
  func.func @transform_16(%arg0: i32) -> (i32, i32) {
    %c0_i32 = arith.constant 0 : i32
    %c0_i32_0 = arith.constant 0 : i32
    %c0_i32_1 = arith.constant 0 : i32
    return %c0_i32, %c0_i32_0 : i32, i32
  }
  func.func @transform_17(%arg0: i32) -> (i32, i32) {
    %c0_i32 = arith.constant 0 : i32
    %c0_i32_0 = arith.constant 0 : i32
    %c0_i32_1 = arith.constant 0 : i32
    return %c0_i32, %c0_i32_0 : i32, i32
  }
  func.func @transform_18(%arg0: i32) -> (i32, i32) {
    %c0_i32 = arith.constant 0 : i32
    %c0_i32_0 = arith.constant 0 : i32
    %c0_i32_1 = arith.constant 0 : i32
    return %c0_i32, %c0_i32_0 : i32, i32
  }
  func.func @transform_19(%arg0: i32) -> (i32, i32) {
    %c0_i32 = arith.constant 0 : i32
    %c0_i32_0 = arith.constant 0 : i32
    %c0_i32_1 = arith.constant 0 : i32
    return %c0_i32, %c0_i32_0 : i32, i32
  }
  func.func @transform_20(%arg0: i32) -> (i32, i32) {
    %c0_i32 = arith.constant 0 : i32
    %c0_i32_0 = arith.constant 0 : i32
    %c0_i32_1 = arith.constant 0 : i32
    return %c0_i32, %c0_i32_0 : i32, i32
  }
  func.func @transform_21(%arg0: i32) -> (i32, i32, i32) {
    %c0_i32 = arith.constant 0 : i32
    %c0_i32_0 = arith.constant 0 : i32
    %c0_i32_1 = arith.constant 0 : i32
    return %arg0, %c0_i32, %c0_i32_0 : i32, i32, i32
  }
  func.func @transform_22(%arg0: i32) -> (i32, i32, i32) {
    %c0_i32 = arith.constant 0 : i32
    %c0_i32_0 = arith.constant 0 : i32
    %c0_i32_1 = arith.constant 0 : i32
    return %arg0, %c0_i32, %c0_i32_0 : i32, i32, i32
  }
  func.func @transform_23(%arg0: i32) -> (i32, i32, i32) {
    %c0_i32 = arith.constant 0 : i32
    %c0_i32_0 = arith.constant 0 : i32
    %c0_i32_1 = arith.constant 0 : i32
    return %arg0, %c0_i32, %c0_i32_0 : i32, i32, i32
  }
  func.func @transform_24(%arg0: i32) -> (i32, i32, i32) {
    %c0_i32 = arith.constant 0 : i32
    %c0_i32_0 = arith.constant 0 : i32
    %c0_i32_1 = arith.constant 0 : i32
    return %arg0, %c0_i32, %c0_i32_0 : i32, i32, i32
  }
}

module attributes {stable_mosaic.version = 11 : i64} {
  func.func @_decoder_stack_kernel(%arg0: i32, %arg1: memref<1x8x32xf32, #tpu.memory_space<vmem>>, %arg2: memref<1x8x32xf32, #tpu.memory_space<vmem>>, %arg3: memref<1x8x32xf32, #tpu.memory_space<vmem>>, %arg4: memref<32x32xbf16, #tpu.memory_space<vmem>>, %arg5: memref<32x32xbf16, #tpu.memory_space<vmem>>, %arg6: memref<32x32xbf16, #tpu.memory_space<vmem>>, %arg7: memref<1x32xf32, #tpu.memory_space<vmem>>, %arg8: memref<6x96x64xbf16, #tpu.memory_space<vmem>>, %arg9: memref<6x1x64xf32, #tpu.memory_space<vmem>>, %arg10: memref<3x32x32xbf16, #tpu.memory_space<vmem>>, %arg11: memref<3x1x32xf32, #tpu.memory_space<vmem>>, %arg12: memref<32x16xbf16, #tpu.memory_space<vmem>>, %arg13: memref<1x16xf32, #tpu.memory_space<vmem>>, %arg14: memref<16x1xbf16, #tpu.memory_space<vmem>>, %arg15: memref<1x1xf32, #tpu.memory_space<vmem>>, %arg16: memref<1x8x16xf32, #tpu.memory_space<vmem>>, %arg17: memref<1x8x1xf32, #tpu.memory_space<vmem>>, %arg18: memref<1x8x32xf32, #tpu.memory_space<vmem>>, %arg19: memref<64x32xf32, #tpu.memory_space<vmem>>) attributes {dimension_semantics = [#tpu.dimension_semantics<parallel>], iteration_bounds = array<i64: 2>, scalar_prefetch = 0 : i64, scratch_operands = 1 : i64, tpu.core_type = #tpu.core_type<tc>, window_params = [{transform_indices = @transform_0, window_bounds = array<i64: 1, 8, 32>}, {transform_indices = @transform_1, window_bounds = array<i64: 1, 8, 32>}, {transform_indices = @transform_2, window_bounds = array<i64: 1, 8, 32>}, {pipeline_mode = #tpu.pipeline_mode<synchronous>, transform_indices = @transform_3, window_bounds = array<i64: 32, 32>}, {pipeline_mode = #tpu.pipeline_mode<synchronous>, transform_indices = @transform_4, window_bounds = array<i64: 32, 32>}, {pipeline_mode = #tpu.pipeline_mode<synchronous>, transform_indices = @transform_5, window_bounds = array<i64: 32, 32>}, {pipeline_mode = #tpu.pipeline_mode<synchronous>, transform_indices = @transform_6, window_bounds = array<i64: 1, 32>}, {pipeline_mode = #tpu.pipeline_mode<synchronous>, transform_indices = @transform_7, window_bounds = array<i64: 6, 96, 64>}, {pipeline_mode = #tpu.pipeline_mode<synchronous>, transform_indices = @transform_8, window_bounds = array<i64: 6, 1, 64>}, {pipeline_mode = #tpu.pipeline_mode<synchronous>, transform_indices = @transform_9, window_bounds = array<i64: 3, 32, 32>}, {pipeline_mode = #tpu.pipeline_mode<synchronous>, transform_indices = @transform_10, window_bounds = array<i64: 3, 1, 32>}, {pipeline_mode = #tpu.pipeline_mode<synchronous>, transform_indices = @transform_11, window_bounds = array<i64: 32, 16>}, {pipeline_mode = #tpu.pipeline_mode<synchronous>, transform_indices = @transform_12, window_bounds = array<i64: 1, 16>}, {pipeline_mode = #tpu.pipeline_mode<synchronous>, transform_indices = @transform_13, window_bounds = array<i64: 16, 1>}, {pipeline_mode = #tpu.pipeline_mode<synchronous>, transform_indices = @transform_14, window_bounds = array<i64: 1, 1>}, {transform_indices = @transform_15, window_bounds = array<i64: 1, 8, 16>}, {transform_indices = @transform_16, window_bounds = array<i64: 1, 8, 1>}, {transform_indices = @transform_17, window_bounds = array<i64: 1, 8, 32>}]} {
    %cst = arith.constant 0.000000e+00 : f32
    %0 = vector.broadcast %cst : f32 to vector<64x32xf32>
    %c0 = arith.constant 0 : index
    %c0_0 = arith.constant 0 : index
    %1 = vector.load %arg19[%c0, %c0_0] : memref<64x32xf32, #tpu.memory_space<vmem>>, vector<64x32xf32>
    tpu.vector_store %arg19[%c0, %c0_0], %0 {strides = array<i32>} : memref<64x32xf32, #tpu.memory_space<vmem>>, vector<64x32xf32>,
    %c0_1 = arith.constant 0 : index
    %c0_2 = arith.constant 0 : index
    %c0_3 = arith.constant 0 : index
    %2 = vector.load %arg1[%c0_1, %c0_2, %c0_3] : memref<1x8x32xf32, #tpu.memory_space<vmem>>, vector<1x8x32xf32>
    %3 = vector.shape_cast %2 : vector<1x8x32xf32> to vector<8x32xf32>
    %c0_4 = arith.constant 0 : index
    %c0_5 = arith.constant 0 : index
    %4 = vector.load %arg4[%c0_4, %c0_5] : memref<32x32xbf16, #tpu.memory_space<vmem>>, vector<32x32xbf16>
    %5 = arith.truncf %3 : vector<8x32xf32> to vector<8x32xbf16>
    %cst_6 = arith.constant dense<0.000000e+00> : vector<8x32xf32>
    %6 = tpu.matmul %5, %4, %cst_6 {dimension_numbers = #tpu.dot_dimension_numbers<[1], [0], [0], [1], [0, 0, 1, 1], [], []>} : vector<8x32xbf16>, vector<32x32xbf16>, vector<8x32xf32> -> vector<8x32xf32>
    %c0_7 = arith.constant 0 : index
    %c0_8 = arith.constant 0 : index
    %c0_9 = arith.constant 0 : index
    %7 = vector.load %arg2[%c0_7, %c0_8, %c0_9] : memref<1x8x32xf32, #tpu.memory_space<vmem>>, vector<1x8x32xf32>
    %8 = vector.shape_cast %7 : vector<1x8x32xf32> to vector<8x32xf32>
    %c0_10 = arith.constant 0 : index
    %c0_11 = arith.constant 0 : index
    %9 = vector.load %arg5[%c0_10, %c0_11] : memref<32x32xbf16, #tpu.memory_space<vmem>>, vector<32x32xbf16>
    %10 = arith.truncf %8 : vector<8x32xf32> to vector<8x32xbf16>
    %cst_12 = arith.constant dense<0.000000e+00> : vector<8x32xf32>
    %11 = tpu.matmul %10, %9, %cst_12 {dimension_numbers = #tpu.dot_dimension_numbers<[1], [0], [0], [1], [0, 0, 1, 1], [], []>} : vector<8x32xbf16>, vector<32x32xbf16>, vector<8x32xf32> -> vector<8x32xf32>
    %12 = arith.addf %6, %11 : vector<8x32xf32>
    %c0_13 = arith.constant 0 : index
    %c0_14 = arith.constant 0 : index
    %c0_15 = arith.constant 0 : index
    %13 = vector.load %arg3[%c0_13, %c0_14, %c0_15] : memref<1x8x32xf32, #tpu.memory_space<vmem>>, vector<1x8x32xf32>
    %14 = vector.shape_cast %13 : vector<1x8x32xf32> to vector<8x32xf32>
    %c0_16 = arith.constant 0 : index
    %c0_17 = arith.constant 0 : index
    %15 = vector.load %arg6[%c0_16, %c0_17] : memref<32x32xbf16, #tpu.memory_space<vmem>>, vector<32x32xbf16>
    %16 = arith.truncf %14 : vector<8x32xf32> to vector<8x32xbf16>
    %cst_18 = arith.constant dense<0.000000e+00> : vector<8x32xf32>
    %17 = tpu.matmul %16, %15, %cst_18 {dimension_numbers = #tpu.dot_dimension_numbers<[1], [0], [0], [1], [0, 0, 1, 1], [], []>} : vector<8x32xbf16>, vector<32x32xbf16>, vector<8x32xf32> -> vector<8x32xf32>
    %18 = arith.addf %12, %17 : vector<8x32xf32>
    %c0_19 = arith.constant 0 : index
    %c0_20 = arith.constant 0 : index
    %19 = vector.load %arg7[%c0_19, %c0_20] : memref<1x32xf32, #tpu.memory_space<vmem>>, vector<1x32xf32>
    %20 = vector.broadcast %19 : vector<1x32xf32> to vector<8x32xf32>
    %21 = arith.addf %18, %20 : vector<8x32xf32>
    %c0_21 = arith.constant 0 : index
    %c0_22 = arith.constant 0 : index
    %c0_23 = arith.constant 0 : index
    %22 = vector.load %arg8[%c0_21, %c0_22, %c0_23] : memref<6x96x64xbf16, #tpu.memory_space<vmem>>, vector<1x96x64xbf16>
    %23 = vector.shape_cast %22 : vector<1x96x64xbf16> to vector<96x64xbf16>
    %c0_24 = arith.constant 0 : index
    %c0_25 = arith.constant 0 : index
    %c0_26 = arith.constant 0 : index
    %24 = vector.load %arg9[%c0_24, %c0_25, %c0_26] : memref<6x1x64xf32, #tpu.memory_space<vmem>>, vector<1x1x64xf32>
    %25 = vector.shape_cast %24 : vector<1x1x64xf32> to vector<1x64xf32>
    %c56 = arith.constant 56 : index
    %c0_27 = arith.constant 0 : index
    %26 = vector.load %arg19[%c56, %c0_27] : memref<64x32xf32, #tpu.memory_space<vmem>>, vector<8x32xf32>
    tpu.vector_store %arg19[%c56, %c0_27], %21 {strides = array<i32>} : memref<64x32xf32, #tpu.memory_space<vmem>>, vector<8x32xf32>,
    %c0_28 = arith.constant 0 : index
    %c0_29 = arith.constant 0 : index
    %27 = vector.load %arg19[%c0_28, %c0_29] : memref<64x32xf32, #tpu.memory_space<vmem>>, vector<64x32xf32>
    %28 = vector.extract_strided_slice %27 {offsets = [54, 0], sizes = [8, 32], strides = [1, 1]} : vector<64x32xf32> to vector<8x32xf32>
    %29 = arith.truncf %28 : vector<8x32xf32> to vector<8x32xbf16>
    %30 = vector.extract_strided_slice %23 {offsets = [0, 0], sizes = [32, 64], strides = [1, 1]} : vector<96x64xbf16> to vector<32x64xbf16>
    %cst_30 = arith.constant dense<0.000000e+00> : vector<8x64xf32>
    %31 = tpu.matmul %29, %30, %cst_30 {dimension_numbers = #tpu.dot_dimension_numbers<[1], [0], [0], [1], [0, 0, 1, 1], [], []>} : vector<8x32xbf16>, vector<32x64xbf16>, vector<8x64xf32> -> vector<8x64xf32>
    %32 = vector.extract_strided_slice %27 {offsets = [55, 0], sizes = [8, 32], strides = [1, 1]} : vector<64x32xf32> to vector<8x32xf32>
    %33 = arith.truncf %32 : vector<8x32xf32> to vector<8x32xbf16>
    %34 = vector.extract_strided_slice %23 {offsets = [32, 0], sizes = [32, 64], strides = [1, 1]} : vector<96x64xbf16> to vector<32x64xbf16>
    %cst_31 = arith.constant dense<0.000000e+00> : vector<8x64xf32>
    %35 = tpu.matmul %33, %34, %cst_31 {dimension_numbers = #tpu.dot_dimension_numbers<[1], [0], [0], [1], [0, 0, 1, 1], [], []>} : vector<8x32xbf16>, vector<32x64xbf16>, vector<8x64xf32> -> vector<8x64xf32>
    %36 = arith.addf %31, %35 : vector<8x64xf32>
    %37 = arith.truncf %21 : vector<8x32xf32> to vector<8x32xbf16>
    %38 = vector.extract_strided_slice %23 {offsets = [64, 0], sizes = [32, 64], strides = [1, 1]} : vector<96x64xbf16> to vector<32x64xbf16>
    %cst_32 = arith.constant dense<0.000000e+00> : vector<8x64xf32>
    %39 = tpu.matmul %37, %38, %cst_32 {dimension_numbers = #tpu.dot_dimension_numbers<[1], [0], [0], [1], [0, 0, 1, 1], [], []>} : vector<8x32xbf16>, vector<32x64xbf16>, vector<8x64xf32> -> vector<8x64xf32>
    %40 = arith.addf %36, %39 : vector<8x64xf32>
    %41 = vector.broadcast %25 : vector<1x64xf32> to vector<8x64xf32>
    %42 = arith.addf %40, %41 : vector<8x64xf32>
    %43 = vector.extract_strided_slice %42 {offsets = [0, 0], sizes = [8, 32], strides = [1, 1]} : vector<8x64xf32> to vector<8x32xf32>
    %44 = vector.extract_strided_slice %42 {offsets = [0, 32], sizes = [8, 32], strides = [1, 1]} : vector<8x64xf32> to vector<8x32xf32>
    %45 = arith.negf %44 : vector<8x32xf32>
    %46 = math.exp %45 : vector<8x32xf32>
    %cst_33 = arith.constant 1.000000e+00 : f32
    %47 = vector.broadcast %cst_33 : f32 to vector<8x32xf32>
    %48 = arith.addf %47, %46 : vector<8x32xf32>
    %49 = arith.divf %47, %48 : vector<8x32xf32>
    %50 = arith.mulf %49, %43 : vector<8x32xf32>
    %cst_34 = arith.constant 1.000000e+00 : f32
    %51 = vector.broadcast %cst_34 : f32 to vector<8x32xf32>
    %52 = arith.subf %51, %49 : vector<8x32xf32>
    %53 = arith.mulf %52, %21 : vector<8x32xf32>
    %54 = arith.addf %50, %53 : vector<8x32xf32>
    %c1 = arith.constant 1 : index
    %c0_35 = arith.constant 0 : index
    %c0_36 = arith.constant 0 : index
    %55 = vector.load %arg8[%c1, %c0_35, %c0_36] : memref<6x96x64xbf16, #tpu.memory_space<vmem>>, vector<1x96x64xbf16>
    %56 = vector.shape_cast %55 : vector<1x96x64xbf16> to vector<96x64xbf16>
    %c1_37 = arith.constant 1 : index
    %c0_38 = arith.constant 0 : index
    %c0_39 = arith.constant 0 : index
    %57 = vector.load %arg9[%c1_37, %c0_38, %c0_39] : memref<6x1x64xf32, #tpu.memory_space<vmem>>, vector<1x1x64xf32>
    %58 = vector.shape_cast %57 : vector<1x1x64xf32> to vector<1x64xf32>
    %c56_40 = arith.constant 56 : index
    %c0_41 = arith.constant 0 : index
    %59 = vector.load %arg19[%c56_40, %c0_41] : memref<64x32xf32, #tpu.memory_space<vmem>>, vector<8x32xf32>
    tpu.vector_store %arg19[%c56_40, %c0_41], %54 {strides = array<i32>} : memref<64x32xf32, #tpu.memory_space<vmem>>, vector<8x32xf32>,
    %c0_42 = arith.constant 0 : index
    %c0_43 = arith.constant 0 : index
    %60 = vector.load %arg19[%c0_42, %c0_43] : memref<64x32xf32, #tpu.memory_space<vmem>>, vector<64x32xf32>
    %61 = vector.extract_strided_slice %60 {offsets = [50, 0], sizes = [8, 32], strides = [1, 1]} : vector<64x32xf32> to vector<8x32xf32>
    %62 = arith.truncf %61 : vector<8x32xf32> to vector<8x32xbf16>
    %63 = vector.extract_strided_slice %56 {offsets = [0, 0], sizes = [32, 64], strides = [1, 1]} : vector<96x64xbf16> to vector<32x64xbf16>
    %cst_44 = arith.constant dense<0.000000e+00> : vector<8x64xf32>
    %64 = tpu.matmul %62, %63, %cst_44 {dimension_numbers = #tpu.dot_dimension_numbers<[1], [0], [0], [1], [0, 0, 1, 1], [], []>} : vector<8x32xbf16>, vector<32x64xbf16>, vector<8x64xf32> -> vector<8x64xf32>
    %65 = vector.extract_strided_slice %60 {offsets = [53, 0], sizes = [8, 32], strides = [1, 1]} : vector<64x32xf32> to vector<8x32xf32>
    %66 = arith.truncf %65 : vector<8x32xf32> to vector<8x32xbf16>
    %67 = vector.extract_strided_slice %56 {offsets = [32, 0], sizes = [32, 64], strides = [1, 1]} : vector<96x64xbf16> to vector<32x64xbf16>
    %cst_45 = arith.constant dense<0.000000e+00> : vector<8x64xf32>
    %68 = tpu.matmul %66, %67, %cst_45 {dimension_numbers = #tpu.dot_dimension_numbers<[1], [0], [0], [1], [0, 0, 1, 1], [], []>} : vector<8x32xbf16>, vector<32x64xbf16>, vector<8x64xf32> -> vector<8x64xf32>
    %69 = arith.addf %64, %68 : vector<8x64xf32>
    %70 = arith.truncf %54 : vector<8x32xf32> to vector<8x32xbf16>
    %71 = vector.extract_strided_slice %56 {offsets = [64, 0], sizes = [32, 64], strides = [1, 1]} : vector<96x64xbf16> to vector<32x64xbf16>
    %cst_46 = arith.constant dense<0.000000e+00> : vector<8x64xf32>
    %72 = tpu.matmul %70, %71, %cst_46 {dimension_numbers = #tpu.dot_dimension_numbers<[1], [0], [0], [1], [0, 0, 1, 1], [], []>} : vector<8x32xbf16>, vector<32x64xbf16>, vector<8x64xf32> -> vector<8x64xf32>
    %73 = arith.addf %69, %72 : vector<8x64xf32>
    %74 = vector.broadcast %58 : vector<1x64xf32> to vector<8x64xf32>
    %75 = arith.addf %73, %74 : vector<8x64xf32>
    %76 = vector.extract_strided_slice %75 {offsets = [0, 0], sizes = [8, 32], strides = [1, 1]} : vector<8x64xf32> to vector<8x32xf32>
    %77 = vector.extract_strided_slice %75 {offsets = [0, 32], sizes = [8, 32], strides = [1, 1]} : vector<8x64xf32> to vector<8x32xf32>
    %78 = arith.negf %77 : vector<8x32xf32>
    %79 = math.exp %78 : vector<8x32xf32>
    %cst_47 = arith.constant 1.000000e+00 : f32
    %80 = vector.broadcast %cst_47 : f32 to vector<8x32xf32>
    %81 = arith.addf %80, %79 : vector<8x32xf32>
    %82 = arith.divf %80, %81 : vector<8x32xf32>
    %83 = arith.mulf %82, %76 : vector<8x32xf32>
    %cst_48 = arith.constant 1.000000e+00 : f32
    %84 = vector.broadcast %cst_48 : f32 to vector<8x32xf32>
    %85 = arith.subf %84, %82 : vector<8x32xf32>
    %86 = arith.mulf %85, %54 : vector<8x32xf32>
    %87 = arith.addf %83, %86 : vector<8x32xf32>
    %c2 = arith.constant 2 : index
    %c0_49 = arith.constant 0 : index
    %c0_50 = arith.constant 0 : index
    %88 = vector.load %arg8[%c2, %c0_49, %c0_50] : memref<6x96x64xbf16, #tpu.memory_space<vmem>>, vector<1x96x64xbf16>
    %89 = vector.shape_cast %88 : vector<1x96x64xbf16> to vector<96x64xbf16>
    %c2_51 = arith.constant 2 : index
    %c0_52 = arith.constant 0 : index
    %c0_53 = arith.constant 0 : index
    %90 = vector.load %arg9[%c2_51, %c0_52, %c0_53] : memref<6x1x64xf32, #tpu.memory_space<vmem>>, vector<1x1x64xf32>
    %91 = vector.shape_cast %90 : vector<1x1x64xf32> to vector<1x64xf32>
    %92 = arith.truncf %87 : vector<8x32xf32> to vector<8x32xbf16>
    %93 = vector.extract_strided_slice %89 {offsets = [64, 0], sizes = [32, 64], strides = [1, 1]} : vector<96x64xbf16> to vector<32x64xbf16>
    %cst_54 = arith.constant dense<0.000000e+00> : vector<8x64xf32>
    %94 = tpu.matmul %92, %93, %cst_54 {dimension_numbers = #tpu.dot_dimension_numbers<[1], [0], [0], [1], [0, 0, 1, 1], [], []>} : vector<8x32xbf16>, vector<32x64xbf16>, vector<8x64xf32> -> vector<8x64xf32>
    %95 = vector.broadcast %91 : vector<1x64xf32> to vector<8x64xf32>
    %96 = arith.addf %94, %95 : vector<8x64xf32>
    %97 = vector.extract_strided_slice %96 {offsets = [0, 0], sizes = [8, 32], strides = [1, 1]} : vector<8x64xf32> to vector<8x32xf32>
    %98 = vector.extract_strided_slice %96 {offsets = [0, 32], sizes = [8, 32], strides = [1, 1]} : vector<8x64xf32> to vector<8x32xf32>
    %99 = arith.negf %98 : vector<8x32xf32>
    %100 = math.exp %99 : vector<8x32xf32>
    %cst_55 = arith.constant 1.000000e+00 : f32
    %101 = vector.broadcast %cst_55 : f32 to vector<8x32xf32>
    %102 = arith.addf %101, %100 : vector<8x32xf32>
    %103 = arith.divf %101, %102 : vector<8x32xf32>
    %104 = arith.mulf %103, %97 : vector<8x32xf32>
    %cst_56 = arith.constant 1.000000e+00 : f32
    %105 = vector.broadcast %cst_56 : f32 to vector<8x32xf32>
    %106 = arith.subf %105, %103 : vector<8x32xf32>
    %107 = arith.mulf %106, %87 : vector<8x32xf32>
    %108 = arith.addf %104, %107 : vector<8x32xf32>
    %c3 = arith.constant 3 : index
    %c0_57 = arith.constant 0 : index
    %c0_58 = arith.constant 0 : index
    %109 = vector.load %arg8[%c3, %c0_57, %c0_58] : memref<6x96x64xbf16, #tpu.memory_space<vmem>>, vector<1x96x64xbf16>
    %110 = vector.shape_cast %109 : vector<1x96x64xbf16> to vector<96x64xbf16>
    %c3_59 = arith.constant 3 : index
    %c0_60 = arith.constant 0 : index
    %c0_61 = arith.constant 0 : index
    %111 = vector.load %arg9[%c3_59, %c0_60, %c0_61] : memref<6x1x64xf32, #tpu.memory_space<vmem>>, vector<1x1x64xf32>
    %112 = vector.shape_cast %111 : vector<1x1x64xf32> to vector<1x64xf32>
    %113 = arith.truncf %108 : vector<8x32xf32> to vector<8x32xbf16>
    %114 = vector.extract_strided_slice %110 {offsets = [64, 0], sizes = [32, 64], strides = [1, 1]} : vector<96x64xbf16> to vector<32x64xbf16>
    %cst_62 = arith.constant dense<0.000000e+00> : vector<8x64xf32>
    %115 = tpu.matmul %113, %114, %cst_62 {dimension_numbers = #tpu.dot_dimension_numbers<[1], [0], [0], [1], [0, 0, 1, 1], [], []>} : vector<8x32xbf16>, vector<32x64xbf16>, vector<8x64xf32> -> vector<8x64xf32>
    %116 = vector.broadcast %112 : vector<1x64xf32> to vector<8x64xf32>
    %117 = arith.addf %115, %116 : vector<8x64xf32>
    %118 = vector.extract_strided_slice %117 {offsets = [0, 0], sizes = [8, 32], strides = [1, 1]} : vector<8x64xf32> to vector<8x32xf32>
    %119 = vector.extract_strided_slice %117 {offsets = [0, 32], sizes = [8, 32], strides = [1, 1]} : vector<8x64xf32> to vector<8x32xf32>
    %120 = arith.negf %119 : vector<8x32xf32>
    %121 = math.exp %120 : vector<8x32xf32>
    %cst_63 = arith.constant 1.000000e+00 : f32
    %122 = vector.broadcast %cst_63 : f32 to vector<8x32xf32>
    %123 = arith.addf %122, %121 : vector<8x32xf32>
    %124 = arith.divf %122, %123 : vector<8x32xf32>
    %125 = arith.mulf %124, %118 : vector<8x32xf32>
    %cst_64 = arith.constant 1.000000e+00 : f32
    %126 = vector.broadcast %cst_64 : f32 to vector<8x32xf32>
    %127 = arith.subf %126, %124 : vector<8x32xf32>
    %128 = arith.mulf %127, %108 : vector<8x32xf32>
    %129 = arith.addf %125, %128 : vector<8x32xf32>
    %c4 = arith.constant 4 : index
    %c0_65 = arith.constant 0 : index
    %c0_66 = arith.constant 0 : index
    %130 = vector.load %arg8[%c4, %c0_65, %c0_66] : memref<6x96x64xbf16, #tpu.memory_space<vmem>>, vector<1x96x64xbf16>
    %131 = vector.shape_cast %130 : vector<1x96x64xbf16> to vector<96x64xbf16>
    %c4_67 = arith.constant 4 : index
    %c0_68 = arith.constant 0 : index
    %c0_69 = arith.constant 0 : index
    %132 = vector.load %arg9[%c4_67, %c0_68, %c0_69] : memref<6x1x64xf32, #tpu.memory_space<vmem>>, vector<1x1x64xf32>
    %133 = vector.shape_cast %132 : vector<1x1x64xf32> to vector<1x64xf32>
    %c56_70 = arith.constant 56 : index
    %c0_71 = arith.constant 0 : index
    %134 = vector.load %arg19[%c56_70, %c0_71] : memref<64x32xf32, #tpu.memory_space<vmem>>, vector<8x32xf32>
    tpu.vector_store %arg19[%c56_70, %c0_71], %129 {strides = array<i32>} : memref<64x32xf32, #tpu.memory_space<vmem>>, vector<8x32xf32>,
    %c0_72 = arith.constant 0 : index
    %c0_73 = arith.constant 0 : index
    %135 = vector.load %arg19[%c0_72, %c0_73] : memref<64x32xf32, #tpu.memory_space<vmem>>, vector<64x32xf32>
    %136 = vector.extract_strided_slice %135 {offsets = [54, 0], sizes = [8, 32], strides = [1, 1]} : vector<64x32xf32> to vector<8x32xf32>
    %137 = arith.truncf %136 : vector<8x32xf32> to vector<8x32xbf16>
    %138 = vector.extract_strided_slice %131 {offsets = [0, 0], sizes = [32, 64], strides = [1, 1]} : vector<96x64xbf16> to vector<32x64xbf16>
    %cst_74 = arith.constant dense<0.000000e+00> : vector<8x64xf32>
    %139 = tpu.matmul %137, %138, %cst_74 {dimension_numbers = #tpu.dot_dimension_numbers<[1], [0], [0], [1], [0, 0, 1, 1], [], []>} : vector<8x32xbf16>, vector<32x64xbf16>, vector<8x64xf32> -> vector<8x64xf32>
    %140 = vector.extract_strided_slice %135 {offsets = [55, 0], sizes = [8, 32], strides = [1, 1]} : vector<64x32xf32> to vector<8x32xf32>
    %141 = arith.truncf %140 : vector<8x32xf32> to vector<8x32xbf16>
    %142 = vector.extract_strided_slice %131 {offsets = [32, 0], sizes = [32, 64], strides = [1, 1]} : vector<96x64xbf16> to vector<32x64xbf16>
    %cst_75 = arith.constant dense<0.000000e+00> : vector<8x64xf32>
    %143 = tpu.matmul %141, %142, %cst_75 {dimension_numbers = #tpu.dot_dimension_numbers<[1], [0], [0], [1], [0, 0, 1, 1], [], []>} : vector<8x32xbf16>, vector<32x64xbf16>, vector<8x64xf32> -> vector<8x64xf32>
    %144 = arith.addf %139, %143 : vector<8x64xf32>
    %145 = arith.truncf %129 : vector<8x32xf32> to vector<8x32xbf16>
    %146 = vector.extract_strided_slice %131 {offsets = [64, 0], sizes = [32, 64], strides = [1, 1]} : vector<96x64xbf16> to vector<32x64xbf16>
    %cst_76 = arith.constant dense<0.000000e+00> : vector<8x64xf32>
    %147 = tpu.matmul %145, %146, %cst_76 {dimension_numbers = #tpu.dot_dimension_numbers<[1], [0], [0], [1], [0, 0, 1, 1], [], []>} : vector<8x32xbf16>, vector<32x64xbf16>, vector<8x64xf32> -> vector<8x64xf32>
    %148 = arith.addf %144, %147 : vector<8x64xf32>
    %149 = vector.broadcast %133 : vector<1x64xf32> to vector<8x64xf32>
    %150 = arith.addf %148, %149 : vector<8x64xf32>
    %151 = vector.extract_strided_slice %150 {offsets = [0, 0], sizes = [8, 32], strides = [1, 1]} : vector<8x64xf32> to vector<8x32xf32>
    %152 = vector.extract_strided_slice %150 {offsets = [0, 32], sizes = [8, 32], strides = [1, 1]} : vector<8x64xf32> to vector<8x32xf32>
    %153 = arith.negf %152 : vector<8x32xf32>
    %154 = math.exp %153 : vector<8x32xf32>
    %cst_77 = arith.constant 1.000000e+00 : f32
    %155 = vector.broadcast %cst_77 : f32 to vector<8x32xf32>
    %156 = arith.addf %155, %154 : vector<8x32xf32>
    %157 = arith.divf %155, %156 : vector<8x32xf32>
    %158 = arith.mulf %157, %151 : vector<8x32xf32>
    %cst_78 = arith.constant 1.000000e+00 : f32
    %159 = vector.broadcast %cst_78 : f32 to vector<8x32xf32>
    %160 = arith.subf %159, %157 : vector<8x32xf32>
    %161 = arith.mulf %160, %129 : vector<8x32xf32>
    %162 = arith.addf %158, %161 : vector<8x32xf32>
    %c5 = arith.constant 5 : index
    %c0_79 = arith.constant 0 : index
    %c0_80 = arith.constant 0 : index
    %163 = vector.load %arg8[%c5, %c0_79, %c0_80] : memref<6x96x64xbf16, #tpu.memory_space<vmem>>, vector<1x96x64xbf16>
    %164 = vector.shape_cast %163 : vector<1x96x64xbf16> to vector<96x64xbf16>
    %c5_81 = arith.constant 5 : index
    %c0_82 = arith.constant 0 : index
    %c0_83 = arith.constant 0 : index
    %165 = vector.load %arg9[%c5_81, %c0_82, %c0_83] : memref<6x1x64xf32, #tpu.memory_space<vmem>>, vector<1x1x64xf32>
    %166 = vector.shape_cast %165 : vector<1x1x64xf32> to vector<1x64xf32>
    %c56_84 = arith.constant 56 : index
    %c0_85 = arith.constant 0 : index
    %167 = vector.load %arg19[%c56_84, %c0_85] : memref<64x32xf32, #tpu.memory_space<vmem>>, vector<8x32xf32>
    tpu.vector_store %arg19[%c56_84, %c0_85], %162 {strides = array<i32>} : memref<64x32xf32, #tpu.memory_space<vmem>>, vector<8x32xf32>,
    %c0_86 = arith.constant 0 : index
    %c0_87 = arith.constant 0 : index
    %168 = vector.load %arg19[%c0_86, %c0_87] : memref<64x32xf32, #tpu.memory_space<vmem>>, vector<64x32xf32>
    %169 = vector.extract_strided_slice %168 {offsets = [54, 0], sizes = [8, 32], strides = [1, 1]} : vector<64x32xf32> to vector<8x32xf32>
    %170 = arith.truncf %169 : vector<8x32xf32> to vector<8x32xbf16>
    %171 = vector.extract_strided_slice %164 {offsets = [0, 0], sizes = [32, 64], strides = [1, 1]} : vector<96x64xbf16> to vector<32x64xbf16>
    %cst_88 = arith.constant dense<0.000000e+00> : vector<8x64xf32>
    %172 = tpu.matmul %170, %171, %cst_88 {dimension_numbers = #tpu.dot_dimension_numbers<[1], [0], [0], [1], [0, 0, 1, 1], [], []>} : vector<8x32xbf16>, vector<32x64xbf16>, vector<8x64xf32> -> vector<8x64xf32>
    %173 = vector.extract_strided_slice %168 {offsets = [55, 0], sizes = [8, 32], strides = [1, 1]} : vector<64x32xf32> to vector<8x32xf32>
    %174 = arith.truncf %173 : vector<8x32xf32> to vector<8x32xbf16>
    %175 = vector.extract_strided_slice %164 {offsets = [32, 0], sizes = [32, 64], strides = [1, 1]} : vector<96x64xbf16> to vector<32x64xbf16>
    %cst_89 = arith.constant dense<0.000000e+00> : vector<8x64xf32>
    %176 = tpu.matmul %174, %175, %cst_89 {dimension_numbers = #tpu.dot_dimension_numbers<[1], [0], [0], [1], [0, 0, 1, 1], [], []>} : vector<8x32xbf16>, vector<32x64xbf16>, vector<8x64xf32> -> vector<8x64xf32>
    %177 = arith.addf %172, %176 : vector<8x64xf32>
    %178 = arith.truncf %162 : vector<8x32xf32> to vector<8x32xbf16>
    %179 = vector.extract_strided_slice %164 {offsets = [64, 0], sizes = [32, 64], strides = [1, 1]} : vector<96x64xbf16> to vector<32x64xbf16>
    %cst_90 = arith.constant dense<0.000000e+00> : vector<8x64xf32>
    %180 = tpu.matmul %178, %179, %cst_90 {dimension_numbers = #tpu.dot_dimension_numbers<[1], [0], [0], [1], [0, 0, 1, 1], [], []>} : vector<8x32xbf16>, vector<32x64xbf16>, vector<8x64xf32> -> vector<8x64xf32>
    %181 = arith.addf %177, %180 : vector<8x64xf32>
    %182 = vector.broadcast %166 : vector<1x64xf32> to vector<8x64xf32>
    %183 = arith.addf %181, %182 : vector<8x64xf32>
    %184 = vector.extract_strided_slice %183 {offsets = [0, 0], sizes = [8, 32], strides = [1, 1]} : vector<8x64xf32> to vector<8x32xf32>
    %185 = vector.extract_strided_slice %183 {offsets = [0, 32], sizes = [8, 32], strides = [1, 1]} : vector<8x64xf32> to vector<8x32xf32>
    %186 = arith.negf %185 : vector<8x32xf32>
    %187 = math.exp %186 : vector<8x32xf32>
    %cst_91 = arith.constant 1.000000e+00 : f32
    %188 = vector.broadcast %cst_91 : f32 to vector<8x32xf32>
    %189 = arith.addf %188, %187 : vector<8x32xf32>
    %190 = arith.divf %188, %189 : vector<8x32xf32>
    %191 = arith.mulf %190, %184 : vector<8x32xf32>
    %cst_92 = arith.constant 1.000000e+00 : f32
    %192 = vector.broadcast %cst_92 : f32 to vector<8x32xf32>
    %193 = arith.subf %192, %190 : vector<8x32xf32>
    %194 = arith.mulf %193, %162 : vector<8x32xf32>
    %195 = arith.addf %191, %194 : vector<8x32xf32>
    %c0_93 = arith.constant 0 : index
    %c0_94 = arith.constant 0 : index
    %c0_95 = arith.constant 0 : index
    %196 = vector.load %arg10[%c0_93, %c0_94, %c0_95] : memref<3x32x32xbf16, #tpu.memory_space<vmem>>, vector<1x32x32xbf16>
    %197 = vector.shape_cast %196 : vector<1x32x32xbf16> to vector<32x32xbf16>
    %198 = arith.truncf %195 : vector<8x32xf32> to vector<8x32xbf16>
    %cst_96 = arith.constant dense<0.000000e+00> : vector<8x32xf32>
    %199 = tpu.matmul %198, %197, %cst_96 {dimension_numbers = #tpu.dot_dimension_numbers<[1], [0], [0], [1], [0, 0, 1, 1], [], []>} : vector<8x32xbf16>, vector<32x32xbf16>, vector<8x32xf32> -> vector<8x32xf32>
    %c0_97 = arith.constant 0 : index
    %c0_98 = arith.constant 0 : index
    %c0_99 = arith.constant 0 : index
    %200 = vector.load %arg11[%c0_97, %c0_98, %c0_99] : memref<3x1x32xf32, #tpu.memory_space<vmem>>, vector<1x1x32xf32>
    %201 = vector.shape_cast %200 : vector<1x1x32xf32> to vector<1x32xf32>
    %202 = vector.broadcast %201 : vector<1x32xf32> to vector<8x32xf32>
    %203 = arith.addf %199, %202 : vector<8x32xf32>
    %cst_100 = arith.constant 0.000000e+00 : f32
    %204 = vector.broadcast %cst_100 : f32 to vector<8x32xf32>
    %205 = arith.maximumf %203, %204 : vector<8x32xf32>
    %c1_101 = arith.constant 1 : index
    %c0_102 = arith.constant 0 : index
    %c0_103 = arith.constant 0 : index
    %206 = vector.load %arg10[%c1_101, %c0_102, %c0_103] : memref<3x32x32xbf16, #tpu.memory_space<vmem>>, vector<1x32x32xbf16>
    %207 = vector.shape_cast %206 : vector<1x32x32xbf16> to vector<32x32xbf16>
    %208 = arith.truncf %205 : vector<8x32xf32> to vector<8x32xbf16>
    %cst_104 = arith.constant dense<0.000000e+00> : vector<8x32xf32>
    %209 = tpu.matmul %208, %207, %cst_104 {dimension_numbers = #tpu.dot_dimension_numbers<[1], [0], [0], [1], [0, 0, 1, 1], [], []>} : vector<8x32xbf16>, vector<32x32xbf16>, vector<8x32xf32> -> vector<8x32xf32>
    %c1_105 = arith.constant 1 : index
    %c0_106 = arith.constant 0 : index
    %c0_107 = arith.constant 0 : index
    %210 = vector.load %arg11[%c1_105, %c0_106, %c0_107] : memref<3x1x32xf32, #tpu.memory_space<vmem>>, vector<1x1x32xf32>
    %211 = vector.shape_cast %210 : vector<1x1x32xf32> to vector<1x32xf32>
    %212 = vector.broadcast %211 : vector<1x32xf32> to vector<8x32xf32>
    %213 = arith.addf %209, %212 : vector<8x32xf32>
    %cst_108 = arith.constant 0.000000e+00 : f32
    %214 = vector.broadcast %cst_108 : f32 to vector<8x32xf32>
    %215 = arith.maximumf %213, %214 : vector<8x32xf32>
    %c2_109 = arith.constant 2 : index
    %c0_110 = arith.constant 0 : index
    %c0_111 = arith.constant 0 : index
    %216 = vector.load %arg10[%c2_109, %c0_110, %c0_111] : memref<3x32x32xbf16, #tpu.memory_space<vmem>>, vector<1x32x32xbf16>
    %217 = vector.shape_cast %216 : vector<1x32x32xbf16> to vector<32x32xbf16>
    %218 = arith.truncf %215 : vector<8x32xf32> to vector<8x32xbf16>
    %cst_112 = arith.constant dense<0.000000e+00> : vector<8x32xf32>
    %219 = tpu.matmul %218, %217, %cst_112 {dimension_numbers = #tpu.dot_dimension_numbers<[1], [0], [0], [1], [0, 0, 1, 1], [], []>} : vector<8x32xbf16>, vector<32x32xbf16>, vector<8x32xf32> -> vector<8x32xf32>
    %c2_113 = arith.constant 2 : index
    %c0_114 = arith.constant 0 : index
    %c0_115 = arith.constant 0 : index
    %220 = vector.load %arg11[%c2_113, %c0_114, %c0_115] : memref<3x1x32xf32, #tpu.memory_space<vmem>>, vector<1x1x32xf32>
    %221 = vector.shape_cast %220 : vector<1x1x32xf32> to vector<1x32xf32>
    %222 = vector.broadcast %221 : vector<1x32xf32> to vector<8x32xf32>
    %223 = arith.addf %219, %222 : vector<8x32xf32>
    %cst_116 = arith.constant 0.000000e+00 : f32
    %224 = vector.broadcast %cst_116 : f32 to vector<8x32xf32>
    %225 = arith.maximumf %223, %224 : vector<8x32xf32>
    %c0_117 = arith.constant 0 : index
    %c0_118 = arith.constant 0 : index
    %c0_119 = arith.constant 0 : index
    %226 = vector.load %arg18[%c0_117, %c0_118, %c0_119] : memref<1x8x32xf32, #tpu.memory_space<vmem>>, vector<1x8x32xf32>
    %227 = vector.shape_cast %226 : vector<1x8x32xf32> to vector<8x32xf32>
    %228 = vector.shape_cast %225 : vector<8x32xf32> to vector<1x8x32xf32>
    tpu.vector_store %arg18[%c0_117, %c0_118, %c0_119], %228 {strides = array<i32>} : memref<1x8x32xf32, #tpu.memory_space<vmem>>, vector<1x8x32xf32>,
    %c0_120 = arith.constant 0 : index
    %c0_121 = arith.constant 0 : index
    %229 = vector.load %arg12[%c0_120, %c0_121] : memref<32x16xbf16, #tpu.memory_space<vmem>>, vector<32x16xbf16>
    %230 = arith.truncf %225 : vector<8x32xf32> to vector<8x32xbf16>
    %cst_122 = arith.constant dense<0.000000e+00> : vector<8x16xf32>
    %231 = tpu.matmul %230, %229, %cst_122 {dimension_numbers = #tpu.dot_dimension_numbers<[1], [0], [0], [1], [0, 0, 1, 1], [], []>} : vector<8x32xbf16>, vector<32x16xbf16>, vector<8x16xf32> -> vector<8x16xf32>
    %c0_123 = arith.constant 0 : index
    %c0_124 = arith.constant 0 : index
    %232 = vector.load %arg13[%c0_123, %c0_124] : memref<1x16xf32, #tpu.memory_space<vmem>>, vector<1x16xf32>
    %233 = vector.broadcast %232 : vector<1x16xf32> to vector<8x16xf32>
    %234 = arith.addf %231, %233 : vector<8x16xf32>
    %235 = arith.negf %234 : vector<8x16xf32>
    %236 = math.exp %235 : vector<8x16xf32>
    %cst_125 = arith.constant 1.000000e+00 : f32
    %237 = vector.broadcast %cst_125 : f32 to vector<8x16xf32>
    %238 = arith.addf %237, %236 : vector<8x16xf32>
    %239 = arith.divf %237, %238 : vector<8x16xf32>
    %c0_126 = arith.constant 0 : index
    %c0_127 = arith.constant 0 : index
    %c0_128 = arith.constant 0 : index
    %240 = vector.load %arg16[%c0_126, %c0_127, %c0_128] : memref<1x8x16xf32, #tpu.memory_space<vmem>>, vector<1x8x16xf32>
    %241 = vector.shape_cast %240 : vector<1x8x16xf32> to vector<8x16xf32>
    %242 = vector.shape_cast %239 : vector<8x16xf32> to vector<1x8x16xf32>
    tpu.vector_store %arg16[%c0_126, %c0_127, %c0_128], %242 {strides = array<i32>} : memref<1x8x16xf32, #tpu.memory_space<vmem>>, vector<1x8x16xf32>,
    %c0_129 = arith.constant 0 : index
    %c0_130 = arith.constant 0 : index
    %243 = vector.load %arg14[%c0_129, %c0_130] : memref<16x1xbf16, #tpu.memory_space<vmem>>, vector<16x1xbf16>
    %244 = arith.truncf %234 : vector<8x16xf32> to vector<8x16xbf16>
    %cst_131 = arith.constant dense<0.000000e+00> : vector<8x1xf32>
    %245 = tpu.matmul %244, %243, %cst_131 {dimension_numbers = #tpu.dot_dimension_numbers<[1], [0], [0], [1], [0, 0, 1, 1], [], []>} : vector<8x16xbf16>, vector<16x1xbf16>, vector<8x1xf32> -> vector<8x1xf32>
    %c0_132 = arith.constant 0 : index
    %c0_133 = arith.constant 0 : index
    %246 = vector.load %arg15[%c0_132, %c0_133] : memref<1x1xf32, #tpu.memory_space<vmem>>, vector<1x1xf32>
    %247 = vector.broadcast %246 : vector<1x1xf32> to vector<8x1xf32>
    %248 = arith.addf %245, %247 : vector<8x1xf32>
    %249 = arith.negf %248 : vector<8x1xf32>
    %250 = math.exp %249 : vector<8x1xf32>
    %cst_134 = arith.constant 1.000000e+00 : f32
    %251 = vector.broadcast %cst_134 : f32 to vector<8x1xf32>
    %252 = arith.addf %251, %250 : vector<8x1xf32>
    %253 = arith.divf %251, %252 : vector<8x1xf32>
    %c0_135 = arith.constant 0 : index
    %c0_136 = arith.constant 0 : index
    %c0_137 = arith.constant 0 : index
    %254 = vector.load %arg17[%c0_135, %c0_136, %c0_137] : memref<1x8x1xf32, #tpu.memory_space<vmem>>, vector<1x8x1xf32>
    %255 = vector.shape_cast %254 : vector<1x8x1xf32> to vector<8x1xf32>
    %256 = vector.shape_cast %253 : vector<8x1xf32> to vector<1x8x1xf32>
    tpu.vector_store %arg17[%c0_135, %c0_136, %c0_137], %256 {strides = array<i32>} : memref<1x8x1xf32, #tpu.memory_space<vmem>>, vector<1x8x1xf32>,
    return
  }
  func.func @transform_0(%arg0: i32) -> (i32, i32, i32) {
    %c0_i32 = arith.constant 0 : i32
    %c0_i32_0 = arith.constant 0 : i32
    %c0_i32_1 = arith.constant 0 : i32
    return %arg0, %c0_i32, %c0_i32_0 : i32, i32, i32
  }
  func.func @transform_1(%arg0: i32) -> (i32, i32, i32) {
    %c0_i32 = arith.constant 0 : i32
    %c0_i32_0 = arith.constant 0 : i32
    %c0_i32_1 = arith.constant 0 : i32
    return %arg0, %c0_i32, %c0_i32_0 : i32, i32, i32
  }
  func.func @transform_2(%arg0: i32) -> (i32, i32, i32) {
    %c0_i32 = arith.constant 0 : i32
    %c0_i32_0 = arith.constant 0 : i32
    %c0_i32_1 = arith.constant 0 : i32
    return %arg0, %c0_i32, %c0_i32_0 : i32, i32, i32
  }
  func.func @transform_3(%arg0: i32) -> (i32, i32) {
    %c0_i32 = arith.constant 0 : i32
    %c0_i32_0 = arith.constant 0 : i32
    %c0_i32_1 = arith.constant 0 : i32
    return %c0_i32, %c0_i32_0 : i32, i32
  }
  func.func @transform_4(%arg0: i32) -> (i32, i32) {
    %c0_i32 = arith.constant 0 : i32
    %c0_i32_0 = arith.constant 0 : i32
    %c0_i32_1 = arith.constant 0 : i32
    return %c0_i32, %c0_i32_0 : i32, i32
  }
  func.func @transform_5(%arg0: i32) -> (i32, i32) {
    %c0_i32 = arith.constant 0 : i32
    %c0_i32_0 = arith.constant 0 : i32
    %c0_i32_1 = arith.constant 0 : i32
    return %c0_i32, %c0_i32_0 : i32, i32
  }
  func.func @transform_6(%arg0: i32) -> (i32, i32) {
    %c0_i32 = arith.constant 0 : i32
    %c0_i32_0 = arith.constant 0 : i32
    %c0_i32_1 = arith.constant 0 : i32
    return %c0_i32, %c0_i32_0 : i32, i32
  }
  func.func @transform_7(%arg0: i32) -> (i32, i32, i32) {
    %c0_i32 = arith.constant 0 : i32
    %c0_i32_0 = arith.constant 0 : i32
    %c0_i32_1 = arith.constant 0 : i32
    %c0_i32_2 = arith.constant 0 : i32
    return %c0_i32, %c0_i32_0, %c0_i32_1 : i32, i32, i32
  }
  func.func @transform_8(%arg0: i32) -> (i32, i32, i32) {
    %c0_i32 = arith.constant 0 : i32
    %c0_i32_0 = arith.constant 0 : i32
    %c0_i32_1 = arith.constant 0 : i32
    %c0_i32_2 = arith.constant 0 : i32
    return %c0_i32, %c0_i32_0, %c0_i32_1 : i32, i32, i32
  }
  func.func @transform_9(%arg0: i32) -> (i32, i32, i32) {
    %c0_i32 = arith.constant 0 : i32
    %c0_i32_0 = arith.constant 0 : i32
    %c0_i32_1 = arith.constant 0 : i32
    %c0_i32_2 = arith.constant 0 : i32
    return %c0_i32, %c0_i32_0, %c0_i32_1 : i32, i32, i32
  }
  func.func @transform_10(%arg0: i32) -> (i32, i32, i32) {
    %c0_i32 = arith.constant 0 : i32
    %c0_i32_0 = arith.constant 0 : i32
    %c0_i32_1 = arith.constant 0 : i32
    %c0_i32_2 = arith.constant 0 : i32
    return %c0_i32, %c0_i32_0, %c0_i32_1 : i32, i32, i32
  }
  func.func @transform_11(%arg0: i32) -> (i32, i32) {
    %c0_i32 = arith.constant 0 : i32
    %c0_i32_0 = arith.constant 0 : i32
    %c0_i32_1 = arith.constant 0 : i32
    return %c0_i32, %c0_i32_0 : i32, i32
  }
  func.func @transform_12(%arg0: i32) -> (i32, i32) {
    %c0_i32 = arith.constant 0 : i32
    %c0_i32_0 = arith.constant 0 : i32
    %c0_i32_1 = arith.constant 0 : i32
    return %c0_i32, %c0_i32_0 : i32, i32
  }
  func.func @transform_13(%arg0: i32) -> (i32, i32) {
    %c0_i32 = arith.constant 0 : i32
    %c0_i32_0 = arith.constant 0 : i32
    %c0_i32_1 = arith.constant 0 : i32
    return %c0_i32, %c0_i32_0 : i32, i32
  }
  func.func @transform_14(%arg0: i32) -> (i32, i32) {
    %c0_i32 = arith.constant 0 : i32
    %c0_i32_0 = arith.constant 0 : i32
    %c0_i32_1 = arith.constant 0 : i32
    return %c0_i32, %c0_i32_0 : i32, i32
  }
  func.func @transform_15(%arg0: i32) -> (i32, i32, i32) {
    %c0_i32 = arith.constant 0 : i32
    %c0_i32_0 = arith.constant 0 : i32
    %c0_i32_1 = arith.constant 0 : i32
    return %arg0, %c0_i32, %c0_i32_0 : i32, i32, i32
  }
  func.func @transform_16(%arg0: i32) -> (i32, i32, i32) {
    %c0_i32 = arith.constant 0 : i32
    %c0_i32_0 = arith.constant 0 : i32
    %c0_i32_1 = arith.constant 0 : i32
    return %arg0, %c0_i32, %c0_i32_0 : i32, i32, i32
  }
  func.func @transform_17(%arg0: i32) -> (i32, i32, i32) {
    %c0_i32 = arith.constant 0 : i32
    %c0_i32_0 = arith.constant 0 : i32
    %c0_i32_1 = arith.constant 0 : i32
    return %arg0, %c0_i32, %c0_i32_0 : i32, i32, i32
  }
}

</mosaic_0001>

<llo_original>
// kernel: decoder_forward.4
$region0: #{decoder_forward.4}
  #allocation0 [shape = 'u32[]', space=smem, size = 0x4, offset = 0x4, fixed_abs, tag = 'smem constant byte address 0x4 - core index']
  #allocation1 [shape = 'u32[144,128]{1,0:T(1,128)}', space=vmem, size = 0x12000, scoped, tag = 'internal scratch']
  %s0 = inlined_call_operand.vmem [shape: f32[2,8,32], index: 0, kind: input, shape index: {}]
  %s1 = inlined_call_operand.vmem [shape: f32[2,8,32], index: 1, kind: input, shape index: {}]
  %s2 = inlined_call_operand.vmem [shape: f32[2,6,32], index: 2, kind: input, shape index: {}]
  %s3 = inlined_call_operand.vmem [shape: f32[2,6,32], index: 3, kind: input, shape index: {}]
  %s4 = inlined_call_operand.vmem [shape: f32[2,6,32], index: 4, kind: input, shape index: {}]
  %s5 = inlined_call_operand.vmem [shape: f32[2,8,32], index: 5, kind: input, shape index: {}]
  %s6 = inlined_call_operand.vmem [shape: f32[2,8,32], index: 6, kind: input, shape index: {}]
  %s7 = inlined_call_operand.vmem [shape: f32[2,8,32], index: 7, kind: input, shape index: {}]
  %s8 = inlined_call_operand.vmem [shape: bf16[32,32], index: 8, kind: input, shape index: {}]
  %s9 = inlined_call_operand.vmem [shape: f32[1,32], index: 9, kind: input, shape index: {}]
  %s10 = inlined_call_operand.vmem [shape: bf16[32,32], index: 10, kind: input, shape index: {}]
  %s11 = inlined_call_operand.vmem [shape: f32[1,32], index: 11, kind: input, shape index: {}]
  %s12 = inlined_call_operand.vmem [shape: bf16[32,32], index: 12, kind: input, shape index: {}]
  %s13 = inlined_call_operand.vmem [shape: bf16[32,32], index: 13, kind: input, shape index: {}]
  %s14 = inlined_call_operand.vmem [shape: f32[1,32], index: 14, kind: input, shape index: {}]
  %s15 = inlined_call_operand.vmem [shape: bf16[32,32], index: 15, kind: input, shape index: {}]
  %s16 = inlined_call_operand.vmem [shape: f32[1,32], index: 16, kind: input, shape index: {}]
  %s17 = inlined_call_operand.vmem [shape: bf16[32,32], index: 17, kind: input, shape index: {}]
  %s18 = inlined_call_operand.vmem [shape: f32[1,32], index: 18, kind: input, shape index: {}]
  %s19 = inlined_call_operand.vmem [shape: bf16[32,64], index: 19, kind: input, shape index: {}]
  %s20 = inlined_call_operand.vmem [shape: f32[1,64], index: 20, kind: input, shape index: {}]
  %s21 = inlined_call_operand.vmem [shape: f32[2,8,32], index: 21, kind: output, shape index: {0}]
  %s22 = inlined_call_operand.vmem [shape: f32[2,8,32], index: 22, kind: output, shape index: {1}]
  %s23 = inlined_call_operand.hbm [shape: f32[2,8,8], index: 23, kind: output, shape index: {2}]
  %s24 = inlined_call_operand.vmem [shape: f32[2,8,6], index: 24, kind: output, shape index: {3}]
  %25 = xla_tuple %s21, %s22, %s23, %s24
  %s26 = sld [smem:[#allocation0]]
  $region141: #{decoder_forward.4} parent=0
    _
  %s28 = ssub.s32 1, %s26
  %s29 = scalar_select 0, %s28, %s26
  $region1: #{decoder_forward.4} parent=0
    #allocation2 [shape = 'u8[8192]{0}', space=vmem, size = 0x2000, scoped, tag = 'output window, operand 2']
    #allocation3 [shape = 's32[2]{0}', space=sflag, size = 0x8, scoped, tag = 'scoped memory for decoder_forward.4']
    %30 = vsyncpa [#allocation3], 0
    %s31 = scalar_lea.sflag [#allocation3], 1
    %32 = vsyncpa %s31, 0
    loop: start=0, step=1, limit=4
    $region2: #{decoder_forward.4} parent=1 // loop_pre_header
      _
    $region3: #{decoder_forward.4} parent=1 // loop_header
      %s34 = sphi 0, %s38
      %p35 = scmp.ge.s32.totalorder %s34, 4
      %s44 = sphi 0, %s46
      %s47 = sphi 0, %s44
      %s48 = sphi 0, %s47
      %s64 = sphi 0, %s48
      %s70 = sphi 0, %s72
      %s73 = sphi 0, %s70
      %s74 = sphi 0, %s73
      %s90 = sphi 0, %s74
      %s96 = sphi 0, %s98
      %s99 = sphi 0, %s96
      %s100 = sphi 0, %s99
      %s116 = sphi 0, %s100
      %s122 = sphi 0, %s124
      %s125 = sphi 0, %s122
      %s126 = sphi 0, %s125
      %s142 = sphi 0, %s126
      %s148 = sphi 0, %s150
      %s151 = sphi 0, %s148
      %s152 = sphi 0, %s151
      %s168 = sphi 0, %s152
      %s174 = sphi 0, %s176
      %s177 = sphi 0, %s174
      %s178 = sphi 0, %s177
      %s194 = sphi 0, %s178
      %s200 = sphi 0, %s202
      %s203 = sphi 0, %s200
      %s204 = sphi 0, %s203
      %s220 = sphi 0, %s204
      %s226 = sphi 0, %s228
      %s229 = sphi 0, %s226
      %s230 = sphi 0, %s229
      %s246 = sphi 0, %s230
      %s250 = sphi 0, %s250
      %s252 = sphi 0, %s250
      %s253 = sphi 0, %s252
      %s267 = sphi 0, %s253
      %s271 = sphi 0, %s271
      %s273 = sphi 0, %s271
      %s274 = sphi 0, %s273
      %s288 = sphi 0, %s274
      %s292 = sphi 0, %s292
      %s294 = sphi 0, %s292
      %s295 = sphi 0, %s294
      %s309 = sphi 0, %s295
      %s313 = sphi 0, %s313
      %s315 = sphi 0, %s313
      %s316 = sphi 0, %s315
      %s330 = sphi 0, %s316
      %s334 = sphi 0, %s334
      %s336 = sphi 0, %s334
      %s337 = sphi 0, %s336
      %s351 = sphi 0, %s337
      %s355 = sphi 0, %s355
      %s357 = sphi 0, %s355
      %s358 = sphi 0, %s357
      %s372 = sphi 0, %s358
      %s376 = sphi 0, %s376
      %s378 = sphi 0, %s376
      %s379 = sphi 0, %s378
      %s393 = sphi 0, %s379
      %s397 = sphi 0, %s397
      %s399 = sphi 0, %s397
      %s400 = sphi 0, %s399
      %s414 = sphi 0, %s400
      %s418 = sphi 0, %s418
      %s420 = sphi 0, %s418
      %s421 = sphi 0, %s420
      %s435 = sphi 0, %s421
      %s439 = sphi 0, %s439
      %s441 = sphi 0, %s439
      %s442 = sphi 0, %s441
      %s456 = sphi 0, %s442
      %s460 = sphi 0, %s460
      %s462 = sphi 0, %s460
      %s463 = sphi 0, %s462
      %s477 = sphi 0, %s463
      %s481 = sphi 0, %s481
      %s483 = sphi 0, %s481
      %s484 = sphi 0, %s483
      %s498 = sphi 0, %s484
      %s502 = sphi 0, %s502
      %s504 = sphi 0, %s502
      %s505 = sphi 0, %s504
      %s519 = sphi 0, %s505
      %s525 = sphi 0, %s527
      %s528 = sphi 0, %s525
      %s529 = sphi 0, %s528
      %s545 = sphi 0, %s529
      %s551 = sphi 0, %s553
      %s554 = sphi 0, %s551
      %s555 = sphi 0, %s554
      %s571 = sphi 0, %s555
      %s577 = sphi 0, %s579
      %s580 = sphi 0, %s577
      %s581 = sphi 0, %s580
      %s597 = sphi 0, %s581
      %s603 = sphi 0, %s605
      %s606 = sphi 0, %s603
      %s607 = sphi 0, %s606
      %s623 = sphi 0, %s607
    $region4: #{decoder_forward.4} parent=1 // loop_header_branch
      %37 = sbr.rel (%p35) target = $region8
    $region5: #{decoder_forward.4} parent=1 // loop_body
      %s39 = ssub.s32 %s34, 1
      %s40 = ssub.s32 %s34, 2
      %s41 = sadd.s32 %s34, 1
      %s42 = ssub.s32 %s34, %s41
      %p43 = scmp.eq.s32.totalorder %s42, 0
      %s45 = sadd.s32 %s44, 1
      %s46 = scalar_select %p43, %s44, %s45
      %p49 = pneg %p43
      %p50 = scmp.eq.s32.totalorder %s34, 1
      %p51 = por %p49, %p50
      %p52 = scmp.ne.s32.totalorder %s44, %s47
      %p53 = scmp.eq.s32.totalorder %s34, 0
      %p54 = por %p52, %p53
      %p55 = scmp.ne.s32.totalorder %s44, %s47
      %p56 = scmp.eq.s32.totalorder %s39, 1
      %p57 = por %p55, %p56
      %p58 = scmp.ne.s32.totalorder %s47, %s48
      %p59 = scmp.eq.s32.totalorder %s39, 0
      %p60 = por %p58, %p59
      %p61 = scmp.ne.s32.totalorder %s47, %s48
      %p62 = scmp.eq.s32.totalorder %s40, 1
      %p63 = por %p61, %p62
      %p65 = scmp.ne.s32.totalorder %s48, %s64
      %p66 = scmp.eq.s32.totalorder %s40, 0
      %p67 = por %p65, %p66
      %s68 = ssub.s32 %s34, %s41
      %p69 = scmp.eq.s32.totalorder %s68, 0
      %s71 = sadd.s32 %s70, 1
      %s72 = scalar_select %p69, %s70, %s71
      %p75 = pneg %p69
      %p76 = scmp.eq.s32.totalorder %s34, 1
      %p77 = por %p75, %p76
      %p78 = scmp.ne.s32.totalorder %s70, %s73
      %p79 = scmp.eq.s32.totalorder %s34, 0
      %p80 = por %p78, %p79
      %p81 = scmp.ne.s32.totalorder %s70, %s73
      %p82 = scmp.eq.s32.totalorder %s39, 1
      %p83 = por %p81, %p82
      %p84 = scmp.ne.s32.totalorder %s73, %s74
      %p85 = scmp.eq.s32.totalorder %s39, 0
      %p86 = por %p84, %p85
      %p87 = scmp.ne.s32.totalorder %s73, %s74
      %p88 = scmp.eq.s32.totalorder %s40, 1
      %p89 = por %p87, %p88
      %p91 = scmp.ne.s32.totalorder %s74, %s90
      %p92 = scmp.eq.s32.totalorder %s40, 0
      %p93 = por %p91, %p92
      %s94 = ssub.s32 %s34, %s41
      %p95 = scmp.eq.s32.totalorder %s94, 0
      %s97 = sadd.s32 %s96, 1
      %s98 = scalar_select %p95, %s96, %s97
      %p101 = pneg %p95
      %p102 = scmp.eq.s32.totalorder %s34, 1
      %p103 = por %p101, %p102
      %p104 = scmp.ne.s32.totalorder %s96, %s99
      %p105 = scmp.eq.s32.totalorder %s34, 0
      %p106 = por %p104, %p105
      %p107 = scmp.ne.s32.totalorder %s96, %s99
      %p108 = scmp.eq.s32.totalorder %s39, 1
      %p109 = por %p107, %p108
      %p110 = scmp.ne.s32.totalorder %s99, %s100
      %p111 = scmp.eq.s32.totalorder %s39, 0
      %p112 = por %p110, %p111
      %p113 = scmp.ne.s32.totalorder %s99, %s100
      %p114 = scmp.eq.s32.totalorder %s40, 1
      %p115 = por %p113, %p114
      %p117 = scmp.ne.s32.totalorder %s100, %s116
      %p118 = scmp.eq.s32.totalorder %s40, 0
      %p119 = por %p117, %p118
      %s120 = ssub.s32 %s34, %s41
      %p121 = scmp.eq.s32.totalorder %s120, 0
      %s123 = sadd.s32 %s122, 1
      %s124 = scalar_select %p121, %s122, %s123
      %p127 = pneg %p121
      %p128 = scmp.eq.s32.totalorder %s34, 1
      %p129 = por %p127, %p128
      %p130 = scmp.ne.s32.totalorder %s122, %s125
      %p131 = scmp.eq.s32.totalorder %s34, 0
      %p132 = por %p130, %p131
      %p133 = scmp.ne.s32.totalorder %s122, %s125
      %p134 = scmp.eq.s32.totalorder %s39, 1
      %p135 = por %p133, %p134
      %p136 = scmp.ne.s32.totalorder %s125, %s126
      %p137 = scmp.eq.s32.totalorder %s39, 0
      %p138 = por %p136, %p137
      %p139 = scmp.ne.s32.totalorder %s125, %s126
      %p140 = scmp.eq.s32.totalorder %s40, 1
      %p141 = por %p139, %p140
      %p143 = scmp.ne.s32.totalorder %s126, %s142
      %p144 = scmp.eq.s32.totalorder %s40, 0
      %p145 = por %p143, %p144
      %s146 = ssub.s32 %s34, %s41
      %p147 = scmp.eq.s32.totalorder %s146, 0
      %s149 = sadd.s32 %s148, 1
      %s150 = scalar_select %p147, %s148, %s149
      %p153 = pneg %p147
      %p154 = scmp.eq.s32.totalorder %s34, 1
      %p155 = por %p153, %p154
      %p156 = scmp.ne.s32.totalorder %s148, %s151
      %p157 = scmp.eq.s32.totalorder %s34, 0
      %p158 = por %p156, %p157
      %p159 = scmp.ne.s32.totalorder %s148, %s151
      %p160 = scmp.eq.s32.totalorder %s39, 1
      %p161 = por %p159, %p160
      %p162 = scmp.ne.s32.totalorder %s151, %s152
      %p163 = scmp.eq.s32.totalorder %s39, 0
      %p164 = por %p162, %p163
      %p165 = scmp.ne.s32.totalorder %s151, %s152
      %p166 = scmp.eq.s32.totalorder %s40, 1
      %p167 = por %p165, %p166
      %p169 = scmp.ne.s32.totalorder %s152, %s168
      %p170 = scmp.eq.s32.totalorder %s40, 0
      %p171 = por %p169, %p170
      %s172 = ssub.s32 %s34, %s41
      %p173 = scmp.eq.s32.totalorder %s172, 0
      %s175 = sadd.s32 %s174, 1
      %s176 = scalar_select %p173, %s174, %s175
      %p179 = pneg %p173
      %p180 = scmp.eq.s32.totalorder %s34, 1
      %p181 = por %p179, %p180
      %p182 = scmp.ne.s32.totalorder %s174, %s177
      %p183 = scmp.eq.s32.totalorder %s34, 0
      %p184 = por %p182, %p183
      %p185 = scmp.ne.s32.totalorder %s174, %s177
      %p186 = scmp.eq.s32.totalorder %s39, 1
      %p187 = por %p185, %p186
      %p188 = scmp.ne.s32.totalorder %s177, %s178
      %p189 = scmp.eq.s32.totalorder %s39, 0
      %p190 = por %p188, %p189
      %p191 = scmp.ne.s32.totalorder %s177, %s178
      %p192 = scmp.eq.s32.totalorder %s40, 1
      %p193 = por %p191, %p192
      %p195 = scmp.ne.s32.totalorder %s178, %s194
      %p196 = scmp.eq.s32.totalorder %s40, 0
      %p197 = por %p195, %p196
      %s198 = ssub.s32 %s34, %s41
      %p199 = scmp.eq.s32.totalorder %s198, 0
      %s201 = sadd.s32 %s200, 1
      %s202 = scalar_select %p199, %s200, %s201
      %p205 = pneg %p199
      %p206 = scmp.eq.s32.totalorder %s34, 1
      %p207 = por %p205, %p206
      %p208 = scmp.ne.s32.totalorder %s200, %s203
      %p209 = scmp.eq.s32.totalorder %s34, 0
      %p210 = por %p208, %p209
      %p211 = scmp.ne.s32.totalorder %s200, %s203
      %p212 = scmp.eq.s32.totalorder %s39, 1
      %p213 = por %p211, %p212
      %p214 = scmp.ne.s32.totalorder %s203, %s204
      %p215 = scmp.eq.s32.totalorder %s39, 0
      %p216 = por %p214, %p215
      %p217 = scmp.ne.s32.totalorder %s203, %s204
      %p218 = scmp.eq.s32.totalorder %s40, 1
      %p219 = por %p217, %p218
      %p221 = scmp.ne.s32.totalorder %s204, %s220
      %p222 = scmp.eq.s32.totalorder %s40, 0
      %p223 = por %p221, %p222
      %s224 = ssub.s32 %s34, %s41
      %p225 = scmp.eq.s32.totalorder %s224, 0
      %s227 = sadd.s32 %s226, 1
      %s228 = scalar_select %p225, %s226, %s227
      %p231 = pneg %p225
      %p232 = scmp.eq.s32.totalorder %s34, 1
      %p233 = por %p231, %p232
      %p234 = scmp.ne.s32.totalorder %s226, %s229
      %p235 = scmp.eq.s32.totalorder %s34, 0
      %p236 = por %p234, %p235
      %p237 = scmp.ne.s32.totalorder %s226, %s229
      %p238 = scmp.eq.s32.totalorder %s39, 1
      %p239 = por %p237, %p238
      %p240 = scmp.ne.s32.totalorder %s229, %s230
      %p241 = scmp.eq.s32.totalorder %s39, 0
      %p242 = por %p240, %p241
      %p243 = scmp.ne.s32.totalorder %s229, %s230
      %p244 = scmp.eq.s32.totalorder %s40, 1
      %p245 = por %p243, %p244
      %p247 = scmp.ne.s32.totalorder %s230, %s246
      %p248 = scmp.eq.s32.totalorder %s40, 0
      %p249 = por %p247, %p248
      %s251 = sadd.s32 %s250, 1
      %p254 = scmp.eq.s32.totalorder %s34, 1
      %p255 = scmp.ne.s32.totalorder %s250, %s252
      %p256 = scmp.eq.s32.totalorder %s34, 0
      %p257 = por %p255, %p256
      %p258 = scmp.ne.s32.totalorder %s250, %s252
      %p259 = scmp.eq.s32.totalorder %s39, 1
      %p260 = por %p258, %p259
      %p261 = scmp.ne.s32.totalorder %s252, %s253
      %p262 = scmp.eq.s32.totalorder %s39, 0
      %p263 = por %p261, %p262
      %p264 = scmp.ne.s32.totalorder %s252, %s253
      %p265 = scmp.eq.s32.totalorder %s40, 1
      %p266 = por %p264, %p265
      %p268 = scmp.ne.s32.totalorder %s253, %s267
      %p269 = scmp.eq.s32.totalorder %s40, 0
      %p270 = por %p268, %p269
      %s272 = sadd.s32 %s271, 1
      %p275 = scmp.eq.s32.totalorder %s34, 1
      %p276 = scmp.ne.s32.totalorder %s271, %s273
      %p277 = scmp.eq.s32.totalorder %s34, 0
      %p278 = por %p276, %p277
      %p279 = scmp.ne.s32.totalorder %s271, %s273
      %p280 = scmp.eq.s32.totalorder %s39, 1
      %p281 = por %p279, %p280
      %p282 = scmp.ne.s32.totalorder %s273, %s274
      %p283 = scmp.eq.s32.totalorder %s39, 0
      %p284 = por %p282, %p283
      %p285 = scmp.ne.s32.totalorder %s273, %s274
      %p286 = scmp.eq.s32.totalorder %s40, 1
      %p287 = por %p285, %p286
      %p289 = scmp.ne.s32.totalorder %s274, %s288
      %p290 = scmp.eq.s32.totalorder %s40, 0
      %p291 = por %p289, %p290
      %s293 = sadd.s32 %s292, 1
      %p296 = scmp.eq.s32.totalorder %s34, 1
      %p297 = scmp.ne.s32.totalorder %s292, %s294
      %p298 = scmp.eq.s32.totalorder %s34, 0
      %p299 = por %p297, %p298
      %p300 = scmp.ne.s32.totalorder %s292, %s294
      %p301 = scmp.eq.s32.totalorder %s39, 1
      %p302 = por %p300, %p301
      %p303 = scmp.ne.s32.totalorder %s294, %s295
      %p304 = scmp.eq.s32.totalorder %s39, 0
      %p305 = por %p303, %p304
      %p306 = scmp.ne.s32.totalorder %s294, %s295
      %p307 = scmp.eq.s32.totalorder %s40, 1
      %p308 = por %p306, %p307
      %p310 = scmp.ne.s32.totalorder %s295, %s309
      %p311 = scmp.eq.s32.totalorder %s40, 0
      %p312 = por %p310, %p311
      %s314 = sadd.s32 %s313, 1
      %p317 = scmp.eq.s32.totalorder %s34, 1
      %p318 = scmp.ne.s32.totalorder %s313, %s315
      %p319 = scmp.eq.s32.totalorder %s34, 0
      %p320 = por %p318, %p319
      %p321 = scmp.ne.s32.totalorder %s313, %s315
      %p322 = scmp.eq.s32.totalorder %s39, 1
      %p323 = por %p321, %p322
      %p324 = scmp.ne.s32.totalorder %s315, %s316
      %p325 = scmp.eq.s32.totalorder %s39, 0
      %p326 = por %p324, %p325
      %p327 = scmp.ne.s32.totalorder %s315, %s316
      %p328 = scmp.eq.s32.totalorder %s40, 1
      %p329 = por %p327, %p328
      %p331 = scmp.ne.s32.totalorder %s316, %s330
      %p332 = scmp.eq.s32.totalorder %s40, 0
      %p333 = por %p331, %p332
      %s335 = sadd.s32 %s334, 1
      %p338 = scmp.eq.s32.totalorder %s34, 1
      %p339 = scmp.ne.s32.totalorder %s334, %s336
      %p340 = scmp.eq.s32.totalorder %s34, 0
      %p341 = por %p339, %p340
      %p342 = scmp.ne.s32.totalorder %s334, %s336
      %p343 = scmp.eq.s32.totalorder %s39, 1
      %p344 = por %p342, %p343
      %p345 = scmp.ne.s32.totalorder %s336, %s337
      %p346 = scmp.eq.s32.totalorder %s39, 0
      %p347 = por %p345, %p346
      %p348 = scmp.ne.s32.totalorder %s336, %s337
      %p349 = scmp.eq.s32.totalorder %s40, 1
      %p350 = por %p348, %p349
      %p352 = scmp.ne.s32.totalorder %s337, %s351
      %p353 = scmp.eq.s32.totalorder %s40, 0
      %p354 = por %p352, %p353
      %s356 = sadd.s32 %s355, 1
      %p359 = scmp.eq.s32.totalorder %s34, 1
      %p360 = scmp.ne.s32.totalorder %s355, %s357
      %p361 = scmp.eq.s32.totalorder %s34, 0
      %p362 = por %p360, %p361
      %p363 = scmp.ne.s32.totalorder %s355, %s357
      %p364 = scmp.eq.s32.totalorder %s39, 1
      %p365 = por %p363, %p364
      %p366 = scmp.ne.s32.totalorder %s357, %s358
      %p367 = scmp.eq.s32.totalorder %s39, 0
      %p368 = por %p366, %p367
      %p369 = scmp.ne.s32.totalorder %s357, %s358
      %p370 = scmp.eq.s32.totalorder %s40, 1
      %p371 = por %p369, %p370
      %p373 = scmp.ne.s32.totalorder %s358, %s372
      %p374 = scmp.eq.s32.totalorder %s40, 0
      %p375 = por %p373, %p374
      %s377 = sadd.s32 %s376, 1
      %p380 = scmp.eq.s32.totalorder %s34, 1
      %p381 = scmp.ne.s32.totalorder %s376, %s378
      %p382 = scmp.eq.s32.totalorder %s34, 0
      %p383 = por %p381, %p382
      %p384 = scmp.ne.s32.totalorder %s376, %s378
      %p385 = scmp.eq.s32.totalorder %s39, 1
      %p386 = por %p384, %p385
      %p387 = scmp.ne.s32.totalorder %s378, %s379
      %p388 = scmp.eq.s32.totalorder %s39, 0
      %p389 = por %p387, %p388
      %p390 = scmp.ne.s32.totalorder %s378, %s379
      %p391 = scmp.eq.s32.totalorder %s40, 1
      %p392 = por %p390, %p391
      %p394 = scmp.ne.s32.totalorder %s379, %s393
      %p395 = scmp.eq.s32.totalorder %s40, 0
      %p396 = por %p394, %p395
      %s398 = sadd.s32 %s397, 1
      %p401 = scmp.eq.s32.totalorder %s34, 1
      %p402 = scmp.ne.s32.totalorder %s397, %s399
      %p403 = scmp.eq.s32.totalorder %s34, 0
      %p404 = por %p402, %p403
      %p405 = scmp.ne.s32.totalorder %s397, %s399
      %p406 = scmp.eq.s32.totalorder %s39, 1
      %p407 = por %p405, %p406
      %p408 = scmp.ne.s32.totalorder %s399, %s400
      %p409 = scmp.eq.s32.totalorder %s39, 0
      %p410 = por %p408, %p409
      %p411 = scmp.ne.s32.totalorder %s399, %s400
      %p412 = scmp.eq.s32.totalorder %s40, 1
      %p413 = por %p411, %p412
      %p415 = scmp.ne.s32.totalorder %s400, %s414
      %p416 = scmp.eq.s32.totalorder %s40, 0
      %p417 = por %p415, %p416
      %s419 = sadd.s32 %s418, 1
      %p422 = scmp.eq.s32.totalorder %s34, 1
      %p423 = scmp.ne.s32.totalorder %s418, %s420
      %p424 = scmp.eq.s32.totalorder %s34, 0
      %p425 = por %p423, %p424
      %p426 = scmp.ne.s32.totalorder %s418, %s420
      %p427 = scmp.eq.s32.totalorder %s39, 1
      %p428 = por %p426, %p427
      %p429 = scmp.ne.s32.totalorder %s420, %s421
      %p430 = scmp.eq.s32.totalorder %s39, 0
      %p431 = por %p429, %p430
      %p432 = scmp.ne.s32.totalorder %s420, %s421
      %p433 = scmp.eq.s32.totalorder %s40, 1
      %p434 = por %p432, %p433
      %p436 = scmp.ne.s32.totalorder %s421, %s435
      %p437 = scmp.eq.s32.totalorder %s40, 0
      %p438 = por %p436, %p437
      %s440 = sadd.s32 %s439, 1
      %p443 = scmp.eq.s32.totalorder %s34, 1
      %p444 = scmp.ne.s32.totalorder %s439, %s441
      %p445 = scmp.eq.s32.totalorder %s34, 0
      %p446 = por %p444, %p445
      %p447 = scmp.ne.s32.totalorder %s439, %s441
      %p448 = scmp.eq.s32.totalorder %s39, 1
      %p449 = por %p447, %p448
      %p450 = scmp.ne.s32.totalorder %s441, %s442
      %p451 = scmp.eq.s32.totalorder %s39, 0
      %p452 = por %p450, %p451
      %p453 = scmp.ne.s32.totalorder %s441, %s442
      %p454 = scmp.eq.s32.totalorder %s40, 1
      %p455 = por %p453, %p454
      %p457 = scmp.ne.s32.totalorder %s442, %s456
      %p458 = scmp.eq.s32.totalorder %s40, 0
      %p459 = por %p457, %p458
      %s461 = sadd.s32 %s460, 1
      %p464 = scmp.eq.s32.totalorder %s34, 1
      %p465 = scmp.ne.s32.totalorder %s460, %s462
      %p466 = scmp.eq.s32.totalorder %s34, 0
      %p467 = por %p465, %p466
      %p468 = scmp.ne.s32.totalorder %s460, %s462
      %p469 = scmp.eq.s32.totalorder %s39, 1
      %p470 = por %p468, %p469
      %p471 = scmp.ne.s32.totalorder %s462, %s463
      %p472 = scmp.eq.s32.totalorder %s39, 0
      %p473 = por %p471, %p472
      %p474 = scmp.ne.s32.totalorder %s462, %s463
      %p475 = scmp.eq.s32.totalorder %s40, 1
      %p476 = por %p474, %p475
      %p478 = scmp.ne.s32.totalorder %s463, %s477
      %p479 = scmp.eq.s32.totalorder %s40, 0
      %p480 = por %p478, %p479
      %s482 = sadd.s32 %s481, 1
      %p485 = scmp.eq.s32.totalorder %s34, 1
      %p486 = scmp.ne.s32.totalorder %s481, %s483
      %p487 = scmp.eq.s32.totalorder %s34, 0
      %p488 = por %p486, %p487
      %p489 = scmp.ne.s32.totalorder %s481, %s483
      %p490 = scmp.eq.s32.totalorder %s39, 1
      %p491 = por %p489, %p490
      %p492 = scmp.ne.s32.totalorder %s483, %s484
      %p493 = scmp.eq.s32.totalorder %s39, 0
      %p494 = por %p492, %p493
      %p495 = scmp.ne.s32.totalorder %s483, %s484
      %p496 = scmp.eq.s32.totalorder %s40, 1
      %p497 = por %p495, %p496
      %p499 = scmp.ne.s32.totalorder %s484, %s498
      %p500 = scmp.eq.s32.totalorder %s40, 0
      %p501 = por %p499, %p500
      %s503 = sadd.s32 %s502, 1
      %p506 = scmp.eq.s32.totalorder %s34, 1
      %p507 = scmp.ne.s32.totalorder %s502, %s504
      %p508 = scmp.eq.s32.totalorder %s34, 0
      %p509 = por %p507, %p508
      %p510 = scmp.ne.s32.totalorder %s502, %s504
      %p511 = scmp.eq.s32.totalorder %s39, 1
      %p512 = por %p510, %p511
      %p513 = scmp.ne.s32.totalorder %s504, %s505
      %p514 = scmp.eq.s32.totalorder %s39, 0
      %p515 = por %p513, %p514
      %p516 = scmp.ne.s32.totalorder %s504, %s505
      %p517 = scmp.eq.s32.totalorder %s40, 1
      %p518 = por %p516, %p517
      %p520 = scmp.ne.s32.totalorder %s505, %s519
      %p521 = scmp.eq.s32.totalorder %s40, 0
      %p522 = por %p520, %p521
      %s523 = ssub.s32 %s34, %s41
      %p524 = scmp.eq.s32.totalorder %s523, 0
      %s526 = sadd.s32 %s525, 1
      %s527 = scalar_select %p524, %s525, %s526
      %p530 = pneg %p524
      %p531 = scmp.eq.s32.totalorder %s34, 1
      %p532 = por %p530, %p531
      %p533 = scmp.ne.s32.totalorder %s525, %s528
      %p534 = scmp.eq.s32.totalorder %s34, 0
      %p535 = por %p533, %p534
      %p536 = scmp.ne.s32.totalorder %s525, %s528
      %p537 = scmp.eq.s32.totalorder %s39, 1
      %p538 = por %p536, %p537
      %p539 = scmp.ne.s32.totalorder %s528, %s529
      %p540 = scmp.eq.s32.totalorder %s39, 0
      %p541 = por %p539, %p540
      %p542 = scmp.ne.s32.totalorder %s528, %s529
      %p543 = scmp.eq.s32.totalorder %s40, 1
      %p544 = por %p542, %p543
      %p546 = scmp.ne.s32.totalorder %s529, %s545
      %p547 = scmp.eq.s32.totalorder %s40, 0
      %p548 = por %p546, %p547
      %s549 = ssub.s32 %s34, %s41
      %p550 = scmp.eq.s32.totalorder %s549, 0
      %s552 = sadd.s32 %s551, 1
      %s553 = scalar_select %p550, %s551, %s552
      %p556 = pneg %p550
      %p557 = scmp.eq.s32.totalorder %s34, 1
      %p558 = por %p556, %p557
      %p559 = scmp.ne.s32.totalorder %s551, %s554
      %p560 = scmp.eq.s32.totalorder %s34, 0
      %p561 = por %p559, %p560
      %p562 = scmp.ne.s32.totalorder %s551, %s554
      %p563 = scmp.eq.s32.totalorder %s39, 1
      %p564 = por %p562, %p563
      %p565 = scmp.ne.s32.totalorder %s554, %s555
      %p566 = scmp.eq.s32.totalorder %s39, 0
      %p567 = por %p565, %p566
      %p568 = scmp.ne.s32.totalorder %s554, %s555
      %p569 = scmp.eq.s32.totalorder %s40, 1
      %p570 = por %p568, %p569
      %p572 = scmp.ne.s32.totalorder %s555, %s571
      %p573 = scmp.eq.s32.totalorder %s40, 0
      %p574 = por %p572, %p573
      %s575 = ssub.s32 %s34, %s41
      %p576 = scmp.eq.s32.totalorder %s575, 0
      %s578 = sadd.s32 %s577, 1
      %s579 = scalar_select %p576, %s577, %s578
      %p582 = pneg %p576
      %p583 = scmp.eq.s32.totalorder %s34, 1
      %p584 = por %p582, %p583
      %p585 = scmp.ne.s32.totalorder %s577, %s580
      %p586 = scmp.eq.s32.totalorder %s34, 0
      %p587 = por %p585, %p586
      %p588 = scmp.ne.s32.totalorder %s577, %s580
      %p589 = scmp.eq.s32.totalorder %s39, 1
      %p590 = por %p588, %p589
      %p591 = scmp.ne.s32.totalorder %s580, %s581
      %p592 = scmp.eq.s32.totalorder %s39, 0
      %p593 = por %p591, %p592
      %p594 = scmp.ne.s32.totalorder %s580, %s581
      %p595 = scmp.eq.s32.totalorder %s40, 1
      %p596 = por %p594, %p595
      %p598 = scmp.ne.s32.totalorder %s581, %s597
      %p599 = scmp.eq.s32.totalorder %s40, 0
      %p600 = por %p598, %p599
      %s601 = ssub.s32 %s34, %s41
      %p602 = scmp.eq.s32.totalorder %s601, 0
      %s604 = sadd.s32 %s603, 1
      %s605 = scalar_select %p602, %s603, %s604
      %p608 = pneg %p602
      %p609 = scmp.eq.s32.totalorder %s34, 1
      %p610 = por %p608, %p609
      %p611 = scmp.ne.s32.totalorder %s603, %s606
      %p612 = scmp.eq.s32.totalorder %s34, 0
      %p613 = por %p611, %p612
      %p614 = scmp.ne.s32.totalorder %s603, %s606
      %p615 = scmp.eq.s32.totalorder %s39, 1
      %p616 = por %p614, %p615
      %p617 = scmp.ne.s32.totalorder %s606, %s607
      %p618 = scmp.eq.s32.totalorder %s39, 0
      %p619 = por %p617, %p618
      %p620 = scmp.ne.s32.totalorder %s606, %s607
      %p621 = scmp.eq.s32.totalorder %s40, 1
      %p622 = por %p620, %p621
      %p624 = scmp.ne.s32.totalorder %s607, %s623
      %p625 = scmp.eq.s32.totalorder %s40, 0
      %p626 = por %p624, %p625
      %p627 = scmp.le.s32.totalorder 1, %s34
      %p628 = scmp.lt.s32.totalorder %s34, 3
      %p629 = pnand %p627, %p628
      %p630 = pneg %p629
      // Predicated region
      $region9: #{decoder_forward.4} parent=5 // pred_check
        _
      $region10: #{decoder_forward.4} parent=5 // pred_check_branch
        %632 = sbr.rel (%p629) target = $region12
      $region11: #{decoder_forward.4} parent=5 // pred_region
        %s633 = ssub.s32 %s34, 1
        // Predicated region
        $region13: #{decoder_forward.4} parent=11 // pred_check
          %p634 = pneg %p263
        $region14: #{decoder_forward.4} parent=11 // pred_check_branch
          %636 = sbr.rel (%p634) target = $region16
        $region15: #{decoder_forward.4} parent=11 // pred_region
          _
        $region16: #{decoder_forward.4} parent=11 // pred_fallthru
          _
        // Predicated region
        $region17: #{decoder_forward.4} parent=11 // pred_check
          %p637 = pneg %p284
        $region18: #{decoder_forward.4} parent=11 // pred_check_branch
          %639 = sbr.rel (%p637) target = $region20
        $region19: #{decoder_forward.4} parent=11 // pred_region
          _
        $region20: #{decoder_forward.4} parent=11 // pred_fallthru
          _
        // Predicated region
        $region21: #{decoder_forward.4} parent=11 // pred_check
          %p640 = pneg %p305
        $region22: #{decoder_forward.4} parent=11 // pred_check_branch
          %642 = sbr.rel (%p640) target = $region24
        $region23: #{decoder_forward.4} parent=11 // pred_region
          _
        $region24: #{decoder_forward.4} parent=11 // pred_fallthru
          _
        // Predicated region
        $region25: #{decoder_forward.4} parent=11 // pred_check
          %p643 = pneg %p326
        $region26: #{decoder_forward.4} parent=11 // pred_check_branch
          %645 = sbr.rel (%p643) target = $region28
        $region27: #{decoder_forward.4} parent=11 // pred_region
          _
        $region28: #{decoder_forward.4} parent=11 // pred_fallthru
          _
        // Predicated region
        $region29: #{decoder_forward.4} parent=11 // pred_check
          %p646 = pneg %p347
        $region30: #{decoder_forward.4} parent=11 // pred_check_branch
          %648 = sbr.rel (%p646) target = $region32
        $region31: #{decoder_forward.4} parent=11 // pred_region
          _
        $region32: #{decoder_forward.4} parent=11 // pred_fallthru
          _
        // Predicated region
        $region33: #{decoder_forward.4} parent=11 // pred_check
          %p649 = pneg %p368
        $region34: #{decoder_forward.4} parent=11 // pred_check_branch
          %651 = sbr.rel (%p649) target = $region36
        $region35: #{decoder_forward.4} parent=11 // pred_region
          _
        $region36: #{decoder_forward.4} parent=11 // pred_fallthru
          _
        // Predicated region
        $region37: #{decoder_forward.4} parent=11 // pred_check
          %p652 = pneg %p389
        $region38: #{decoder_forward.4} parent=11 // pred_check_branch
          %654 = sbr.rel (%p652) target = $region40
        $region39: #{decoder_forward.4} parent=11 // pred_region
          _
        $region40: #{decoder_forward.4} parent=11 // pred_fallthru
          _
        // Predicated region
        $region41: #{decoder_forward.4} parent=11 // pred_check
          %p655 = pneg %p410
        $region42: #{decoder_forward.4} parent=11 // pred_check_branch
          %657 = sbr.rel (%p655) target = $region44
        $region43: #{decoder_forward.4} parent=11 // pred_region
          _
        $region44: #{decoder_forward.4} parent=11 // pred_fallthru
          _
        // Predicated region
        $region45: #{decoder_forward.4} parent=11 // pred_check
          %p658 = pneg %p431
        $region46: #{decoder_forward.4} parent=11 // pred_check_branch
          %660 = sbr.rel (%p658) target = $region48
        $region47: #{decoder_forward.4} parent=11 // pred_region
          _
        $region48: #{decoder_forward.4} parent=11 // pred_fallthru
          _
        // Predicated region
        $region49: #{decoder_forward.4} parent=11 // pred_check
          %p661 = pneg %p452
        $region50: #{decoder_forward.4} parent=11 // pred_check_branch
          %663 = sbr.rel (%p661) target = $region52
        $region51: #{decoder_forward.4} parent=11 // pred_region
          _
        $region52: #{decoder_forward.4} parent=11 // pred_fallthru
          _
        // Predicated region
        $region53: #{decoder_forward.4} parent=11 // pred_check
          %p664 = pneg %p473
        $region54: #{decoder_forward.4} parent=11 // pred_check_branch
          %666 = sbr.rel (%p664) target = $region56
        $region55: #{decoder_forward.4} parent=11 // pred_region
          _
        $region56: #{decoder_forward.4} parent=11 // pred_fallthru
          _
        // Predicated region
        $region57: #{decoder_forward.4} parent=11 // pred_check
          %p667 = pneg %p494
        $region58: #{decoder_forward.4} parent=11 // pred_check_branch
          %669 = sbr.rel (%p667) target = $region60
        $region59: #{decoder_forward.4} parent=11 // pred_region
          _
        $region60: #{decoder_forward.4} parent=11 // pred_fallthru
          _
        // Predicated region
        $region61: #{decoder_forward.4} parent=11 // pred_check
          %p670 = pneg %p515
        $region62: #{decoder_forward.4} parent=11 // pred_check_branch
          %672 = sbr.rel (%p670) target = $region64
        $region63: #{decoder_forward.4} parent=11 // pred_region
          _
        $region64: #{decoder_forward.4} parent=11 // pred_fallthru
          _
      $region12: #{decoder_forward.4} parent=5 // pred_fallthru
        _
      %p673 = scmp.lt.s32.totalorder %s34, 2
      // Predicated region
      $region65: #{decoder_forward.4} parent=5 // pred_check
        %p674 = pneg %p673
      $region66: #{decoder_forward.4} parent=5 // pred_check_branch
        %676 = sbr.rel (%p674) target = $region68
      $region67: #{decoder_forward.4} parent=5 // pred_region
        // Predicated region
        $region69: #{decoder_forward.4} parent=67 // pred_check
          %p677 = pneg %p54
        $region70: #{decoder_forward.4} parent=67 // pred_check_branch
          %679 = sbr.rel (%p677) target = $region72
        $region71: #{decoder_forward.4} parent=67 // pred_region
          %p680 = scmp.lt.s32.totalorder %s34, 1
          %s681 = scalar_select %p680, %s34, 1
          %s682 = smul.addr %s681, 8
          %s683 = scalar_lea.vmem %s0, %s682
        $region72: #{decoder_forward.4} parent=67 // pred_fallthru
          _
        // Predicated region
        $region73: #{decoder_forward.4} parent=67 // pred_check
          %p684 = pneg %p80
        $region74: #{decoder_forward.4} parent=67 // pred_check_branch
          %686 = sbr.rel (%p684) target = $region76
        $region75: #{decoder_forward.4} parent=67 // pred_region
          %p687 = scmp.lt.s32.totalorder %s34, 1
          %s688 = scalar_select %p687, %s34, 1
          %s689 = smul.addr %s688, 8
          %s690 = scalar_lea.vmem %s1, %s689
        $region76: #{decoder_forward.4} parent=67 // pred_fallthru
          _
        // Predicated region
        $region77: #{decoder_forward.4} parent=67 // pred_check
          %p691 = pneg %p106
        $region78: #{decoder_forward.4} parent=67 // pred_check_branch
          %693 = sbr.rel (%p691) target = $region80
        $region79: #{decoder_forward.4} parent=67 // pred_region
          %p694 = scmp.lt.s32.totalorder %s34, 1
          %s695 = scalar_select %p694, %s34, 1
          %s696 = smul.addr %s695, 8
          %s697 = scalar_lea.vmem %s2, %s696
        $region80: #{decoder_forward.4} parent=67 // pred_fallthru
          _
        // Predicated region
        $region81: #{decoder_forward.4} parent=67 // pred_check
          %p698 = pneg %p132
        $region82: #{decoder_forward.4} parent=67 // pred_check_branch
          %700 = sbr.rel (%p698) target = $region84
        $region83: #{decoder_forward.4} parent=67 // pred_region
          %p701 = scmp.lt.s32.totalorder %s34, 1
          %s702 = scalar_select %p701, %s34, 1
          %s703 = smul.addr %s702, 8
          %s704 = scalar_lea.vmem %s3, %s703
        $region84: #{decoder_forward.4} parent=67 // pred_fallthru
          _
        // Predicated region
        $region85: #{decoder_forward.4} parent=67 // pred_check
          %p705 = pneg %p158
        $region86: #{decoder_forward.4} parent=67 // pred_check_branch
          %707 = sbr.rel (%p705) target = $region88
        $region87: #{decoder_forward.4} parent=67 // pred_region
          %p708 = scmp.lt.s32.totalorder %s34, 1
          %s709 = scalar_select %p708, %s34, 1
          %s710 = smul.addr %s709, 8
          %s711 = scalar_lea.vmem %s4, %s710
        $region88: #{decoder_forward.4} parent=67 // pred_fallthru
          _
        // Predicated region
        $region89: #{decoder_forward.4} parent=67 // pred_check
          %p712 = pneg %p184
        $region90: #{decoder_forward.4} parent=67 // pred_check_branch
          %714 = sbr.rel (%p712) target = $region92
        $region91: #{decoder_forward.4} parent=67 // pred_region
          %p715 = scmp.lt.s32.totalorder %s34, 1
          %s716 = scalar_select %p715, %s34, 1
          %s717 = smul.addr %s716, 8
          %s718 = scalar_lea.vmem %s5, %s717
        $region92: #{decoder_forward.4} parent=67 // pred_fallthru
          _
        // Predicated region
        $region93: #{decoder_forward.4} parent=67 // pred_check
          %p719 = pneg %p210
        $region94: #{decoder_forward.4} parent=67 // pred_check_branch
          %721 = sbr.rel (%p719) target = $region96
        $region95: #{decoder_forward.4} parent=67 // pred_region
          %p722 = scmp.lt.s32.totalorder %s34, 1
          %s723 = scalar_select %p722, %s34, 1
          %s724 = smul.addr %s723, 8
          %s725 = scalar_lea.vmem %s6, %s724
        $region96: #{decoder_forward.4} parent=67 // pred_fallthru
          _
        // Predicated region
        $region97: #{decoder_forward.4} parent=67 // pred_check
          %p726 = pneg %p236
        $region98: #{decoder_forward.4} parent=67 // pred_check_branch
          %728 = sbr.rel (%p726) target = $region100
        $region99: #{decoder_forward.4} parent=67 // pred_region
          %p729 = scmp.lt.s32.totalorder %s34, 1
          %s730 = scalar_select %p729, %s34, 1
          %s731 = smul.addr %s730, 8
          %s732 = scalar_lea.vmem %s7, %s731
        $region100: #{decoder_forward.4} parent=67 // pred_fallthru
          _
      $region68: #{decoder_forward.4} parent=5 // pred_fallthru
        _
      %p733 = scmp.le.s32.totalorder 1, %s34
      %p734 = scmp.lt.s32.totalorder %s34, 3
      %p735 = pnand %p733, %p734
      %p736 = pneg %p735
      // Predicated region
      $region101: #{decoder_forward.4} parent=5 // pred_check
        _
      $region102: #{decoder_forward.4} parent=5 // pred_check_branch
        %738 = sbr.rel (%p735) target = $region104
      $region103: #{decoder_forward.4} parent=5 // pred_region
        %s739 = ssub.s32 %s34, 1
        %p740 = scmp.lt.s32.totalorder %s39, 1
        %s741 = scalar_select %p740, %s39, 1
        %s742 = smul.addr %s741, 8
        %s743 = scalar_lea.vmem %s0, %s742
        %p744 = pneg %p60
        %p745 = pneg %p57
        %p746 = scmp.lt.s32.totalorder %s39, 1
        %s747 = scalar_select %p746, %s39, 1
        %s748 = smul.addr %s747, 8
        %s749 = scalar_lea.vmem %s1, %s748
        %p750 = pneg %p86
        %p751 = pneg %p83
        %p752 = scmp.lt.s32.totalorder %s39, 1
        %s753 = scalar_select %p752, %s39, 1
        %s754 = smul.addr %s753, 8
        %s755 = scalar_lea.vmem %s2, %s754
        %p756 = pneg %p112
        %p757 = pneg %p109
        %p758 = scmp.lt.s32.totalorder %s39, 1
        %s759 = scalar_select %p758, %s39, 1
        %s760 = smul.addr %s759, 8
        %s761 = scalar_lea.vmem %s3, %s760
        %p762 = pneg %p138
        %p763 = pneg %p135
        %p764 = scmp.lt.s32.totalorder %s39, 1
        %s765 = scalar_select %p764, %s39, 1
        %s766 = smul.addr %s765, 8
        %s767 = scalar_lea.vmem %s4, %s766
        %p768 = pneg %p164
        %p769 = pneg %p161
        %p770 = scmp.lt.s32.totalorder %s39, 1
        %s771 = scalar_select %p770, %s39, 1
        %s772 = smul.addr %s771, 8
        %s773 = scalar_lea.vmem %s5, %s772
        %p774 = pneg %p190
        %p775 = pneg %p187
        %p776 = scmp.lt.s32.totalorder %s39, 1
        %s777 = scalar_select %p776, %s39, 1
        %s778 = smul.addr %s777, 8
        %s779 = scalar_lea.vmem %s6, %s778
        %p780 = pneg %p216
        %p781 = pneg %p213
        %p782 = scmp.lt.s32.totalorder %s39, 1
        %s783 = scalar_select %p782, %s39, 1
        %s784 = smul.addr %s783, 8
        %s785 = scalar_lea.vmem %s7, %s784
        %p786 = pneg %p242
        %p787 = pneg %p239
        %p788 = pneg %p263
        %p789 = pneg %p260
        %p790 = pneg %p284
        %p791 = pneg %p281
        %p792 = pneg %p305
        %p793 = pneg %p302
        %p794 = pneg %p326
        %p795 = pneg %p323
        %p796 = pneg %p347
        %p797 = pneg %p344
        %p798 = pneg %p368
        %p799 = pneg %p365
        %p800 = pneg %p389
        %p801 = pneg %p386
        %p802 = pneg %p410
        %p803 = pneg %p407
        %p804 = pneg %p431
        %p805 = pneg %p428
        %p806 = pneg %p452
        %p807 = pneg %p449
        %p808 = pneg %p473
        %p809 = pneg %p470
        %p810 = pneg %p494
        %p811 = pneg %p491
        %p812 = pneg %p515
        %p813 = pneg %p512
        %p814 = pneg %p541
        %p815 = pneg %p538
        %p816 = scmp.lt.s32.totalorder %s39, 1
        %s817 = scalar_select %p816, %s39, 1
        %s818 = smul.addr %s817, 8
        %s819 = scalar_lea.vmem %s21, %s818
        %p820 = pneg %p567
        %p821 = pneg %p564
        %p822 = scmp.lt.s32.totalorder %s39, 1
        %s823 = scalar_select %p822, %s39, 1
        %s824 = smul.addr %s823, 8
        %s825 = scalar_lea.vmem %s22, %s824
        %p826 = pneg %p593
        %p827 = pneg %p590
        %s828 = sand.u32 %s580, 1
        %s829 = scalar_lea.sflag [#allocation3], %s828
        %s830 = sand.u32 %s580, 1
        %s831 = smul.addr %s830, 8
        %s832 = scalar_lea.vmem [#allocation2], %s831
        %p833 = pneg %p619
        %p834 = pneg %p616
        %p835 = scmp.lt.s32.totalorder %s39, 1
        %s836 = scalar_select %p835, %s39, 1
        %s837 = smul.addr %s836, 8
        %s838 = scalar_lea.vmem %s24, %s837
        %p839 = scmp.lt.s32.totalorder %s39, 1
        %s840 = scalar_select %p839, %s39, 1
        %s841 = smul.addr %s840, 8
        %s842 = scalar_lea.vmem %s0, %s841
        %p843 = scmp.lt.s32.totalorder %s39, 1
        %s844 = scalar_select %p843, %s39, 1
        %s845 = smul.addr %s844, 8
        %s846 = scalar_lea.vmem %s1, %s845
        %p847 = scmp.lt.s32.totalorder %s39, 1
        %s848 = scalar_select %p847, %s39, 1
        %s849 = smul.addr %s848, 8
        %s850 = scalar_lea.vmem %s2, %s849
        %p851 = scmp.lt.s32.totalorder %s39, 1
        %s852 = scalar_select %p851, %s39, 1
        %s853 = smul.addr %s852, 8
        %s854 = scalar_lea.vmem %s3, %s853
        %p855 = scmp.lt.s32.totalorder %s39, 1
        %s856 = scalar_select %p855, %s39, 1
        %s857 = smul.addr %s856, 8
        %s858 = scalar_lea.vmem %s4, %s857
        %p859 = scmp.lt.s32.totalorder %s39, 1
        %s860 = scalar_select %p859, %s39, 1
        %s861 = smul.addr %s860, 8
        %s862 = scalar_lea.vmem %s5, %s861
        %p863 = scmp.lt.s32.totalorder %s39, 1
        %s864 = scalar_select %p863, %s39, 1
        %s865 = smul.addr %s864, 8
        %s866 = scalar_lea.vmem %s6, %s865
        %p867 = scmp.lt.s32.totalorder %s39, 1
        %s868 = scalar_select %p867, %s39, 1
        %s869 = smul.addr %s868, 8
        %s870 = scalar_lea.vmem %s7, %s869
        %p871 = scmp.lt.s32.totalorder %s39, 1
        %s872 = scalar_select %p871, %s39, 1
        %s873 = smul.addr %s872, 8
        %s874 = scalar_lea.vmem %s21, %s873
        %p875 = scmp.lt.s32.totalorder %s39, 1
        %s876 = scalar_select %p875, %s39, 1
        %s877 = smul.addr %s876, 8
        %s878 = scalar_lea.vmem %s22, %s877
        %p879 = scmp.lt.s32.totalorder %s39, 1
        %s880 = scalar_select %p879, %s39, 1
        %s881 = smul.addr %s880, 8
        %s882 = scalar_lea.vmem %s24, %s881
        %v884 = vld [vmem:[%s842] sm:$0xff]
        %v885 = vld [vmem:[%s846] sm:$0xff]
        %v886 = vadd.f32 %v884, %v885
        %v887 = vld [vmem:[%s850] sm:$0x3f]
        %v888 = vld [vmem:[%s854] sm:$0x3f]
        %v889 = vadd.f32 %v887, %v888
        %v890 = vld [vmem:[%s8] sm:$0xf]
        %v891 = vld [vmem:[%s8 + $0x4] sm:$0xf]
        %v892 = vld [vmem:[%s8 + $0x8] sm:$0xf]
        %v893 = vld [vmem:[%s8 + $0xc] sm:$0xf]
        %v894 = vpack.c.bf16 %v886, %v886
        %v895 = vld [vmem:[%s9] sm:$0x1]
        %v897 = vlaneseq
        %v898 = vshrl.u32 %v897, 7
        %v899 = vsub.s32 0, %v898
        %v900 = vrot.slane %v895, %v899
        %v906 = vunpack.c.l.b16 %v890
        %v907 = vunpack.c.l.b16 %v891
        %v908 = vunpack.c.l.b16 %v892
        %v909 = vunpack.c.l.b16 %v893
        %v910 = vpack.c.b16 %v907, %v906
        %v911 = vpack.c.b16 %v909, %v908
        %vm914 = vcmask 261120
        %v916 = vsel %vm914, %v894, 0
        %918 = vmatprep.subr.bf16.mxu0 0
        %919 = vmatpush1.bf16.msra.mxu0 0
        %920 = vmatprep.subr.bf16.mxu0 0
        %921 = vmatpush1.bf16.msra.mxu0 0
        %922 = vmatprep.subr.bf16.mxu0 0
        %923 = vmatpush1.bf16.msra.mxu0 0
        %924 = vmatprep.subr.bf16.mxu0 0
        %925 = vmatpush1.bf16.msra.mxu0 0
        %926 = vmatprep.subr.bf16.mxu0 0
        %927 = vmatpush1.bf16.msra.mxu0 0
        %928 = vmatprep.subr.bf16.mxu0 0
        %929 = vmatpush1.bf16.msra.mxu0 0
        %930 = vmatprep.subr.bf16.mxu0 0
        %931 = vmatpush1.bf16.msra.mxu0 %v911
        %932 = vmatprep.subr.bf16.mxu0 0
        %933 = vmatpush1.bf16.msra.mxu0 %v910
        %934 = vmatprep.subr.bf16.mxu0 0
        %935 = vmatpush2.bf16.msra.mxu0 0
        %936 = vmatprep.subr.bf16.mxu0 0
        %937 = vmatpush2.bf16.msra.mxu0 0
        %938 = vmatprep.subr.bf16.mxu0 0
        %939 = vmatpush2.bf16.msra.mxu0 0
        %940 = vmatprep.subr.bf16.mxu0 0
        %941 = vmatpush2.bf16.msra.mxu0 0
        %942 = vmatprep.subr.bf16.mxu0 0
        %943 = vmatpush2.bf16.msra.mxu0 0
        %944 = vmatprep.subr.bf16.mxu0 0
        %945 = vmatpush2.bf16.msra.mxu0 0
        %946 = vmatprep.subr.bf16.mxu0 0
        %947 = vmatpush2.bf16.msra.mxu0 0
        %948 = vmatprep.subr.bf16.mxu0 0
        %949 = vmatpush2.bf16.msra.mxu0 0
        %950 = vmatprep.mubr.bf16.mxu0 0
        %951 = vmatmul.mubr.bf16.gmra.mxu0 %v916
        %v952 = vpop.f32.mrf.mxu0
        %v953 = vadd.f32 %v900, %v952
        %v954 = vpop.f32.mrf.mxu0
        %v955 = vpop.f32.mrf.mxu0
        %v956 = vpop.f32.mrf.mxu0
        %957 = vdwg.mxu0
        %v958 = vpack.c.bf16 %v953, %v953
        %v959 = vpack.c.bf16 %v889, %v889
        %v961 = vsel %vm914, %v958, 0
        %v964 = vsel %vm914, %v959, 0
        %966 = vmatprep.subr.bf16.mxu0 0
        %967 = vmatpush1.bf16.xpose.msra.mxu0 0
        %968 = vmatprep.subr.bf16.mxu0 0
        %969 = vmatpush1.bf16.xpose.msra.mxu0 0
        %970 = vmatprep.subr.bf16.mxu0 0
        %971 = vmatpush1.bf16.xpose.msra.mxu0 0
        %972 = vmatprep.subr.bf16.mxu0 0
        %973 = vmatpush1.bf16.xpose.msra.mxu0 0
        %974 = vmatprep.subr.bf16.mxu0 0
        %975 = vmatpush1.bf16.xpose.msra.mxu0 0
        %976 = vmatprep.subr.bf16.mxu0 0
        %977 = vmatpush1.bf16.xpose.msra.mxu0 0
        %978 = vmatprep.subr.bf16.mxu0 0
        %979 = vmatpush1.bf16.xpose.msra.mxu0 0
        %980 = vmatprep.subr.bf16.mxu0 0
        %981 = vmatpush1.bf16.xpose.msra.mxu0 %v964
        %982 = vmatprep.subr.bf16.mxu0 0
        %983 = vmatpush2.bf16.xpose.msra.mxu0 0
        %984 = vmatprep.subr.bf16.mxu0 0
        %985 = vmatpush2.bf16.xpose.msra.mxu0 0
        %986 = vmatprep.subr.bf16.mxu0 0
        %987 = vmatpush2.bf16.xpose.msra.mxu0 0
        %988 = vmatprep.subr.bf16.mxu0 0
        %989 = vmatpush2.bf16.xpose.msra.mxu0 0
        %990 = vmatprep.subr.bf16.mxu0 0
        %991 = vmatpush2.bf16.xpose.msra.mxu0 0
        %992 = vmatprep.subr.bf16.mxu0 0
        %993 = vmatpush2.bf16.xpose.msra.mxu0 0
        %994 = vmatprep.subr.bf16.mxu0 0
        %995 = vmatpush2.bf16.xpose.msra.mxu0 0
        %996 = vmatprep.subr.bf16.mxu0 0
        %997 = vmatpush2.bf16.xpose.msra.mxu0 0
        %998 = vmatprep.mubr.bf16.mxu0 0
        %999 = vmatmul.mubr.bf16.gmra.mxu0 %v961
        %v1000 = vpop.f32.mrf.mxu0
        %v1001 = vadd.f32 0.0, %v1000
        %v1002 = vpop.f32.mrf.mxu0
        %v1003 = vpop.f32.mrf.mxu0
        %v1004 = vpop.f32.mrf.mxu0
        %1005 = vdwg.mxu0
        %vm1006 = vcmask 48128
        %v1007 = vsel %vm1006, %v1001, -inf
        %1008 = vmax.xlane.f32.xlu0 %v1007
        %v1009 = vpop.xlane.xlu0 %1008
        %v1010 = vsub.f32 %v1001, %v1009
        %v1011 = vmul.f32 %v1010, 1.442695
        %v1012 = vpow.pop %v1011
        %v1013 = vsel %vm1006, %v1012, 0.0
        %1014 = vadd.xlane.f32.xlu0 %v1013
        %v1015 = vpop.xlane.xlu0 %1014
        %v1016 = vrcp.pop %v1015
        %v1017 = vmul.f32 %v1012, %v1016
        %1018 = vst.msk [vmem:[%s882] sm:$0xff] %vm1006, %v1017
        %v1019 = vld [vmem:[%s858] sm:$0x3f]
        %v1020 = vpack.c.bf16 %v1017, %v1017
        %v1021 = vpack.c.bf16 %v1019, %v1019
        %v1023 = vsel %vm1006, %v1020, 0
        %vm1025 = vcmask 1042432
        %v1027 = vsel %vm1025, %v1021, 0
        %1029 = vmatprep.subr.bf16.mxu0 0
        %1030 = vmatpush1.bf16.msra.mxu0 0
        %1031 = vmatprep.subr.bf16.mxu0 0
        %1032 = vmatpush1.bf16.msra.mxu0 0
        %1033 = vmatprep.subr.bf16.mxu0 0
        %1034 = vmatpush1.bf16.msra.mxu0 0
        %1035 = vmatprep.subr.bf16.mxu0 0
        %1036 = vmatpush1.bf16.msra.mxu0 0
        %1037 = vmatprep.subr.bf16.mxu0 0
        %1038 = vmatpush1.bf16.msra.mxu0 0
        %1039 = vmatprep.subr.bf16.mxu0 0
        %1040 = vmatpush1.bf16.msra.mxu0 0
        %1041 = vmatprep.subr.bf16.mxu0 0
        %1042 = vmatpush1.bf16.msra.mxu0 0
        %1043 = vmatprep.subr.bf16.mxu0 0
        %1044 = vmatpush1.bf16.msra.mxu0 %v1027
        %1045 = vmatprep.subr.bf16.mxu0 0
        %1046 = vmatpush2.bf16.msra.mxu0 0
        %1047 = vmatprep.subr.bf16.mxu0 0
        %1048 = vmatpush2.bf16.msra.mxu0 0
        %1049 = vmatprep.subr.bf16.mxu0 0
        %1050 = vmatpush2.bf16.msra.mxu0 0
        %1051 = vmatprep.subr.bf16.mxu0 0
        %1052 = vmatpush2.bf16.msra.mxu0 0
        %1053 = vmatprep.subr.bf16.mxu0 0
        %1054 = vmatpush2.bf16.msra.mxu0 0
        %1055 = vmatprep.subr.bf16.mxu0 0
        %1056 = vmatpush2.bf16.msra.mxu0 0
        %1057 = vmatprep.subr.bf16.mxu0 0
        %1058 = vmatpush2.bf16.msra.mxu0 0
        %1059 = vmatprep.subr.bf16.mxu0 0
        %1060 = vmatpush2.bf16.msra.mxu0 0
        %1061 = vmatprep.mubr.bf16.mxu0 0
        %1062 = vmatmul.mubr.bf16.gmra.mxu0 %v1023
        %v1063 = vpop.f32.mrf.mxu0
        %v1064 = vadd.f32 0.0, %v1063
        %v1065 = vpop.f32.mrf.mxu0
        %v1066 = vpop.f32.mrf.mxu0
        %v1067 = vpop.f32.mrf.mxu0
        %1068 = vdwg.mxu0
        %v1069 = vld [vmem:[%s10] sm:$0xf]
        %v1070 = vld [vmem:[%s10 + $0x4] sm:$0xf]
        %v1071 = vld [vmem:[%s10 + $0x8] sm:$0xf]
        %v1072 = vld [vmem:[%s10 + $0xc] sm:$0xf]
        %v1073 = vpack.c.bf16 %v1064, %v1064
        %v1074 = vld [vmem:[%s11] sm:$0x1]
        %v1076 = vlaneseq
        %v1077 = vshrl.u32 %v1076, 7
        %v1078 = vsub.s32 0, %v1077
        %v1079 = vrot.slane %v1074, %v1078
        %v1085 = vunpack.c.l.b16 %v1069
        %v1086 = vunpack.c.l.b16 %v1070
        %v1087 = vunpack.c.l.b16 %v1071
        %v1088 = vunpack.c.l.b16 %v1072
        %v1089 = vpack.c.b16 %v1086, %v1085
        %v1090 = vpack.c.b16 %v1088, %v1087
        %v1094 = vsel %vm914, %v1073, 0
        %1096 = vmatprep.subr.bf16.mxu0 0
        %1097 = vmatpush1.bf16.msra.mxu0 0
        %1098 = vmatprep.subr.bf16.mxu0 0
        %1099 = vmatpush1.bf16.msra.mxu0 0
        %1100 = vmatprep.subr.bf16.mxu0 0
        %1101 = vmatpush1.bf16.msra.mxu0 0
        %1102 = vmatprep.subr.bf16.mxu0 0
        %1103 = vmatpush1.bf16.msra.mxu0 0
        %1104 = vmatprep.subr.bf16.mxu0 0
        %1105 = vmatpush1.bf16.msra.mxu0 0
        %1106 = vmatprep.subr.bf16.mxu0 0
        %1107 = vmatpush1.bf16.msra.mxu0 0
        %1108 = vmatprep.subr.bf16.mxu0 0
        %1109 = vmatpush1.bf16.msra.mxu0 %v1090
        %1110 = vmatprep.subr.bf16.mxu0 0
        %1111 = vmatpush1.bf16.msra.mxu0 %v1089
        %1112 = vmatprep.subr.bf16.mxu0 0
        %1113 = vmatpush2.bf16.msra.mxu0 0
        %1114 = vmatprep.subr.bf16.mxu0 0
        %1115 = vmatpush2.bf16.msra.mxu0 0
        %1116 = vmatprep.subr.bf16.mxu0 0
        %1117 = vmatpush2.bf16.msra.mxu0 0
        %1118 = vmatprep.subr.bf16.mxu0 0
        %1119 = vmatpush2.bf16.msra.mxu0 0
        %1120 = vmatprep.subr.bf16.mxu0 0
        %1121 = vmatpush2.bf16.msra.mxu0 0
        %1122 = vmatprep.subr.bf16.mxu0 0
        %1123 = vmatpush2.bf16.msra.mxu0 0
        %1124 = vmatprep.subr.bf16.mxu0 0
        %1125 = vmatpush2.bf16.msra.mxu0 0
        %1126 = vmatprep.subr.bf16.mxu0 0
        %1127 = vmatpush2.bf16.msra.mxu0 0
        %1128 = vmatprep.mubr.bf16.mxu0 0
        %1129 = vmatmul.mubr.bf16.gmra.mxu0 %v1094
        %v1130 = vpop.f32.mrf.mxu0
        %v1131 = vadd.f32 %v1079, %v1130
        %v1132 = vpop.f32.mrf.mxu0
        %v1133 = vpop.f32.mrf.mxu0
        %v1134 = vpop.f32.mrf.mxu0
        %1135 = vdwg.mxu0
        %v1136 = vmul.f32 %v886, 0.70710677
        %v1137 = vadd.f32 %v1131, %v1136
        %v1138 = vld [vmem:[%s862] sm:$0xff]
        %v1139 = vld [vmem:[%s866] sm:$0xff]
        %v1140 = vadd.f32 %v1138, %v1139
        %v1141 = vld [vmem:[%s15] sm:$0xf]
        %v1142 = vld [vmem:[%s15 + $0x4] sm:$0xf]
        %v1143 = vld [vmem:[%s15 + $0x8] sm:$0xf]
        %v1144 = vld [vmem:[%s15 + $0xc] sm:$0xf]
        %v1145 = vpack.c.bf16 %v1140, %v1140
        %v1146 = vld [vmem:[%s16] sm:$0x1]
        %v1148 = vlaneseq
        %v1149 = vshrl.u32 %v1148, 7
        %v1150 = vsub.s32 0, %v1149
        %v1151 = vrot.slane %v1146, %v1150
        %v1157 = vunpack.c.l.b16 %v1141
        %v1158 = vunpack.c.l.b16 %v1142
        %v1159 = vunpack.c.l.b16 %v1143
        %v1160 = vunpack.c.l.b16 %v1144
        %v1161 = vpack.c.b16 %v1158, %v1157
        %v1162 = vpack.c.b16 %v1160, %v1159
        %v1166 = vsel %vm914, %v1145, 0
        %1168 = vmatprep.subr.bf16.mxu0 0
        %1169 = vmatpush1.bf16.msra.mxu0 0
        %1170 = vmatprep.subr.bf16.mxu0 0
        %1171 = vmatpush1.bf16.msra.mxu0 0
        %1172 = vmatprep.subr.bf16.mxu0 0
        %1173 = vmatpush1.bf16.msra.mxu0 0
        %1174 = vmatprep.subr.bf16.mxu0 0
        %1175 = vmatpush1.bf16.msra.mxu0 0
        %1176 = vmatprep.subr.bf16.mxu0 0
        %1177 = vmatpush1.bf16.msra.mxu0 0
        %1178 = vmatprep.subr.bf16.mxu0 0
        %1179 = vmatpush1.bf16.msra.mxu0 0
        %1180 = vmatprep.subr.bf16.mxu0 0
        %1181 = vmatpush1.bf16.msra.mxu0 %v1162
        %1182 = vmatprep.subr.bf16.mxu0 0
        %1183 = vmatpush1.bf16.msra.mxu0 %v1161
        %1184 = vmatprep.subr.bf16.mxu0 0
        %1185 = vmatpush2.bf16.msra.mxu0 0
        %1186 = vmatprep.subr.bf16.mxu0 0
        %1187 = vmatpush2.bf16.msra.mxu0 0
        %1188 = vmatprep.subr.bf16.mxu0 0
        %1189 = vmatpush2.bf16.msra.mxu0 0
        %1190 = vmatprep.subr.bf16.mxu0 0
        %1191 = vmatpush2.bf16.msra.mxu0 0
        %1192 = vmatprep.subr.bf16.mxu0 0
        %1193 = vmatpush2.bf16.msra.mxu0 0
        %1194 = vmatprep.subr.bf16.mxu0 0
        %1195 = vmatpush2.bf16.msra.mxu0 0
        %1196 = vmatprep.subr.bf16.mxu0 0
        %1197 = vmatpush2.bf16.msra.mxu0 0
        %1198 = vmatprep.subr.bf16.mxu0 0
        %1199 = vmatpush2.bf16.msra.mxu0 0
        %1200 = vmatprep.mubr.bf16.mxu0 0
        %1201 = vmatmul.mubr.bf16.gmra.mxu0 %v1166
        %v1202 = vpop.f32.mrf.mxu0
        %v1203 = vadd.f32 %v1151, %v1202
        %v1204 = vpop.f32.mrf.mxu0
        %v1205 = vpop.f32.mrf.mxu0
        %v1206 = vpop.f32.mrf.mxu0
        %1207 = vdwg.mxu0
        %v1208 = vld [vmem:[%s870] sm:$0xff]
        %v1209 = vld [vmem:[%s17] sm:$0xf]
        %v1210 = vld [vmem:[%s17 + $0x4] sm:$0xf]
        %v1211 = vld [vmem:[%s17 + $0x8] sm:$0xf]
        %v1212 = vld [vmem:[%s17 + $0xc] sm:$0xf]
        %v1213 = vpack.c.bf16 %v1208, %v1208
        %v1214 = vld [vmem:[%s18] sm:$0x1]
        %v1216 = vlaneseq
        %v1217 = vshrl.u32 %v1216, 7
        %v1218 = vsub.s32 0, %v1217
        %v1219 = vrot.slane %v1214, %v1218
        %v1225 = vunpack.c.l.b16 %v1209
        %v1226 = vunpack.c.l.b16 %v1210
        %v1227 = vunpack.c.l.b16 %v1211
        %v1228 = vunpack.c.l.b16 %v1212
        %v1229 = vpack.c.b16 %v1226, %v1225
        %v1230 = vpack.c.b16 %v1228, %v1227
        %v1234 = vsel %vm914, %v1213, 0
        %1236 = vmatprep.subr.bf16.mxu0 0
        %1237 = vmatpush1.bf16.msra.mxu0 0
        %1238 = vmatprep.subr.bf16.mxu0 0
        %1239 = vmatpush1.bf16.msra.mxu0 0
        %1240 = vmatprep.subr.bf16.mxu0 0
        %1241 = vmatpush1.bf16.msra.mxu0 0
        %1242 = vmatprep.subr.bf16.mxu0 0
        %1243 = vmatpush1.bf16.msra.mxu0 0
        %1244 = vmatprep.subr.bf16.mxu0 0
        %1245 = vmatpush1.bf16.msra.mxu0 0
        %1246 = vmatprep.subr.bf16.mxu0 0
        %1247 = vmatpush1.bf16.msra.mxu0 0
        %1248 = vmatprep.subr.bf16.mxu0 0
        %1249 = vmatpush1.bf16.msra.mxu0 %v1230
        %1250 = vmatprep.subr.bf16.mxu0 0
        %1251 = vmatpush1.bf16.msra.mxu0 %v1229
        %1252 = vmatprep.subr.bf16.mxu0 0
        %1253 = vmatpush2.bf16.msra.mxu0 0
        %1254 = vmatprep.subr.bf16.mxu0 0
        %1255 = vmatpush2.bf16.msra.mxu0 0
        %1256 = vmatprep.subr.bf16.mxu0 0
        %1257 = vmatpush2.bf16.msra.mxu0 0
        %1258 = vmatprep.subr.bf16.mxu0 0
        %1259 = vmatpush2.bf16.msra.mxu0 0
        %1260 = vmatprep.subr.bf16.mxu0 0
        %1261 = vmatpush2.bf16.msra.mxu0 0
        %1262 = vmatprep.subr.bf16.mxu0 0
        %1263 = vmatpush2.bf16.msra.mxu0 0
        %1264 = vmatprep.subr.bf16.mxu0 0
        %1265 = vmatpush2.bf16.msra.mxu0 0
        %1266 = vmatprep.subr.bf16.mxu0 0
        %1267 = vmatpush2.bf16.msra.mxu0 0
        %1268 = vmatprep.mubr.bf16.mxu0 0
        %1269 = vmatmul.mubr.bf16.gmra.mxu0 %v1234
        %v1270 = vpop.f32.mrf.mxu0
        %v1271 = vadd.f32 %v1219, %v1270
        %v1272 = vpop.f32.mrf.mxu0
        %v1273 = vpop.f32.mrf.mxu0
        %v1274 = vpop.f32.mrf.mxu0
        %1275 = vdwg.mxu0
        %v1276 = vld [vmem:[%s12] sm:$0xf]
        %v1277 = vld [vmem:[%s12 + $0x4] sm:$0xf]
        %v1278 = vld [vmem:[%s12 + $0x8] sm:$0xf]
        %v1279 = vld [vmem:[%s12 + $0xc] sm:$0xf]
        %v1280 = vld [vmem:[%s13] sm:$0xf]
        %v1281 = vld [vmem:[%s13 + $0x4] sm:$0xf]
        %v1282 = vld [vmem:[%s13 + $0x8] sm:$0xf]
        %v1283 = vld [vmem:[%s13 + $0xc] sm:$0xf]
        %v1284 = vpack.c.bf16 %v1137, %v1137
        %v1289 = vunpack.c.l.b16 %v1280
        %v1290 = vunpack.c.l.b16 %v1281
        %v1291 = vunpack.c.l.b16 %v1282
        %v1292 = vunpack.c.l.b16 %v1283
        %v1293 = vpack.c.b16 %v1290, %v1289
        %v1294 = vpack.c.b16 %v1292, %v1291
        %v1298 = vsel %vm914, %v1284, 0
        %1300 = vmatprep.subr.bf16.mxu0 0
        %1301 = vmatpush1.bf16.msra.mxu0 0
        %1302 = vmatprep.subr.bf16.mxu0 0
        %1303 = vmatpush1.bf16.msra.mxu0 0
        %1304 = vmatprep.subr.bf16.mxu0 0
        %1305 = vmatpush1.bf16.msra.mxu0 0
        %1306 = vmatprep.subr.bf16.mxu0 0
        %1307 = vmatpush1.bf16.msra.mxu0 0
        %1308 = vmatprep.subr.bf16.mxu0 0
        %1309 = vmatpush1.bf16.msra.mxu0 0
        %1310 = vmatprep.subr.bf16.mxu0 0
        %1311 = vmatpush1.bf16.msra.mxu0 0
        %1312 = vmatprep.subr.bf16.mxu0 0
        %1313 = vmatpush1.bf16.msra.mxu0 %v1294
        %1314 = vmatprep.subr.bf16.mxu0 0
        %1315 = vmatpush1.bf16.msra.mxu0 %v1293
        %1316 = vmatprep.subr.bf16.mxu0 0
        %1317 = vmatpush2.bf16.msra.mxu0 0
        %1318 = vmatprep.subr.bf16.mxu0 0
        %1319 = vmatpush2.bf16.msra.mxu0 0
        %1320 = vmatprep.subr.bf16.mxu0 0
        %1321 = vmatpush2.bf16.msra.mxu0 0
        %1322 = vmatprep.subr.bf16.mxu0 0
        %1323 = vmatpush2.bf16.msra.mxu0 0
        %1324 = vmatprep.subr.bf16.mxu0 0
        %1325 = vmatpush2.bf16.msra.mxu0 0
        %1326 = vmatprep.subr.bf16.mxu0 0
        %1327 = vmatpush2.bf16.msra.mxu0 0
        %1328 = vmatprep.subr.bf16.mxu0 0
        %1329 = vmatpush2.bf16.msra.mxu0 0
        %1330 = vmatprep.subr.bf16.mxu0 0
        %1331 = vmatpush2.bf16.msra.mxu0 0
        %1332 = vmatprep.mubr.bf16.mxu0 0
        %1333 = vmatmul.mubr.bf16.gmra.mxu0 %v1298
        %v1334 = vpop.f32.mrf.mxu0
        %v1335 = vadd.f32 0.0, %v1334
        %v1336 = vpop.f32.mrf.mxu0
        %v1337 = vpop.f32.mrf.mxu0
        %v1338 = vpop.f32.mrf.mxu0
        %1339 = vdwg.mxu0
        %v1344 = vunpack.c.l.b16 %v1276
        %v1345 = vunpack.c.l.b16 %v1277
        %v1346 = vunpack.c.l.b16 %v1278
        %v1347 = vunpack.c.l.b16 %v1279
        %v1348 = vpack.c.b16 %v1345, %v1344
        %v1349 = vpack.c.b16 %v1347, %v1346
        %1352 = vmatprep.subr.bf16.mxu0 0
        %1353 = vmatpush1.bf16.msra.mxu0 0
        %1354 = vmatprep.subr.bf16.mxu0 0
        %1355 = vmatpush1.bf16.msra.mxu0 0
        %1356 = vmatprep.subr.bf16.mxu0 0
        %1357 = vmatpush1.bf16.msra.mxu0 0
        %1358 = vmatprep.subr.bf16.mxu0 0
        %1359 = vmatpush1.bf16.msra.mxu0 0
        %1360 = vmatprep.subr.bf16.mxu0 0
        %1361 = vmatpush1.bf16.msra.mxu0 0
        %1362 = vmatprep.subr.bf16.mxu0 0
        %1363 = vmatpush1.bf16.msra.mxu0 0
        %1364 = vmatprep.subr.bf16.mxu0 0
        %1365 = vmatpush1.bf16.msra.mxu0 %v1349
        %1366 = vmatprep.subr.bf16.mxu0 0
        %1367 = vmatpush1.bf16.msra.mxu0 %v1348
        %1368 = vmatprep.subr.bf16.mxu0 0
        %1369 = vmatpush2.bf16.msra.mxu0 0
        %1370 = vmatprep.subr.bf16.mxu0 0
        %1371 = vmatpush2.bf16.msra.mxu0 0
        %1372 = vmatprep.subr.bf16.mxu0 0
        %1373 = vmatpush2.bf16.msra.mxu0 0
        %1374 = vmatprep.subr.bf16.mxu0 0
        %1375 = vmatpush2.bf16.msra.mxu0 0
        %1376 = vmatprep.subr.bf16.mxu0 0
        %1377 = vmatpush2.bf16.msra.mxu0 0
        %1378 = vmatprep.subr.bf16.mxu0 0
        %1379 = vmatpush2.bf16.msra.mxu0 0
        %1380 = vmatprep.subr.bf16.mxu0 0
        %1381 = vmatpush2.bf16.msra.mxu0 0
        %1382 = vmatprep.subr.bf16.mxu0 0
        %1383 = vmatpush2.bf16.msra.mxu0 0
        %1384 = vmatprep.mubr.bf16.mxu0 0
        %1385 = vmatmul.mubr.bf16.gmra.mxu0 %v916
        %v1386 = vpop.f32.mrf.mxu0
        %v1387 = vadd.f32 %v1335, %v1386
        %v1388 = vpop.f32.mrf.mxu0
        %v1389 = vpop.f32.mrf.mxu0
        %v1390 = vpop.f32.mrf.mxu0
        %1391 = vdwg.mxu0
        %v1392 = vld [vmem:[%s14] sm:$0x1]
        %v1394 = vlaneseq
        %v1395 = vshrl.u32 %v1394, 7
        %v1396 = vsub.s32 0, %v1395
        %v1397 = vrot.slane %v1392, %v1396
        %v1399 = vadd.f32 %v1387, %v1397
        %v1400 = vpack.c.bf16 %v1399, %v1399
        %v1401 = vpack.c.bf16 %v1203, %v1203
        %v1403 = vsel %vm914, %v1400, 0
        %v1406 = vsel %vm914, %v1401, 0
        %1408 = vmatprep.subr.bf16.mxu0 0
        %1409 = vmatpush1.bf16.xpose.msra.mxu0 0
        %1410 = vmatprep.subr.bf16.mxu0 0
        %1411 = vmatpush1.bf16.xpose.msra.mxu0 0
        %1412 = vmatprep.subr.bf16.mxu0 0
        %1413 = vmatpush1.bf16.xpose.msra.mxu0 0
        %1414 = vmatprep.subr.bf16.mxu0 0
        %1415 = vmatpush1.bf16.xpose.msra.mxu0 0
        %1416 = vmatprep.subr.bf16.mxu0 0
        %1417 = vmatpush1.bf16.xpose.msra.mxu0 0
        %1418 = vmatprep.subr.bf16.mxu0 0
        %1419 = vmatpush1.bf16.xpose.msra.mxu0 0
        %1420 = vmatprep.subr.bf16.mxu0 0
        %1421 = vmatpush1.bf16.xpose.msra.mxu0 0
        %1422 = vmatprep.subr.bf16.mxu0 0
        %1423 = vmatpush1.bf16.xpose.msra.mxu0 %v1406
        %1424 = vmatprep.subr.bf16.mxu0 0
        %1425 = vmatpush2.bf16.xpose.msra.mxu0 0
        %1426 = vmatprep.subr.bf16.mxu0 0
        %1427 = vmatpush2.bf16.xpose.msra.mxu0 0
        %1428 = vmatprep.subr.bf16.mxu0 0
        %1429 = vmatpush2.bf16.xpose.msra.mxu0 0
        %1430 = vmatprep.subr.bf16.mxu0 0
        %1431 = vmatpush2.bf16.xpose.msra.mxu0 0
        %1432 = vmatprep.subr.bf16.mxu0 0
        %1433 = vmatpush2.bf16.xpose.msra.mxu0 0
        %1434 = vmatprep.subr.bf16.mxu0 0
        %1435 = vmatpush2.bf16.xpose.msra.mxu0 0
        %1436 = vmatprep.subr.bf16.mxu0 0
        %1437 = vmatpush2.bf16.xpose.msra.mxu0 0
        %1438 = vmatprep.subr.bf16.mxu0 0
        %1439 = vmatpush2.bf16.xpose.msra.mxu0 0
        %1440 = vmatprep.mubr.bf16.mxu0 0
        %1441 = vmatmul.mubr.bf16.gmra.mxu0 %v1403
        %v1442 = vpop.f32.mrf.mxu0
        %v1443 = vadd.f32 0.0, %v1442
        %v1444 = vpop.f32.mrf.mxu0
        %v1445 = vpop.f32.mrf.mxu0
        %v1446 = vpop.f32.mrf.mxu0
        %1447 = vdwg.mxu0
        %vm1448 = vcmask 64512
        %v1449 = vsel %vm1448, %v1443, -inf
        %1450 = vmax.xlane.f32.xlu0 %v1449
        %v1451 = vpop.xlane.xlu0 %1450
        %v1452 = vsub.f32 %v1443, %v1451
        %v1453 = vmul.f32 %v1452, 1.442695
        %v1454 = vpow.pop %v1453
        %v1455 = vsel %vm1448, %v1454, 0.0
        %1456 = vadd.xlane.f32.xlu0 %v1455
        %v1457 = vpop.xlane.xlu0 %1456
        %v1458 = vrcp.pop %v1457
        %v1459 = vmul.f32 %v1454, %v1458
        %1460 = vst.msk [vmem:[%s832] sm:$0xff] %vm1448, %v1459
        %v1461 = vpack.c.bf16 %v1459, %v1459
        %v1462 = vpack.c.bf16 %v1271, %v1271
        %v1464 = vsel %vm1448, %v1461, 0
        %vm1466 = vcmask 1043456
        %v1468 = vsel %vm1466, %v1462, 0
        %1470 = vmatprep.subr.bf16.mxu0 0
        %1471 = vmatpush1.bf16.msra.mxu0 0
        %1472 = vmatprep.subr.bf16.mxu0 0
        %1473 = vmatpush1.bf16.msra.mxu0 0
        %1474 = vmatprep.subr.bf16.mxu0 0
        %1475 = vmatpush1.bf16.msra.mxu0 0
        %1476 = vmatprep.subr.bf16.mxu0 0
        %1477 = vmatpush1.bf16.msra.mxu0 0
        %1478 = vmatprep.subr.bf16.mxu0 0
        %1479 = vmatpush1.bf16.msra.mxu0 0
        %1480 = vmatprep.subr.bf16.mxu0 0
        %1481 = vmatpush1.bf16.msra.mxu0 0
        %1482 = vmatprep.subr.bf16.mxu0 0
        %1483 = vmatpush1.bf16.msra.mxu0 0
        %1484 = vmatprep.subr.bf16.mxu0 0
        %1485 = vmatpush1.bf16.msra.mxu0 %v1468
        %1486 = vmatprep.subr.bf16.mxu0 0
        %1487 = vmatpush2.bf16.msra.mxu0 0
        %1488 = vmatprep.subr.bf16.mxu0 0
        %1489 = vmatpush2.bf16.msra.mxu0 0
        %1490 = vmatprep.subr.bf16.mxu0 0
        %1491 = vmatpush2.bf16.msra.mxu0 0
        %1492 = vmatprep.subr.bf16.mxu0 0
        %1493 = vmatpush2.bf16.msra.mxu0 0
        %1494 = vmatprep.subr.bf16.mxu0 0
        %1495 = vmatpush2.bf16.msra.mxu0 0
        %1496 = vmatprep.subr.bf16.mxu0 0
        %1497 = vmatpush2.bf16.msra.mxu0 0
        %1498 = vmatprep.subr.bf16.mxu0 0
        %1499 = vmatpush2.bf16.msra.mxu0 0
        %1500 = vmatprep.subr.bf16.mxu0 0
        %1501 = vmatpush2.bf16.msra.mxu0 0
        %1502 = vmatprep.mubr.bf16.mxu0 0
        %1503 = vmatmul.mubr.bf16.gmra.mxu0 %v1464
        %v1504 = vpop.f32.mrf.mxu0
        %v1505 = vadd.f32 0.0, %v1504
        %v1506 = vpop.f32.mrf.mxu0
        %v1507 = vpop.f32.mrf.mxu0
        %v1508 = vpop.f32.mrf.mxu0
        %1509 = vdwg.mxu0
        %v1510 = vld [vmem:[%s19] sm:$0xf]
        %v1511 = vld [vmem:[%s19 + $0x4] sm:$0xf]
        %v1512 = vld [vmem:[%s19 + $0x8] sm:$0xf]
        %v1513 = vld [vmem:[%s19 + $0xc] sm:$0xf]
        %v1514 = vpack.c.bf16 %v1505, %v1505
        %v1515 = vld [vmem:[%s20] sm:$0x1]
        %v1517 = vlaneseq
        %v1518 = vshrl.u32 %v1517, 7
        %v1519 = vsub.s32 0, %v1518
        %v1520 = vrot.slane %v1515, %v1519
        %v1526 = vunpack.c.l.b16 %v1510
        %v1527 = vunpack.c.l.b16 %v1511
        %v1528 = vunpack.c.l.b16 %v1512
        %v1529 = vunpack.c.l.b16 %v1513
        %v1530 = vpack.c.b16 %v1527, %v1526
        %v1531 = vpack.c.b16 %v1529, %v1528
        %v1535 = vsel %vm914, %v1514, 0
        %1537 = vmatprep.subr.bf16.mxu0 0
        %1538 = vmatpush1.bf16.msra.mxu0 0
        %1539 = vmatprep.subr.bf16.mxu0 0
        %1540 = vmatpush1.bf16.msra.mxu0 0
        %1541 = vmatprep.subr.bf16.mxu0 0
        %1542 = vmatpush1.bf16.msra.mxu0 0
        %1543 = vmatprep.subr.bf16.mxu0 0
        %1544 = vmatpush1.bf16.msra.mxu0 0
        %1545 = vmatprep.subr.bf16.mxu0 0
        %1546 = vmatpush1.bf16.msra.mxu0 0
        %1547 = vmatprep.subr.bf16.mxu0 0
        %1548 = vmatpush1.bf16.msra.mxu0 0
        %1549 = vmatprep.subr.bf16.mxu0 0
        %1550 = vmatpush1.bf16.msra.mxu0 %v1531
        %1551 = vmatprep.subr.bf16.mxu0 0
        %1552 = vmatpush1.bf16.msra.mxu0 %v1530
        %1553 = vmatprep.subr.bf16.mxu0 0
        %1554 = vmatpush2.bf16.msra.mxu0 0
        %1555 = vmatprep.subr.bf16.mxu0 0
        %1556 = vmatpush2.bf16.msra.mxu0 0
        %1557 = vmatprep.subr.bf16.mxu0 0
        %1558 = vmatpush2.bf16.msra.mxu0 0
        %1559 = vmatprep.subr.bf16.mxu0 0
        %1560 = vmatpush2.bf16.msra.mxu0 0
        %1561 = vmatprep.subr.bf16.mxu0 0
        %1562 = vmatpush2.bf16.msra.mxu0 0
        %1563 = vmatprep.subr.bf16.mxu0 0
        %1564 = vmatpush2.bf16.msra.mxu0 0
        %1565 = vmatprep.subr.bf16.mxu0 0
        %1566 = vmatpush2.bf16.msra.mxu0 0
        %1567 = vmatprep.subr.bf16.mxu0 0
        %1568 = vmatpush2.bf16.msra.mxu0 0
        %1569 = vmatprep.mubr.bf16.mxu0 0
        %1570 = vmatmul.mubr.bf16.gmra.mxu0 %v1535
        %v1571 = vpop.f32.mrf.mxu0
        %v1572 = vadd.f32 %v1520, %v1571
        %v1573 = vpop.f32.mrf.mxu0
        %v1574 = vpop.f32.mrf.mxu0
        %v1575 = vpop.f32.mrf.mxu0
        %1576 = vdwg.mxu0
        %v1577 = vadd.f32 %v1572, %v1136
        %1578 = vst.msk [vmem:[%s874] sm:$0xff] %vm914, %v1577
        %v1579 = vmul.f32 %v1137, 0.70710677
        %1581 = vrot.lane.b32.xlu0 %v1579, 32
        %v1582 = vpop.permute.xlu0 %1581
        %v1584 = vadd.f32 %v1572, %v1582
        %1586 = vrot.lane.b32.xlu0 %v1584, 96
        %v1587 = vpop.permute.xlu0 %1586
        %1589 = vst.msk [vmem:[%s878] sm:$0xff] %vm914, %v1587
        %p1590 = scmp.lt.s32.totalorder %s39, 1
        %s1591 = scalar_select %p1590, %s39, 1
        %s1592 = smul.addr %s1591, 8
        %s1593 = scalar_lea.vmem %s21, %s1592
        %p1594 = scmp.lt.s32.totalorder %s39, 1
        %s1595 = scalar_select %p1594, %s39, 1
        %s1596 = smul.addr %s1595, 8
        %s1597 = scalar_lea.vmem %s22, %s1596
        %s1598 = sand.u32 %s580, 1
        %s1599 = scalar_lea.sflag [#allocation3], %s1598
        %s1600 = sand.u32 %s580, 1
        %s1601 = smul.addr %s1600, 8
        %s1602 = scalar_lea.vmem [#allocation2], %s1601
        %p1603 = scmp.lt.s32.totalorder %s39, 1
        %s1604 = scalar_select %p1603, %s39, 1
        %s1605 = smul.addr %s1604, 8
        %s1606 = scalar_lea.vmem %s24, %s1605
        // Predicated region
        $region105: #{decoder_forward.4} parent=103 // pred_check
          %p1607 = pneg %p538
        $region106: #{decoder_forward.4} parent=103 // pred_check_branch
          %1609 = sbr.rel (%p1607) target = $region108
        $region107: #{decoder_forward.4} parent=103 // pred_region
          _
        $region108: #{decoder_forward.4} parent=103 // pred_fallthru
          _
        // Predicated region
        $region109: #{decoder_forward.4} parent=103 // pred_check
          %p1610 = pneg %p564
        $region110: #{decoder_forward.4} parent=103 // pred_check_branch
          %1612 = sbr.rel (%p1610) target = $region112
        $region111: #{decoder_forward.4} parent=103 // pred_region
          _
        $region112: #{decoder_forward.4} parent=103 // pred_fallthru
          _
        // Predicated region
        $region113: #{decoder_forward.4} parent=103 // pred_check
          %p1613 = pneg %p590
        $region114: #{decoder_forward.4} parent=103 // pred_check_branch
          %1615 = sbr.rel (%p1613) target = $region116
        $region115: #{decoder_forward.4} parent=103 // pred_region
          %s1617 = ssub.s32 128, 128
          %1618 = vsyncadd %s1599, %s1617
          %s1619 = smul.addr %s39, 128
          %s1620 = scalar_lea.hbm %s23, %s1619
          %s1622 = sshll.u32 %s1602, 4
          %s1623 = int_to_ptr.vmem [resolvable:$true] %s1622
          %1625 = dma.vmem_to_hbm [thread:$0]  %s1623, 128, %s1620, %s1599
        $region116: #{decoder_forward.4} parent=103 // pred_fallthru
          _
        // Predicated region
        $region117: #{decoder_forward.4} parent=103 // pred_check
          %p1626 = pneg %p616
        $region118: #{decoder_forward.4} parent=103 // pred_check_branch
          %1628 = sbr.rel (%p1626) target = $region120
        $region119: #{decoder_forward.4} parent=103 // pred_region
          _
        $region120: #{decoder_forward.4} parent=103 // pred_fallthru
          _
      $region104: #{decoder_forward.4} parent=5 // pred_fallthru
        _
      %p1629 = scmp.le.s32.totalorder 2, %s34
      // Predicated region
      $region121: #{decoder_forward.4} parent=5 // pred_check
        %p1630 = pneg %p1629
      $region122: #{decoder_forward.4} parent=5 // pred_check_branch
        %1632 = sbr.rel (%p1630) target = $region124
      $region123: #{decoder_forward.4} parent=5 // pred_region
        %s1633 = ssub.s32 %s34, 2
        // Predicated region
        $region125: #{decoder_forward.4} parent=123 // pred_check
          %p1634 = pneg %p544
        $region126: #{decoder_forward.4} parent=123 // pred_check_branch
          %1636 = sbr.rel (%p1634) target = $region128
        $region127: #{decoder_forward.4} parent=123 // pred_region
          %p1637 = scmp.lt.s32.totalorder %s40, 1
          %s1638 = scalar_select %p1637, %s40, 1
          %s1639 = smul.addr %s1638, 8
          %s1640 = scalar_lea.vmem %s21, %s1639
        $region128: #{decoder_forward.4} parent=123 // pred_fallthru
          _
        // Predicated region
        $region129: #{decoder_forward.4} parent=123 // pred_check
          %p1641 = pneg %p570
        $region130: #{decoder_forward.4} parent=123 // pred_check_branch
          %1643 = sbr.rel (%p1641) target = $region132
        $region131: #{decoder_forward.4} parent=123 // pred_region
          %p1644 = scmp.lt.s32.totalorder %s40, 1
          %s1645 = scalar_select %p1644, %s40, 1
          %s1646 = smul.addr %s1645, 8
          %s1647 = scalar_lea.vmem %s22, %s1646
        $region132: #{decoder_forward.4} parent=123 // pred_fallthru
          _
        // Predicated region
        $region133: #{decoder_forward.4} parent=123 // pred_check
          %p1648 = pneg %p596
        $region134: #{decoder_forward.4} parent=123 // pred_check_branch
          %1650 = sbr.rel (%p1648) target = $region136
        $region135: #{decoder_forward.4} parent=123 // pred_region
          %s1651 = sand.u32 %s581, 1
          %s1652 = scalar_lea.sflag [#allocation3], %s1651
          %s1653 = sand.u32 %s581, 1
          %s1654 = smul.addr %s1653, 8
          %s1655 = scalar_lea.vmem [#allocation2], %s1654
          %1656 = dma.done %s1652, 128
        $region136: #{decoder_forward.4} parent=123 // pred_fallthru
          _
        // Predicated region
        $region137: #{decoder_forward.4} parent=123 // pred_check
          %p1657 = pneg %p622
        $region138: #{decoder_forward.4} parent=123 // pred_check_branch
          %1659 = sbr.rel (%p1657) target = $region140
        $region139: #{decoder_forward.4} parent=123 // pred_region
          %p1660 = scmp.lt.s32.totalorder %s40, 1
          %s1661 = scalar_select %p1660, %s40, 1
          %s1662 = smul.addr %s1661, 8
          %s1663 = scalar_lea.vmem %s24, %s1662
        $region140: #{decoder_forward.4} parent=123 // pred_fallthru
          _
      $region124: #{decoder_forward.4} parent=5 // pred_fallthru
        _
    $region6: #{decoder_forward.4} parent=1 // loop_footer
      %s38 = sadd.s32 1, %s34
    $region7: #{decoder_forward.4} parent=1 // loop_footer_branch
      %33 = sbr.rel target = $region3
    $region8: #{decoder_forward.4} parent=1 // loop_exit
      _
    %1664 = vsyncpa [#allocation3], 1
    %s1665 = scalar_lea.sflag [#allocation3], 1
    %1666 = vsyncpa %s1665, 1

// kernel: decoder_forward.3
$region0: #{decoder_forward.3}
  #allocation0 [shape = 'u32[]', space=smem, size = 0x4, offset = 0x4, fixed_abs, tag = 'smem constant byte address 0x4 - core index']
  #allocation1 [shape = 'u32[144,128]{1,0:T(1,128)}', space=vmem, size = 0x12000, scoped, tag = 'internal scratch']
  #allocation2 [shape = 'f32[64,32]{1,0:T(8,128)}', space=vmem, size = 0x8000, scoped, tag = 'scratch operand']
  %s0 = inlined_call_operand.vmem [shape: f32[2,8,16], index: 0, kind: input, shape index: {}]
  %s1 = inlined_call_operand.vmem [shape: bf16[16,32], index: 1, kind: input, shape index: {}]
  %s2 = inlined_call_operand.vmem [shape: f32[1,32], index: 2, kind: input, shape index: {}]
  %s3 = inlined_call_operand.vmem [shape: bf16[32,32], index: 3, kind: input, shape index: {}]
  %s4 = inlined_call_operand.vmem [shape: f32[1,32], index: 4, kind: input, shape index: {}]
  %s5 = inlined_call_operand.vmem [shape: bf16[32,32], index: 5, kind: input, shape index: {}]
  %s6 = inlined_call_operand.vmem [shape: f32[1,32], index: 6, kind: input, shape index: {}]
  %s7 = inlined_call_operand.vmem [shape: bf16[10,96,64], index: 7, kind: input, shape index: {}]
  %s8 = inlined_call_operand.vmem [shape: f32[10,1,64], index: 8, kind: input, shape index: {}]
  %s9 = inlined_call_operand.vmem [shape: f32[2,8,32], index: 9, kind: output, shape index: {}]
  %s10 = sld [smem:[#allocation0]]
  $region69: #{decoder_forward.3} parent=0
    _
  %s12 = ssub.s32 1, %s10
  %s13 = scalar_select 0, %s12, %s10
  loop: start=0, step=1, limit=4
  $region2: #{decoder_forward.3} parent=0 // loop_pre_header
    _
  $region3: #{decoder_forward.3} parent=0 // loop_header
    %s15 = sphi 0, %s19
    %p16 = scmp.ge.s32.totalorder %s15, 4
    %s25 = sphi 0, %s27
    %s28 = sphi 0, %s25
    %s29 = sphi 0, %s28
    %s45 = sphi 0, %s29
    %s49 = sphi 0, %s49
    %s51 = sphi 0, %s49
    %s52 = sphi 0, %s51
    %s66 = sphi 0, %s52
    %s70 = sphi 0, %s70
    %s72 = sphi 0, %s70
    %s73 = sphi 0, %s72
    %s87 = sphi 0, %s73
    %s91 = sphi 0, %s91
    %s93 = sphi 0, %s91
    %s94 = sphi 0, %s93
    %s108 = sphi 0, %s94
    %s112 = sphi 0, %s112
    %s114 = sphi 0, %s112
    %s115 = sphi 0, %s114
    %s129 = sphi 0, %s115
    %s133 = sphi 0, %s133
    %s135 = sphi 0, %s133
    %s136 = sphi 0, %s135
    %s150 = sphi 0, %s136
    %s154 = sphi 0, %s154
    %s156 = sphi 0, %s154
    %s157 = sphi 0, %s156
    %s171 = sphi 0, %s157
    %s175 = sphi 0, %s175
    %s177 = sphi 0, %s175
    %s178 = sphi 0, %s177
    %s192 = sphi 0, %s178
    %s196 = sphi 0, %s196
    %s198 = sphi 0, %s196
    %s199 = sphi 0, %s198
    %s213 = sphi 0, %s199
    %s219 = sphi 0, %s221
    %s222 = sphi 0, %s219
    %s223 = sphi 0, %s222
    %s239 = sphi 0, %s223
  $region4: #{decoder_forward.3} parent=0 // loop_header_branch
    %18 = sbr.rel (%p16) target = $region8
  $region5: #{decoder_forward.3} parent=0 // loop_body
    %s20 = ssub.s32 %s15, 1
    %s21 = ssub.s32 %s15, 2
    %s22 = sadd.s32 %s15, 1
    %s23 = ssub.s32 %s15, %s22
    %p24 = scmp.eq.s32.totalorder %s23, 0
    %s26 = sadd.s32 %s25, 1
    %s27 = scalar_select %p24, %s25, %s26
    %p30 = pneg %p24
    %p31 = scmp.eq.s32.totalorder %s15, 1
    %p32 = por %p30, %p31
    %p33 = scmp.ne.s32.totalorder %s25, %s28
    %p34 = scmp.eq.s32.totalorder %s15, 0
    %p35 = por %p33, %p34
    %p36 = scmp.ne.s32.totalorder %s25, %s28
    %p37 = scmp.eq.s32.totalorder %s20, 1
    %p38 = por %p36, %p37
    %p39 = scmp.ne.s32.totalorder %s28, %s29
    %p40 = scmp.eq.s32.totalorder %s20, 0
    %p41 = por %p39, %p40
    %p42 = scmp.ne.s32.totalorder %s28, %s29
    %p43 = scmp.eq.s32.totalorder %s21, 1
    %p44 = por %p42, %p43
    %p46 = scmp.ne.s32.totalorder %s29, %s45
    %p47 = scmp.eq.s32.totalorder %s21, 0
    %p48 = por %p46, %p47
    %s50 = sadd.s32 %s49, 1
    %p53 = scmp.eq.s32.totalorder %s15, 1
    %p54 = scmp.ne.s32.totalorder %s49, %s51
    %p55 = scmp.eq.s32.totalorder %s15, 0
    %p56 = por %p54, %p55
    %p57 = scmp.ne.s32.totalorder %s49, %s51
    %p58 = scmp.eq.s32.totalorder %s20, 1
    %p59 = por %p57, %p58
    %p60 = scmp.ne.s32.totalorder %s51, %s52
    %p61 = scmp.eq.s32.totalorder %s20, 0
    %p62 = por %p60, %p61
    %p63 = scmp.ne.s32.totalorder %s51, %s52
    %p64 = scmp.eq.s32.totalorder %s21, 1
    %p65 = por %p63, %p64
    %p67 = scmp.ne.s32.totalorder %s52, %s66
    %p68 = scmp.eq.s32.totalorder %s21, 0
    %p69 = por %p67, %p68
    %s71 = sadd.s32 %s70, 1
    %p74 = scmp.eq.s32.totalorder %s15, 1
    %p75 = scmp.ne.s32.totalorder %s70, %s72
    %p76 = scmp.eq.s32.totalorder %s15, 0
    %p77 = por %p75, %p76
    %p78 = scmp.ne.s32.totalorder %s70, %s72
    %p79 = scmp.eq.s32.totalorder %s20, 1
    %p80 = por %p78, %p79
    %p81 = scmp.ne.s32.totalorder %s72, %s73
    %p82 = scmp.eq.s32.totalorder %s20, 0
    %p83 = por %p81, %p82
    %p84 = scmp.ne.s32.totalorder %s72, %s73
    %p85 = scmp.eq.s32.totalorder %s21, 1
    %p86 = por %p84, %p85
    %p88 = scmp.ne.s32.totalorder %s73, %s87
    %p89 = scmp.eq.s32.totalorder %s21, 0
    %p90 = por %p88, %p89
    %s92 = sadd.s32 %s91, 1
    %p95 = scmp.eq.s32.totalorder %s15, 1
    %p96 = scmp.ne.s32.totalorder %s91, %s93
    %p97 = scmp.eq.s32.totalorder %s15, 0
    %p98 = por %p96, %p97
    %p99 = scmp.ne.s32.totalorder %s91, %s93
    %p100 = scmp.eq.s32.totalorder %s20, 1
    %p101 = por %p99, %p100
    %p102 = scmp.ne.s32.totalorder %s93, %s94
    %p103 = scmp.eq.s32.totalorder %s20, 0
    %p104 = por %p102, %p103
    %p105 = scmp.ne.s32.totalorder %s93, %s94
    %p106 = scmp.eq.s32.totalorder %s21, 1
    %p107 = por %p105, %p106
    %p109 = scmp.ne.s32.totalorder %s94, %s108
    %p110 = scmp.eq.s32.totalorder %s21, 0
    %p111 = por %p109, %p110
    %s113 = sadd.s32 %s112, 1
    %p116 = scmp.eq.s32.totalorder %s15, 1
    %p117 = scmp.ne.s32.totalorder %s112, %s114
    %p118 = scmp.eq.s32.totalorder %s15, 0
    %p119 = por %p117, %p118
    %p120 = scmp.ne.s32.totalorder %s112, %s114
    %p121 = scmp.eq.s32.totalorder %s20, 1
    %p122 = por %p120, %p121
    %p123 = scmp.ne.s32.totalorder %s114, %s115
    %p124 = scmp.eq.s32.totalorder %s20, 0
    %p125 = por %p123, %p124
    %p126 = scmp.ne.s32.totalorder %s114, %s115
    %p127 = scmp.eq.s32.totalorder %s21, 1
    %p128 = por %p126, %p127
    %p130 = scmp.ne.s32.totalorder %s115, %s129
    %p131 = scmp.eq.s32.totalorder %s21, 0
    %p132 = por %p130, %p131
    %s134 = sadd.s32 %s133, 1
    %p137 = scmp.eq.s32.totalorder %s15, 1
    %p138 = scmp.ne.s32.totalorder %s133, %s135
    %p139 = scmp.eq.s32.totalorder %s15, 0
    %p140 = por %p138, %p139
    %p141 = scmp.ne.s32.totalorder %s133, %s135
    %p142 = scmp.eq.s32.totalorder %s20, 1
    %p143 = por %p141, %p142
    %p144 = scmp.ne.s32.totalorder %s135, %s136
    %p145 = scmp.eq.s32.totalorder %s20, 0
    %p146 = por %p144, %p145
    %p147 = scmp.ne.s32.totalorder %s135, %s136
    %p148 = scmp.eq.s32.totalorder %s21, 1
    %p149 = por %p147, %p148
    %p151 = scmp.ne.s32.totalorder %s136, %s150
    %p152 = scmp.eq.s32.totalorder %s21, 0
    %p153 = por %p151, %p152
    %s155 = sadd.s32 %s154, 1
    %p158 = scmp.eq.s32.totalorder %s15, 1
    %p159 = scmp.ne.s32.totalorder %s154, %s156
    %p160 = scmp.eq.s32.totalorder %s15, 0
    %p161 = por %p159, %p160
    %p162 = scmp.ne.s32.totalorder %s154, %s156
    %p163 = scmp.eq.s32.totalorder %s20, 1
    %p164 = por %p162, %p163
    %p165 = scmp.ne.s32.totalorder %s156, %s157
    %p166 = scmp.eq.s32.totalorder %s20, 0
    %p167 = por %p165, %p166
    %p168 = scmp.ne.s32.totalorder %s156, %s157
    %p169 = scmp.eq.s32.totalorder %s21, 1
    %p170 = por %p168, %p169
    %p172 = scmp.ne.s32.totalorder %s157, %s171
    %p173 = scmp.eq.s32.totalorder %s21, 0
    %p174 = por %p172, %p173
    %s176 = sadd.s32 %s175, 1
    %p179 = scmp.eq.s32.totalorder %s15, 1
    %p180 = scmp.ne.s32.totalorder %s175, %s177
    %p181 = scmp.eq.s32.totalorder %s15, 0
    %p182 = por %p180, %p181
    %p183 = scmp.ne.s32.totalorder %s175, %s177
    %p184 = scmp.eq.s32.totalorder %s20, 1
    %p185 = por %p183, %p184
    %p186 = scmp.ne.s32.totalorder %s177, %s178
    %p187 = scmp.eq.s32.totalorder %s20, 0
    %p188 = por %p186, %p187
    %p189 = scmp.ne.s32.totalorder %s177, %s178
    %p190 = scmp.eq.s32.totalorder %s21, 1
    %p191 = por %p189, %p190
    %p193 = scmp.ne.s32.totalorder %s178, %s192
    %p194 = scmp.eq.s32.totalorder %s21, 0
    %p195 = por %p193, %p194
    %s197 = sadd.s32 %s196, 1
    %p200 = scmp.eq.s32.totalorder %s15, 1
    %p201 = scmp.ne.s32.totalorder %s196, %s198
    %p202 = scmp.eq.s32.totalorder %s15, 0
    %p203 = por %p201, %p202
    %p204 = scmp.ne.s32.totalorder %s196, %s198
    %p205 = scmp.eq.s32.totalorder %s20, 1
    %p206 = por %p204, %p205
    %p207 = scmp.ne.s32.totalorder %s198, %s199
    %p208 = scmp.eq.s32.totalorder %s20, 0
    %p209 = por %p207, %p208
    %p210 = scmp.ne.s32.totalorder %s198, %s199
    %p211 = scmp.eq.s32.totalorder %s21, 1
    %p212 = por %p210, %p211
    %p214 = scmp.ne.s32.totalorder %s199, %s213
    %p215 = scmp.eq.s32.totalorder %s21, 0
    %p216 = por %p214, %p215
    %s217 = ssub.s32 %s15, %s22
    %p218 = scmp.eq.s32.totalorder %s217, 0
    %s220 = sadd.s32 %s219, 1
    %s221 = scalar_select %p218, %s219, %s220
    %p224 = pneg %p218
    %p225 = scmp.eq.s32.totalorder %s15, 1
    %p226 = por %p224, %p225
    %p227 = scmp.ne.s32.totalorder %s219, %s222
    %p228 = scmp.eq.s32.totalorder %s15, 0
    %p229 = por %p227, %p228
    %p230 = scmp.ne.s32.totalorder %s219, %s222
    %p231 = scmp.eq.s32.totalorder %s20, 1
    %p232 = por %p230, %p231
    %p233 = scmp.ne.s32.totalorder %s222, %s223
    %p234 = scmp.eq.s32.totalorder %s20, 0
    %p235 = por %p233, %p234
    %p236 = scmp.ne.s32.totalorder %s222, %s223
    %p237 = scmp.eq.s32.totalorder %s21, 1
    %p238 = por %p236, %p237
    %p240 = scmp.ne.s32.totalorder %s223, %s239
    %p241 = scmp.eq.s32.totalorder %s21, 0
    %p242 = por %p240, %p241
    %p243 = scmp.le.s32.totalorder 1, %s15
    %p244 = scmp.lt.s32.totalorder %s15, 3
    %p245 = pnand %p243, %p244
    %p246 = pneg %p245
    // Predicated region
    $region9: #{decoder_forward.3} parent=5 // pred_check
      _
    $region10: #{decoder_forward.3} parent=5 // pred_check_branch
      %248 = sbr.rel (%p245) target = $region12
    $region11: #{decoder_forward.3} parent=5 // pred_region
      %s249 = ssub.s32 %s15, 1
      // Predicated region
      $region13: #{decoder_forward.3} parent=11 // pred_check
        %p250 = pneg %p62
      $region14: #{decoder_forward.3} parent=11 // pred_check_branch
        %252 = sbr.rel (%p250) target = $region16
      $region15: #{decoder_forward.3} parent=11 // pred_region
        _
      $region16: #{decoder_forward.3} parent=11 // pred_fallthru
        _
      // Predicated region
      $region17: #{decoder_forward.3} parent=11 // pred_check
        %p253 = pneg %p83
      $region18: #{decoder_forward.3} parent=11 // pred_check_branch
        %255 = sbr.rel (%p253) target = $region20
      $region19: #{decoder_forward.3} parent=11 // pred_region
        _
      $region20: #{decoder_forward.3} parent=11 // pred_fallthru
        _
      // Predicated region
      $region21: #{decoder_forward.3} parent=11 // pred_check
        %p256 = pneg %p104
      $region22: #{decoder_forward.3} parent=11 // pred_check_branch
        %258 = sbr.rel (%p256) target = $region24
      $region23: #{decoder_forward.3} parent=11 // pred_region
        _
      $region24: #{decoder_forward.3} parent=11 // pred_fallthru
        _
      // Predicated region
      $region25: #{decoder_forward.3} parent=11 // pred_check
        %p259 = pneg %p125
      $region26: #{decoder_forward.3} parent=11 // pred_check_branch
        %261 = sbr.rel (%p259) target = $region28
      $region27: #{decoder_forward.3} parent=11 // pred_region
        _
      $region28: #{decoder_forward.3} parent=11 // pred_fallthru
        _
      // Predicated region
      $region29: #{decoder_forward.3} parent=11 // pred_check
        %p262 = pneg %p146
      $region30: #{decoder_forward.3} parent=11 // pred_check_branch
        %264 = sbr.rel (%p262) target = $region32
      $region31: #{decoder_forward.3} parent=11 // pred_region
        _
      $region32: #{decoder_forward.3} parent=11 // pred_fallthru
        _
      // Predicated region
      $region33: #{decoder_forward.3} parent=11 // pred_check
        %p265 = pneg %p167
      $region34: #{decoder_forward.3} parent=11 // pred_check_branch
        %267 = sbr.rel (%p265) target = $region36
      $region35: #{decoder_forward.3} parent=11 // pred_region
        _
      $region36: #{decoder_forward.3} parent=11 // pred_fallthru
        _
      // Predicated region
      $region37: #{decoder_forward.3} parent=11 // pred_check
        %p268 = pneg %p188
      $region38: #{decoder_forward.3} parent=11 // pred_check_branch
        %270 = sbr.rel (%p268) target = $region40
      $region39: #{decoder_forward.3} parent=11 // pred_region
        _
      $region40: #{decoder_forward.3} parent=11 // pred_fallthru
        _
      // Predicated region
      $region41: #{decoder_forward.3} parent=11 // pred_check
        %p271 = pneg %p209
      $region42: #{decoder_forward.3} parent=11 // pred_check_branch
        %273 = sbr.rel (%p271) target = $region44
      $region43: #{decoder_forward.3} parent=11 // pred_region
        _
      $region44: #{decoder_forward.3} parent=11 // pred_fallthru
        _
    $region12: #{decoder_forward.3} parent=5 // pred_fallthru
      _
    %p274 = scmp.lt.s32.totalorder %s15, 2
    // Predicated region
    $region45: #{decoder_forward.3} parent=5 // pred_check
      %p275 = pneg %p274
    $region46: #{decoder_forward.3} parent=5 // pred_check_branch
      %277 = sbr.rel (%p275) target = $region48
    $region47: #{decoder_forward.3} parent=5 // pred_region
      // Predicated region
      $region49: #{decoder_forward.3} parent=47 // pred_check
        %p278 = pneg %p35
      $region50: #{decoder_forward.3} parent=47 // pred_check_branch
        %280 = sbr.rel (%p278) target = $region52
      $region51: #{decoder_forward.3} parent=47 // pred_region
        %p281 = scmp.lt.s32.totalorder %s15, 1
        %s282 = scalar_select %p281, %s15, 1
        %s283 = smul.addr %s282, 8
        %s284 = scalar_lea.vmem %s0, %s283
      $region52: #{decoder_forward.3} parent=47 // pred_fallthru
        _
    $region48: #{decoder_forward.3} parent=5 // pred_fallthru
      _
    %p285 = scmp.le.s32.totalorder 1, %s15
    %p286 = scmp.lt.s32.totalorder %s15, 3
    %p287 = pnand %p285, %p286
    %p288 = pneg %p287
    // Predicated region
    $region53: #{decoder_forward.3} parent=5 // pred_check
      _
    $region54: #{decoder_forward.3} parent=5 // pred_check_branch
      %290 = sbr.rel (%p287) target = $region56
    $region55: #{decoder_forward.3} parent=5 // pred_region
      %s291 = ssub.s32 %s15, 1
      %p292 = scmp.lt.s32.totalorder %s20, 1
      %s293 = scalar_select %p292, %s20, 1
      %s294 = smul.addr %s293, 8
      %s295 = scalar_lea.vmem %s0, %s294
      %p296 = pneg %p41
      %p297 = pneg %p38
      %p298 = pneg %p62
      %p299 = pneg %p59
      %p300 = pneg %p83
      %p301 = pneg %p80
      %p302 = pneg %p104
      %p303 = pneg %p101
      %p304 = pneg %p125
      %p305 = pneg %p122
      %p306 = pneg %p146
      %p307 = pneg %p143
      %p308 = pneg %p167
      %p309 = pneg %p164
      %p310 = pneg %p188
      %p311 = pneg %p185
      %p312 = pneg %p209
      %p313 = pneg %p206
      %p314 = pneg %p235
      %p315 = pneg %p232
      %p316 = scmp.lt.s32.totalorder %s20, 1
      %s317 = scalar_select %p316, %s20, 1
      %s318 = smul.addr %s317, 8
      %s319 = scalar_lea.vmem %s9, %s318
      %p320 = scmp.lt.s32.totalorder %s20, 1
      %s321 = scalar_select %p320, %s20, 1
      %s322 = smul.addr %s321, 8
      %s323 = scalar_lea.vmem %s0, %s322
      %p324 = scmp.lt.s32.totalorder %s20, 1
      %s325 = scalar_select %p324, %s20, 1
      %s326 = smul.addr %s325, 8
      %s327 = scalar_lea.vmem %s9, %s326
      %vm329 = vcmask 261120
      %330 = vst.msk [vmem:[#allocation2] sm:$0xff] %vm329, 0.0
      %331 = vst.msk [vmem:[#allocation2 + $0x8] sm:$0xff] %vm329, 0.0
      %332 = vst.msk [vmem:[#allocation2 + $0x10] sm:$0xff] %vm329, 0.0
      %333 = vst.msk [vmem:[#allocation2 + $0x18] sm:$0xff] %vm329, 0.0
      %334 = vst.msk [vmem:[#allocation2 + $0x20] sm:$0xff] %vm329, 0.0
      %335 = vst.msk [vmem:[#allocation2 + $0x28] sm:$0xff] %vm329, 0.0
      %336 = vst.msk [vmem:[#allocation2 + $0x30] sm:$0xff] %vm329, 0.0
      %337 = vst.msk [vmem:[#allocation2 + $0x38] sm:$0xff] %vm329, 0.0
      %v338 = vld [vmem:[%s323] sm:$0xff]
      %v339 = vld [vmem:[%s1] sm:$0xf]
      %v340 = vld [vmem:[%s1 + $0x4] sm:$0xf]
      %v341 = vpack.c.bf16 %v338, %v338
      %v342 = vld [vmem:[%s2] sm:$0x1]
      %v344 = vlaneseq
      %v345 = vshrl.u32 %v344, 7
      %v346 = vsub.s32 0, %v345
      %v347 = vrot.slane %v342, %v346
      %v351 = vunpack.c.l.b16 %v339
      %v352 = vunpack.c.l.b16 %v340
      %v353 = vpack.c.b16 %v352, %v351
      %vm355 = vcmask 130048
      %v357 = vsel %vm355, %v341, 0
      %359 = vmatprep.subr.bf16.mxu0 0
      %360 = vmatpush1.bf16.msra.mxu0 0
      %361 = vmatprep.subr.bf16.mxu0 0
      %362 = vmatpush1.bf16.msra.mxu0 0
      %363 = vmatprep.subr.bf16.mxu0 0
      %364 = vmatpush1.bf16.msra.mxu0 0
      %365 = vmatprep.subr.bf16.mxu0 0
      %366 = vmatpush1.bf16.msra.mxu0 0
      %367 = vmatprep.subr.bf16.mxu0 0
      %368 = vmatpush1.bf16.msra.mxu0 0
      %369 = vmatprep.subr.bf16.mxu0 0
      %370 = vmatpush1.bf16.msra.mxu0 0
      %371 = vmatprep.subr.bf16.mxu0 0
      %372 = vmatpush1.bf16.msra.mxu0 0
      %373 = vmatprep.subr.bf16.mxu0 0
      %374 = vmatpush1.bf16.msra.mxu0 %v353
      %375 = vmatprep.subr.bf16.mxu0 0
      %376 = vmatpush2.bf16.msra.mxu0 0
      %377 = vmatprep.subr.bf16.mxu0 0
      %378 = vmatpush2.bf16.msra.mxu0 0
      %379 = vmatprep.subr.bf16.mxu0 0
      %380 = vmatpush2.bf16.msra.mxu0 0
      %381 = vmatprep.subr.bf16.mxu0 0
      %382 = vmatpush2.bf16.msra.mxu0 0
      %383 = vmatprep.subr.bf16.mxu0 0
      %384 = vmatpush2.bf16.msra.mxu0 0
      %385 = vmatprep.subr.bf16.mxu0 0
      %386 = vmatpush2.bf16.msra.mxu0 0
      %387 = vmatprep.subr.bf16.mxu0 0
      %388 = vmatpush2.bf16.msra.mxu0 0
      %389 = vmatprep.subr.bf16.mxu0 0
      %390 = vmatpush2.bf16.msra.mxu0 0
      %391 = vmatprep.mubr.bf16.mxu0 0
      %392 = vmatmul.mubr.bf16.gmra.mxu0 %v357
      %v393 = vpop.f32.mrf.mxu0
      %v394 = vadd.f32 %v347, %v393
      %v395 = vpop.f32.mrf.mxu0
      %v396 = vpop.f32.mrf.mxu0
      %v397 = vpop.f32.mrf.mxu0
      %398 = vdwg.mxu0
      %v399 = vmax.f32 %v394, 0.0
      %v400 = vld [vmem:[%s3] sm:$0xf]
      %v401 = vld [vmem:[%s3 + $0x4] sm:$0xf]
      %v402 = vld [vmem:[%s3 + $0x8] sm:$0xf]
      %v403 = vld [vmem:[%s3 + $0xc] sm:$0xf]
      %v404 = vpack.c.bf16 %v399, %v399
      %v405 = vld [vmem:[%s4] sm:$0x1]
      %v407 = vlaneseq
      %v408 = vshrl.u32 %v407, 7
      %v409 = vsub.s32 0, %v408
      %v410 = vrot.slane %v405, %v409
      %v416 = vunpack.c.l.b16 %v400
      %v417 = vunpack.c.l.b16 %v401
      %v418 = vunpack.c.l.b16 %v402
      %v419 = vunpack.c.l.b16 %v403
      %v420 = vpack.c.b16 %v417, %v416
      %v421 = vpack.c.b16 %v419, %v418
      %v425 = vsel %vm329, %v404, 0
      %427 = vmatprep.subr.bf16.mxu0 0
      %428 = vmatpush1.bf16.msra.mxu0 0
      %429 = vmatprep.subr.bf16.mxu0 0
      %430 = vmatpush1.bf16.msra.mxu0 0
      %431 = vmatprep.subr.bf16.mxu0 0
      %432 = vmatpush1.bf16.msra.mxu0 0
      %433 = vmatprep.subr.bf16.mxu0 0
      %434 = vmatpush1.bf16.msra.mxu0 0
      %435 = vmatprep.subr.bf16.mxu0 0
      %436 = vmatpush1.bf16.msra.mxu0 0
      %437 = vmatprep.subr.bf16.mxu0 0
      %438 = vmatpush1.bf16.msra.mxu0 0
      %439 = vmatprep.subr.bf16.mxu0 0
      %440 = vmatpush1.bf16.msra.mxu0 %v421
      %441 = vmatprep.subr.bf16.mxu0 0
      %442 = vmatpush1.bf16.msra.mxu0 %v420
      %443 = vmatprep.subr.bf16.mxu0 0
      %444 = vmatpush2.bf16.msra.mxu0 0
      %445 = vmatprep.subr.bf16.mxu0 0
      %446 = vmatpush2.bf16.msra.mxu0 0
      %447 = vmatprep.subr.bf16.mxu0 0
      %448 = vmatpush2.bf16.msra.mxu0 0
      %449 = vmatprep.subr.bf16.mxu0 0
      %450 = vmatpush2.bf16.msra.mxu0 0
      %451 = vmatprep.subr.bf16.mxu0 0
      %452 = vmatpush2.bf16.msra.mxu0 0
      %453 = vmatprep.subr.bf16.mxu0 0
      %454 = vmatpush2.bf16.msra.mxu0 0
      %455 = vmatprep.subr.bf16.mxu0 0
      %456 = vmatpush2.bf16.msra.mxu0 0
      %457 = vmatprep.subr.bf16.mxu0 0
      %458 = vmatpush2.bf16.msra.mxu0 0
      %459 = vmatprep.mubr.bf16.mxu0 0
      %460 = vmatmul.mubr.bf16.gmra.mxu0 %v425
      %v461 = vpop.f32.mrf.mxu0
      %v462 = vadd.f32 %v410, %v461
      %v463 = vpop.f32.mrf.mxu0
      %v464 = vpop.f32.mrf.mxu0
      %v465 = vpop.f32.mrf.mxu0
      %466 = vdwg.mxu0
      %v467 = vmax.f32 %v462, 0.0
      %v468 = vld [vmem:[%s5] sm:$0xf]
      %v469 = vld [vmem:[%s5 + $0x4] sm:$0xf]
      %v470 = vld [vmem:[%s5 + $0x8] sm:$0xf]
      %v471 = vld [vmem:[%s5 + $0xc] sm:$0xf]
      %v472 = vpack.c.bf16 %v467, %v467
      %v473 = vld [vmem:[%s6] sm:$0x1]
      %v475 = vlaneseq
      %v476 = vshrl.u32 %v475, 7
      %v477 = vsub.s32 0, %v476
      %v478 = vrot.slane %v473, %v477
      %v484 = vunpack.c.l.b16 %v468
      %v485 = vunpack.c.l.b16 %v469
      %v486 = vunpack.c.l.b16 %v470
      %v487 = vunpack.c.l.b16 %v471
      %v488 = vpack.c.b16 %v485, %v484
      %v489 = vpack.c.b16 %v487, %v486
      %v493 = vsel %vm329, %v472, 0
      %495 = vmatprep.subr.bf16.mxu0 0
      %496 = vmatpush1.bf16.msra.mxu0 0
      %497 = vmatprep.subr.bf16.mxu0 0
      %498 = vmatpush1.bf16.msra.mxu0 0
      %499 = vmatprep.subr.bf16.mxu0 0
      %500 = vmatpush1.bf16.msra.mxu0 0
      %501 = vmatprep.subr.bf16.mxu0 0
      %502 = vmatpush1.bf16.msra.mxu0 0
      %503 = vmatprep.subr.bf16.mxu0 0
      %504 = vmatpush1.bf16.msra.mxu0 0
      %505 = vmatprep.subr.bf16.mxu0 0
      %506 = vmatpush1.bf16.msra.mxu0 0
      %507 = vmatprep.subr.bf16.mxu0 0
      %508 = vmatpush1.bf16.msra.mxu0 %v489
      %509 = vmatprep.subr.bf16.mxu0 0
      %510 = vmatpush1.bf16.msra.mxu0 %v488
      %511 = vmatprep.subr.bf16.mxu0 0
      %512 = vmatpush2.bf16.msra.mxu0 0
      %513 = vmatprep.subr.bf16.mxu0 0
      %514 = vmatpush2.bf16.msra.mxu0 0
      %515 = vmatprep.subr.bf16.mxu0 0
      %516 = vmatpush2.bf16.msra.mxu0 0
      %517 = vmatprep.subr.bf16.mxu0 0
      %518 = vmatpush2.bf16.msra.mxu0 0
      %519 = vmatprep.subr.bf16.mxu0 0
      %520 = vmatpush2.bf16.msra.mxu0 0
      %521 = vmatprep.subr.bf16.mxu0 0
      %522 = vmatpush2.bf16.msra.mxu0 0
      %523 = vmatprep.subr.bf16.mxu0 0
      %524 = vmatpush2.bf16.msra.mxu0 0
      %525 = vmatprep.subr.bf16.mxu0 0
      %526 = vmatpush2.bf16.msra.mxu0 0
      %527 = vmatprep.mubr.bf16.mxu0 0
      %528 = vmatmul.mubr.bf16.gmra.mxu0 %v493
      %v529 = vpop.f32.mrf.mxu0
      %v530 = vadd.f32 %v478, %v529
      %v531 = vpop.f32.mrf.mxu0
      %v532 = vpop.f32.mrf.mxu0
      %v533 = vpop.f32.mrf.mxu0
      %534 = vdwg.mxu0
      %v535 = vld [vmem:[%s7] sm:$0xf]
      %v536 = vld [vmem:[%s7 + $0x4] sm:$0xf]
      %v537 = vld [vmem:[%s7 + $0x8] sm:$0xf]
      %v538 = vld [vmem:[%s7 + $0xc] sm:$0xf]
      %v539 = vld [vmem:[%s7 + $0x10] sm:$0xf]
      %v540 = vld [vmem:[%s7 + $0x14] sm:$0xf]
      %v541 = vld [vmem:[%s7 + $0x18] sm:$0xf]
      %v542 = vld [vmem:[%s7 + $0x1c] sm:$0xf]
      %v543 = vld [vmem:[%s7 + $0x20] sm:$0xf]
      %v544 = vld [vmem:[%s7 + $0x24] sm:$0xf]
      %v545 = vld [vmem:[%s7 + $0x28] sm:$0xf]
      %v546 = vld [vmem:[%s7 + $0x2c] sm:$0xf]
      %v547 = vld [vmem:[%s8] sm:$0x1]
      %548 = vst.msk [vmem:[#allocation2 + $0x38] sm:$0xff] %vm329, %v530
      %v549 = vld [vmem:[#allocation2 + $0x30] sm:$0xff]
      %v550 = vld [vmem:[#allocation2 + $0x38] sm:$0xff]
      %v551 = vpack.c.bf16 %v550, %v549
      %v553 = vshrl.u32 %v551, 16
      %v555 = vrot.slane %v553, 3
      %v556 = vshll.u32 %v551, 16
      %v558 = vrot.slane %v556, 4
      %v559 = vor.u32 %v555, %v558
      %v564 = vunpack.c.l.b16 %v539
      %v565 = vunpack.c.l.b16 %v540
      %v566 = vunpack.c.l.b16 %v541
      %v567 = vunpack.c.l.b16 %v542
      %v568 = vpack.c.b16 %v565, %v564
      %v569 = vpack.c.b16 %v567, %v566
      %v573 = vsel %vm329, %v559, 0
      %575 = vmatprep.subr.bf16.mxu0 0
      %576 = vmatpush1.bf16.msra.mxu0 0
      %577 = vmatprep.subr.bf16.mxu0 0
      %578 = vmatpush1.bf16.msra.mxu0 0
      %579 = vmatprep.subr.bf16.mxu0 0
      %580 = vmatpush1.bf16.msra.mxu0 0
      %581 = vmatprep.subr.bf16.mxu0 0
      %582 = vmatpush1.bf16.msra.mxu0 0
      %583 = vmatprep.subr.bf16.mxu0 0
      %584 = vmatpush1.bf16.msra.mxu0 0
      %585 = vmatprep.subr.bf16.mxu0 0
      %586 = vmatpush1.bf16.msra.mxu0 0
      %587 = vmatprep.subr.bf16.mxu0 0
      %588 = vmatpush1.bf16.msra.mxu0 %v569
      %589 = vmatprep.subr.bf16.mxu0 0
      %590 = vmatpush1.bf16.msra.mxu0 %v568
      %591 = vmatprep.subr.bf16.mxu0 0
      %592 = vmatpush2.bf16.msra.mxu0 0
      %593 = vmatprep.subr.bf16.mxu0 0
      %594 = vmatpush2.bf16.msra.mxu0 0
      %595 = vmatprep.subr.bf16.mxu0 0
      %596 = vmatpush2.bf16.msra.mxu0 0
      %597 = vmatprep.subr.bf16.mxu0 0
      %598 = vmatpush2.bf16.msra.mxu0 0
      %599 = vmatprep.subr.bf16.mxu0 0
      %600 = vmatpush2.bf16.msra.mxu0 0
      %601 = vmatprep.subr.bf16.mxu0 0
      %602 = vmatpush2.bf16.msra.mxu0 0
      %603 = vmatprep.subr.bf16.mxu0 0
      %604 = vmatpush2.bf16.msra.mxu0 0
      %605 = vmatprep.subr.bf16.mxu0 0
      %606 = vmatpush2.bf16.msra.mxu0 0
      %607 = vmatprep.mubr.bf16.mxu0 0
      %608 = vmatmul.mubr.bf16.gmra.mxu0 %v573
      %v609 = vpop.f32.mrf.mxu0
      %v610 = vadd.f32 0.0, %v609
      %v611 = vpop.f32.mrf.mxu0
      %v612 = vpop.f32.mrf.mxu0
      %v613 = vpop.f32.mrf.mxu0
      %614 = vdwg.mxu0
      %v616 = vrot.slane %v551, 3
      %v621 = vunpack.c.l.b16 %v535
      %v622 = vunpack.c.l.b16 %v536
      %v623 = vunpack.c.l.b16 %v537
      %v624 = vunpack.c.l.b16 %v538
      %v625 = vpack.c.b16 %v622, %v621
      %v626 = vpack.c.b16 %v624, %v623
      %v630 = vsel %vm329, %v616, 0
      %632 = vmatprep.subr.bf16.mxu0 0
      %633 = vmatpush1.bf16.msra.mxu0 0
      %634 = vmatprep.subr.bf16.mxu0 0
      %635 = vmatpush1.bf16.msra.mxu0 0
      %636 = vmatprep.subr.bf16.mxu0 0
      %637 = vmatpush1.bf16.msra.mxu0 0
      %638 = vmatprep.subr.bf16.mxu0 0
      %639 = vmatpush1.bf16.msra.mxu0 0
      %640 = vmatprep.subr.bf16.mxu0 0
      %641 = vmatpush1.bf16.msra.mxu0 0
      %642 = vmatprep.subr.bf16.mxu0 0
      %643 = vmatpush1.bf16.msra.mxu0 0
      %644 = vmatprep.subr.bf16.mxu0 0
      %645 = vmatpush1.bf16.msra.mxu0 %v626
      %646 = vmatprep.subr.bf16.mxu0 0
      %647 = vmatpush1.bf16.msra.mxu0 %v625
      %648 = vmatprep.subr.bf16.mxu0 0
      %649 = vmatpush2.bf16.msra.mxu0 0
      %650 = vmatprep.subr.bf16.mxu0 0
      %651 = vmatpush2.bf16.msra.mxu0 0
      %652 = vmatprep.subr.bf16.mxu0 0
      %653 = vmatpush2.bf16.msra.mxu0 0
      %654 = vmatprep.subr.bf16.mxu0 0
      %655 = vmatpush2.bf16.msra.mxu0 0
      %656 = vmatprep.subr.bf16.mxu0 0
      %657 = vmatpush2.bf16.msra.mxu0 0
      %658 = vmatprep.subr.bf16.mxu0 0
      %659 = vmatpush2.bf16.msra.mxu0 0
      %660 = vmatprep.subr.bf16.mxu0 0
      %661 = vmatpush2.bf16.msra.mxu0 0
      %662 = vmatprep.subr.bf16.mxu0 0
      %663 = vmatpush2.bf16.msra.mxu0 0
      %664 = vmatprep.mubr.bf16.mxu0 0
      %665 = vmatmul.mubr.bf16.gmra.mxu0 %v630
      %v666 = vpop.f32.mrf.mxu0
      %v667 = vadd.f32 %v610, %v666
      %v668 = vpop.f32.mrf.mxu0
      %v669 = vpop.f32.mrf.mxu0
      %v670 = vpop.f32.mrf.mxu0
      %671 = vdwg.mxu0
      %v672 = vpack.c.bf16 %v530, %v530
      %v677 = vunpack.c.l.b16 %v543
      %v678 = vunpack.c.l.b16 %v544
      %v679 = vunpack.c.l.b16 %v545
      %v680 = vunpack.c.l.b16 %v546
      %v681 = vpack.c.b16 %v678, %v677
      %v682 = vpack.c.b16 %v680, %v679
      %v686 = vsel %vm329, %v672, 0
      %688 = vmatprep.subr.bf16.mxu0 0
      %689 = vmatpush1.bf16.msra.mxu0 0
      %690 = vmatprep.subr.bf16.mxu0 0
      %691 = vmatpush1.bf16.msra.mxu0 0
      %692 = vmatprep.subr.bf16.mxu0 0
      %693 = vmatpush1.bf16.msra.mxu0 0
      %694 = vmatprep.subr.bf16.mxu0 0
      %695 = vmatpush1.bf16.msra.mxu0 0
      %696 = vmatprep.subr.bf16.mxu0 0
      %697 = vmatpush1.bf16.msra.mxu0 0
      %698 = vmatprep.subr.bf16.mxu0 0
      %699 = vmatpush1.bf16.msra.mxu0 0
      %700 = vmatprep.subr.bf16.mxu0 0
      %701 = vmatpush1.bf16.msra.mxu0 %v682
      %702 = vmatprep.subr.bf16.mxu0 0
      %703 = vmatpush1.bf16.msra.mxu0 %v681
      %704 = vmatprep.subr.bf16.mxu0 0
      %705 = vmatpush2.bf16.msra.mxu0 0
      %706 = vmatprep.subr.bf16.mxu0 0
      %707 = vmatpush2.bf16.msra.mxu0 0
      %708 = vmatprep.subr.bf16.mxu0 0
      %709 = vmatpush2.bf16.msra.mxu0 0
      %710 = vmatprep.subr.bf16.mxu0 0
      %711 = vmatpush2.bf16.msra.mxu0 0
      %712 = vmatprep.subr.bf16.mxu0 0
      %713 = vmatpush2.bf16.msra.mxu0 0
      %714 = vmatprep.subr.bf16.mxu0 0
      %715 = vmatpush2.bf16.msra.mxu0 0
      %716 = vmatprep.subr.bf16.mxu0 0
      %717 = vmatpush2.bf16.msra.mxu0 0
      %718 = vmatprep.subr.bf16.mxu0 0
      %719 = vmatpush2.bf16.msra.mxu0 0
      %720 = vmatprep.mubr.bf16.mxu0 0
      %721 = vmatmul.mubr.bf16.gmra.mxu0 %v686
      %v722 = vpop.f32.mrf.mxu0
      %v723 = vadd.f32 0.0, %v722
      %v724 = vpop.f32.mrf.mxu0
      %v725 = vpop.f32.mrf.mxu0
      %v726 = vpop.f32.mrf.mxu0
      %727 = vdwg.mxu0
      %v728 = vadd.f32 %v667, %v723
      %v730 = vlaneseq
      %v731 = vshrl.u32 %v730, 7
      %v732 = vsub.s32 0, %v731
      %v733 = vrot.slane %v547, %v732
      %v735 = vadd.f32 %v728, %v733
      %v736 = vxor.u32 %v735, 2147483648
      %v737 = vmul.f32 %v736, 1.442695
      %v738 = vpow.pop %v737
      %v739 = vadd.f32 %v738, 1.0
      %v740 = vrcp.pop %v739
      %v741 = vmul.f32 1.0, %v740
      %743 = vrot.lane.b32.xlu0 %v735, 32
      %v744 = vpop.permute.xlu0 %743
      %v746 = vmul.f32 %v741, %v744
      %v747 = vsub.f32 1.0, %v741
      %749 = vrot.lane.b32.xlu0 %v530, 32
      %v750 = vpop.permute.xlu0 %749
      %v752 = vmul.f32 %v747, %v750
      %v753 = vadd.f32 %v746, %v752
      %s754 = scalar_lea.vmem %s7, 48
      %v755 = vld [vmem:[%s754] sm:$0xf]
      %v756 = vld [vmem:[%s754 + $0x4] sm:$0xf]
      %v757 = vld [vmem:[%s754 + $0x8] sm:$0xf]
      %v758 = vld [vmem:[%s754 + $0xc] sm:$0xf]
      %v759 = vld [vmem:[%s754 + $0x10] sm:$0xf]
      %v760 = vld [vmem:[%s754 + $0x14] sm:$0xf]
      %v761 = vld [vmem:[%s754 + $0x18] sm:$0xf]
      %v762 = vld [vmem:[%s754 + $0x1c] sm:$0xf]
      %v763 = vld [vmem:[%s754 + $0x20] sm:$0xf]
      %v764 = vld [vmem:[%s754 + $0x24] sm:$0xf]
      %v765 = vld [vmem:[%s754 + $0x28] sm:$0xf]
      %v766 = vld [vmem:[%s754 + $0x2c] sm:$0xf]
      %s767 = scalar_lea.vmem %s8, 1
      %v768 = vld [vmem:[%s767] sm:$0x1]
      %770 = vrot.lane.b32.xlu0 %v753, 96
      %v771 = vpop.permute.xlu0 %770
      %773 = vst.msk [vmem:[#allocation2 + $0x38] sm:$0xff] %vm329, %v771
      %v774 = vld [vmem:[#allocation2 + $0x30] sm:$0xff]
      %v775 = vld [vmem:[#allocation2 + $0x38] sm:$0xff]
      %v776 = vpack.c.bf16 %v775, %v774
      %v778 = vshrl.u32 %v776, 16
      %v780 = vrot.slane %v778, 2
      %v781 = vshll.u32 %v776, 16
      %v783 = vrot.slane %v781, 3
      %v784 = vor.u32 %v780, %v783
      %v789 = vunpack.c.l.b16 %v759
      %v790 = vunpack.c.l.b16 %v760
      %v791 = vunpack.c.l.b16 %v761
      %v792 = vunpack.c.l.b16 %v762
      %v793 = vpack.c.b16 %v790, %v789
      %v794 = vpack.c.b16 %v792, %v791
      %v798 = vsel %vm329, %v784, 0
      %800 = vmatprep.subr.bf16.mxu0 0
      %801 = vmatpush1.bf16.msra.mxu0 0
      %802 = vmatprep.subr.bf16.mxu0 0
      %803 = vmatpush1.bf16.msra.mxu0 0
      %804 = vmatprep.subr.bf16.mxu0 0
      %805 = vmatpush1.bf16.msra.mxu0 0
      %806 = vmatprep.subr.bf16.mxu0 0
      %807 = vmatpush1.bf16.msra.mxu0 0
      %808 = vmatprep.subr.bf16.mxu0 0
      %809 = vmatpush1.bf16.msra.mxu0 0
      %810 = vmatprep.subr.bf16.mxu0 0
      %811 = vmatpush1.bf16.msra.mxu0 0
      %812 = vmatprep.subr.bf16.mxu0 0
      %813 = vmatpush1.bf16.msra.mxu0 %v794
      %814 = vmatprep.subr.bf16.mxu0 0
      %815 = vmatpush1.bf16.msra.mxu0 %v793
      %816 = vmatprep.subr.bf16.mxu0 0
      %817 = vmatpush2.bf16.msra.mxu0 0
      %818 = vmatprep.subr.bf16.mxu0 0
      %819 = vmatpush2.bf16.msra.mxu0 0
      %820 = vmatprep.subr.bf16.mxu0 0
      %821 = vmatpush2.bf16.msra.mxu0 0
      %822 = vmatprep.subr.bf16.mxu0 0
      %823 = vmatpush2.bf16.msra.mxu0 0
      %824 = vmatprep.subr.bf16.mxu0 0
      %825 = vmatpush2.bf16.msra.mxu0 0
      %826 = vmatprep.subr.bf16.mxu0 0
      %827 = vmatpush2.bf16.msra.mxu0 0
      %828 = vmatprep.subr.bf16.mxu0 0
      %829 = vmatpush2.bf16.msra.mxu0 0
      %830 = vmatprep.subr.bf16.mxu0 0
      %831 = vmatpush2.bf16.msra.mxu0 0
      %832 = vmatprep.mubr.bf16.mxu0 0
      %833 = vmatmul.mubr.bf16.gmra.mxu0 %v798
      %v834 = vpop.f32.mrf.mxu0
      %v835 = vadd.f32 0.0, %v834
      %v836 = vpop.f32.mrf.mxu0
      %v837 = vpop.f32.mrf.mxu0
      %v838 = vpop.f32.mrf.mxu0
      %839 = vdwg.mxu0
      %v841 = vrot.slane %v776, 1
      %v846 = vunpack.c.l.b16 %v755
      %v847 = vunpack.c.l.b16 %v756
      %v848 = vunpack.c.l.b16 %v757
      %v849 = vunpack.c.l.b16 %v758
      %v850 = vpack.c.b16 %v847, %v846
      %v851 = vpack.c.b16 %v849, %v848
      %v855 = vsel %vm329, %v841, 0
      %857 = vmatprep.subr.bf16.mxu0 0
      %858 = vmatpush1.bf16.msra.mxu0 0
      %859 = vmatprep.subr.bf16.mxu0 0
      %860 = vmatpush1.bf16.msra.mxu0 0
      %861 = vmatprep.subr.bf16.mxu0 0
      %862 = vmatpush1.bf16.msra.mxu0 0
      %863 = vmatprep.subr.bf16.mxu0 0
      %864 = vmatpush1.bf16.msra.mxu0 0
      %865 = vmatprep.subr.bf16.mxu0 0
      %866 = vmatpush1.bf16.msra.mxu0 0
      %867 = vmatprep.subr.bf16.mxu0 0
      %868 = vmatpush1.bf16.msra.mxu0 0
      %869 = vmatprep.subr.bf16.mxu0 0
      %870 = vmatpush1.bf16.msra.mxu0 %v851
      %871 = vmatprep.subr.bf16.mxu0 0
      %872 = vmatpush1.bf16.msra.mxu0 %v850
      %873 = vmatprep.subr.bf16.mxu0 0
      %874 = vmatpush2.bf16.msra.mxu0 0
      %875 = vmatprep.subr.bf16.mxu0 0
      %876 = vmatpush2.bf16.msra.mxu0 0
      %877 = vmatprep.subr.bf16.mxu0 0
      %878 = vmatpush2.bf16.msra.mxu0 0
      %879 = vmatprep.subr.bf16.mxu0 0
      %880 = vmatpush2.bf16.msra.mxu0 0
      %881 = vmatprep.subr.bf16.mxu0 0
      %882 = vmatpush2.bf16.msra.mxu0 0
      %883 = vmatprep.subr.bf16.mxu0 0
      %884 = vmatpush2.bf16.msra.mxu0 0
      %885 = vmatprep.subr.bf16.mxu0 0
      %886 = vmatpush2.bf16.msra.mxu0 0
      %887 = vmatprep.subr.bf16.mxu0 0
      %888 = vmatpush2.bf16.msra.mxu0 0
      %889 = vmatprep.mubr.bf16.mxu0 0
      %890 = vmatmul.mubr.bf16.gmra.mxu0 %v855
      %v891 = vpop.f32.mrf.mxu0
      %v892 = vadd.f32 %v835, %v891
      %v893 = vpop.f32.mrf.mxu0
      %v894 = vpop.f32.mrf.mxu0
      %v895 = vpop.f32.mrf.mxu0
      %896 = vdwg.mxu0
      %v897 = vpack.c.bf16 %v753, %v753
      %899 = vrot.lane.b32.xlu0 %v897, 96
      %v900 = vpop.permute.xlu0 %899
      %v905 = vunpack.c.l.b16 %v763
      %v906 = vunpack.c.l.b16 %v764
      %v907 = vunpack.c.l.b16 %v765
      %v908 = vunpack.c.l.b16 %v766
      %v909 = vpack.c.b16 %v906, %v905
      %v910 = vpack.c.b16 %v908, %v907
      %v914 = vsel %vm329, %v900, 0
      %916 = vmatprep.subr.bf16.mxu0 0
      %917 = vmatpush1.bf16.msra.mxu0 0
      %918 = vmatprep.subr.bf16.mxu0 0
      %919 = vmatpush1.bf16.msra.mxu0 0
      %920 = vmatprep.subr.bf16.mxu0 0
      %921 = vmatpush1.bf16.msra.mxu0 0
      %922 = vmatprep.subr.bf16.mxu0 0
      %923 = vmatpush1.bf16.msra.mxu0 0
      %924 = vmatprep.subr.bf16.mxu0 0
      %925 = vmatpush1.bf16.msra.mxu0 0
      %926 = vmatprep.subr.bf16.mxu0 0
      %927 = vmatpush1.bf16.msra.mxu0 0
      %928 = vmatprep.subr.bf16.mxu0 0
      %929 = vmatpush1.bf16.msra.mxu0 %v910
      %930 = vmatprep.subr.bf16.mxu0 0
      %931 = vmatpush1.bf16.msra.mxu0 %v909
      %932 = vmatprep.subr.bf16.mxu0 0
      %933 = vmatpush2.bf16.msra.mxu0 0
      %934 = vmatprep.subr.bf16.mxu0 0
      %935 = vmatpush2.bf16.msra.mxu0 0
      %936 = vmatprep.subr.bf16.mxu0 0
      %937 = vmatpush2.bf16.msra.mxu0 0
      %938 = vmatprep.subr.bf16.mxu0 0
      %939 = vmatpush2.bf16.msra.mxu0 0
      %940 = vmatprep.subr.bf16.mxu0 0
      %941 = vmatpush2.bf16.msra.mxu0 0
      %942 = vmatprep.subr.bf16.mxu0 0
      %943 = vmatpush2.bf16.msra.mxu0 0
      %944 = vmatprep.subr.bf16.mxu0 0
      %945 = vmatpush2.bf16.msra.mxu0 0
      %946 = vmatprep.subr.bf16.mxu0 0
      %947 = vmatpush2.bf16.msra.mxu0 0
      %948 = vmatprep.mubr.bf16.mxu0 0
      %949 = vmatmul.mubr.bf16.gmra.mxu0 %v914
      %v950 = vpop.f32.mrf.mxu0
      %v951 = vadd.f32 0.0, %v950
      %v952 = vpop.f32.mrf.mxu0
      %v953 = vpop.f32.mrf.mxu0
      %v954 = vpop.f32.mrf.mxu0
      %955 = vdwg.mxu0
      %v956 = vadd.f32 %v892, %v951
      %v958 = vlaneseq
      %v959 = vshrl.u32 %v958, 7
      %v960 = vsub.s32 0, %v959
      %v961 = vrot.slane %v768, %v960
      %v963 = vadd.f32 %v956, %v961
      %v964 = vxor.u32 %v963, 2147483648
      %v965 = vmul.f32 %v964, 1.442695
      %v966 = vpow.pop %v965
      %v967 = vadd.f32 %v966, 1.0
      %v968 = vrcp.pop %v967
      %v969 = vmul.f32 1.0, %v968
      %971 = vrot.lane.b32.xlu0 %v963, 32
      %v972 = vpop.permute.xlu0 %971
      %v974 = vmul.f32 %v969, %v972
      %v975 = vsub.f32 1.0, %v969
      %v976 = vmul.f32 %v975, %v753
      %v977 = vadd.f32 %v974, %v976
      %s978 = scalar_lea.vmem %s7, 96
      %v979 = vld [vmem:[%s978 + $0x20] sm:$0xf]
      %v980 = vld [vmem:[%s978 + $0x24] sm:$0xf]
      %v981 = vld [vmem:[%s978 + $0x28] sm:$0xf]
      %v982 = vld [vmem:[%s978 + $0x2c] sm:$0xf]
      %s983 = scalar_lea.vmem %s8, 2
      %v984 = vld [vmem:[%s983] sm:$0x1]
      %v985 = vpack.c.bf16 %v977, %v977
      %v987 = vlaneseq
      %v988 = vshrl.u32 %v987, 7
      %v989 = vsub.s32 0, %v988
      %v990 = vrot.slane %v984, %v989
      %993 = vrot.lane.b32.xlu0 %v985, 96
      %v994 = vpop.permute.xlu0 %993
      %v999 = vunpack.c.l.b16 %v979
      %v1000 = vunpack.c.l.b16 %v980
      %v1001 = vunpack.c.l.b16 %v981
      %v1002 = vunpack.c.l.b16 %v982
      %v1003 = vpack.c.b16 %v1000, %v999
      %v1004 = vpack.c.b16 %v1002, %v1001
      %v1008 = vsel %vm329, %v994, 0
      %1010 = vmatprep.subr.bf16.mxu0 0
      %1011 = vmatpush1.bf16.msra.mxu0 0
      %1012 = vmatprep.subr.bf16.mxu0 0
      %1013 = vmatpush1.bf16.msra.mxu0 0
      %1014 = vmatprep.subr.bf16.mxu0 0
      %1015 = vmatpush1.bf16.msra.mxu0 0
      %1016 = vmatprep.subr.bf16.mxu0 0
      %1017 = vmatpush1.bf16.msra.mxu0 0
      %1018 = vmatprep.subr.bf16.mxu0 0
      %1019 = vmatpush1.bf16.msra.mxu0 0
      %1020 = vmatprep.subr.bf16.mxu0 0
      %1021 = vmatpush1.bf16.msra.mxu0 0
      %1022 = vmatprep.subr.bf16.mxu0 0
      %1023 = vmatpush1.bf16.msra.mxu0 %v1004
      %1024 = vmatprep.subr.bf16.mxu0 0
      %1025 = vmatpush1.bf16.msra.mxu0 %v1003
      %1026 = vmatprep.subr.bf16.mxu0 0
      %1027 = vmatpush2.bf16.msra.mxu0 0
      %1028 = vmatprep.subr.bf16.mxu0 0
      %1029 = vmatpush2.bf16.msra.mxu0 0
      %1030 = vmatprep.subr.bf16.mxu0 0
      %1031 = vmatpush2.bf16.msra.mxu0 0
      %1032 = vmatprep.subr.bf16.mxu0 0
      %1033 = vmatpush2.bf16.msra.mxu0 0
      %1034 = vmatprep.subr.bf16.mxu0 0
      %1035 = vmatpush2.bf16.msra.mxu0 0
      %1036 = vmatprep.subr.bf16.mxu0 0
      %1037 = vmatpush2.bf16.msra.mxu0 0
      %1038 = vmatprep.subr.bf16.mxu0 0
      %1039 = vmatpush2.bf16.msra.mxu0 0
      %1040 = vmatprep.subr.bf16.mxu0 0
      %1041 = vmatpush2.bf16.msra.mxu0 0
      %1042 = vmatprep.mubr.bf16.mxu0 0
      %1043 = vmatmul.mubr.bf16.gmra.mxu0 %v1008
      %v1044 = vpop.f32.mrf.mxu0
      %v1045 = vadd.f32 %v990, %v1044
      %v1046 = vpop.f32.mrf.mxu0
      %v1047 = vpop.f32.mrf.mxu0
      %v1048 = vpop.f32.mrf.mxu0
      %1049 = vdwg.mxu0
      %v1050 = vxor.u32 %v1045, 2147483648
      %v1051 = vmul.f32 %v1050, 1.442695
      %v1052 = vpow.pop %v1051
      %v1053 = vadd.f32 %v1052, 1.0
      %v1054 = vrcp.pop %v1053
      %v1055 = vmul.f32 1.0, %v1054
      %1057 = vrot.lane.b32.xlu0 %v1045, 32
      %v1058 = vpop.permute.xlu0 %1057
      %v1060 = vmul.f32 %v1055, %v1058
      %v1061 = vsub.f32 1.0, %v1055
      %v1062 = vmul.f32 %v1061, %v977
      %v1063 = vadd.f32 %v1060, %v1062
      %s1064 = scalar_lea.vmem %s7, 144
      %v1065 = vld [vmem:[%s1064 + $0x20] sm:$0xf]
      %v1066 = vld [vmem:[%s1064 + $0x24] sm:$0xf]
      %v1067 = vld [vmem:[%s1064 + $0x28] sm:$0xf]
      %v1068 = vld [vmem:[%s1064 + $0x2c] sm:$0xf]
      %s1069 = scalar_lea.vmem %s8, 3
      %v1070 = vld [vmem:[%s1069] sm:$0x1]
      %v1071 = vpack.c.bf16 %v1063, %v1063
      %v1073 = vlaneseq
      %v1074 = vshrl.u32 %v1073, 7
      %v1075 = vsub.s32 0, %v1074
      %v1076 = vrot.slane %v1070, %v1075
      %1079 = vrot.lane.b32.xlu0 %v1071, 96
      %v1080 = vpop.permute.xlu0 %1079
      %v1085 = vunpack.c.l.b16 %v1065
      %v1086 = vunpack.c.l.b16 %v1066
      %v1087 = vunpack.c.l.b16 %v1067
      %v1088 = vunpack.c.l.b16 %v1068
      %v1089 = vpack.c.b16 %v1086, %v1085
      %v1090 = vpack.c.b16 %v1088, %v1087
      %v1094 = vsel %vm329, %v1080, 0
      %1096 = vmatprep.subr.bf16.mxu0 0
      %1097 = vmatpush1.bf16.msra.mxu0 0
      %1098 = vmatprep.subr.bf16.mxu0 0
      %1099 = vmatpush1.bf16.msra.mxu0 0
      %1100 = vmatprep.subr.bf16.mxu0 0
      %1101 = vmatpush1.bf16.msra.mxu0 0
      %1102 = vmatprep.subr.bf16.mxu0 0
      %1103 = vmatpush1.bf16.msra.mxu0 0
      %1104 = vmatprep.subr.bf16.mxu0 0
      %1105 = vmatpush1.bf16.msra.mxu0 0
      %1106 = vmatprep.subr.bf16.mxu0 0
      %1107 = vmatpush1.bf16.msra.mxu0 0
      %1108 = vmatprep.subr.bf16.mxu0 0
      %1109 = vmatpush1.bf16.msra.mxu0 %v1090
      %1110 = vmatprep.subr.bf16.mxu0 0
      %1111 = vmatpush1.bf16.msra.mxu0 %v1089
      %1112 = vmatprep.subr.bf16.mxu0 0
      %1113 = vmatpush2.bf16.msra.mxu0 0
      %1114 = vmatprep.subr.bf16.mxu0 0
      %1115 = vmatpush2.bf16.msra.mxu0 0
      %1116 = vmatprep.subr.bf16.mxu0 0
      %1117 = vmatpush2.bf16.msra.mxu0 0
      %1118 = vmatprep.subr.bf16.mxu0 0
      %1119 = vmatpush2.bf16.msra.mxu0 0
      %1120 = vmatprep.subr.bf16.mxu0 0
      %1121 = vmatpush2.bf16.msra.mxu0 0
      %1122 = vmatprep.subr.bf16.mxu0 0
      %1123 = vmatpush2.bf16.msra.mxu0 0
      %1124 = vmatprep.subr.bf16.mxu0 0
      %1125 = vmatpush2.bf16.msra.mxu0 0
      %1126 = vmatprep.subr.bf16.mxu0 0
      %1127 = vmatpush2.bf16.msra.mxu0 0
      %1128 = vmatprep.mubr.bf16.mxu0 0
      %1129 = vmatmul.mubr.bf16.gmra.mxu0 %v1094
      %v1130 = vpop.f32.mrf.mxu0
      %v1131 = vadd.f32 %v1076, %v1130
      %v1132 = vpop.f32.mrf.mxu0
      %v1133 = vpop.f32.mrf.mxu0
      %v1134 = vpop.f32.mrf.mxu0
      %1135 = vdwg.mxu0
      %v1136 = vxor.u32 %v1131, 2147483648
      %v1137 = vmul.f32 %v1136, 1.442695
      %v1138 = vpow.pop %v1137
      %v1139 = vadd.f32 %v1138, 1.0
      %v1140 = vrcp.pop %v1139
      %v1141 = vmul.f32 1.0, %v1140
      %1143 = vrot.lane.b32.xlu0 %v1131, 32
      %v1144 = vpop.permute.xlu0 %1143
      %v1146 = vmul.f32 %v1141, %v1144
      %v1147 = vsub.f32 1.0, %v1141
      %v1148 = vmul.f32 %v1147, %v1063
      %v1149 = vadd.f32 %v1146, %v1148
      %s1150 = scalar_lea.vmem %s7, 192
      %v1151 = vld [vmem:[%s1150] sm:$0xf]
      %v1152 = vld [vmem:[%s1150 + $0x4] sm:$0xf]
      %v1153 = vld [vmem:[%s1150 + $0x8] sm:$0xf]
      %v1154 = vld [vmem:[%s1150 + $0xc] sm:$0xf]
      %v1155 = vld [vmem:[%s1150 + $0x10] sm:$0xf]
      %v1156 = vld [vmem:[%s1150 + $0x14] sm:$0xf]
      %v1157 = vld [vmem:[%s1150 + $0x18] sm:$0xf]
      %v1158 = vld [vmem:[%s1150 + $0x1c] sm:$0xf]
      %v1159 = vld [vmem:[%s1150 + $0x20] sm:$0xf]
      %v1160 = vld [vmem:[%s1150 + $0x24] sm:$0xf]
      %v1161 = vld [vmem:[%s1150 + $0x28] sm:$0xf]
      %v1162 = vld [vmem:[%s1150 + $0x2c] sm:$0xf]
      %s1163 = scalar_lea.vmem %s8, 4
      %v1164 = vld [vmem:[%s1163] sm:$0x1]
      %1166 = vrot.lane.b32.xlu0 %v1149, 96
      %v1167 = vpop.permute.xlu0 %1166
      %1169 = vst.msk [vmem:[#allocation2 + $0x38] sm:$0xff] %vm329, %v1167
      %v1170 = vld [vmem:[#allocation2 + $0x30] sm:$0xff]
      %v1171 = vld [vmem:[#allocation2 + $0x38] sm:$0xff]
      %v1172 = vpack.c.bf16 %v1171, %v1170
      %v1174 = vshrl.u32 %v1172, 16
      %v1176 = vrot.slane %v1174, 3
      %v1177 = vshll.u32 %v1172, 16
      %v1179 = vrot.slane %v1177, 4
      %v1180 = vor.u32 %v1176, %v1179
      %v1185 = vunpack.c.l.b16 %v1155
      %v1186 = vunpack.c.l.b16 %v1156
      %v1187 = vunpack.c.l.b16 %v1157
      %v1188 = vunpack.c.l.b16 %v1158
      %v1189 = vpack.c.b16 %v1186, %v1185
      %v1190 = vpack.c.b16 %v1188, %v1187
      %v1194 = vsel %vm329, %v1180, 0
      %1196 = vmatprep.subr.bf16.mxu0 0
      %1197 = vmatpush1.bf16.msra.mxu0 0
      %1198 = vmatprep.subr.bf16.mxu0 0
      %1199 = vmatpush1.bf16.msra.mxu0 0
      %1200 = vmatprep.subr.bf16.mxu0 0
      %1201 = vmatpush1.bf16.msra.mxu0 0
      %1202 = vmatprep.subr.bf16.mxu0 0
      %1203 = vmatpush1.bf16.msra.mxu0 0
      %1204 = vmatprep.subr.bf16.mxu0 0
      %1205 = vmatpush1.bf16.msra.mxu0 0
      %1206 = vmatprep.subr.bf16.mxu0 0
      %1207 = vmatpush1.bf16.msra.mxu0 0
      %1208 = vmatprep.subr.bf16.mxu0 0
      %1209 = vmatpush1.bf16.msra.mxu0 %v1190
      %1210 = vmatprep.subr.bf16.mxu0 0
      %1211 = vmatpush1.bf16.msra.mxu0 %v1189
      %1212 = vmatprep.subr.bf16.mxu0 0
      %1213 = vmatpush2.bf16.msra.mxu0 0
      %1214 = vmatprep.subr.bf16.mxu0 0
      %1215 = vmatpush2.bf16.msra.mxu0 0
      %1216 = vmatprep.subr.bf16.mxu0 0
      %1217 = vmatpush2.bf16.msra.mxu0 0
      %1218 = vmatprep.subr.bf16.mxu0 0
      %1219 = vmatpush2.bf16.msra.mxu0 0
      %1220 = vmatprep.subr.bf16.mxu0 0
      %1221 = vmatpush2.bf16.msra.mxu0 0
      %1222 = vmatprep.subr.bf16.mxu0 0
      %1223 = vmatpush2.bf16.msra.mxu0 0
      %1224 = vmatprep.subr.bf16.mxu0 0
      %1225 = vmatpush2.bf16.msra.mxu0 0
      %1226 = vmatprep.subr.bf16.mxu0 0
      %1227 = vmatpush2.bf16.msra.mxu0 0
      %1228 = vmatprep.mubr.bf16.mxu0 0
      %1229 = vmatmul.mubr.bf16.gmra.mxu0 %v1194
      %v1230 = vpop.f32.mrf.mxu0
      %v1231 = vadd.f32 0.0, %v1230
      %v1232 = vpop.f32.mrf.mxu0
      %v1233 = vpop.f32.mrf.mxu0
      %v1234 = vpop.f32.mrf.mxu0
      %1235 = vdwg.mxu0
      %v1237 = vrot.slane %v1172, 3
      %v1242 = vunpack.c.l.b16 %v1151
      %v1243 = vunpack.c.l.b16 %v1152
      %v1244 = vunpack.c.l.b16 %v1153
      %v1245 = vunpack.c.l.b16 %v1154
      %v1246 = vpack.c.b16 %v1243, %v1242
      %v1247 = vpack.c.b16 %v1245, %v1244
      %v1251 = vsel %vm329, %v1237, 0
      %1253 = vmatprep.subr.bf16.mxu0 0
      %1254 = vmatpush1.bf16.msra.mxu0 0
      %1255 = vmatprep.subr.bf16.mxu0 0
      %1256 = vmatpush1.bf16.msra.mxu0 0
      %1257 = vmatprep.subr.bf16.mxu0 0
      %1258 = vmatpush1.bf16.msra.mxu0 0
      %1259 = vmatprep.subr.bf16.mxu0 0
      %1260 = vmatpush1.bf16.msra.mxu0 0
      %1261 = vmatprep.subr.bf16.mxu0 0
      %1262 = vmatpush1.bf16.msra.mxu0 0
      %1263 = vmatprep.subr.bf16.mxu0 0
      %1264 = vmatpush1.bf16.msra.mxu0 0
      %1265 = vmatprep.subr.bf16.mxu0 0
      %1266 = vmatpush1.bf16.msra.mxu0 %v1247
      %1267 = vmatprep.subr.bf16.mxu0 0
      %1268 = vmatpush1.bf16.msra.mxu0 %v1246
      %1269 = vmatprep.subr.bf16.mxu0 0
      %1270 = vmatpush2.bf16.msra.mxu0 0
      %1271 = vmatprep.subr.bf16.mxu0 0
      %1272 = vmatpush2.bf16.msra.mxu0 0
      %1273 = vmatprep.subr.bf16.mxu0 0
      %1274 = vmatpush2.bf16.msra.mxu0 0
      %1275 = vmatprep.subr.bf16.mxu0 0
      %1276 = vmatpush2.bf16.msra.mxu0 0
      %1277 = vmatprep.subr.bf16.mxu0 0
      %1278 = vmatpush2.bf16.msra.mxu0 0
      %1279 = vmatprep.subr.bf16.mxu0 0
      %1280 = vmatpush2.bf16.msra.mxu0 0
      %1281 = vmatprep.subr.bf16.mxu0 0
      %1282 = vmatpush2.bf16.msra.mxu0 0
      %1283 = vmatprep.subr.bf16.mxu0 0
      %1284 = vmatpush2.bf16.msra.mxu0 0
      %1285 = vmatprep.mubr.bf16.mxu0 0
      %1286 = vmatmul.mubr.bf16.gmra.mxu0 %v1251
      %v1287 = vpop.f32.mrf.mxu0
      %v1288 = vadd.f32 %v1231, %v1287
      %v1289 = vpop.f32.mrf.mxu0
      %v1290 = vpop.f32.mrf.mxu0
      %v1291 = vpop.f32.mrf.mxu0
      %1292 = vdwg.mxu0
      %v1293 = vpack.c.bf16 %v1149, %v1149
      %1295 = vrot.lane.b32.xlu0 %v1293, 96
      %v1296 = vpop.permute.xlu0 %1295
      %v1301 = vunpack.c.l.b16 %v1159
      %v1302 = vunpack.c.l.b16 %v1160
      %v1303 = vunpack.c.l.b16 %v1161
      %v1304 = vunpack.c.l.b16 %v1162
      %v1305 = vpack.c.b16 %v1302, %v1301
      %v1306 = vpack.c.b16 %v1304, %v1303
      %v1310 = vsel %vm329, %v1296, 0
      %1312 = vmatprep.subr.bf16.mxu0 0
      %1313 = vmatpush1.bf16.msra.mxu0 0
      %1314 = vmatprep.subr.bf16.mxu0 0
      %1315 = vmatpush1.bf16.msra.mxu0 0
      %1316 = vmatprep.subr.bf16.mxu0 0
      %1317 = vmatpush1.bf16.msra.mxu0 0
      %1318 = vmatprep.subr.bf16.mxu0 0
      %1319 = vmatpush1.bf16.msra.mxu0 0
      %1320 = vmatprep.subr.bf16.mxu0 0
      %1321 = vmatpush1.bf16.msra.mxu0 0
      %1322 = vmatprep.subr.bf16.mxu0 0
      %1323 = vmatpush1.bf16.msra.mxu0 0
      %1324 = vmatprep.subr.bf16.mxu0 0
      %1325 = vmatpush1.bf16.msra.mxu0 %v1306
      %1326 = vmatprep.subr.bf16.mxu0 0
      %1327 = vmatpush1.bf16.msra.mxu0 %v1305
      %1328 = vmatprep.subr.bf16.mxu0 0
      %1329 = vmatpush2.bf16.msra.mxu0 0
      %1330 = vmatprep.subr.bf16.mxu0 0
      %1331 = vmatpush2.bf16.msra.mxu0 0
      %1332 = vmatprep.subr.bf16.mxu0 0
      %1333 = vmatpush2.bf16.msra.mxu0 0
      %1334 = vmatprep.subr.bf16.mxu0 0
      %1335 = vmatpush2.bf16.msra.mxu0 0
      %1336 = vmatprep.subr.bf16.mxu0 0
      %1337 = vmatpush2.bf16.msra.mxu0 0
      %1338 = vmatprep.subr.bf16.mxu0 0
      %1339 = vmatpush2.bf16.msra.mxu0 0
      %1340 = vmatprep.subr.bf16.mxu0 0
      %1341 = vmatpush2.bf16.msra.mxu0 0
      %1342 = vmatprep.subr.bf16.mxu0 0
      %1343 = vmatpush2.bf16.msra.mxu0 0
      %1344 = vmatprep.mubr.bf16.mxu0 0
      %1345 = vmatmul.mubr.bf16.gmra.mxu0 %v1310
      %v1346 = vpop.f32.mrf.mxu0
      %v1347 = vadd.f32 0.0, %v1346
      %v1348 = vpop.f32.mrf.mxu0
      %v1349 = vpop.f32.mrf.mxu0
      %v1350 = vpop.f32.mrf.mxu0
      %1351 = vdwg.mxu0
      %v1352 = vadd.f32 %v1288, %v1347
      %v1354 = vlaneseq
      %v1355 = vshrl.u32 %v1354, 7
      %v1356 = vsub.s32 0, %v1355
      %v1357 = vrot.slane %v1164, %v1356
      %v1359 = vadd.f32 %v1352, %v1357
      %v1360 = vxor.u32 %v1359, 2147483648
      %v1361 = vmul.f32 %v1360, 1.442695
      %v1362 = vpow.pop %v1361
      %v1363 = vadd.f32 %v1362, 1.0
      %v1364 = vrcp.pop %v1363
      %v1365 = vmul.f32 1.0, %v1364
      %1367 = vrot.lane.b32.xlu0 %v1359, 32
      %v1368 = vpop.permute.xlu0 %1367
      %v1370 = vmul.f32 %v1365, %v1368
      %v1371 = vsub.f32 1.0, %v1365
      %v1372 = vmul.f32 %v1371, %v1149
      %v1373 = vadd.f32 %v1370, %v1372
      %s1374 = scalar_lea.vmem %s7, 240
      %v1375 = vld [vmem:[%s1374] sm:$0xf]
      %v1376 = vld [vmem:[%s1374 + $0x4] sm:$0xf]
      %v1377 = vld [vmem:[%s1374 + $0x8] sm:$0xf]
      %v1378 = vld [vmem:[%s1374 + $0xc] sm:$0xf]
      %v1379 = vld [vmem:[%s1374 + $0x10] sm:$0xf]
      %v1380 = vld [vmem:[%s1374 + $0x14] sm:$0xf]
      %v1381 = vld [vmem:[%s1374 + $0x18] sm:$0xf]
      %v1382 = vld [vmem:[%s1374 + $0x1c] sm:$0xf]
      %v1383 = vld [vmem:[%s1374 + $0x20] sm:$0xf]
      %v1384 = vld [vmem:[%s1374 + $0x24] sm:$0xf]
      %v1385 = vld [vmem:[%s1374 + $0x28] sm:$0xf]
      %v1386 = vld [vmem:[%s1374 + $0x2c] sm:$0xf]
      %s1387 = scalar_lea.vmem %s8, 5
      %v1388 = vld [vmem:[%s1387] sm:$0x1]
      %1390 = vrot.lane.b32.xlu0 %v1373, 96
      %v1391 = vpop.permute.xlu0 %1390
      %1393 = vst.msk [vmem:[#allocation2 + $0x38] sm:$0xff] %vm329, %v1391
      %v1394 = vld [vmem:[#allocation2 + $0x30] sm:$0xff]
      %v1395 = vld [vmem:[#allocation2 + $0x38] sm:$0xff]
      %v1396 = vpack.c.bf16 %v1395, %v1394
      %v1398 = vshrl.u32 %v1396, 16
      %v1400 = vrot.slane %v1398, 2
      %v1401 = vshll.u32 %v1396, 16
      %v1403 = vrot.slane %v1401, 3
      %v1404 = vor.u32 %v1400, %v1403
      %v1409 = vunpack.c.l.b16 %v1379
      %v1410 = vunpack.c.l.b16 %v1380
      %v1411 = vunpack.c.l.b16 %v1381
      %v1412 = vunpack.c.l.b16 %v1382
      %v1413 = vpack.c.b16 %v1410, %v1409
      %v1414 = vpack.c.b16 %v1412, %v1411
      %v1418 = vsel %vm329, %v1404, 0
      %1420 = vmatprep.subr.bf16.mxu0 0
      %1421 = vmatpush1.bf16.msra.mxu0 0
      %1422 = vmatprep.subr.bf16.mxu0 0
      %1423 = vmatpush1.bf16.msra.mxu0 0
      %1424 = vmatprep.subr.bf16.mxu0 0
      %1425 = vmatpush1.bf16.msra.mxu0 0
      %1426 = vmatprep.subr.bf16.mxu0 0
      %1427 = vmatpush1.bf16.msra.mxu0 0
      %1428 = vmatprep.subr.bf16.mxu0 0
      %1429 = vmatpush1.bf16.msra.mxu0 0
      %1430 = vmatprep.subr.bf16.mxu0 0
      %1431 = vmatpush1.bf16.msra.mxu0 0
      %1432 = vmatprep.subr.bf16.mxu0 0
      %1433 = vmatpush1.bf16.msra.mxu0 %v1414
      %1434 = vmatprep.subr.bf16.mxu0 0
      %1435 = vmatpush1.bf16.msra.mxu0 %v1413
      %1436 = vmatprep.subr.bf16.mxu0 0
      %1437 = vmatpush2.bf16.msra.mxu0 0
      %1438 = vmatprep.subr.bf16.mxu0 0
      %1439 = vmatpush2.bf16.msra.mxu0 0
      %1440 = vmatprep.subr.bf16.mxu0 0
      %1441 = vmatpush2.bf16.msra.mxu0 0
      %1442 = vmatprep.subr.bf16.mxu0 0
      %1443 = vmatpush2.bf16.msra.mxu0 0
      %1444 = vmatprep.subr.bf16.mxu0 0
      %1445 = vmatpush2.bf16.msra.mxu0 0
      %1446 = vmatprep.subr.bf16.mxu0 0
      %1447 = vmatpush2.bf16.msra.mxu0 0
      %1448 = vmatprep.subr.bf16.mxu0 0
      %1449 = vmatpush2.bf16.msra.mxu0 0
      %1450 = vmatprep.subr.bf16.mxu0 0
      %1451 = vmatpush2.bf16.msra.mxu0 0
      %1452 = vmatprep.mubr.bf16.mxu0 0
      %1453 = vmatmul.mubr.bf16.gmra.mxu0 %v1418
      %v1454 = vpop.f32.mrf.mxu0
      %v1455 = vadd.f32 0.0, %v1454
      %v1456 = vpop.f32.mrf.mxu0
      %v1457 = vpop.f32.mrf.mxu0
      %v1458 = vpop.f32.mrf.mxu0
      %1459 = vdwg.mxu0
      %v1461 = vrot.slane %v1396, 1
      %v1466 = vunpack.c.l.b16 %v1375
      %v1467 = vunpack.c.l.b16 %v1376
      %v1468 = vunpack.c.l.b16 %v1377
      %v1469 = vunpack.c.l.b16 %v1378
      %v1470 = vpack.c.b16 %v1467, %v1466
      %v1471 = vpack.c.b16 %v1469, %v1468
      %v1475 = vsel %vm329, %v1461, 0
      %1477 = vmatprep.subr.bf16.mxu0 0
      %1478 = vmatpush1.bf16.msra.mxu0 0
      %1479 = vmatprep.subr.bf16.mxu0 0
      %1480 = vmatpush1.bf16.msra.mxu0 0
      %1481 = vmatprep.subr.bf16.mxu0 0
      %1482 = vmatpush1.bf16.msra.mxu0 0
      %1483 = vmatprep.subr.bf16.mxu0 0
      %1484 = vmatpush1.bf16.msra.mxu0 0
      %1485 = vmatprep.subr.bf16.mxu0 0
      %1486 = vmatpush1.bf16.msra.mxu0 0
      %1487 = vmatprep.subr.bf16.mxu0 0
      %1488 = vmatpush1.bf16.msra.mxu0 0
      %1489 = vmatprep.subr.bf16.mxu0 0
      %1490 = vmatpush1.bf16.msra.mxu0 %v1471
      %1491 = vmatprep.subr.bf16.mxu0 0
      %1492 = vmatpush1.bf16.msra.mxu0 %v1470
      %1493 = vmatprep.subr.bf16.mxu0 0
      %1494 = vmatpush2.bf16.msra.mxu0 0
      %1495 = vmatprep.subr.bf16.mxu0 0
      %1496 = vmatpush2.bf16.msra.mxu0 0
      %1497 = vmatprep.subr.bf16.mxu0 0
      %1498 = vmatpush2.bf16.msra.mxu0 0
      %1499 = vmatprep.subr.bf16.mxu0 0
      %1500 = vmatpush2.bf16.msra.mxu0 0
      %1501 = vmatprep.subr.bf16.mxu0 0
      %1502 = vmatpush2.bf16.msra.mxu0 0
      %1503 = vmatprep.subr.bf16.mxu0 0
      %1504 = vmatpush2.bf16.msra.mxu0 0
      %1505 = vmatprep.subr.bf16.mxu0 0
      %1506 = vmatpush2.bf16.msra.mxu0 0
      %1507 = vmatprep.subr.bf16.mxu0 0
      %1508 = vmatpush2.bf16.msra.mxu0 0
      %1509 = vmatprep.mubr.bf16.mxu0 0
      %1510 = vmatmul.mubr.bf16.gmra.mxu0 %v1475
      %v1511 = vpop.f32.mrf.mxu0
      %v1512 = vadd.f32 %v1455, %v1511
      %v1513 = vpop.f32.mrf.mxu0
      %v1514 = vpop.f32.mrf.mxu0
      %v1515 = vpop.f32.mrf.mxu0
      %1516 = vdwg.mxu0
      %v1517 = vpack.c.bf16 %v1373, %v1373
      %1519 = vrot.lane.b32.xlu0 %v1517, 96
      %v1520 = vpop.permute.xlu0 %1519
      %v1525 = vunpack.c.l.b16 %v1383
      %v1526 = vunpack.c.l.b16 %v1384
      %v1527 = vunpack.c.l.b16 %v1385
      %v1528 = vunpack.c.l.b16 %v1386
      %v1529 = vpack.c.b16 %v1526, %v1525
      %v1530 = vpack.c.b16 %v1528, %v1527
      %v1534 = vsel %vm329, %v1520, 0
      %1536 = vmatprep.subr.bf16.mxu0 0
      %1537 = vmatpush1.bf16.msra.mxu0 0
      %1538 = vmatprep.subr.bf16.mxu0 0
      %1539 = vmatpush1.bf16.msra.mxu0 0
      %1540 = vmatprep.subr.bf16.mxu0 0
      %1541 = vmatpush1.bf16.msra.mxu0 0
      %1542 = vmatprep.subr.bf16.mxu0 0
      %1543 = vmatpush1.bf16.msra.mxu0 0
      %1544 = vmatprep.subr.bf16.mxu0 0
      %1545 = vmatpush1.bf16.msra.mxu0 0
      %1546 = vmatprep.subr.bf16.mxu0 0
      %1547 = vmatpush1.bf16.msra.mxu0 0
      %1548 = vmatprep.subr.bf16.mxu0 0
      %1549 = vmatpush1.bf16.msra.mxu0 %v1530
      %1550 = vmatprep.subr.bf16.mxu0 0
      %1551 = vmatpush1.bf16.msra.mxu0 %v1529
      %1552 = vmatprep.subr.bf16.mxu0 0
      %1553 = vmatpush2.bf16.msra.mxu0 0
      %1554 = vmatprep.subr.bf16.mxu0 0
      %1555 = vmatpush2.bf16.msra.mxu0 0
      %1556 = vmatprep.subr.bf16.mxu0 0
      %1557 = vmatpush2.bf16.msra.mxu0 0
      %1558 = vmatprep.subr.bf16.mxu0 0
      %1559 = vmatpush2.bf16.msra.mxu0 0
      %1560 = vmatprep.subr.bf16.mxu0 0
      %1561 = vmatpush2.bf16.msra.mxu0 0
      %1562 = vmatprep.subr.bf16.mxu0 0
      %1563 = vmatpush2.bf16.msra.mxu0 0
      %1564 = vmatprep.subr.bf16.mxu0 0
      %1565 = vmatpush2.bf16.msra.mxu0 0
      %1566 = vmatprep.subr.bf16.mxu0 0
      %1567 = vmatpush2.bf16.msra.mxu0 0
      %1568 = vmatprep.mubr.bf16.mxu0 0
      %1569 = vmatmul.mubr.bf16.gmra.mxu0 %v1534
      %v1570 = vpop.f32.mrf.mxu0
      %v1571 = vadd.f32 0.0, %v1570
      %v1572 = vpop.f32.mrf.mxu0
      %v1573 = vpop.f32.mrf.mxu0
      %v1574 = vpop.f32.mrf.mxu0
      %1575 = vdwg.mxu0
      %v1576 = vadd.f32 %v1512, %v1571
      %v1578 = vlaneseq
      %v1579 = vshrl.u32 %v1578, 7
      %v1580 = vsub.s32 0, %v1579
      %v1581 = vrot.slane %v1388, %v1580
      %v1583 = vadd.f32 %v1576, %v1581
      %v1584 = vxor.u32 %v1583, 2147483648
      %v1585 = vmul.f32 %v1584, 1.442695
      %v1586 = vpow.pop %v1585
      %v1587 = vadd.f32 %v1586, 1.0
      %v1588 = vrcp.pop %v1587
      %v1589 = vmul.f32 1.0, %v1588
      %1591 = vrot.lane.b32.xlu0 %v1583, 32
      %v1592 = vpop.permute.xlu0 %1591
      %v1594 = vmul.f32 %v1589, %v1592
      %v1595 = vsub.f32 1.0, %v1589
      %v1596 = vmul.f32 %v1595, %v1373
      %v1597 = vadd.f32 %v1594, %v1596
      %s1598 = scalar_lea.vmem %s7, 288
      %v1599 = vld [vmem:[%s1598 + $0x20] sm:$0xf]
      %v1600 = vld [vmem:[%s1598 + $0x24] sm:$0xf]
      %v1601 = vld [vmem:[%s1598 + $0x28] sm:$0xf]
      %v1602 = vld [vmem:[%s1598 + $0x2c] sm:$0xf]
      %s1603 = scalar_lea.vmem %s8, 6
      %v1604 = vld [vmem:[%s1603] sm:$0x1]
      %v1605 = vpack.c.bf16 %v1597, %v1597
      %v1607 = vlaneseq
      %v1608 = vshrl.u32 %v1607, 7
      %v1609 = vsub.s32 0, %v1608
      %v1610 = vrot.slane %v1604, %v1609
      %1613 = vrot.lane.b32.xlu0 %v1605, 96
      %v1614 = vpop.permute.xlu0 %1613
      %v1619 = vunpack.c.l.b16 %v1599
      %v1620 = vunpack.c.l.b16 %v1600
      %v1621 = vunpack.c.l.b16 %v1601
      %v1622 = vunpack.c.l.b16 %v1602
      %v1623 = vpack.c.b16 %v1620, %v1619
      %v1624 = vpack.c.b16 %v1622, %v1621
      %v1628 = vsel %vm329, %v1614, 0
      %1630 = vmatprep.subr.bf16.mxu0 0
      %1631 = vmatpush1.bf16.msra.mxu0 0
      %1632 = vmatprep.subr.bf16.mxu0 0
      %1633 = vmatpush1.bf16.msra.mxu0 0
      %1634 = vmatprep.subr.bf16.mxu0 0
      %1635 = vmatpush1.bf16.msra.mxu0 0
      %1636 = vmatprep.subr.bf16.mxu0 0
      %1637 = vmatpush1.bf16.msra.mxu0 0
      %1638 = vmatprep.subr.bf16.mxu0 0
      %1639 = vmatpush1.bf16.msra.mxu0 0
      %1640 = vmatprep.subr.bf16.mxu0 0
      %1641 = vmatpush1.bf16.msra.mxu0 0
      %1642 = vmatprep.subr.bf16.mxu0 0
      %1643 = vmatpush1.bf16.msra.mxu0 %v1624
      %1644 = vmatprep.subr.bf16.mxu0 0
      %1645 = vmatpush1.bf16.msra.mxu0 %v1623
      %1646 = vmatprep.subr.bf16.mxu0 0
      %1647 = vmatpush2.bf16.msra.mxu0 0
      %1648 = vmatprep.subr.bf16.mxu0 0
      %1649 = vmatpush2.bf16.msra.mxu0 0
      %1650 = vmatprep.subr.bf16.mxu0 0
      %1651 = vmatpush2.bf16.msra.mxu0 0
      %1652 = vmatprep.subr.bf16.mxu0 0
      %1653 = vmatpush2.bf16.msra.mxu0 0
      %1654 = vmatprep.subr.bf16.mxu0 0
      %1655 = vmatpush2.bf16.msra.mxu0 0
      %1656 = vmatprep.subr.bf16.mxu0 0
      %1657 = vmatpush2.bf16.msra.mxu0 0
      %1658 = vmatprep.subr.bf16.mxu0 0
      %1659 = vmatpush2.bf16.msra.mxu0 0
      %1660 = vmatprep.subr.bf16.mxu0 0
      %1661 = vmatpush2.bf16.msra.mxu0 0
      %1662 = vmatprep.mubr.bf16.mxu0 0
      %1663 = vmatmul.mubr.bf16.gmra.mxu0 %v1628
      %v1664 = vpop.f32.mrf.mxu0
      %v1665 = vadd.f32 %v1610, %v1664
      %v1666 = vpop.f32.mrf.mxu0
      %v1667 = vpop.f32.mrf.mxu0
      %v1668 = vpop.f32.mrf.mxu0
      %1669 = vdwg.mxu0
      %v1670 = vxor.u32 %v1665, 2147483648
      %v1671 = vmul.f32 %v1670, 1.442695
      %v1672 = vpow.pop %v1671
      %v1673 = vadd.f32 %v1672, 1.0
      %v1674 = vrcp.pop %v1673
      %v1675 = vmul.f32 1.0, %v1674
      %1677 = vrot.lane.b32.xlu0 %v1665, 32
      %v1678 = vpop.permute.xlu0 %1677
      %v1680 = vmul.f32 %v1675, %v1678
      %v1681 = vsub.f32 1.0, %v1675
      %v1682 = vmul.f32 %v1681, %v1597
      %v1683 = vadd.f32 %v1680, %v1682
      %s1684 = scalar_lea.vmem %s7, 336
      %v1685 = vld [vmem:[%s1684 + $0x20] sm:$0xf]
      %v1686 = vld [vmem:[%s1684 + $0x24] sm:$0xf]
      %v1687 = vld [vmem:[%s1684 + $0x28] sm:$0xf]
      %v1688 = vld [vmem:[%s1684 + $0x2c] sm:$0xf]
      %s1689 = scalar_lea.vmem %s8, 7
      %v1690 = vld [vmem:[%s1689] sm:$0x1]
      %v1691 = vpack.c.bf16 %v1683, %v1683
      %v1693 = vlaneseq
      %v1694 = vshrl.u32 %v1693, 7
      %v1695 = vsub.s32 0, %v1694
      %v1696 = vrot.slane %v1690, %v1695
      %1699 = vrot.lane.b32.xlu0 %v1691, 96
      %v1700 = vpop.permute.xlu0 %1699
      %v1705 = vunpack.c.l.b16 %v1685
      %v1706 = vunpack.c.l.b16 %v1686
      %v1707 = vunpack.c.l.b16 %v1687
      %v1708 = vunpack.c.l.b16 %v1688
      %v1709 = vpack.c.b16 %v1706, %v1705
      %v1710 = vpack.c.b16 %v1708, %v1707
      %v1714 = vsel %vm329, %v1700, 0
      %1716 = vmatprep.subr.bf16.mxu0 0
      %1717 = vmatpush1.bf16.msra.mxu0 0
      %1718 = vmatprep.subr.bf16.mxu0 0
      %1719 = vmatpush1.bf16.msra.mxu0 0
      %1720 = vmatprep.subr.bf16.mxu0 0
      %1721 = vmatpush1.bf16.msra.mxu0 0
      %1722 = vmatprep.subr.bf16.mxu0 0
      %1723 = vmatpush1.bf16.msra.mxu0 0
      %1724 = vmatprep.subr.bf16.mxu0 0
      %1725 = vmatpush1.bf16.msra.mxu0 0
      %1726 = vmatprep.subr.bf16.mxu0 0
      %1727 = vmatpush1.bf16.msra.mxu0 0
      %1728 = vmatprep.subr.bf16.mxu0 0
      %1729 = vmatpush1.bf16.msra.mxu0 %v1710
      %1730 = vmatprep.subr.bf16.mxu0 0
      %1731 = vmatpush1.bf16.msra.mxu0 %v1709
      %1732 = vmatprep.subr.bf16.mxu0 0
      %1733 = vmatpush2.bf16.msra.mxu0 0
      %1734 = vmatprep.subr.bf16.mxu0 0
      %1735 = vmatpush2.bf16.msra.mxu0 0
      %1736 = vmatprep.subr.bf16.mxu0 0
      %1737 = vmatpush2.bf16.msra.mxu0 0
      %1738 = vmatprep.subr.bf16.mxu0 0
      %1739 = vmatpush2.bf16.msra.mxu0 0
      %1740 = vmatprep.subr.bf16.mxu0 0
      %1741 = vmatpush2.bf16.msra.mxu0 0
      %1742 = vmatprep.subr.bf16.mxu0 0
      %1743 = vmatpush2.bf16.msra.mxu0 0
      %1744 = vmatprep.subr.bf16.mxu0 0
      %1745 = vmatpush2.bf16.msra.mxu0 0
      %1746 = vmatprep.subr.bf16.mxu0 0
      %1747 = vmatpush2.bf16.msra.mxu0 0
      %1748 = vmatprep.mubr.bf16.mxu0 0
      %1749 = vmatmul.mubr.bf16.gmra.mxu0 %v1714
      %v1750 = vpop.f32.mrf.mxu0
      %v1751 = vadd.f32 %v1696, %v1750
      %v1752 = vpop.f32.mrf.mxu0
      %v1753 = vpop.f32.mrf.mxu0
      %v1754 = vpop.f32.mrf.mxu0
      %1755 = vdwg.mxu0
      %v1756 = vxor.u32 %v1751, 2147483648
      %v1757 = vmul.f32 %v1756, 1.442695
      %v1758 = vpow.pop %v1757
      %v1759 = vadd.f32 %v1758, 1.0
      %v1760 = vrcp.pop %v1759
      %v1761 = vmul.f32 1.0, %v1760
      %1763 = vrot.lane.b32.xlu0 %v1751, 32
      %v1764 = vpop.permute.xlu0 %1763
      %v1766 = vmul.f32 %v1761, %v1764
      %v1767 = vsub.f32 1.0, %v1761
      %v1768 = vmul.f32 %v1767, %v1683
      %v1769 = vadd.f32 %v1766, %v1768
      %s1770 = scalar_lea.vmem %s7, 384
      %v1771 = vld [vmem:[%s1770] sm:$0xf]
      %v1772 = vld [vmem:[%s1770 + $0x4] sm:$0xf]
      %v1773 = vld [vmem:[%s1770 + $0x8] sm:$0xf]
      %v1774 = vld [vmem:[%s1770 + $0xc] sm:$0xf]
      %v1775 = vld [vmem:[%s1770 + $0x10] sm:$0xf]
      %v1776 = vld [vmem:[%s1770 + $0x14] sm:$0xf]
      %v1777 = vld [vmem:[%s1770 + $0x18] sm:$0xf]
      %v1778 = vld [vmem:[%s1770 + $0x1c] sm:$0xf]
      %v1779 = vld [vmem:[%s1770 + $0x20] sm:$0xf]
      %v1780 = vld [vmem:[%s1770 + $0x24] sm:$0xf]
      %v1781 = vld [vmem:[%s1770 + $0x28] sm:$0xf]
      %v1782 = vld [vmem:[%s1770 + $0x2c] sm:$0xf]
      %s1783 = scalar_lea.vmem %s8, 8
      %v1784 = vld [vmem:[%s1783] sm:$0x1]
      %1786 = vrot.lane.b32.xlu0 %v1769, 96
      %v1787 = vpop.permute.xlu0 %1786
      %1789 = vst.msk [vmem:[#allocation2 + $0x38] sm:$0xff] %vm329, %v1787
      %v1790 = vld [vmem:[#allocation2 + $0x30] sm:$0xff]
      %v1791 = vld [vmem:[#allocation2 + $0x38] sm:$0xff]
      %v1792 = vpack.c.bf16 %v1791, %v1790
      %v1794 = vshrl.u32 %v1792, 16
      %v1796 = vrot.slane %v1794, 2
      %v1797 = vshll.u32 %v1792, 16
      %v1799 = vrot.slane %v1797, 3
      %v1800 = vor.u32 %v1796, %v1799
      %v1805 = vunpack.c.l.b16 %v1775
      %v1806 = vunpack.c.l.b16 %v1776
      %v1807 = vunpack.c.l.b16 %v1777
      %v1808 = vunpack.c.l.b16 %v1778
      %v1809 = vpack.c.b16 %v1806, %v1805
      %v1810 = vpack.c.b16 %v1808, %v1807
      %v1814 = vsel %vm329, %v1800, 0
      %1816 = vmatprep.subr.bf16.mxu0 0
      %1817 = vmatpush1.bf16.msra.mxu0 0
      %1818 = vmatprep.subr.bf16.mxu0 0
      %1819 = vmatpush1.bf16.msra.mxu0 0
      %1820 = vmatprep.subr.bf16.mxu0 0
      %1821 = vmatpush1.bf16.msra.mxu0 0
      %1822 = vmatprep.subr.bf16.mxu0 0
      %1823 = vmatpush1.bf16.msra.mxu0 0
      %1824 = vmatprep.subr.bf16.mxu0 0
      %1825 = vmatpush1.bf16.msra.mxu0 0
      %1826 = vmatprep.subr.bf16.mxu0 0
      %1827 = vmatpush1.bf16.msra.mxu0 0
      %1828 = vmatprep.subr.bf16.mxu0 0
      %1829 = vmatpush1.bf16.msra.mxu0 %v1810
      %1830 = vmatprep.subr.bf16.mxu0 0
      %1831 = vmatpush1.bf16.msra.mxu0 %v1809
      %1832 = vmatprep.subr.bf16.mxu0 0
      %1833 = vmatpush2.bf16.msra.mxu0 0
      %1834 = vmatprep.subr.bf16.mxu0 0
      %1835 = vmatpush2.bf16.msra.mxu0 0
      %1836 = vmatprep.subr.bf16.mxu0 0
      %1837 = vmatpush2.bf16.msra.mxu0 0
      %1838 = vmatprep.subr.bf16.mxu0 0
      %1839 = vmatpush2.bf16.msra.mxu0 0
      %1840 = vmatprep.subr.bf16.mxu0 0
      %1841 = vmatpush2.bf16.msra.mxu0 0
      %1842 = vmatprep.subr.bf16.mxu0 0
      %1843 = vmatpush2.bf16.msra.mxu0 0
      %1844 = vmatprep.subr.bf16.mxu0 0
      %1845 = vmatpush2.bf16.msra.mxu0 0
      %1846 = vmatprep.subr.bf16.mxu0 0
      %1847 = vmatpush2.bf16.msra.mxu0 0
      %1848 = vmatprep.mubr.bf16.mxu0 0
      %1849 = vmatmul.mubr.bf16.gmra.mxu0 %v1814
      %v1850 = vpop.f32.mrf.mxu0
      %v1851 = vadd.f32 0.0, %v1850
      %v1852 = vpop.f32.mrf.mxu0
      %v1853 = vpop.f32.mrf.mxu0
      %v1854 = vpop.f32.mrf.mxu0
      %1855 = vdwg.mxu0
      %v1857 = vrot.slane %v1792, 1
      %v1862 = vunpack.c.l.b16 %v1771
      %v1863 = vunpack.c.l.b16 %v1772
      %v1864 = vunpack.c.l.b16 %v1773
      %v1865 = vunpack.c.l.b16 %v1774
      %v1866 = vpack.c.b16 %v1863, %v1862
      %v1867 = vpack.c.b16 %v1865, %v1864
      %v1871 = vsel %vm329, %v1857, 0
      %1873 = vmatprep.subr.bf16.mxu0 0
      %1874 = vmatpush1.bf16.msra.mxu0 0
      %1875 = vmatprep.subr.bf16.mxu0 0
      %1876 = vmatpush1.bf16.msra.mxu0 0
      %1877 = vmatprep.subr.bf16.mxu0 0
      %1878 = vmatpush1.bf16.msra.mxu0 0
      %1879 = vmatprep.subr.bf16.mxu0 0
      %1880 = vmatpush1.bf16.msra.mxu0 0
      %1881 = vmatprep.subr.bf16.mxu0 0
      %1882 = vmatpush1.bf16.msra.mxu0 0
      %1883 = vmatprep.subr.bf16.mxu0 0
      %1884 = vmatpush1.bf16.msra.mxu0 0
      %1885 = vmatprep.subr.bf16.mxu0 0
      %1886 = vmatpush1.bf16.msra.mxu0 %v1867
      %1887 = vmatprep.subr.bf16.mxu0 0
      %1888 = vmatpush1.bf16.msra.mxu0 %v1866
      %1889 = vmatprep.subr.bf16.mxu0 0
      %1890 = vmatpush2.bf16.msra.mxu0 0
      %1891 = vmatprep.subr.bf16.mxu0 0
      %1892 = vmatpush2.bf16.msra.mxu0 0
      %1893 = vmatprep.subr.bf16.mxu0 0
      %1894 = vmatpush2.bf16.msra.mxu0 0
      %1895 = vmatprep.subr.bf16.mxu0 0
      %1896 = vmatpush2.bf16.msra.mxu0 0
      %1897 = vmatprep.subr.bf16.mxu0 0
      %1898 = vmatpush2.bf16.msra.mxu0 0
      %1899 = vmatprep.subr.bf16.mxu0 0
      %1900 = vmatpush2.bf16.msra.mxu0 0
      %1901 = vmatprep.subr.bf16.mxu0 0
      %1902 = vmatpush2.bf16.msra.mxu0 0
      %1903 = vmatprep.subr.bf16.mxu0 0
      %1904 = vmatpush2.bf16.msra.mxu0 0
      %1905 = vmatprep.mubr.bf16.mxu0 0
      %1906 = vmatmul.mubr.bf16.gmra.mxu0 %v1871
      %v1907 = vpop.f32.mrf.mxu0
      %v1908 = vadd.f32 %v1851, %v1907
      %v1909 = vpop.f32.mrf.mxu0
      %v1910 = vpop.f32.mrf.mxu0
      %v1911 = vpop.f32.mrf.mxu0
      %1912 = vdwg.mxu0
      %v1913 = vpack.c.bf16 %v1769, %v1769
      %1915 = vrot.lane.b32.xlu0 %v1913, 96
      %v1916 = vpop.permute.xlu0 %1915
      %v1921 = vunpack.c.l.b16 %v1779
      %v1922 = vunpack.c.l.b16 %v1780
      %v1923 = vunpack.c.l.b16 %v1781
      %v1924 = vunpack.c.l.b16 %v1782
      %v1925 = vpack.c.b16 %v1922, %v1921
      %v1926 = vpack.c.b16 %v1924, %v1923
      %v1930 = vsel %vm329, %v1916, 0
      %1932 = vmatprep.subr.bf16.mxu0 0
      %1933 = vmatpush1.bf16.msra.mxu0 0
      %1934 = vmatprep.subr.bf16.mxu0 0
      %1935 = vmatpush1.bf16.msra.mxu0 0
      %1936 = vmatprep.subr.bf16.mxu0 0
      %1937 = vmatpush1.bf16.msra.mxu0 0
      %1938 = vmatprep.subr.bf16.mxu0 0
      %1939 = vmatpush1.bf16.msra.mxu0 0
      %1940 = vmatprep.subr.bf16.mxu0 0
      %1941 = vmatpush1.bf16.msra.mxu0 0
      %1942 = vmatprep.subr.bf16.mxu0 0
      %1943 = vmatpush1.bf16.msra.mxu0 0
      %1944 = vmatprep.subr.bf16.mxu0 0
      %1945 = vmatpush1.bf16.msra.mxu0 %v1926
      %1946 = vmatprep.subr.bf16.mxu0 0
      %1947 = vmatpush1.bf16.msra.mxu0 %v1925
      %1948 = vmatprep.subr.bf16.mxu0 0
      %1949 = vmatpush2.bf16.msra.mxu0 0
      %1950 = vmatprep.subr.bf16.mxu0 0
      %1951 = vmatpush2.bf16.msra.mxu0 0
      %1952 = vmatprep.subr.bf16.mxu0 0
      %1953 = vmatpush2.bf16.msra.mxu0 0
      %1954 = vmatprep.subr.bf16.mxu0 0
      %1955 = vmatpush2.bf16.msra.mxu0 0
      %1956 = vmatprep.subr.bf16.mxu0 0
      %1957 = vmatpush2.bf16.msra.mxu0 0
      %1958 = vmatprep.subr.bf16.mxu0 0
      %1959 = vmatpush2.bf16.msra.mxu0 0
      %1960 = vmatprep.subr.bf16.mxu0 0
      %1961 = vmatpush2.bf16.msra.mxu0 0
      %1962 = vmatprep.subr.bf16.mxu0 0
      %1963 = vmatpush2.bf16.msra.mxu0 0
      %1964 = vmatprep.mubr.bf16.mxu0 0
      %1965 = vmatmul.mubr.bf16.gmra.mxu0 %v1930
      %v1966 = vpop.f32.mrf.mxu0
      %v1967 = vadd.f32 0.0, %v1966
      %v1968 = vpop.f32.mrf.mxu0
      %v1969 = vpop.f32.mrf.mxu0
      %v1970 = vpop.f32.mrf.mxu0
      %1971 = vdwg.mxu0
      %v1972 = vadd.f32 %v1908, %v1967
      %v1974 = vlaneseq
      %v1975 = vshrl.u32 %v1974, 7
      %v1976 = vsub.s32 0, %v1975
      %v1977 = vrot.slane %v1784, %v1976
      %v1979 = vadd.f32 %v1972, %v1977
      %v1980 = vxor.u32 %v1979, 2147483648
      %v1981 = vmul.f32 %v1980, 1.442695
      %v1982 = vpow.pop %v1981
      %v1983 = vadd.f32 %v1982, 1.0
      %v1984 = vrcp.pop %v1983
      %v1985 = vmul.f32 1.0, %v1984
      %1987 = vrot.lane.b32.xlu0 %v1979, 32
      %v1988 = vpop.permute.xlu0 %1987
      %v1990 = vmul.f32 %v1985, %v1988
      %v1991 = vsub.f32 1.0, %v1985
      %v1992 = vmul.f32 %v1991, %v1769
      %v1993 = vadd.f32 %v1990, %v1992
      %s1994 = scalar_lea.vmem %s7, 432
      %v1995 = vld [vmem:[%s1994] sm:$0xf]
      %v1996 = vld [vmem:[%s1994 + $0x4] sm:$0xf]
      %v1997 = vld [vmem:[%s1994 + $0x8] sm:$0xf]
      %v1998 = vld [vmem:[%s1994 + $0xc] sm:$0xf]
      %v1999 = vld [vmem:[%s1994 + $0x10] sm:$0xf]
      %v2000 = vld [vmem:[%s1994 + $0x14] sm:$0xf]
      %v2001 = vld [vmem:[%s1994 + $0x18] sm:$0xf]
      %v2002 = vld [vmem:[%s1994 + $0x1c] sm:$0xf]
      %v2003 = vld [vmem:[%s1994 + $0x20] sm:$0xf]
      %v2004 = vld [vmem:[%s1994 + $0x24] sm:$0xf]
      %v2005 = vld [vmem:[%s1994 + $0x28] sm:$0xf]
      %v2006 = vld [vmem:[%s1994 + $0x2c] sm:$0xf]
      %s2007 = scalar_lea.vmem %s8, 9
      %v2008 = vld [vmem:[%s2007] sm:$0x1]
      %2010 = vrot.lane.b32.xlu0 %v1993, 96
      %v2011 = vpop.permute.xlu0 %2010
      %2013 = vst.msk [vmem:[#allocation2 + $0x38] sm:$0xff] %vm329, %v2011
      %v2014 = vld [vmem:[#allocation2 + $0x30] sm:$0xff]
      %v2015 = vld [vmem:[#allocation2 + $0x38] sm:$0xff]
      %v2016 = vpack.c.bf16 %v2015, %v2014
      %v2018 = vshrl.u32 %v2016, 16
      %v2020 = vrot.slane %v2018, 2
      %v2021 = vshll.u32 %v2016, 16
      %v2023 = vrot.slane %v2021, 3
      %v2024 = vor.u32 %v2020, %v2023
      %v2029 = vunpack.c.l.b16 %v1999
      %v2030 = vunpack.c.l.b16 %v2000
      %v2031 = vunpack.c.l.b16 %v2001
      %v2032 = vunpack.c.l.b16 %v2002
      %v2033 = vpack.c.b16 %v2030, %v2029
      %v2034 = vpack.c.b16 %v2032, %v2031
      %v2038 = vsel %vm329, %v2024, 0
      %2040 = vmatprep.subr.bf16.mxu0 0
      %2041 = vmatpush1.bf16.msra.mxu0 0
      %2042 = vmatprep.subr.bf16.mxu0 0
      %2043 = vmatpush1.bf16.msra.mxu0 0
      %2044 = vmatprep.subr.bf16.mxu0 0
      %2045 = vmatpush1.bf16.msra.mxu0 0
      %2046 = vmatprep.subr.bf16.mxu0 0
      %2047 = vmatpush1.bf16.msra.mxu0 0
      %2048 = vmatprep.subr.bf16.mxu0 0
      %2049 = vmatpush1.bf16.msra.mxu0 0
      %2050 = vmatprep.subr.bf16.mxu0 0
      %2051 = vmatpush1.bf16.msra.mxu0 0
      %2052 = vmatprep.subr.bf16.mxu0 0
      %2053 = vmatpush1.bf16.msra.mxu0 %v2034
      %2054 = vmatprep.subr.bf16.mxu0 0
      %2055 = vmatpush1.bf16.msra.mxu0 %v2033
      %2056 = vmatprep.subr.bf16.mxu0 0
      %2057 = vmatpush2.bf16.msra.mxu0 0
      %2058 = vmatprep.subr.bf16.mxu0 0
      %2059 = vmatpush2.bf16.msra.mxu0 0
      %2060 = vmatprep.subr.bf16.mxu0 0
      %2061 = vmatpush2.bf16.msra.mxu0 0
      %2062 = vmatprep.subr.bf16.mxu0 0
      %2063 = vmatpush2.bf16.msra.mxu0 0
      %2064 = vmatprep.subr.bf16.mxu0 0
      %2065 = vmatpush2.bf16.msra.mxu0 0
      %2066 = vmatprep.subr.bf16.mxu0 0
      %2067 = vmatpush2.bf16.msra.mxu0 0
      %2068 = vmatprep.subr.bf16.mxu0 0
      %2069 = vmatpush2.bf16.msra.mxu0 0
      %2070 = vmatprep.subr.bf16.mxu0 0
      %2071 = vmatpush2.bf16.msra.mxu0 0
      %2072 = vmatprep.mubr.bf16.mxu0 0
      %2073 = vmatmul.mubr.bf16.gmra.mxu0 %v2038
      %v2074 = vpop.f32.mrf.mxu0
      %v2075 = vadd.f32 0.0, %v2074
      %v2076 = vpop.f32.mrf.mxu0
      %v2077 = vpop.f32.mrf.mxu0
      %v2078 = vpop.f32.mrf.mxu0
      %2079 = vdwg.mxu0
      %v2081 = vrot.slane %v2016, 1
      %v2086 = vunpack.c.l.b16 %v1995
      %v2087 = vunpack.c.l.b16 %v1996
      %v2088 = vunpack.c.l.b16 %v1997
      %v2089 = vunpack.c.l.b16 %v1998
      %v2090 = vpack.c.b16 %v2087, %v2086
      %v2091 = vpack.c.b16 %v2089, %v2088
      %v2095 = vsel %vm329, %v2081, 0
      %2097 = vmatprep.subr.bf16.mxu0 0
      %2098 = vmatpush1.bf16.msra.mxu0 0
      %2099 = vmatprep.subr.bf16.mxu0 0
      %2100 = vmatpush1.bf16.msra.mxu0 0
      %2101 = vmatprep.subr.bf16.mxu0 0
      %2102 = vmatpush1.bf16.msra.mxu0 0
      %2103 = vmatprep.subr.bf16.mxu0 0
      %2104 = vmatpush1.bf16.msra.mxu0 0
      %2105 = vmatprep.subr.bf16.mxu0 0
      %2106 = vmatpush1.bf16.msra.mxu0 0
      %2107 = vmatprep.subr.bf16.mxu0 0
      %2108 = vmatpush1.bf16.msra.mxu0 0
      %2109 = vmatprep.subr.bf16.mxu0 0
      %2110 = vmatpush1.bf16.msra.mxu0 %v2091
      %2111 = vmatprep.subr.bf16.mxu0 0
      %2112 = vmatpush1.bf16.msra.mxu0 %v2090
      %2113 = vmatprep.subr.bf16.mxu0 0
      %2114 = vmatpush2.bf16.msra.mxu0 0
      %2115 = vmatprep.subr.bf16.mxu0 0
      %2116 = vmatpush2.bf16.msra.mxu0 0
      %2117 = vmatprep.subr.bf16.mxu0 0
      %2118 = vmatpush2.bf16.msra.mxu0 0
      %2119 = vmatprep.subr.bf16.mxu0 0
      %2120 = vmatpush2.bf16.msra.mxu0 0
      %2121 = vmatprep.subr.bf16.mxu0 0
      %2122 = vmatpush2.bf16.msra.mxu0 0
      %2123 = vmatprep.subr.bf16.mxu0 0
      %2124 = vmatpush2.bf16.msra.mxu0 0
      %2125 = vmatprep.subr.bf16.mxu0 0
      %2126 = vmatpush2.bf16.msra.mxu0 0
      %2127 = vmatprep.subr.bf16.mxu0 0
      %2128 = vmatpush2.bf16.msra.mxu0 0
      %2129 = vmatprep.mubr.bf16.mxu0 0
      %2130 = vmatmul.mubr.bf16.gmra.mxu0 %v2095
      %v2131 = vpop.f32.mrf.mxu0
      %v2132 = vadd.f32 %v2075, %v2131
      %v2133 = vpop.f32.mrf.mxu0
      %v2134 = vpop.f32.mrf.mxu0
      %v2135 = vpop.f32.mrf.mxu0
      %2136 = vdwg.mxu0
      %v2137 = vpack.c.bf16 %v1993, %v1993
      %2139 = vrot.lane.b32.xlu0 %v2137, 96
      %v2140 = vpop.permute.xlu0 %2139
      %v2145 = vunpack.c.l.b16 %v2003
      %v2146 = vunpack.c.l.b16 %v2004
      %v2147 = vunpack.c.l.b16 %v2005
      %v2148 = vunpack.c.l.b16 %v2006
      %v2149 = vpack.c.b16 %v2146, %v2145
      %v2150 = vpack.c.b16 %v2148, %v2147
      %v2154 = vsel %vm329, %v2140, 0
      %2156 = vmatprep.subr.bf16.mxu0 0
      %2157 = vmatpush1.bf16.msra.mxu0 0
      %2158 = vmatprep.subr.bf16.mxu0 0
      %2159 = vmatpush1.bf16.msra.mxu0 0
      %2160 = vmatprep.subr.bf16.mxu0 0
      %2161 = vmatpush1.bf16.msra.mxu0 0
      %2162 = vmatprep.subr.bf16.mxu0 0
      %2163 = vmatpush1.bf16.msra.mxu0 0
      %2164 = vmatprep.subr.bf16.mxu0 0
      %2165 = vmatpush1.bf16.msra.mxu0 0
      %2166 = vmatprep.subr.bf16.mxu0 0
      %2167 = vmatpush1.bf16.msra.mxu0 0
      %2168 = vmatprep.subr.bf16.mxu0 0
      %2169 = vmatpush1.bf16.msra.mxu0 %v2150
      %2170 = vmatprep.subr.bf16.mxu0 0
      %2171 = vmatpush1.bf16.msra.mxu0 %v2149
      %2172 = vmatprep.subr.bf16.mxu0 0
      %2173 = vmatpush2.bf16.msra.mxu0 0
      %2174 = vmatprep.subr.bf16.mxu0 0
      %2175 = vmatpush2.bf16.msra.mxu0 0
      %2176 = vmatprep.subr.bf16.mxu0 0
      %2177 = vmatpush2.bf16.msra.mxu0 0
      %2178 = vmatprep.subr.bf16.mxu0 0
      %2179 = vmatpush2.bf16.msra.mxu0 0
      %2180 = vmatprep.subr.bf16.mxu0 0
      %2181 = vmatpush2.bf16.msra.mxu0 0
      %2182 = vmatprep.subr.bf16.mxu0 0
      %2183 = vmatpush2.bf16.msra.mxu0 0
      %2184 = vmatprep.subr.bf16.mxu0 0
      %2185 = vmatpush2.bf16.msra.mxu0 0
      %2186 = vmatprep.subr.bf16.mxu0 0
      %2187 = vmatpush2.bf16.msra.mxu0 0
      %2188 = vmatprep.mubr.bf16.mxu0 0
      %2189 = vmatmul.mubr.bf16.gmra.mxu0 %v2154
      %v2190 = vpop.f32.mrf.mxu0
      %v2191 = vadd.f32 0.0, %v2190
      %v2192 = vpop.f32.mrf.mxu0
      %v2193 = vpop.f32.mrf.mxu0
      %v2194 = vpop.f32.mrf.mxu0
      %2195 = vdwg.mxu0
      %v2196 = vadd.f32 %v2132, %v2191
      %v2198 = vlaneseq
      %v2199 = vshrl.u32 %v2198, 7
      %v2200 = vsub.s32 0, %v2199
      %v2201 = vrot.slane %v2008, %v2200
      %v2203 = vadd.f32 %v2196, %v2201
      %v2204 = vxor.u32 %v2203, 2147483648
      %v2205 = vmul.f32 %v2204, 1.442695
      %v2206 = vpow.pop %v2205
      %v2207 = vadd.f32 %v2206, 1.0
      %v2208 = vrcp.pop %v2207
      %v2209 = vmul.f32 1.0, %v2208
      %2211 = vrot.lane.b32.xlu0 %v2203, 32
      %v2212 = vpop.permute.xlu0 %2211
      %v2214 = vmul.f32 %v2209, %v2212
      %v2215 = vsub.f32 1.0, %v2209
      %v2216 = vmul.f32 %v2215, %v1993
      %v2217 = vadd.f32 %v2214, %v2216
      %2219 = vrot.lane.b32.xlu0 %v2217, 96
      %v2220 = vpop.permute.xlu0 %2219
      %2222 = vst.msk [vmem:[%s327] sm:$0xff] %vm329, %v2220
      %p2223 = scmp.lt.s32.totalorder %s20, 1
      %s2224 = scalar_select %p2223, %s20, 1
      %s2225 = smul.addr %s2224, 8
      %s2226 = scalar_lea.vmem %s9, %s2225
      // Predicated region
      $region57: #{decoder_forward.3} parent=55 // pred_check
        %p2227 = pneg %p232
      $region58: #{decoder_forward.3} parent=55 // pred_check_branch
        %2229 = sbr.rel (%p2227) target = $region60
      $region59: #{decoder_forward.3} parent=55 // pred_region
        _
      $region60: #{decoder_forward.3} parent=55 // pred_fallthru
        _
    $region56: #{decoder_forward.3} parent=5 // pred_fallthru
      _
    %p2230 = scmp.le.s32.totalorder 2, %s15
    // Predicated region
    $region61: #{decoder_forward.3} parent=5 // pred_check
      %p2231 = pneg %p2230
    $region62: #{decoder_forward.3} parent=5 // pred_check_branch
      %2233 = sbr.rel (%p2231) target = $region64
    $region63: #{decoder_forward.3} parent=5 // pred_region
      %s2234 = ssub.s32 %s15, 2
      // Predicated region
      $region65: #{decoder_forward.3} parent=63 // pred_check
        %p2235 = pneg %p238
      $region66: #{decoder_forward.3} parent=63 // pred_check_branch
        %2237 = sbr.rel (%p2235) target = $region68
      $region67: #{decoder_forward.3} parent=63 // pred_region
        %p2238 = scmp.lt.s32.totalorder %s21, 1
        %s2239 = scalar_select %p2238, %s21, 1
        %s2240 = smul.addr %s2239, 8
        %s2241 = scalar_lea.vmem %s9, %s2240
      $region68: #{decoder_forward.3} parent=63 // pred_fallthru
        _
    $region64: #{decoder_forward.3} parent=5 // pred_fallthru
      _
  $region6: #{decoder_forward.3} parent=0 // loop_footer
    %s19 = sadd.s32 1, %s15
  $region7: #{decoder_forward.3} parent=0 // loop_footer_branch
    %14 = sbr.rel target = $region3
  $region8: #{decoder_forward.3} parent=0 // loop_exit
    _

// kernel: decoder_forward.5
$region0: #{decoder_forward.5}
  #allocation0 [shape = 'u32[]', space=smem, size = 0x4, offset = 0x4, fixed_abs, tag = 'smem constant byte address 0x4 - core index']
  #allocation1 [shape = 'u32[144,128]{1,0:T(1,128)}', space=vmem, size = 0x12000, scoped, tag = 'internal scratch']
  #allocation2 [shape = 'f32[64,32]{1,0:T(8,128)}', space=vmem, size = 0x8000, scoped, tag = 'scratch operand']
  #allocation3 [shape = 'f32[1,1]{1,0:T(1,128)S(1)}', space=vmem, size = 0x200, scoped, tag = 'scoped memory for decoder_forward.5']
  %s0 = inlined_call_operand.vmem [shape: f32[2,8,32], index: 0, kind: input, shape index: {}]
  %s1 = inlined_call_operand.vmem [shape: f32[2,8,32], index: 1, kind: input, shape index: {}]
  %s2 = inlined_call_operand.vmem [shape: f32[2,8,32], index: 2, kind: input, shape index: {}]
  %s3 = inlined_call_operand.vmem [shape: bf16[32,32], index: 3, kind: input, shape index: {}]
  %s4 = inlined_call_operand.vmem [shape: bf16[32,32], index: 4, kind: input, shape index: {}]
  %s5 = inlined_call_operand.vmem [shape: bf16[32,32], index: 5, kind: input, shape index: {}]
  %s6 = inlined_call_operand.vmem [shape: f32[1,32], index: 6, kind: input, shape index: {}]
  %s7 = inlined_call_operand.vmem [shape: bf16[6,96,64], index: 7, kind: input, shape index: {}]
  %s8 = inlined_call_operand.vmem [shape: f32[6,1,64], index: 8, kind: input, shape index: {}]
  %s9 = inlined_call_operand.vmem [shape: bf16[3,32,32], index: 9, kind: input, shape index: {}]
  %s10 = inlined_call_operand.vmem [shape: f32[3,1,32], index: 10, kind: input, shape index: {}]
  %s11 = inlined_call_operand.vmem [shape: bf16[32,16], index: 11, kind: input, shape index: {}]
  %s12 = inlined_call_operand.vmem [shape: f32[1,16], index: 12, kind: input, shape index: {}]
  %s13 = inlined_call_operand.vmem [shape: bf16[16,1], index: 13, kind: input, shape index: {}]
  %s14 = inlined_call_operand.<no memory space> [shape: f32[1,1], index: 14, kind: input, shape index: {}]
  %s15 = inlined_call_operand.hbm [shape: f32[2,8,16], index: 15, kind: output, shape index: {0}]
  %s16 = inlined_call_operand.vmem [shape: f32[2,8,1], index: 16, kind: output, shape index: {1}]
  %s17 = inlined_call_operand.hbm [shape: f32[2,8,32], index: 17, kind: output, shape index: {2}]
  %18 = xla_tuple %s15, %s16, %s17
  %s19 = sld [smem:[#allocation0]]
  $region109: #{decoder_forward.5} parent=0
    _
  %s21 = ssub.s32 1, %s19
  %s22 = scalar_select 0, %s21, %s19
  %v23 = vstv %s14
  %24 = vst [vmem:[#allocation3] sm:$0x1] %v23
  $region1: #{decoder_forward.5} parent=0
    #allocation4 [shape = 'u8[8192]{0}', space=vmem, size = 0x2000, scoped, tag = 'output window, operand 0']
    #allocation5 [shape = 's32[2]{0}', space=sflag, size = 0x8, scoped, tag = 'scoped memory for decoder_forward.5']
    #allocation6 [shape = 'u8[8192]{0}', space=vmem, size = 0x2000, scoped, tag = 'output window, operand 2']
    #allocation7 [shape = 's32[2]{0}', space=sflag, size = 0x8, scoped, tag = 'scoped memory for decoder_forward.5']
    %25 = vsyncpa [#allocation5], 0
    %s26 = scalar_lea.sflag [#allocation5], 1
    %27 = vsyncpa %s26, 0
    %28 = vsyncpa [#allocation7], 0
    %s29 = scalar_lea.sflag [#allocation7], 1
    %30 = vsyncpa %s29, 0
    loop: start=0, step=1, limit=4
    $region2: #{decoder_forward.5} parent=1 // loop_pre_header
      _
    $region3: #{decoder_forward.5} parent=1 // loop_header
      %s32 = sphi 0, %s36
      %p33 = scmp.ge.s32.totalorder %s32, 4
      %s42 = sphi 0, %s44
      %s45 = sphi 0, %s42
      %s46 = sphi 0, %s45
      %s62 = sphi 0, %s46
      %s68 = sphi 0, %s70
      %s71 = sphi 0, %s68
      %s72 = sphi 0, %s71
      %s88 = sphi 0, %s72
      %s94 = sphi 0, %s96
      %s97 = sphi 0, %s94
      %s98 = sphi 0, %s97
      %s114 = sphi 0, %s98
      %s118 = sphi 0, %s118
      %s120 = sphi 0, %s118
      %s121 = sphi 0, %s120
      %s135 = sphi 0, %s121
      %s139 = sphi 0, %s139
      %s141 = sphi 0, %s139
      %s142 = sphi 0, %s141
      %s156 = sphi 0, %s142
      %s160 = sphi 0, %s160
      %s162 = sphi 0, %s160
      %s163 = sphi 0, %s162
      %s177 = sphi 0, %s163
      %s181 = sphi 0, %s181
      %s183 = sphi 0, %s181
      %s184 = sphi 0, %s183
      %s198 = sphi 0, %s184
      %s202 = sphi 0, %s202
      %s204 = sphi 0, %s202
      %s205 = sphi 0, %s204
      %s219 = sphi 0, %s205
      %s223 = sphi 0, %s223
      %s225 = sphi 0, %s223
      %s226 = sphi 0, %s225
      %s240 = sphi 0, %s226
      %s244 = sphi 0, %s244
      %s246 = sphi 0, %s244
      %s247 = sphi 0, %s246
      %s261 = sphi 0, %s247
      %s265 = sphi 0, %s265
      %s267 = sphi 0, %s265
      %s268 = sphi 0, %s267
      %s282 = sphi 0, %s268
      %s286 = sphi 0, %s286
      %s288 = sphi 0, %s286
      %s289 = sphi 0, %s288
      %s303 = sphi 0, %s289
      %s307 = sphi 0, %s307
      %s309 = sphi 0, %s307
      %s310 = sphi 0, %s309
      %s324 = sphi 0, %s310
      %s328 = sphi 0, %s328
      %s330 = sphi 0, %s328
      %s331 = sphi 0, %s330
      %s345 = sphi 0, %s331
      %s349 = sphi 0, %s349
      %s351 = sphi 0, %s349
      %s352 = sphi 0, %s351
      %s366 = sphi 0, %s352
      %s372 = sphi 0, %s374
      %s375 = sphi 0, %s372
      %s376 = sphi 0, %s375
      %s392 = sphi 0, %s376
      %s398 = sphi 0, %s400
      %s401 = sphi 0, %s398
      %s402 = sphi 0, %s401
      %s418 = sphi 0, %s402
      %s424 = sphi 0, %s426
      %s427 = sphi 0, %s424
      %s428 = sphi 0, %s427
      %s444 = sphi 0, %s428
    $region4: #{decoder_forward.5} parent=1 // loop_header_branch
      %35 = sbr.rel (%p33) target = $region8
    $region5: #{decoder_forward.5} parent=1 // loop_body
      %s37 = ssub.s32 %s32, 1
      %s38 = ssub.s32 %s32, 2
      %s39 = sadd.s32 %s32, 1
      %s40 = ssub.s32 %s32, %s39
      %p41 = scmp.eq.s32.totalorder %s40, 0
      %s43 = sadd.s32 %s42, 1
      %s44 = scalar_select %p41, %s42, %s43
      %p47 = pneg %p41
      %p48 = scmp.eq.s32.totalorder %s32, 1
      %p49 = por %p47, %p48
      %p50 = scmp.ne.s32.totalorder %s42, %s45
      %p51 = scmp.eq.s32.totalorder %s32, 0
      %p52 = por %p50, %p51
      %p53 = scmp.ne.s32.totalorder %s42, %s45
      %p54 = scmp.eq.s32.totalorder %s37, 1
      %p55 = por %p53, %p54
      %p56 = scmp.ne.s32.totalorder %s45, %s46
      %p57 = scmp.eq.s32.totalorder %s37, 0
      %p58 = por %p56, %p57
      %p59 = scmp.ne.s32.totalorder %s45, %s46
      %p60 = scmp.eq.s32.totalorder %s38, 1
      %p61 = por %p59, %p60
      %p63 = scmp.ne.s32.totalorder %s46, %s62
      %p64 = scmp.eq.s32.totalorder %s38, 0
      %p65 = por %p63, %p64
      %s66 = ssub.s32 %s32, %s39
      %p67 = scmp.eq.s32.totalorder %s66, 0
      %s69 = sadd.s32 %s68, 1
      %s70 = scalar_select %p67, %s68, %s69
      %p73 = pneg %p67
      %p74 = scmp.eq.s32.totalorder %s32, 1
      %p75 = por %p73, %p74
      %p76 = scmp.ne.s32.totalorder %s68, %s71
      %p77 = scmp.eq.s32.totalorder %s32, 0
      %p78 = por %p76, %p77
      %p79 = scmp.ne.s32.totalorder %s68, %s71
      %p80 = scmp.eq.s32.totalorder %s37, 1
      %p81 = por %p79, %p80
      %p82 = scmp.ne.s32.totalorder %s71, %s72
      %p83 = scmp.eq.s32.totalorder %s37, 0
      %p84 = por %p82, %p83
      %p85 = scmp.ne.s32.totalorder %s71, %s72
      %p86 = scmp.eq.s32.totalorder %s38, 1
      %p87 = por %p85, %p86
      %p89 = scmp.ne.s32.totalorder %s72, %s88
      %p90 = scmp.eq.s32.totalorder %s38, 0
      %p91 = por %p89, %p90
      %s92 = ssub.s32 %s32, %s39
      %p93 = scmp.eq.s32.totalorder %s92, 0
      %s95 = sadd.s32 %s94, 1
      %s96 = scalar_select %p93, %s94, %s95
      %p99 = pneg %p93
      %p100 = scmp.eq.s32.totalorder %s32, 1
      %p101 = por %p99, %p100
      %p102 = scmp.ne.s32.totalorder %s94, %s97
      %p103 = scmp.eq.s32.totalorder %s32, 0
      %p104 = por %p102, %p103
      %p105 = scmp.ne.s32.totalorder %s94, %s97
      %p106 = scmp.eq.s32.totalorder %s37, 1
      %p107 = por %p105, %p106
      %p108 = scmp.ne.s32.totalorder %s97, %s98
      %p109 = scmp.eq.s32.totalorder %s37, 0
      %p110 = por %p108, %p109
      %p111 = scmp.ne.s32.totalorder %s97, %s98
      %p112 = scmp.eq.s32.totalorder %s38, 1
      %p113 = por %p111, %p112
      %p115 = scmp.ne.s32.totalorder %s98, %s114
      %p116 = scmp.eq.s32.totalorder %s38, 0
      %p117 = por %p115, %p116
      %s119 = sadd.s32 %s118, 1
      %p122 = scmp.eq.s32.totalorder %s32, 1
      %p123 = scmp.ne.s32.totalorder %s118, %s120
      %p124 = scmp.eq.s32.totalorder %s32, 0
      %p125 = por %p123, %p124
      %p126 = scmp.ne.s32.totalorder %s118, %s120
      %p127 = scmp.eq.s32.totalorder %s37, 1
      %p128 = por %p126, %p127
      %p129 = scmp.ne.s32.totalorder %s120, %s121
      %p130 = scmp.eq.s32.totalorder %s37, 0
      %p131 = por %p129, %p130
      %p132 = scmp.ne.s32.totalorder %s120, %s121
      %p133 = scmp.eq.s32.totalorder %s38, 1
      %p134 = por %p132, %p133
      %p136 = scmp.ne.s32.totalorder %s121, %s135
      %p137 = scmp.eq.s32.totalorder %s38, 0
      %p138 = por %p136, %p137
      %s140 = sadd.s32 %s139, 1
      %p143 = scmp.eq.s32.totalorder %s32, 1
      %p144 = scmp.ne.s32.totalorder %s139, %s141
      %p145 = scmp.eq.s32.totalorder %s32, 0
      %p146 = por %p144, %p145
      %p147 = scmp.ne.s32.totalorder %s139, %s141
      %p148 = scmp.eq.s32.totalorder %s37, 1
      %p149 = por %p147, %p148
      %p150 = scmp.ne.s32.totalorder %s141, %s142
      %p151 = scmp.eq.s32.totalorder %s37, 0
      %p152 = por %p150, %p151
      %p153 = scmp.ne.s32.totalorder %s141, %s142
      %p154 = scmp.eq.s32.totalorder %s38, 1
      %p155 = por %p153, %p154
      %p157 = scmp.ne.s32.totalorder %s142, %s156
      %p158 = scmp.eq.s32.totalorder %s38, 0
      %p159 = por %p157, %p158
      %s161 = sadd.s32 %s160, 1
      %p164 = scmp.eq.s32.totalorder %s32, 1
      %p165 = scmp.ne.s32.totalorder %s160, %s162
      %p166 = scmp.eq.s32.totalorder %s32, 0
      %p167 = por %p165, %p166
      %p168 = scmp.ne.s32.totalorder %s160, %s162
      %p169 = scmp.eq.s32.totalorder %s37, 1
      %p170 = por %p168, %p169
      %p171 = scmp.ne.s32.totalorder %s162, %s163
      %p172 = scmp.eq.s32.totalorder %s37, 0
      %p173 = por %p171, %p172
      %p174 = scmp.ne.s32.totalorder %s162, %s163
      %p175 = scmp.eq.s32.totalorder %s38, 1
      %p176 = por %p174, %p175
      %p178 = scmp.ne.s32.totalorder %s163, %s177
      %p179 = scmp.eq.s32.totalorder %s38, 0
      %p180 = por %p178, %p179
      %s182 = sadd.s32 %s181, 1
      %p185 = scmp.eq.s32.totalorder %s32, 1
      %p186 = scmp.ne.s32.totalorder %s181, %s183
      %p187 = scmp.eq.s32.totalorder %s32, 0
      %p188 = por %p186, %p187
      %p189 = scmp.ne.s32.totalorder %s181, %s183
      %p190 = scmp.eq.s32.totalorder %s37, 1
      %p191 = por %p189, %p190
      %p192 = scmp.ne.s32.totalorder %s183, %s184
      %p193 = scmp.eq.s32.totalorder %s37, 0
      %p194 = por %p192, %p193
      %p195 = scmp.ne.s32.totalorder %s183, %s184
      %p196 = scmp.eq.s32.totalorder %s38, 1
      %p197 = por %p195, %p196
      %p199 = scmp.ne.s32.totalorder %s184, %s198
      %p200 = scmp.eq.s32.totalorder %s38, 0
      %p201 = por %p199, %p200
      %s203 = sadd.s32 %s202, 1
      %p206 = scmp.eq.s32.totalorder %s32, 1
      %p207 = scmp.ne.s32.totalorder %s202, %s204
      %p208 = scmp.eq.s32.totalorder %s32, 0
      %p209 = por %p207, %p208
      %p210 = scmp.ne.s32.totalorder %s202, %s204
      %p211 = scmp.eq.s32.totalorder %s37, 1
      %p212 = por %p210, %p211
      %p213 = scmp.ne.s32.totalorder %s204, %s205
      %p214 = scmp.eq.s32.totalorder %s37, 0
      %p215 = por %p213, %p214
      %p216 = scmp.ne.s32.totalorder %s204, %s205
      %p217 = scmp.eq.s32.totalorder %s38, 1
      %p218 = por %p216, %p217
      %p220 = scmp.ne.s32.totalorder %s205, %s219
      %p221 = scmp.eq.s32.totalorder %s38, 0
      %p222 = por %p220, %p221
      %s224 = sadd.s32 %s223, 1
      %p227 = scmp.eq.s32.totalorder %s32, 1
      %p228 = scmp.ne.s32.totalorder %s223, %s225
      %p229 = scmp.eq.s32.totalorder %s32, 0
      %p230 = por %p228, %p229
      %p231 = scmp.ne.s32.totalorder %s223, %s225
      %p232 = scmp.eq.s32.totalorder %s37, 1
      %p233 = por %p231, %p232
      %p234 = scmp.ne.s32.totalorder %s225, %s226
      %p235 = scmp.eq.s32.totalorder %s37, 0
      %p236 = por %p234, %p235
      %p237 = scmp.ne.s32.totalorder %s225, %s226
      %p238 = scmp.eq.s32.totalorder %s38, 1
      %p239 = por %p237, %p238
      %p241 = scmp.ne.s32.totalorder %s226, %s240
      %p242 = scmp.eq.s32.totalorder %s38, 0
      %p243 = por %p241, %p242
      %s245 = sadd.s32 %s244, 1
      %p248 = scmp.eq.s32.totalorder %s32, 1
      %p249 = scmp.ne.s32.totalorder %s244, %s246
      %p250 = scmp.eq.s32.totalorder %s32, 0
      %p251 = por %p249, %p250
      %p252 = scmp.ne.s32.totalorder %s244, %s246
      %p253 = scmp.eq.s32.totalorder %s37, 1
      %p254 = por %p252, %p253
      %p255 = scmp.ne.s32.totalorder %s246, %s247
      %p256 = scmp.eq.s32.totalorder %s37, 0
      %p257 = por %p255, %p256
      %p258 = scmp.ne.s32.totalorder %s246, %s247
      %p259 = scmp.eq.s32.totalorder %s38, 1
      %p260 = por %p258, %p259
      %p262 = scmp.ne.s32.totalorder %s247, %s261
      %p263 = scmp.eq.s32.totalorder %s38, 0
      %p264 = por %p262, %p263
      %s266 = sadd.s32 %s265, 1
      %p269 = scmp.eq.s32.totalorder %s32, 1
      %p270 = scmp.ne.s32.totalorder %s265, %s267
      %p271 = scmp.eq.s32.totalorder %s32, 0
      %p272 = por %p270, %p271
      %p273 = scmp.ne.s32.totalorder %s265, %s267
      %p274 = scmp.eq.s32.totalorder %s37, 1
      %p275 = por %p273, %p274
      %p276 = scmp.ne.s32.totalorder %s267, %s268
      %p277 = scmp.eq.s32.totalorder %s37, 0
      %p278 = por %p276, %p277
      %p279 = scmp.ne.s32.totalorder %s267, %s268
      %p280 = scmp.eq.s32.totalorder %s38, 1
      %p281 = por %p279, %p280
      %p283 = scmp.ne.s32.totalorder %s268, %s282
      %p284 = scmp.eq.s32.totalorder %s38, 0
      %p285 = por %p283, %p284
      %s287 = sadd.s32 %s286, 1
      %p290 = scmp.eq.s32.totalorder %s32, 1
      %p291 = scmp.ne.s32.totalorder %s286, %s288
      %p292 = scmp.eq.s32.totalorder %s32, 0
      %p293 = por %p291, %p292
      %p294 = scmp.ne.s32.totalorder %s286, %s288
      %p295 = scmp.eq.s32.totalorder %s37, 1
      %p296 = por %p294, %p295
      %p297 = scmp.ne.s32.totalorder %s288, %s289
      %p298 = scmp.eq.s32.totalorder %s37, 0
      %p299 = por %p297, %p298
      %p300 = scmp.ne.s32.totalorder %s288, %s289
      %p301 = scmp.eq.s32.totalorder %s38, 1
      %p302 = por %p300, %p301
      %p304 = scmp.ne.s32.totalorder %s289, %s303
      %p305 = scmp.eq.s32.totalorder %s38, 0
      %p306 = por %p304, %p305
      %s308 = sadd.s32 %s307, 1
      %p311 = scmp.eq.s32.totalorder %s32, 1
      %p312 = scmp.ne.s32.totalorder %s307, %s309
      %p313 = scmp.eq.s32.totalorder %s32, 0
      %p314 = por %p312, %p313
      %p315 = scmp.ne.s32.totalorder %s307, %s309
      %p316 = scmp.eq.s32.totalorder %s37, 1
      %p317 = por %p315, %p316
      %p318 = scmp.ne.s32.totalorder %s309, %s310
      %p319 = scmp.eq.s32.totalorder %s37, 0
      %p320 = por %p318, %p319
      %p321 = scmp.ne.s32.totalorder %s309, %s310
      %p322 = scmp.eq.s32.totalorder %s38, 1
      %p323 = por %p321, %p322
      %p325 = scmp.ne.s32.totalorder %s310, %s324
      %p326 = scmp.eq.s32.totalorder %s38, 0
      %p327 = por %p325, %p326
      %s329 = sadd.s32 %s328, 1
      %p332 = scmp.eq.s32.totalorder %s32, 1
      %p333 = scmp.ne.s32.totalorder %s328, %s330
      %p334 = scmp.eq.s32.totalorder %s32, 0
      %p335 = por %p333, %p334
      %p336 = scmp.ne.s32.totalorder %s328, %s330
      %p337 = scmp.eq.s32.totalorder %s37, 1
      %p338 = por %p336, %p337
      %p339 = scmp.ne.s32.totalorder %s330, %s331
      %p340 = scmp.eq.s32.totalorder %s37, 0
      %p341 = por %p339, %p340
      %p342 = scmp.ne.s32.totalorder %s330, %s331
      %p343 = scmp.eq.s32.totalorder %s38, 1
      %p344 = por %p342, %p343
      %p346 = scmp.ne.s32.totalorder %s331, %s345
      %p347 = scmp.eq.s32.totalorder %s38, 0
      %p348 = por %p346, %p347
      %s350 = sadd.s32 %s349, 1
      %p353 = scmp.eq.s32.totalorder %s32, 1
      %p354 = scmp.ne.s32.totalorder %s349, %s351
      %p355 = scmp.eq.s32.totalorder %s32, 0
      %p356 = por %p354, %p355
      %p357 = scmp.ne.s32.totalorder %s349, %s351
      %p358 = scmp.eq.s32.totalorder %s37, 1
      %p359 = por %p357, %p358
      %p360 = scmp.ne.s32.totalorder %s351, %s352
      %p361 = scmp.eq.s32.totalorder %s37, 0
      %p362 = por %p360, %p361
      %p363 = scmp.ne.s32.totalorder %s351, %s352
      %p364 = scmp.eq.s32.totalorder %s38, 1
      %p365 = por %p363, %p364
      %p367 = scmp.ne.s32.totalorder %s352, %s366
      %p368 = scmp.eq.s32.totalorder %s38, 0
      %p369 = por %p367, %p368
      %s370 = ssub.s32 %s32, %s39
      %p371 = scmp.eq.s32.totalorder %s370, 0
      %s373 = sadd.s32 %s372, 1
      %s374 = scalar_select %p371, %s372, %s373
      %p377 = pneg %p371
      %p378 = scmp.eq.s32.totalorder %s32, 1
      %p379 = por %p377, %p378
      %p380 = scmp.ne.s32.totalorder %s372, %s375
      %p381 = scmp.eq.s32.totalorder %s32, 0
      %p382 = por %p380, %p381
      %p383 = scmp.ne.s32.totalorder %s372, %s375
      %p384 = scmp.eq.s32.totalorder %s37, 1
      %p385 = por %p383, %p384
      %p386 = scmp.ne.s32.totalorder %s375, %s376
      %p387 = scmp.eq.s32.totalorder %s37, 0
      %p388 = por %p386, %p387
      %p389 = scmp.ne.s32.totalorder %s375, %s376
      %p390 = scmp.eq.s32.totalorder %s38, 1
      %p391 = por %p389, %p390
      %p393 = scmp.ne.s32.totalorder %s376, %s392
      %p394 = scmp.eq.s32.totalorder %s38, 0
      %p395 = por %p393, %p394
      %s396 = ssub.s32 %s32, %s39
      %p397 = scmp.eq.s32.totalorder %s396, 0
      %s399 = sadd.s32 %s398, 1
      %s400 = scalar_select %p397, %s398, %s399
      %p403 = pneg %p397
      %p404 = scmp.eq.s32.totalorder %s32, 1
      %p405 = por %p403, %p404
      %p406 = scmp.ne.s32.totalorder %s398, %s401
      %p407 = scmp.eq.s32.totalorder %s32, 0
      %p408 = por %p406, %p407
      %p409 = scmp.ne.s32.totalorder %s398, %s401
      %p410 = scmp.eq.s32.totalorder %s37, 1
      %p411 = por %p409, %p410
      %p412 = scmp.ne.s32.totalorder %s401, %s402
      %p413 = scmp.eq.s32.totalorder %s37, 0
      %p414 = por %p412, %p413
      %p415 = scmp.ne.s32.totalorder %s401, %s402
      %p416 = scmp.eq.s32.totalorder %s38, 1
      %p417 = por %p415, %p416
      %p419 = scmp.ne.s32.totalorder %s402, %s418
      %p420 = scmp.eq.s32.totalorder %s38, 0
      %p421 = por %p419, %p420
      %s422 = ssub.s32 %s32, %s39
      %p423 = scmp.eq.s32.totalorder %s422, 0
      %s425 = sadd.s32 %s424, 1
      %s426 = scalar_select %p423, %s424, %s425
      %p429 = pneg %p423
      %p430 = scmp.eq.s32.totalorder %s32, 1
      %p431 = por %p429, %p430
      %p432 = scmp.ne.s32.totalorder %s424, %s427
      %p433 = scmp.eq.s32.totalorder %s32, 0
      %p434 = por %p432, %p433
      %p435 = scmp.ne.s32.totalorder %s424, %s427
      %p436 = scmp.eq.s32.totalorder %s37, 1
      %p437 = por %p435, %p436
      %p438 = scmp.ne.s32.totalorder %s427, %s428
      %p439 = scmp.eq.s32.totalorder %s37, 0
      %p440 = por %p438, %p439
      %p441 = scmp.ne.s32.totalorder %s427, %s428
      %p442 = scmp.eq.s32.totalorder %s38, 1
      %p443 = por %p441, %p442
      %p445 = scmp.ne.s32.totalorder %s428, %s444
      %p446 = scmp.eq.s32.totalorder %s38, 0
      %p447 = por %p445, %p446
      %p448 = scmp.le.s32.totalorder 1, %s32
      %p449 = scmp.lt.s32.totalorder %s32, 3
      %p450 = pnand %p448, %p449
      %p451 = pneg %p450
      // Predicated region
      $region9: #{decoder_forward.5} parent=5 // pred_check
        _
      $region10: #{decoder_forward.5} parent=5 // pred_check_branch
        %453 = sbr.rel (%p450) target = $region12
      $region11: #{decoder_forward.5} parent=5 // pred_region
        %s454 = ssub.s32 %s32, 1
        // Predicated region
        $region13: #{decoder_forward.5} parent=11 // pred_check
          %p455 = pneg %p131
        $region14: #{decoder_forward.5} parent=11 // pred_check_branch
          %457 = sbr.rel (%p455) target = $region16
        $region15: #{decoder_forward.5} parent=11 // pred_region
          _
        $region16: #{decoder_forward.5} parent=11 // pred_fallthru
          _
        // Predicated region
        $region17: #{decoder_forward.5} parent=11 // pred_check
          %p458 = pneg %p152
        $region18: #{decoder_forward.5} parent=11 // pred_check_branch
          %460 = sbr.rel (%p458) target = $region20
        $region19: #{decoder_forward.5} parent=11 // pred_region
          _
        $region20: #{decoder_forward.5} parent=11 // pred_fallthru
          _
        // Predicated region
        $region21: #{decoder_forward.5} parent=11 // pred_check
          %p461 = pneg %p173
        $region22: #{decoder_forward.5} parent=11 // pred_check_branch
          %463 = sbr.rel (%p461) target = $region24
        $region23: #{decoder_forward.5} parent=11 // pred_region
          _
        $region24: #{decoder_forward.5} parent=11 // pred_fallthru
          _
        // Predicated region
        $region25: #{decoder_forward.5} parent=11 // pred_check
          %p464 = pneg %p194
        $region26: #{decoder_forward.5} parent=11 // pred_check_branch
          %466 = sbr.rel (%p464) target = $region28
        $region27: #{decoder_forward.5} parent=11 // pred_region
          _
        $region28: #{decoder_forward.5} parent=11 // pred_fallthru
          _
        // Predicated region
        $region29: #{decoder_forward.5} parent=11 // pred_check
          %p467 = pneg %p215
        $region30: #{decoder_forward.5} parent=11 // pred_check_branch
          %469 = sbr.rel (%p467) target = $region32
        $region31: #{decoder_forward.5} parent=11 // pred_region
          _
        $region32: #{decoder_forward.5} parent=11 // pred_fallthru
          _
        // Predicated region
        $region33: #{decoder_forward.5} parent=11 // pred_check
          %p470 = pneg %p236
        $region34: #{decoder_forward.5} parent=11 // pred_check_branch
          %472 = sbr.rel (%p470) target = $region36
        $region35: #{decoder_forward.5} parent=11 // pred_region
          _
        $region36: #{decoder_forward.5} parent=11 // pred_fallthru
          _
        // Predicated region
        $region37: #{decoder_forward.5} parent=11 // pred_check
          %p473 = pneg %p257
        $region38: #{decoder_forward.5} parent=11 // pred_check_branch
          %475 = sbr.rel (%p473) target = $region40
        $region39: #{decoder_forward.5} parent=11 // pred_region
          _
        $region40: #{decoder_forward.5} parent=11 // pred_fallthru
          _
        // Predicated region
        $region41: #{decoder_forward.5} parent=11 // pred_check
          %p476 = pneg %p278
        $region42: #{decoder_forward.5} parent=11 // pred_check_branch
          %478 = sbr.rel (%p476) target = $region44
        $region43: #{decoder_forward.5} parent=11 // pred_region
          _
        $region44: #{decoder_forward.5} parent=11 // pred_fallthru
          _
        // Predicated region
        $region45: #{decoder_forward.5} parent=11 // pred_check
          %p479 = pneg %p299
        $region46: #{decoder_forward.5} parent=11 // pred_check_branch
          %481 = sbr.rel (%p479) target = $region48
        $region47: #{decoder_forward.5} parent=11 // pred_region
          _
        $region48: #{decoder_forward.5} parent=11 // pred_fallthru
          _
        // Predicated region
        $region49: #{decoder_forward.5} parent=11 // pred_check
          %p482 = pneg %p320
        $region50: #{decoder_forward.5} parent=11 // pred_check_branch
          %484 = sbr.rel (%p482) target = $region52
        $region51: #{decoder_forward.5} parent=11 // pred_region
          _
        $region52: #{decoder_forward.5} parent=11 // pred_fallthru
          _
        // Predicated region
        $region53: #{decoder_forward.5} parent=11 // pred_check
          %p485 = pneg %p341
        $region54: #{decoder_forward.5} parent=11 // pred_check_branch
          %487 = sbr.rel (%p485) target = $region56
        $region55: #{decoder_forward.5} parent=11 // pred_region
          _
        $region56: #{decoder_forward.5} parent=11 // pred_fallthru
          _
        // Predicated region
        $region57: #{decoder_forward.5} parent=11 // pred_check
          %p488 = pneg %p362
        $region58: #{decoder_forward.5} parent=11 // pred_check_branch
          %490 = sbr.rel (%p488) target = $region60
        $region59: #{decoder_forward.5} parent=11 // pred_region
          _
        $region60: #{decoder_forward.5} parent=11 // pred_fallthru
          _
      $region12: #{decoder_forward.5} parent=5 // pred_fallthru
        _
      %p491 = scmp.lt.s32.totalorder %s32, 2
      // Predicated region
      $region61: #{decoder_forward.5} parent=5 // pred_check
        %p492 = pneg %p491
      $region62: #{decoder_forward.5} parent=5 // pred_check_branch
        %494 = sbr.rel (%p492) target = $region64
      $region63: #{decoder_forward.5} parent=5 // pred_region
        // Predicated region
        $region65: #{decoder_forward.5} parent=63 // pred_check
          %p495 = pneg %p52
        $region66: #{decoder_forward.5} parent=63 // pred_check_branch
          %497 = sbr.rel (%p495) target = $region68
        $region67: #{decoder_forward.5} parent=63 // pred_region
          %p498 = scmp.lt.s32.totalorder %s32, 1
          %s499 = scalar_select %p498, %s32, 1
          %s500 = smul.addr %s499, 8
          %s501 = scalar_lea.vmem %s0, %s500
        $region68: #{decoder_forward.5} parent=63 // pred_fallthru
          _
        // Predicated region
        $region69: #{decoder_forward.5} parent=63 // pred_check
          %p502 = pneg %p78
        $region70: #{decoder_forward.5} parent=63 // pred_check_branch
          %504 = sbr.rel (%p502) target = $region72
        $region71: #{decoder_forward.5} parent=63 // pred_region
          %p505 = scmp.lt.s32.totalorder %s32, 1
          %s506 = scalar_select %p505, %s32, 1
          %s507 = smul.addr %s506, 8
          %s508 = scalar_lea.vmem %s1, %s507
        $region72: #{decoder_forward.5} parent=63 // pred_fallthru
          _
        // Predicated region
        $region73: #{decoder_forward.5} parent=63 // pred_check
          %p509 = pneg %p104
        $region74: #{decoder_forward.5} parent=63 // pred_check_branch
          %511 = sbr.rel (%p509) target = $region76
        $region75: #{decoder_forward.5} parent=63 // pred_region
          %p512 = scmp.lt.s32.totalorder %s32, 1
          %s513 = scalar_select %p512, %s32, 1
          %s514 = smul.addr %s513, 8
          %s515 = scalar_lea.vmem %s2, %s514
        $region76: #{decoder_forward.5} parent=63 // pred_fallthru
          _
      $region64: #{decoder_forward.5} parent=5 // pred_fallthru
        _
      %p516 = scmp.le.s32.totalorder 1, %s32
      %p517 = scmp.lt.s32.totalorder %s32, 3
      %p518 = pnand %p516, %p517
      %p519 = pneg %p518
      // Predicated region
      $region77: #{decoder_forward.5} parent=5 // pred_check
        _
      $region78: #{decoder_forward.5} parent=5 // pred_check_branch
        %521 = sbr.rel (%p518) target = $region80
      $region79: #{decoder_forward.5} parent=5 // pred_region
        %s522 = ssub.s32 %s32, 1
        %p523 = scmp.lt.s32.totalorder %s37, 1
        %s524 = scalar_select %p523, %s37, 1
        %s525 = smul.addr %s524, 8
        %s526 = scalar_lea.vmem %s0, %s525
        %p527 = pneg %p58
        %p528 = pneg %p55
        %p529 = scmp.lt.s32.totalorder %s37, 1
        %s530 = scalar_select %p529, %s37, 1
        %s531 = smul.addr %s530, 8
        %s532 = scalar_lea.vmem %s1, %s531
        %p533 = pneg %p84
        %p534 = pneg %p81
        %p535 = scmp.lt.s32.totalorder %s37, 1
        %s536 = scalar_select %p535, %s37, 1
        %s537 = smul.addr %s536, 8
        %s538 = scalar_lea.vmem %s2, %s537
        %p539 = pneg %p110
        %p540 = pneg %p107
        %p541 = pneg %p131
        %p542 = pneg %p128
        %p543 = pneg %p152
        %p544 = pneg %p149
        %p545 = pneg %p173
        %p546 = pneg %p170
        %p547 = pneg %p194
        %p548 = pneg %p191
        %p549 = pneg %p215
        %p550 = pneg %p212
        %p551 = pneg %p236
        %p552 = pneg %p233
        %p553 = pneg %p257
        %p554 = pneg %p254
        %p555 = pneg %p278
        %p556 = pneg %p275
        %p557 = pneg %p299
        %p558 = pneg %p296
        %p559 = pneg %p320
        %p560 = pneg %p317
        %p561 = pneg %p341
        %p562 = pneg %p338
        %p563 = pneg %p362
        %p564 = pneg %p359
        %p565 = pneg %p388
        %p566 = pneg %p385
        %s567 = sand.u32 %s375, 1
        %s568 = scalar_lea.sflag [#allocation5], %s567
        %s569 = sand.u32 %s375, 1
        %s570 = smul.addr %s569, 8
        %s571 = scalar_lea.vmem [#allocation4], %s570
        %p572 = pneg %p414
        %p573 = pneg %p411
        %p574 = scmp.lt.s32.totalorder %s37, 1
        %s575 = scalar_select %p574, %s37, 1
        %s576 = smul.addr %s575, 8
        %s577 = scalar_lea.vmem %s16, %s576
        %p578 = pneg %p440
        %p579 = pneg %p437
        %s580 = sand.u32 %s427, 1
        %s581 = scalar_lea.sflag [#allocation7], %s580
        %s582 = sand.u32 %s427, 1
        %s583 = smul.addr %s582, 8
        %s584 = scalar_lea.vmem [#allocation6], %s583
        %p585 = scmp.lt.s32.totalorder %s37, 1
        %s586 = scalar_select %p585, %s37, 1
        %s587 = smul.addr %s586, 8
        %s588 = scalar_lea.vmem %s0, %s587
        %p589 = scmp.lt.s32.totalorder %s37, 1
        %s590 = scalar_select %p589, %s37, 1
        %s591 = smul.addr %s590, 8
        %s592 = scalar_lea.vmem %s1, %s591
        %p593 = scmp.lt.s32.totalorder %s37, 1
        %s594 = scalar_select %p593, %s37, 1
        %s595 = smul.addr %s594, 8
        %s596 = scalar_lea.vmem %s2, %s595
        %p597 = scmp.lt.s32.totalorder %s37, 1
        %s598 = scalar_select %p597, %s37, 1
        %s599 = smul.addr %s598, 8
        %s600 = scalar_lea.vmem %s16, %s599
        %vm602 = vcmask 261120
        %603 = vst.msk [vmem:[#allocation2] sm:$0xff] %vm602, 0.0
        %604 = vst.msk [vmem:[#allocation2 + $0x8] sm:$0xff] %vm602, 0.0
        %605 = vst.msk [vmem:[#allocation2 + $0x10] sm:$0xff] %vm602, 0.0
        %606 = vst.msk [vmem:[#allocation2 + $0x18] sm:$0xff] %vm602, 0.0
        %607 = vst.msk [vmem:[#allocation2 + $0x20] sm:$0xff] %vm602, 0.0
        %608 = vst.msk [vmem:[#allocation2 + $0x28] sm:$0xff] %vm602, 0.0
        %609 = vst.msk [vmem:[#allocation2 + $0x30] sm:$0xff] %vm602, 0.0
        %610 = vst.msk [vmem:[#allocation2 + $0x38] sm:$0xff] %vm602, 0.0
        %v611 = vld [vmem:[%s588] sm:$0xff]
        %v612 = vld [vmem:[%s3] sm:$0xf]
        %v613 = vld [vmem:[%s3 + $0x4] sm:$0xf]
        %v614 = vld [vmem:[%s3 + $0x8] sm:$0xf]
        %v615 = vld [vmem:[%s3 + $0xc] sm:$0xf]
        %v616 = vpack.c.bf16 %v611, %v611
        %v617 = vld [vmem:[%s592] sm:$0xff]
        %v618 = vld [vmem:[%s4] sm:$0xf]
        %v619 = vld [vmem:[%s4 + $0x4] sm:$0xf]
        %v620 = vld [vmem:[%s4 + $0x8] sm:$0xf]
        %v621 = vld [vmem:[%s4 + $0xc] sm:$0xf]
        %v622 = vpack.c.bf16 %v617, %v617
        %v627 = vunpack.c.l.b16 %v618
        %v628 = vunpack.c.l.b16 %v619
        %v629 = vunpack.c.l.b16 %v620
        %v630 = vunpack.c.l.b16 %v621
        %v631 = vpack.c.b16 %v628, %v627
        %v632 = vpack.c.b16 %v630, %v629
        %v636 = vsel %vm602, %v622, 0
        %638 = vmatprep.subr.bf16.mxu0 0
        %639 = vmatpush1.bf16.msra.mxu0 0
        %640 = vmatprep.subr.bf16.mxu0 0
        %641 = vmatpush1.bf16.msra.mxu0 0
        %642 = vmatprep.subr.bf16.mxu0 0
        %643 = vmatpush1.bf16.msra.mxu0 0
        %644 = vmatprep.subr.bf16.mxu0 0
        %645 = vmatpush1.bf16.msra.mxu0 0
        %646 = vmatprep.subr.bf16.mxu0 0
        %647 = vmatpush1.bf16.msra.mxu0 0
        %648 = vmatprep.subr.bf16.mxu0 0
        %649 = vmatpush1.bf16.msra.mxu0 0
        %650 = vmatprep.subr.bf16.mxu0 0
        %651 = vmatpush1.bf16.msra.mxu0 %v632
        %652 = vmatprep.subr.bf16.mxu0 0
        %653 = vmatpush1.bf16.msra.mxu0 %v631
        %654 = vmatprep.subr.bf16.mxu0 0
        %655 = vmatpush2.bf16.msra.mxu0 0
        %656 = vmatprep.subr.bf16.mxu0 0
        %657 = vmatpush2.bf16.msra.mxu0 0
        %658 = vmatprep.subr.bf16.mxu0 0
        %659 = vmatpush2.bf16.msra.mxu0 0
        %660 = vmatprep.subr.bf16.mxu0 0
        %661 = vmatpush2.bf16.msra.mxu0 0
        %662 = vmatprep.subr.bf16.mxu0 0
        %663 = vmatpush2.bf16.msra.mxu0 0
        %664 = vmatprep.subr.bf16.mxu0 0
        %665 = vmatpush2.bf16.msra.mxu0 0
        %666 = vmatprep.subr.bf16.mxu0 0
        %667 = vmatpush2.bf16.msra.mxu0 0
        %668 = vmatprep.subr.bf16.mxu0 0
        %669 = vmatpush2.bf16.msra.mxu0 0
        %670 = vmatprep.mubr.bf16.mxu0 0
        %671 = vmatmul.mubr.bf16.gmra.mxu0 %v636
        %v672 = vpop.f32.mrf.mxu0
        %v673 = vadd.f32 0.0, %v672
        %v674 = vpop.f32.mrf.mxu0
        %v675 = vpop.f32.mrf.mxu0
        %v676 = vpop.f32.mrf.mxu0
        %677 = vdwg.mxu0
        %v682 = vunpack.c.l.b16 %v612
        %v683 = vunpack.c.l.b16 %v613
        %v684 = vunpack.c.l.b16 %v614
        %v685 = vunpack.c.l.b16 %v615
        %v686 = vpack.c.b16 %v683, %v682
        %v687 = vpack.c.b16 %v685, %v684
        %v691 = vsel %vm602, %v616, 0
        %693 = vmatprep.subr.bf16.mxu0 0
        %694 = vmatpush1.bf16.msra.mxu0 0
        %695 = vmatprep.subr.bf16.mxu0 0
        %696 = vmatpush1.bf16.msra.mxu0 0
        %697 = vmatprep.subr.bf16.mxu0 0
        %698 = vmatpush1.bf16.msra.mxu0 0
        %699 = vmatprep.subr.bf16.mxu0 0
        %700 = vmatpush1.bf16.msra.mxu0 0
        %701 = vmatprep.subr.bf16.mxu0 0
        %702 = vmatpush1.bf16.msra.mxu0 0
        %703 = vmatprep.subr.bf16.mxu0 0
        %704 = vmatpush1.bf16.msra.mxu0 0
        %705 = vmatprep.subr.bf16.mxu0 0
        %706 = vmatpush1.bf16.msra.mxu0 %v687
        %707 = vmatprep.subr.bf16.mxu0 0
        %708 = vmatpush1.bf16.msra.mxu0 %v686
        %709 = vmatprep.subr.bf16.mxu0 0
        %710 = vmatpush2.bf16.msra.mxu0 0
        %711 = vmatprep.subr.bf16.mxu0 0
        %712 = vmatpush2.bf16.msra.mxu0 0
        %713 = vmatprep.subr.bf16.mxu0 0
        %714 = vmatpush2.bf16.msra.mxu0 0
        %715 = vmatprep.subr.bf16.mxu0 0
        %716 = vmatpush2.bf16.msra.mxu0 0
        %717 = vmatprep.subr.bf16.mxu0 0
        %718 = vmatpush2.bf16.msra.mxu0 0
        %719 = vmatprep.subr.bf16.mxu0 0
        %720 = vmatpush2.bf16.msra.mxu0 0
        %721 = vmatprep.subr.bf16.mxu0 0
        %722 = vmatpush2.bf16.msra.mxu0 0
        %723 = vmatprep.subr.bf16.mxu0 0
        %724 = vmatpush2.bf16.msra.mxu0 0
        %725 = vmatprep.mubr.bf16.mxu0 0
        %726 = vmatmul.mubr.bf16.gmra.mxu0 %v691
        %v727 = vpop.f32.mrf.mxu0
        %v728 = vadd.f32 %v673, %v727
        %v729 = vpop.f32.mrf.mxu0
        %v730 = vpop.f32.mrf.mxu0
        %v731 = vpop.f32.mrf.mxu0
        %732 = vdwg.mxu0
        %v733 = vld [vmem:[%s596] sm:$0xff]
        %v734 = vld [vmem:[%s5] sm:$0xf]
        %v735 = vld [vmem:[%s5 + $0x4] sm:$0xf]
        %v736 = vld [vmem:[%s5 + $0x8] sm:$0xf]
        %v737 = vld [vmem:[%s5 + $0xc] sm:$0xf]
        %v738 = vpack.c.bf16 %v733, %v733
        %v743 = vunpack.c.l.b16 %v734
        %v744 = vunpack.c.l.b16 %v735
        %v745 = vunpack.c.l.b16 %v736
        %v746 = vunpack.c.l.b16 %v737
        %v747 = vpack.c.b16 %v744, %v743
        %v748 = vpack.c.b16 %v746, %v745
        %v752 = vsel %vm602, %v738, 0
        %754 = vmatprep.subr.bf16.mxu0 0
        %755 = vmatpush1.bf16.msra.mxu0 0
        %756 = vmatprep.subr.bf16.mxu0 0
        %757 = vmatpush1.bf16.msra.mxu0 0
        %758 = vmatprep.subr.bf16.mxu0 0
        %759 = vmatpush1.bf16.msra.mxu0 0
        %760 = vmatprep.subr.bf16.mxu0 0
        %761 = vmatpush1.bf16.msra.mxu0 0
        %762 = vmatprep.subr.bf16.mxu0 0
        %763 = vmatpush1.bf16.msra.mxu0 0
        %764 = vmatprep.subr.bf16.mxu0 0
        %765 = vmatpush1.bf16.msra.mxu0 0
        %766 = vmatprep.subr.bf16.mxu0 0
        %767 = vmatpush1.bf16.msra.mxu0 %v748
        %768 = vmatprep.subr.bf16.mxu0 0
        %769 = vmatpush1.bf16.msra.mxu0 %v747
        %770 = vmatprep.subr.bf16.mxu0 0
        %771 = vmatpush2.bf16.msra.mxu0 0
        %772 = vmatprep.subr.bf16.mxu0 0
        %773 = vmatpush2.bf16.msra.mxu0 0
        %774 = vmatprep.subr.bf16.mxu0 0
        %775 = vmatpush2.bf16.msra.mxu0 0
        %776 = vmatprep.subr.bf16.mxu0 0
        %777 = vmatpush2.bf16.msra.mxu0 0
        %778 = vmatprep.subr.bf16.mxu0 0
        %779 = vmatpush2.bf16.msra.mxu0 0
        %780 = vmatprep.subr.bf16.mxu0 0
        %781 = vmatpush2.bf16.msra.mxu0 0
        %782 = vmatprep.subr.bf16.mxu0 0
        %783 = vmatpush2.bf16.msra.mxu0 0
        %784 = vmatprep.subr.bf16.mxu0 0
        %785 = vmatpush2.bf16.msra.mxu0 0
        %786 = vmatprep.mubr.bf16.mxu0 0
        %787 = vmatmul.mubr.bf16.gmra.mxu0 %v752
        %v788 = vpop.f32.mrf.mxu0
        %v789 = vadd.f32 0.0, %v788
        %v790 = vpop.f32.mrf.mxu0
        %v791 = vpop.f32.mrf.mxu0
        %v792 = vpop.f32.mrf.mxu0
        %793 = vdwg.mxu0
        %v794 = vadd.f32 %v728, %v789
        %v795 = vld [vmem:[%s6] sm:$0x1]
        %v797 = vlaneseq
        %v798 = vshrl.u32 %v797, 7
        %v799 = vsub.s32 0, %v798
        %v800 = vrot.slane %v795, %v799
        %v802 = vadd.f32 %v794, %v800
        %v803 = vld [vmem:[%s7] sm:$0xf]
        %v804 = vld [vmem:[%s7 + $0x4] sm:$0xf]
        %v805 = vld [vmem:[%s7 + $0x8] sm:$0xf]
        %v806 = vld [vmem:[%s7 + $0xc] sm:$0xf]
        %v807 = vld [vmem:[%s7 + $0x10] sm:$0xf]
        %v808 = vld [vmem:[%s7 + $0x14] sm:$0xf]
        %v809 = vld [vmem:[%s7 + $0x18] sm:$0xf]
        %v810 = vld [vmem:[%s7 + $0x1c] sm:$0xf]
        %v811 = vld [vmem:[%s7 + $0x20] sm:$0xf]
        %v812 = vld [vmem:[%s7 + $0x24] sm:$0xf]
        %v813 = vld [vmem:[%s7 + $0x28] sm:$0xf]
        %v814 = vld [vmem:[%s7 + $0x2c] sm:$0xf]
        %v815 = vld [vmem:[%s8] sm:$0x1]
        %816 = vst.msk [vmem:[#allocation2 + $0x38] sm:$0xff] %vm602, %v802
        %v817 = vld [vmem:[#allocation2 + $0x30] sm:$0xff]
        %v818 = vld [vmem:[#allocation2 + $0x38] sm:$0xff]
        %v819 = vpack.c.bf16 %v818, %v817
        %v821 = vshrl.u32 %v819, 16
        %v823 = vrot.slane %v821, 3
        %v824 = vshll.u32 %v819, 16
        %v826 = vrot.slane %v824, 4
        %v827 = vor.u32 %v823, %v826
        %v832 = vunpack.c.l.b16 %v807
        %v833 = vunpack.c.l.b16 %v808
        %v834 = vunpack.c.l.b16 %v809
        %v835 = vunpack.c.l.b16 %v810
        %v836 = vpack.c.b16 %v833, %v832
        %v837 = vpack.c.b16 %v835, %v834
        %v841 = vsel %vm602, %v827, 0
        %843 = vmatprep.subr.bf16.mxu0 0
        %844 = vmatpush1.bf16.msra.mxu0 0
        %845 = vmatprep.subr.bf16.mxu0 0
        %846 = vmatpush1.bf16.msra.mxu0 0
        %847 = vmatprep.subr.bf16.mxu0 0
        %848 = vmatpush1.bf16.msra.mxu0 0
        %849 = vmatprep.subr.bf16.mxu0 0
        %850 = vmatpush1.bf16.msra.mxu0 0
        %851 = vmatprep.subr.bf16.mxu0 0
        %852 = vmatpush1.bf16.msra.mxu0 0
        %853 = vmatprep.subr.bf16.mxu0 0
        %854 = vmatpush1.bf16.msra.mxu0 0
        %855 = vmatprep.subr.bf16.mxu0 0
        %856 = vmatpush1.bf16.msra.mxu0 %v837
        %857 = vmatprep.subr.bf16.mxu0 0
        %858 = vmatpush1.bf16.msra.mxu0 %v836
        %859 = vmatprep.subr.bf16.mxu0 0
        %860 = vmatpush2.bf16.msra.mxu0 0
        %861 = vmatprep.subr.bf16.mxu0 0
        %862 = vmatpush2.bf16.msra.mxu0 0
        %863 = vmatprep.subr.bf16.mxu0 0
        %864 = vmatpush2.bf16.msra.mxu0 0
        %865 = vmatprep.subr.bf16.mxu0 0
        %866 = vmatpush2.bf16.msra.mxu0 0
        %867 = vmatprep.subr.bf16.mxu0 0
        %868 = vmatpush2.bf16.msra.mxu0 0
        %869 = vmatprep.subr.bf16.mxu0 0
        %870 = vmatpush2.bf16.msra.mxu0 0
        %871 = vmatprep.subr.bf16.mxu0 0
        %872 = vmatpush2.bf16.msra.mxu0 0
        %873 = vmatprep.subr.bf16.mxu0 0
        %874 = vmatpush2.bf16.msra.mxu0 0
        %875 = vmatprep.mubr.bf16.mxu0 0
        %876 = vmatmul.mubr.bf16.gmra.mxu0 %v841
        %v877 = vpop.f32.mrf.mxu0
        %v878 = vadd.f32 0.0, %v877
        %v879 = vpop.f32.mrf.mxu0
        %v880 = vpop.f32.mrf.mxu0
        %v881 = vpop.f32.mrf.mxu0
        %882 = vdwg.mxu0
        %v884 = vrot.slane %v819, 3
        %v889 = vunpack.c.l.b16 %v803
        %v890 = vunpack.c.l.b16 %v804
        %v891 = vunpack.c.l.b16 %v805
        %v892 = vunpack.c.l.b16 %v806
        %v893 = vpack.c.b16 %v890, %v889
        %v894 = vpack.c.b16 %v892, %v891
        %v898 = vsel %vm602, %v884, 0
        %900 = vmatprep.subr.bf16.mxu0 0
        %901 = vmatpush1.bf16.msra.mxu0 0
        %902 = vmatprep.subr.bf16.mxu0 0
        %903 = vmatpush1.bf16.msra.mxu0 0
        %904 = vmatprep.subr.bf16.mxu0 0
        %905 = vmatpush1.bf16.msra.mxu0 0
        %906 = vmatprep.subr.bf16.mxu0 0
        %907 = vmatpush1.bf16.msra.mxu0 0
        %908 = vmatprep.subr.bf16.mxu0 0
        %909 = vmatpush1.bf16.msra.mxu0 0
        %910 = vmatprep.subr.bf16.mxu0 0
        %911 = vmatpush1.bf16.msra.mxu0 0
        %912 = vmatprep.subr.bf16.mxu0 0
        %913 = vmatpush1.bf16.msra.mxu0 %v894
        %914 = vmatprep.subr.bf16.mxu0 0
        %915 = vmatpush1.bf16.msra.mxu0 %v893
        %916 = vmatprep.subr.bf16.mxu0 0
        %917 = vmatpush2.bf16.msra.mxu0 0
        %918 = vmatprep.subr.bf16.mxu0 0
        %919 = vmatpush2.bf16.msra.mxu0 0
        %920 = vmatprep.subr.bf16.mxu0 0
        %921 = vmatpush2.bf16.msra.mxu0 0
        %922 = vmatprep.subr.bf16.mxu0 0
        %923 = vmatpush2.bf16.msra.mxu0 0
        %924 = vmatprep.subr.bf16.mxu0 0
        %925 = vmatpush2.bf16.msra.mxu0 0
        %926 = vmatprep.subr.bf16.mxu0 0
        %927 = vmatpush2.bf16.msra.mxu0 0
        %928 = vmatprep.subr.bf16.mxu0 0
        %929 = vmatpush2.bf16.msra.mxu0 0
        %930 = vmatprep.subr.bf16.mxu0 0
        %931 = vmatpush2.bf16.msra.mxu0 0
        %932 = vmatprep.mubr.bf16.mxu0 0
        %933 = vmatmul.mubr.bf16.gmra.mxu0 %v898
        %v934 = vpop.f32.mrf.mxu0
        %v935 = vadd.f32 %v878, %v934
        %v936 = vpop.f32.mrf.mxu0
        %v937 = vpop.f32.mrf.mxu0
        %v938 = vpop.f32.mrf.mxu0
        %939 = vdwg.mxu0
        %v940 = vpack.c.bf16 %v802, %v802
        %v945 = vunpack.c.l.b16 %v811
        %v946 = vunpack.c.l.b16 %v812
        %v947 = vunpack.c.l.b16 %v813
        %v948 = vunpack.c.l.b16 %v814
        %v949 = vpack.c.b16 %v946, %v945
        %v950 = vpack.c.b16 %v948, %v947
        %v954 = vsel %vm602, %v940, 0
        %956 = vmatprep.subr.bf16.mxu0 0
        %957 = vmatpush1.bf16.msra.mxu0 0
        %958 = vmatprep.subr.bf16.mxu0 0
        %959 = vmatpush1.bf16.msra.mxu0 0
        %960 = vmatprep.subr.bf16.mxu0 0
        %961 = vmatpush1.bf16.msra.mxu0 0
        %962 = vmatprep.subr.bf16.mxu0 0
        %963 = vmatpush1.bf16.msra.mxu0 0
        %964 = vmatprep.subr.bf16.mxu0 0
        %965 = vmatpush1.bf16.msra.mxu0 0
        %966 = vmatprep.subr.bf16.mxu0 0
        %967 = vmatpush1.bf16.msra.mxu0 0
        %968 = vmatprep.subr.bf16.mxu0 0
        %969 = vmatpush1.bf16.msra.mxu0 %v950
        %970 = vmatprep.subr.bf16.mxu0 0
        %971 = vmatpush1.bf16.msra.mxu0 %v949
        %972 = vmatprep.subr.bf16.mxu0 0
        %973 = vmatpush2.bf16.msra.mxu0 0
        %974 = vmatprep.subr.bf16.mxu0 0
        %975 = vmatpush2.bf16.msra.mxu0 0
        %976 = vmatprep.subr.bf16.mxu0 0
        %977 = vmatpush2.bf16.msra.mxu0 0
        %978 = vmatprep.subr.bf16.mxu0 0
        %979 = vmatpush2.bf16.msra.mxu0 0
        %980 = vmatprep.subr.bf16.mxu0 0
        %981 = vmatpush2.bf16.msra.mxu0 0
        %982 = vmatprep.subr.bf16.mxu0 0
        %983 = vmatpush2.bf16.msra.mxu0 0
        %984 = vmatprep.subr.bf16.mxu0 0
        %985 = vmatpush2.bf16.msra.mxu0 0
        %986 = vmatprep.subr.bf16.mxu0 0
        %987 = vmatpush2.bf16.msra.mxu0 0
        %988 = vmatprep.mubr.bf16.mxu0 0
        %989 = vmatmul.mubr.bf16.gmra.mxu0 %v954
        %v990 = vpop.f32.mrf.mxu0
        %v991 = vadd.f32 0.0, %v990
        %v992 = vpop.f32.mrf.mxu0
        %v993 = vpop.f32.mrf.mxu0
        %v994 = vpop.f32.mrf.mxu0
        %995 = vdwg.mxu0
        %v996 = vadd.f32 %v935, %v991
        %v998 = vlaneseq
        %v999 = vshrl.u32 %v998, 7
        %v1000 = vsub.s32 0, %v999
        %v1001 = vrot.slane %v815, %v1000
        %v1003 = vadd.f32 %v996, %v1001
        %v1004 = vxor.u32 %v1003, 2147483648
        %v1005 = vmul.f32 %v1004, 1.442695
        %v1006 = vpow.pop %v1005
        %v1007 = vadd.f32 %v1006, 1.0
        %v1008 = vrcp.pop %v1007
        %v1009 = vmul.f32 1.0, %v1008
        %1011 = vrot.lane.b32.xlu0 %v1003, 32
        %v1012 = vpop.permute.xlu0 %1011
        %v1014 = vmul.f32 %v1009, %v1012
        %v1015 = vsub.f32 1.0, %v1009
        %1017 = vrot.lane.b32.xlu0 %v802, 32
        %v1018 = vpop.permute.xlu0 %1017
        %v1020 = vmul.f32 %v1015, %v1018
        %v1021 = vadd.f32 %v1014, %v1020
        %s1022 = scalar_lea.vmem %s7, 48
        %v1023 = vld [vmem:[%s1022] sm:$0xf]
        %v1024 = vld [vmem:[%s1022 + $0x4] sm:$0xf]
        %v1025 = vld [vmem:[%s1022 + $0x8] sm:$0xf]
        %v1026 = vld [vmem:[%s1022 + $0xc] sm:$0xf]
        %v1027 = vld [vmem:[%s1022 + $0x10] sm:$0xf]
        %v1028 = vld [vmem:[%s1022 + $0x14] sm:$0xf]
        %v1029 = vld [vmem:[%s1022 + $0x18] sm:$0xf]
        %v1030 = vld [vmem:[%s1022 + $0x1c] sm:$0xf]
        %v1031 = vld [vmem:[%s1022 + $0x20] sm:$0xf]
        %v1032 = vld [vmem:[%s1022 + $0x24] sm:$0xf]
        %v1033 = vld [vmem:[%s1022 + $0x28] sm:$0xf]
        %v1034 = vld [vmem:[%s1022 + $0x2c] sm:$0xf]
        %s1035 = scalar_lea.vmem %s8, 1
        %v1036 = vld [vmem:[%s1035] sm:$0x1]
        %1038 = vrot.lane.b32.xlu0 %v1021, 96
        %v1039 = vpop.permute.xlu0 %1038
        %1041 = vst.msk [vmem:[#allocation2 + $0x38] sm:$0xff] %vm602, %v1039
        %v1042 = vld [vmem:[#allocation2 + $0x30] sm:$0xff]
        %v1043 = vld [vmem:[#allocation2 + $0x38] sm:$0xff]
        %v1044 = vpack.c.bf16 %v1043, %v1042
        %v1046 = vshrl.u32 %v1044, 16
        %v1048 = vrot.slane %v1046, 2
        %v1049 = vshll.u32 %v1044, 16
        %v1051 = vrot.slane %v1049, 3
        %v1052 = vor.u32 %v1048, %v1051
        %v1057 = vunpack.c.l.b16 %v1027
        %v1058 = vunpack.c.l.b16 %v1028
        %v1059 = vunpack.c.l.b16 %v1029
        %v1060 = vunpack.c.l.b16 %v1030
        %v1061 = vpack.c.b16 %v1058, %v1057
        %v1062 = vpack.c.b16 %v1060, %v1059
        %v1066 = vsel %vm602, %v1052, 0
        %1068 = vmatprep.subr.bf16.mxu0 0
        %1069 = vmatpush1.bf16.msra.mxu0 0
        %1070 = vmatprep.subr.bf16.mxu0 0
        %1071 = vmatpush1.bf16.msra.mxu0 0
        %1072 = vmatprep.subr.bf16.mxu0 0
        %1073 = vmatpush1.bf16.msra.mxu0 0
        %1074 = vmatprep.subr.bf16.mxu0 0
        %1075 = vmatpush1.bf16.msra.mxu0 0
        %1076 = vmatprep.subr.bf16.mxu0 0
        %1077 = vmatpush1.bf16.msra.mxu0 0
        %1078 = vmatprep.subr.bf16.mxu0 0
        %1079 = vmatpush1.bf16.msra.mxu0 0
        %1080 = vmatprep.subr.bf16.mxu0 0
        %1081 = vmatpush1.bf16.msra.mxu0 %v1062
        %1082 = vmatprep.subr.bf16.mxu0 0
        %1083 = vmatpush1.bf16.msra.mxu0 %v1061
        %1084 = vmatprep.subr.bf16.mxu0 0
        %1085 = vmatpush2.bf16.msra.mxu0 0
        %1086 = vmatprep.subr.bf16.mxu0 0
        %1087 = vmatpush2.bf16.msra.mxu0 0
        %1088 = vmatprep.subr.bf16.mxu0 0
        %1089 = vmatpush2.bf16.msra.mxu0 0
        %1090 = vmatprep.subr.bf16.mxu0 0
        %1091 = vmatpush2.bf16.msra.mxu0 0
        %1092 = vmatprep.subr.bf16.mxu0 0
        %1093 = vmatpush2.bf16.msra.mxu0 0
        %1094 = vmatprep.subr.bf16.mxu0 0
        %1095 = vmatpush2.bf16.msra.mxu0 0
        %1096 = vmatprep.subr.bf16.mxu0 0
        %1097 = vmatpush2.bf16.msra.mxu0 0
        %1098 = vmatprep.subr.bf16.mxu0 0
        %1099 = vmatpush2.bf16.msra.mxu0 0
        %1100 = vmatprep.mubr.bf16.mxu0 0
        %1101 = vmatmul.mubr.bf16.gmra.mxu0 %v1066
        %v1102 = vpop.f32.mrf.mxu0
        %v1103 = vadd.f32 0.0, %v1102
        %v1104 = vpop.f32.mrf.mxu0
        %v1105 = vpop.f32.mrf.mxu0
        %v1106 = vpop.f32.mrf.mxu0
        %1107 = vdwg.mxu0
        %v1109 = vrot.slane %v1044, 1
        %v1114 = vunpack.c.l.b16 %v1023
        %v1115 = vunpack.c.l.b16 %v1024
        %v1116 = vunpack.c.l.b16 %v1025
        %v1117 = vunpack.c.l.b16 %v1026
        %v1118 = vpack.c.b16 %v1115, %v1114
        %v1119 = vpack.c.b16 %v1117, %v1116
        %v1123 = vsel %vm602, %v1109, 0
        %1125 = vmatprep.subr.bf16.mxu0 0
        %1126 = vmatpush1.bf16.msra.mxu0 0
        %1127 = vmatprep.subr.bf16.mxu0 0
        %1128 = vmatpush1.bf16.msra.mxu0 0
        %1129 = vmatprep.subr.bf16.mxu0 0
        %1130 = vmatpush1.bf16.msra.mxu0 0
        %1131 = vmatprep.subr.bf16.mxu0 0
        %1132 = vmatpush1.bf16.msra.mxu0 0
        %1133 = vmatprep.subr.bf16.mxu0 0
        %1134 = vmatpush1.bf16.msra.mxu0 0
        %1135 = vmatprep.subr.bf16.mxu0 0
        %1136 = vmatpush1.bf16.msra.mxu0 0
        %1137 = vmatprep.subr.bf16.mxu0 0
        %1138 = vmatpush1.bf16.msra.mxu0 %v1119
        %1139 = vmatprep.subr.bf16.mxu0 0
        %1140 = vmatpush1.bf16.msra.mxu0 %v1118
        %1141 = vmatprep.subr.bf16.mxu0 0
        %1142 = vmatpush2.bf16.msra.mxu0 0
        %1143 = vmatprep.subr.bf16.mxu0 0
        %1144 = vmatpush2.bf16.msra.mxu0 0
        %1145 = vmatprep.subr.bf16.mxu0 0
        %1146 = vmatpush2.bf16.msra.mxu0 0
        %1147 = vmatprep.subr.bf16.mxu0 0
        %1148 = vmatpush2.bf16.msra.mxu0 0
        %1149 = vmatprep.subr.bf16.mxu0 0
        %1150 = vmatpush2.bf16.msra.mxu0 0
        %1151 = vmatprep.subr.bf16.mxu0 0
        %1152 = vmatpush2.bf16.msra.mxu0 0
        %1153 = vmatprep.subr.bf16.mxu0 0
        %1154 = vmatpush2.bf16.msra.mxu0 0
        %1155 = vmatprep.subr.bf16.mxu0 0
        %1156 = vmatpush2.bf16.msra.mxu0 0
        %1157 = vmatprep.mubr.bf16.mxu0 0
        %1158 = vmatmul.mubr.bf16.gmra.mxu0 %v1123
        %v1159 = vpop.f32.mrf.mxu0
        %v1160 = vadd.f32 %v1103, %v1159
        %v1161 = vpop.f32.mrf.mxu0
        %v1162 = vpop.f32.mrf.mxu0
        %v1163 = vpop.f32.mrf.mxu0
        %1164 = vdwg.mxu0
        %v1165 = vpack.c.bf16 %v1021, %v1021
        %1167 = vrot.lane.b32.xlu0 %v1165, 96
        %v1168 = vpop.permute.xlu0 %1167
        %v1173 = vunpack.c.l.b16 %v1031
        %v1174 = vunpack.c.l.b16 %v1032
        %v1175 = vunpack.c.l.b16 %v1033
        %v1176 = vunpack.c.l.b16 %v1034
        %v1177 = vpack.c.b16 %v1174, %v1173
        %v1178 = vpack.c.b16 %v1176, %v1175
        %v1182 = vsel %vm602, %v1168, 0
        %1184 = vmatprep.subr.bf16.mxu0 0
        %1185 = vmatpush1.bf16.msra.mxu0 0
        %1186 = vmatprep.subr.bf16.mxu0 0
        %1187 = vmatpush1.bf16.msra.mxu0 0
        %1188 = vmatprep.subr.bf16.mxu0 0
        %1189 = vmatpush1.bf16.msra.mxu0 0
        %1190 = vmatprep.subr.bf16.mxu0 0
        %1191 = vmatpush1.bf16.msra.mxu0 0
        %1192 = vmatprep.subr.bf16.mxu0 0
        %1193 = vmatpush1.bf16.msra.mxu0 0
        %1194 = vmatprep.subr.bf16.mxu0 0
        %1195 = vmatpush1.bf16.msra.mxu0 0
        %1196 = vmatprep.subr.bf16.mxu0 0
        %1197 = vmatpush1.bf16.msra.mxu0 %v1178
        %1198 = vmatprep.subr.bf16.mxu0 0
        %1199 = vmatpush1.bf16.msra.mxu0 %v1177
        %1200 = vmatprep.subr.bf16.mxu0 0
        %1201 = vmatpush2.bf16.msra.mxu0 0
        %1202 = vmatprep.subr.bf16.mxu0 0
        %1203 = vmatpush2.bf16.msra.mxu0 0
        %1204 = vmatprep.subr.bf16.mxu0 0
        %1205 = vmatpush2.bf16.msra.mxu0 0
        %1206 = vmatprep.subr.bf16.mxu0 0
        %1207 = vmatpush2.bf16.msra.mxu0 0
        %1208 = vmatprep.subr.bf16.mxu0 0
        %1209 = vmatpush2.bf16.msra.mxu0 0
        %1210 = vmatprep.subr.bf16.mxu0 0
        %1211 = vmatpush2.bf16.msra.mxu0 0
        %1212 = vmatprep.subr.bf16.mxu0 0
        %1213 = vmatpush2.bf16.msra.mxu0 0
        %1214 = vmatprep.subr.bf16.mxu0 0
        %1215 = vmatpush2.bf16.msra.mxu0 0
        %1216 = vmatprep.mubr.bf16.mxu0 0
        %1217 = vmatmul.mubr.bf16.gmra.mxu0 %v1182
        %v1218 = vpop.f32.mrf.mxu0
        %v1219 = vadd.f32 0.0, %v1218
        %v1220 = vpop.f32.mrf.mxu0
        %v1221 = vpop.f32.mrf.mxu0
        %v1222 = vpop.f32.mrf.mxu0
        %1223 = vdwg.mxu0
        %v1224 = vadd.f32 %v1160, %v1219
        %v1226 = vlaneseq
        %v1227 = vshrl.u32 %v1226, 7
        %v1228 = vsub.s32 0, %v1227
        %v1229 = vrot.slane %v1036, %v1228
        %v1231 = vadd.f32 %v1224, %v1229
        %v1232 = vxor.u32 %v1231, 2147483648
        %v1233 = vmul.f32 %v1232, 1.442695
        %v1234 = vpow.pop %v1233
        %v1235 = vadd.f32 %v1234, 1.0
        %v1236 = vrcp.pop %v1235
        %v1237 = vmul.f32 1.0, %v1236
        %1239 = vrot.lane.b32.xlu0 %v1231, 32
        %v1240 = vpop.permute.xlu0 %1239
        %v1242 = vmul.f32 %v1237, %v1240
        %v1243 = vsub.f32 1.0, %v1237
        %v1244 = vmul.f32 %v1243, %v1021
        %v1245 = vadd.f32 %v1242, %v1244
        %s1246 = scalar_lea.vmem %s7, 96
        %v1247 = vld [vmem:[%s1246 + $0x20] sm:$0xf]
        %v1248 = vld [vmem:[%s1246 + $0x24] sm:$0xf]
        %v1249 = vld [vmem:[%s1246 + $0x28] sm:$0xf]
        %v1250 = vld [vmem:[%s1246 + $0x2c] sm:$0xf]
        %s1251 = scalar_lea.vmem %s8, 2
        %v1252 = vld [vmem:[%s1251] sm:$0x1]
        %v1253 = vpack.c.bf16 %v1245, %v1245
        %v1255 = vlaneseq
        %v1256 = vshrl.u32 %v1255, 7
        %v1257 = vsub.s32 0, %v1256
        %v1258 = vrot.slane %v1252, %v1257
        %1261 = vrot.lane.b32.xlu0 %v1253, 96
        %v1262 = vpop.permute.xlu0 %1261
        %v1267 = vunpack.c.l.b16 %v1247
        %v1268 = vunpack.c.l.b16 %v1248
        %v1269 = vunpack.c.l.b16 %v1249
        %v1270 = vunpack.c.l.b16 %v1250
        %v1271 = vpack.c.b16 %v1268, %v1267
        %v1272 = vpack.c.b16 %v1270, %v1269
        %v1276 = vsel %vm602, %v1262, 0
        %1278 = vmatprep.subr.bf16.mxu0 0
        %1279 = vmatpush1.bf16.msra.mxu0 0
        %1280 = vmatprep.subr.bf16.mxu0 0
        %1281 = vmatpush1.bf16.msra.mxu0 0
        %1282 = vmatprep.subr.bf16.mxu0 0
        %1283 = vmatpush1.bf16.msra.mxu0 0
        %1284 = vmatprep.subr.bf16.mxu0 0
        %1285 = vmatpush1.bf16.msra.mxu0 0
        %1286 = vmatprep.subr.bf16.mxu0 0
        %1287 = vmatpush1.bf16.msra.mxu0 0
        %1288 = vmatprep.subr.bf16.mxu0 0
        %1289 = vmatpush1.bf16.msra.mxu0 0
        %1290 = vmatprep.subr.bf16.mxu0 0
        %1291 = vmatpush1.bf16.msra.mxu0 %v1272
        %1292 = vmatprep.subr.bf16.mxu0 0
        %1293 = vmatpush1.bf16.msra.mxu0 %v1271
        %1294 = vmatprep.subr.bf16.mxu0 0
        %1295 = vmatpush2.bf16.msra.mxu0 0
        %1296 = vmatprep.subr.bf16.mxu0 0
        %1297 = vmatpush2.bf16.msra.mxu0 0
        %1298 = vmatprep.subr.bf16.mxu0 0
        %1299 = vmatpush2.bf16.msra.mxu0 0
        %1300 = vmatprep.subr.bf16.mxu0 0
        %1301 = vmatpush2.bf16.msra.mxu0 0
        %1302 = vmatprep.subr.bf16.mxu0 0
        %1303 = vmatpush2.bf16.msra.mxu0 0
        %1304 = vmatprep.subr.bf16.mxu0 0
        %1305 = vmatpush2.bf16.msra.mxu0 0
        %1306 = vmatprep.subr.bf16.mxu0 0
        %1307 = vmatpush2.bf16.msra.mxu0 0
        %1308 = vmatprep.subr.bf16.mxu0 0
        %1309 = vmatpush2.bf16.msra.mxu0 0
        %1310 = vmatprep.mubr.bf16.mxu0 0
        %1311 = vmatmul.mubr.bf16.gmra.mxu0 %v1276
        %v1312 = vpop.f32.mrf.mxu0
        %v1313 = vadd.f32 %v1258, %v1312
        %v1314 = vpop.f32.mrf.mxu0
        %v1315 = vpop.f32.mrf.mxu0
        %v1316 = vpop.f32.mrf.mxu0
        %1317 = vdwg.mxu0
        %v1318 = vxor.u32 %v1313, 2147483648
        %v1319 = vmul.f32 %v1318, 1.442695
        %v1320 = vpow.pop %v1319
        %v1321 = vadd.f32 %v1320, 1.0
        %v1322 = vrcp.pop %v1321
        %v1323 = vmul.f32 1.0, %v1322
        %1325 = vrot.lane.b32.xlu0 %v1313, 32
        %v1326 = vpop.permute.xlu0 %1325
        %v1328 = vmul.f32 %v1323, %v1326
        %v1329 = vsub.f32 1.0, %v1323
        %v1330 = vmul.f32 %v1329, %v1245
        %v1331 = vadd.f32 %v1328, %v1330
        %s1332 = scalar_lea.vmem %s7, 144
        %v1333 = vld [vmem:[%s1332 + $0x20] sm:$0xf]
        %v1334 = vld [vmem:[%s1332 + $0x24] sm:$0xf]
        %v1335 = vld [vmem:[%s1332 + $0x28] sm:$0xf]
        %v1336 = vld [vmem:[%s1332 + $0x2c] sm:$0xf]
        %s1337 = scalar_lea.vmem %s8, 3
        %v1338 = vld [vmem:[%s1337] sm:$0x1]
        %v1339 = vpack.c.bf16 %v1331, %v1331
        %v1341 = vlaneseq
        %v1342 = vshrl.u32 %v1341, 7
        %v1343 = vsub.s32 0, %v1342
        %v1344 = vrot.slane %v1338, %v1343
        %1347 = vrot.lane.b32.xlu0 %v1339, 96
        %v1348 = vpop.permute.xlu0 %1347
        %v1353 = vunpack.c.l.b16 %v1333
        %v1354 = vunpack.c.l.b16 %v1334
        %v1355 = vunpack.c.l.b16 %v1335
        %v1356 = vunpack.c.l.b16 %v1336
        %v1357 = vpack.c.b16 %v1354, %v1353
        %v1358 = vpack.c.b16 %v1356, %v1355
        %v1362 = vsel %vm602, %v1348, 0
        %1364 = vmatprep.subr.bf16.mxu0 0
        %1365 = vmatpush1.bf16.msra.mxu0 0
        %1366 = vmatprep.subr.bf16.mxu0 0
        %1367 = vmatpush1.bf16.msra.mxu0 0
        %1368 = vmatprep.subr.bf16.mxu0 0
        %1369 = vmatpush1.bf16.msra.mxu0 0
        %1370 = vmatprep.subr.bf16.mxu0 0
        %1371 = vmatpush1.bf16.msra.mxu0 0
        %1372 = vmatprep.subr.bf16.mxu0 0
        %1373 = vmatpush1.bf16.msra.mxu0 0
        %1374 = vmatprep.subr.bf16.mxu0 0
        %1375 = vmatpush1.bf16.msra.mxu0 0
        %1376 = vmatprep.subr.bf16.mxu0 0
        %1377 = vmatpush1.bf16.msra.mxu0 %v1358
        %1378 = vmatprep.subr.bf16.mxu0 0
        %1379 = vmatpush1.bf16.msra.mxu0 %v1357
        %1380 = vmatprep.subr.bf16.mxu0 0
        %1381 = vmatpush2.bf16.msra.mxu0 0
        %1382 = vmatprep.subr.bf16.mxu0 0
        %1383 = vmatpush2.bf16.msra.mxu0 0
        %1384 = vmatprep.subr.bf16.mxu0 0
        %1385 = vmatpush2.bf16.msra.mxu0 0
        %1386 = vmatprep.subr.bf16.mxu0 0
        %1387 = vmatpush2.bf16.msra.mxu0 0
        %1388 = vmatprep.subr.bf16.mxu0 0
        %1389 = vmatpush2.bf16.msra.mxu0 0
        %1390 = vmatprep.subr.bf16.mxu0 0
        %1391 = vmatpush2.bf16.msra.mxu0 0
        %1392 = vmatprep.subr.bf16.mxu0 0
        %1393 = vmatpush2.bf16.msra.mxu0 0
        %1394 = vmatprep.subr.bf16.mxu0 0
        %1395 = vmatpush2.bf16.msra.mxu0 0
        %1396 = vmatprep.mubr.bf16.mxu0 0
        %1397 = vmatmul.mubr.bf16.gmra.mxu0 %v1362
        %v1398 = vpop.f32.mrf.mxu0
        %v1399 = vadd.f32 %v1344, %v1398
        %v1400 = vpop.f32.mrf.mxu0
        %v1401 = vpop.f32.mrf.mxu0
        %v1402 = vpop.f32.mrf.mxu0
        %1403 = vdwg.mxu0
        %v1404 = vxor.u32 %v1399, 2147483648
        %v1405 = vmul.f32 %v1404, 1.442695
        %v1406 = vpow.pop %v1405
        %v1407 = vadd.f32 %v1406, 1.0
        %v1408 = vrcp.pop %v1407
        %v1409 = vmul.f32 1.0, %v1408
        %1411 = vrot.lane.b32.xlu0 %v1399, 32
        %v1412 = vpop.permute.xlu0 %1411
        %v1414 = vmul.f32 %v1409, %v1412
        %v1415 = vsub.f32 1.0, %v1409
        %v1416 = vmul.f32 %v1415, %v1331
        %v1417 = vadd.f32 %v1414, %v1416
        %s1418 = scalar_lea.vmem %s7, 192
        %v1419 = vld [vmem:[%s1418] sm:$0xf]
        %v1420 = vld [vmem:[%s1418 + $0x4] sm:$0xf]
        %v1421 = vld [vmem:[%s1418 + $0x8] sm:$0xf]
        %v1422 = vld [vmem:[%s1418 + $0xc] sm:$0xf]
        %v1423 = vld [vmem:[%s1418 + $0x10] sm:$0xf]
        %v1424 = vld [vmem:[%s1418 + $0x14] sm:$0xf]
        %v1425 = vld [vmem:[%s1418 + $0x18] sm:$0xf]
        %v1426 = vld [vmem:[%s1418 + $0x1c] sm:$0xf]
        %v1427 = vld [vmem:[%s1418 + $0x20] sm:$0xf]
        %v1428 = vld [vmem:[%s1418 + $0x24] sm:$0xf]
        %v1429 = vld [vmem:[%s1418 + $0x28] sm:$0xf]
        %v1430 = vld [vmem:[%s1418 + $0x2c] sm:$0xf]
        %s1431 = scalar_lea.vmem %s8, 4
        %v1432 = vld [vmem:[%s1431] sm:$0x1]
        %1434 = vrot.lane.b32.xlu0 %v1417, 96
        %v1435 = vpop.permute.xlu0 %1434
        %1437 = vst.msk [vmem:[#allocation2 + $0x38] sm:$0xff] %vm602, %v1435
        %v1438 = vld [vmem:[#allocation2 + $0x30] sm:$0xff]
        %v1439 = vld [vmem:[#allocation2 + $0x38] sm:$0xff]
        %v1440 = vpack.c.bf16 %v1439, %v1438
        %v1442 = vshrl.u32 %v1440, 16
        %v1444 = vrot.slane %v1442, 3
        %v1445 = vshll.u32 %v1440, 16
        %v1447 = vrot.slane %v1445, 4
        %v1448 = vor.u32 %v1444, %v1447
        %v1453 = vunpack.c.l.b16 %v1423
        %v1454 = vunpack.c.l.b16 %v1424
        %v1455 = vunpack.c.l.b16 %v1425
        %v1456 = vunpack.c.l.b16 %v1426
        %v1457 = vpack.c.b16 %v1454, %v1453
        %v1458 = vpack.c.b16 %v1456, %v1455
        %v1462 = vsel %vm602, %v1448, 0
        %1464 = vmatprep.subr.bf16.mxu0 0
        %1465 = vmatpush1.bf16.msra.mxu0 0
        %1466 = vmatprep.subr.bf16.mxu0 0
        %1467 = vmatpush1.bf16.msra.mxu0 0
        %1468 = vmatprep.subr.bf16.mxu0 0
        %1469 = vmatpush1.bf16.msra.mxu0 0
        %1470 = vmatprep.subr.bf16.mxu0 0
        %1471 = vmatpush1.bf16.msra.mxu0 0
        %1472 = vmatprep.subr.bf16.mxu0 0
        %1473 = vmatpush1.bf16.msra.mxu0 0
        %1474 = vmatprep.subr.bf16.mxu0 0
        %1475 = vmatpush1.bf16.msra.mxu0 0
        %1476 = vmatprep.subr.bf16.mxu0 0
        %1477 = vmatpush1.bf16.msra.mxu0 %v1458
        %1478 = vmatprep.subr.bf16.mxu0 0
        %1479 = vmatpush1.bf16.msra.mxu0 %v1457
        %1480 = vmatprep.subr.bf16.mxu0 0
        %1481 = vmatpush2.bf16.msra.mxu0 0
        %1482 = vmatprep.subr.bf16.mxu0 0
        %1483 = vmatpush2.bf16.msra.mxu0 0
        %1484 = vmatprep.subr.bf16.mxu0 0
        %1485 = vmatpush2.bf16.msra.mxu0 0
        %1486 = vmatprep.subr.bf16.mxu0 0
        %1487 = vmatpush2.bf16.msra.mxu0 0
        %1488 = vmatprep.subr.bf16.mxu0 0
        %1489 = vmatpush2.bf16.msra.mxu0 0
        %1490 = vmatprep.subr.bf16.mxu0 0
        %1491 = vmatpush2.bf16.msra.mxu0 0
        %1492 = vmatprep.subr.bf16.mxu0 0
        %1493 = vmatpush2.bf16.msra.mxu0 0
        %1494 = vmatprep.subr.bf16.mxu0 0
        %1495 = vmatpush2.bf16.msra.mxu0 0
        %1496 = vmatprep.mubr.bf16.mxu0 0
        %1497 = vmatmul.mubr.bf16.gmra.mxu0 %v1462
        %v1498 = vpop.f32.mrf.mxu0
        %v1499 = vadd.f32 0.0, %v1498
        %v1500 = vpop.f32.mrf.mxu0
        %v1501 = vpop.f32.mrf.mxu0
        %v1502 = vpop.f32.mrf.mxu0
        %1503 = vdwg.mxu0
        %v1505 = vrot.slane %v1440, 3
        %v1510 = vunpack.c.l.b16 %v1419
        %v1511 = vunpack.c.l.b16 %v1420
        %v1512 = vunpack.c.l.b16 %v1421
        %v1513 = vunpack.c.l.b16 %v1422
        %v1514 = vpack.c.b16 %v1511, %v1510
        %v1515 = vpack.c.b16 %v1513, %v1512
        %v1519 = vsel %vm602, %v1505, 0
        %1521 = vmatprep.subr.bf16.mxu0 0
        %1522 = vmatpush1.bf16.msra.mxu0 0
        %1523 = vmatprep.subr.bf16.mxu0 0
        %1524 = vmatpush1.bf16.msra.mxu0 0
        %1525 = vmatprep.subr.bf16.mxu0 0
        %1526 = vmatpush1.bf16.msra.mxu0 0
        %1527 = vmatprep.subr.bf16.mxu0 0
        %1528 = vmatpush1.bf16.msra.mxu0 0
        %1529 = vmatprep.subr.bf16.mxu0 0
        %1530 = vmatpush1.bf16.msra.mxu0 0
        %1531 = vmatprep.subr.bf16.mxu0 0
        %1532 = vmatpush1.bf16.msra.mxu0 0
        %1533 = vmatprep.subr.bf16.mxu0 0
        %1534 = vmatpush1.bf16.msra.mxu0 %v1515
        %1535 = vmatprep.subr.bf16.mxu0 0
        %1536 = vmatpush1.bf16.msra.mxu0 %v1514
        %1537 = vmatprep.subr.bf16.mxu0 0
        %1538 = vmatpush2.bf16.msra.mxu0 0
        %1539 = vmatprep.subr.bf16.mxu0 0
        %1540 = vmatpush2.bf16.msra.mxu0 0
        %1541 = vmatprep.subr.bf16.mxu0 0
        %1542 = vmatpush2.bf16.msra.mxu0 0
        %1543 = vmatprep.subr.bf16.mxu0 0
        %1544 = vmatpush2.bf16.msra.mxu0 0
        %1545 = vmatprep.subr.bf16.mxu0 0
        %1546 = vmatpush2.bf16.msra.mxu0 0
        %1547 = vmatprep.subr.bf16.mxu0 0
        %1548 = vmatpush2.bf16.msra.mxu0 0
        %1549 = vmatprep.subr.bf16.mxu0 0
        %1550 = vmatpush2.bf16.msra.mxu0 0
        %1551 = vmatprep.subr.bf16.mxu0 0
        %1552 = vmatpush2.bf16.msra.mxu0 0
        %1553 = vmatprep.mubr.bf16.mxu0 0
        %1554 = vmatmul.mubr.bf16.gmra.mxu0 %v1519
        %v1555 = vpop.f32.mrf.mxu0
        %v1556 = vadd.f32 %v1499, %v1555
        %v1557 = vpop.f32.mrf.mxu0
        %v1558 = vpop.f32.mrf.mxu0
        %v1559 = vpop.f32.mrf.mxu0
        %1560 = vdwg.mxu0
        %v1561 = vpack.c.bf16 %v1417, %v1417
        %1563 = vrot.lane.b32.xlu0 %v1561, 96
        %v1564 = vpop.permute.xlu0 %1563
        %v1569 = vunpack.c.l.b16 %v1427
        %v1570 = vunpack.c.l.b16 %v1428
        %v1571 = vunpack.c.l.b16 %v1429
        %v1572 = vunpack.c.l.b16 %v1430
        %v1573 = vpack.c.b16 %v1570, %v1569
        %v1574 = vpack.c.b16 %v1572, %v1571
        %v1578 = vsel %vm602, %v1564, 0
        %1580 = vmatprep.subr.bf16.mxu0 0
        %1581 = vmatpush1.bf16.msra.mxu0 0
        %1582 = vmatprep.subr.bf16.mxu0 0
        %1583 = vmatpush1.bf16.msra.mxu0 0
        %1584 = vmatprep.subr.bf16.mxu0 0
        %1585 = vmatpush1.bf16.msra.mxu0 0
        %1586 = vmatprep.subr.bf16.mxu0 0
        %1587 = vmatpush1.bf16.msra.mxu0 0
        %1588 = vmatprep.subr.bf16.mxu0 0
        %1589 = vmatpush1.bf16.msra.mxu0 0
        %1590 = vmatprep.subr.bf16.mxu0 0
        %1591 = vmatpush1.bf16.msra.mxu0 0
        %1592 = vmatprep.subr.bf16.mxu0 0
        %1593 = vmatpush1.bf16.msra.mxu0 %v1574
        %1594 = vmatprep.subr.bf16.mxu0 0
        %1595 = vmatpush1.bf16.msra.mxu0 %v1573
        %1596 = vmatprep.subr.bf16.mxu0 0
        %1597 = vmatpush2.bf16.msra.mxu0 0
        %1598 = vmatprep.subr.bf16.mxu0 0
        %1599 = vmatpush2.bf16.msra.mxu0 0
        %1600 = vmatprep.subr.bf16.mxu0 0
        %1601 = vmatpush2.bf16.msra.mxu0 0
        %1602 = vmatprep.subr.bf16.mxu0 0
        %1603 = vmatpush2.bf16.msra.mxu0 0
        %1604 = vmatprep.subr.bf16.mxu0 0
        %1605 = vmatpush2.bf16.msra.mxu0 0
        %1606 = vmatprep.subr.bf16.mxu0 0
        %1607 = vmatpush2.bf16.msra.mxu0 0
        %1608 = vmatprep.subr.bf16.mxu0 0
        %1609 = vmatpush2.bf16.msra.mxu0 0
        %1610 = vmatprep.subr.bf16.mxu0 0
        %1611 = vmatpush2.bf16.msra.mxu0 0
        %1612 = vmatprep.mubr.bf16.mxu0 0
        %1613 = vmatmul.mubr.bf16.gmra.mxu0 %v1578
        %v1614 = vpop.f32.mrf.mxu0
        %v1615 = vadd.f32 0.0, %v1614
        %v1616 = vpop.f32.mrf.mxu0
        %v1617 = vpop.f32.mrf.mxu0
        %v1618 = vpop.f32.mrf.mxu0
        %1619 = vdwg.mxu0
        %v1620 = vadd.f32 %v1556, %v1615
        %v1622 = vlaneseq
        %v1623 = vshrl.u32 %v1622, 7
        %v1624 = vsub.s32 0, %v1623
        %v1625 = vrot.slane %v1432, %v1624
        %v1627 = vadd.f32 %v1620, %v1625
        %v1628 = vxor.u32 %v1627, 2147483648
        %v1629 = vmul.f32 %v1628, 1.442695
        %v1630 = vpow.pop %v1629
        %v1631 = vadd.f32 %v1630, 1.0
        %v1632 = vrcp.pop %v1631
        %v1633 = vmul.f32 1.0, %v1632
        %1635 = vrot.lane.b32.xlu0 %v1627, 32
        %v1636 = vpop.permute.xlu0 %1635
        %v1638 = vmul.f32 %v1633, %v1636
        %v1639 = vsub.f32 1.0, %v1633
        %v1640 = vmul.f32 %v1639, %v1417
        %v1641 = vadd.f32 %v1638, %v1640
        %s1642 = scalar_lea.vmem %s7, 240
        %v1643 = vld [vmem:[%s1642] sm:$0xf]
        %v1644 = vld [vmem:[%s1642 + $0x4] sm:$0xf]
        %v1645 = vld [vmem:[%s1642 + $0x8] sm:$0xf]
        %v1646 = vld [vmem:[%s1642 + $0xc] sm:$0xf]
        %v1647 = vld [vmem:[%s1642 + $0x10] sm:$0xf]
        %v1648 = vld [vmem:[%s1642 + $0x14] sm:$0xf]
        %v1649 = vld [vmem:[%s1642 + $0x18] sm:$0xf]
        %v1650 = vld [vmem:[%s1642 + $0x1c] sm:$0xf]
        %v1651 = vld [vmem:[%s1642 + $0x20] sm:$0xf]
        %v1652 = vld [vmem:[%s1642 + $0x24] sm:$0xf]
        %v1653 = vld [vmem:[%s1642 + $0x28] sm:$0xf]
        %v1654 = vld [vmem:[%s1642 + $0x2c] sm:$0xf]
        %s1655 = scalar_lea.vmem %s8, 5
        %v1656 = vld [vmem:[%s1655] sm:$0x1]
        %1658 = vrot.lane.b32.xlu0 %v1641, 96
        %v1659 = vpop.permute.xlu0 %1658
        %1661 = vst.msk [vmem:[#allocation2 + $0x38] sm:$0xff] %vm602, %v1659
        %v1662 = vld [vmem:[#allocation2 + $0x30] sm:$0xff]
        %v1663 = vld [vmem:[#allocation2 + $0x38] sm:$0xff]
        %v1664 = vpack.c.bf16 %v1663, %v1662
        %v1666 = vshrl.u32 %v1664, 16
        %v1668 = vrot.slane %v1666, 3
        %v1669 = vshll.u32 %v1664, 16
        %v1671 = vrot.slane %v1669, 4
        %v1672 = vor.u32 %v1668, %v1671
        %v1677 = vunpack.c.l.b16 %v1647
        %v1678 = vunpack.c.l.b16 %v1648
        %v1679 = vunpack.c.l.b16 %v1649
        %v1680 = vunpack.c.l.b16 %v1650
        %v1681 = vpack.c.b16 %v1678, %v1677
        %v1682 = vpack.c.b16 %v1680, %v1679
        %v1686 = vsel %vm602, %v1672, 0
        %1688 = vmatprep.subr.bf16.mxu0 0
        %1689 = vmatpush1.bf16.msra.mxu0 0
        %1690 = vmatprep.subr.bf16.mxu0 0
        %1691 = vmatpush1.bf16.msra.mxu0 0
        %1692 = vmatprep.subr.bf16.mxu0 0
        %1693 = vmatpush1.bf16.msra.mxu0 0
        %1694 = vmatprep.subr.bf16.mxu0 0
        %1695 = vmatpush1.bf16.msra.mxu0 0
        %1696 = vmatprep.subr.bf16.mxu0 0
        %1697 = vmatpush1.bf16.msra.mxu0 0
        %1698 = vmatprep.subr.bf16.mxu0 0
        %1699 = vmatpush1.bf16.msra.mxu0 0
        %1700 = vmatprep.subr.bf16.mxu0 0
        %1701 = vmatpush1.bf16.msra.mxu0 %v1682
        %1702 = vmatprep.subr.bf16.mxu0 0
        %1703 = vmatpush1.bf16.msra.mxu0 %v1681
        %1704 = vmatprep.subr.bf16.mxu0 0
        %1705 = vmatpush2.bf16.msra.mxu0 0
        %1706 = vmatprep.subr.bf16.mxu0 0
        %1707 = vmatpush2.bf16.msra.mxu0 0
        %1708 = vmatprep.subr.bf16.mxu0 0
        %1709 = vmatpush2.bf16.msra.mxu0 0
        %1710 = vmatprep.subr.bf16.mxu0 0
        %1711 = vmatpush2.bf16.msra.mxu0 0
        %1712 = vmatprep.subr.bf16.mxu0 0
        %1713 = vmatpush2.bf16.msra.mxu0 0
        %1714 = vmatprep.subr.bf16.mxu0 0
        %1715 = vmatpush2.bf16.msra.mxu0 0
        %1716 = vmatprep.subr.bf16.mxu0 0
        %1717 = vmatpush2.bf16.msra.mxu0 0
        %1718 = vmatprep.subr.bf16.mxu0 0
        %1719 = vmatpush2.bf16.msra.mxu0 0
        %1720 = vmatprep.mubr.bf16.mxu0 0
        %1721 = vmatmul.mubr.bf16.gmra.mxu0 %v1686
        %v1722 = vpop.f32.mrf.mxu0
        %v1723 = vadd.f32 0.0, %v1722
        %v1724 = vpop.f32.mrf.mxu0
        %v1725 = vpop.f32.mrf.mxu0
        %v1726 = vpop.f32.mrf.mxu0
        %1727 = vdwg.mxu0
        %v1729 = vrot.slane %v1664, 3
        %v1734 = vunpack.c.l.b16 %v1643
        %v1735 = vunpack.c.l.b16 %v1644
        %v1736 = vunpack.c.l.b16 %v1645
        %v1737 = vunpack.c.l.b16 %v1646
        %v1738 = vpack.c.b16 %v1735, %v1734
        %v1739 = vpack.c.b16 %v1737, %v1736
        %v1743 = vsel %vm602, %v1729, 0
        %1745 = vmatprep.subr.bf16.mxu0 0
        %1746 = vmatpush1.bf16.msra.mxu0 0
        %1747 = vmatprep.subr.bf16.mxu0 0
        %1748 = vmatpush1.bf16.msra.mxu0 0
        %1749 = vmatprep.subr.bf16.mxu0 0
        %1750 = vmatpush1.bf16.msra.mxu0 0
        %1751 = vmatprep.subr.bf16.mxu0 0
        %1752 = vmatpush1.bf16.msra.mxu0 0
        %1753 = vmatprep.subr.bf16.mxu0 0
        %1754 = vmatpush1.bf16.msra.mxu0 0
        %1755 = vmatprep.subr.bf16.mxu0 0
        %1756 = vmatpush1.bf16.msra.mxu0 0
        %1757 = vmatprep.subr.bf16.mxu0 0
        %1758 = vmatpush1.bf16.msra.mxu0 %v1739
        %1759 = vmatprep.subr.bf16.mxu0 0
        %1760 = vmatpush1.bf16.msra.mxu0 %v1738
        %1761 = vmatprep.subr.bf16.mxu0 0
        %1762 = vmatpush2.bf16.msra.mxu0 0
        %1763 = vmatprep.subr.bf16.mxu0 0
        %1764 = vmatpush2.bf16.msra.mxu0 0
        %1765 = vmatprep.subr.bf16.mxu0 0
        %1766 = vmatpush2.bf16.msra.mxu0 0
        %1767 = vmatprep.subr.bf16.mxu0 0
        %1768 = vmatpush2.bf16.msra.mxu0 0
        %1769 = vmatprep.subr.bf16.mxu0 0
        %1770 = vmatpush2.bf16.msra.mxu0 0
        %1771 = vmatprep.subr.bf16.mxu0 0
        %1772 = vmatpush2.bf16.msra.mxu0 0
        %1773 = vmatprep.subr.bf16.mxu0 0
        %1774 = vmatpush2.bf16.msra.mxu0 0
        %1775 = vmatprep.subr.bf16.mxu0 0
        %1776 = vmatpush2.bf16.msra.mxu0 0
        %1777 = vmatprep.mubr.bf16.mxu0 0
        %1778 = vmatmul.mubr.bf16.gmra.mxu0 %v1743
        %v1779 = vpop.f32.mrf.mxu0
        %v1780 = vadd.f32 %v1723, %v1779
        %v1781 = vpop.f32.mrf.mxu0
        %v1782 = vpop.f32.mrf.mxu0
        %v1783 = vpop.f32.mrf.mxu0
        %1784 = vdwg.mxu0
        %v1785 = vpack.c.bf16 %v1641, %v1641
        %1787 = vrot.lane.b32.xlu0 %v1785, 96
        %v1788 = vpop.permute.xlu0 %1787
        %v1793 = vunpack.c.l.b16 %v1651
        %v1794 = vunpack.c.l.b16 %v1652
        %v1795 = vunpack.c.l.b16 %v1653
        %v1796 = vunpack.c.l.b16 %v1654
        %v1797 = vpack.c.b16 %v1794, %v1793
        %v1798 = vpack.c.b16 %v1796, %v1795
        %v1802 = vsel %vm602, %v1788, 0
        %1804 = vmatprep.subr.bf16.mxu0 0
        %1805 = vmatpush1.bf16.msra.mxu0 0
        %1806 = vmatprep.subr.bf16.mxu0 0
        %1807 = vmatpush1.bf16.msra.mxu0 0
        %1808 = vmatprep.subr.bf16.mxu0 0
        %1809 = vmatpush1.bf16.msra.mxu0 0
        %1810 = vmatprep.subr.bf16.mxu0 0
        %1811 = vmatpush1.bf16.msra.mxu0 0
        %1812 = vmatprep.subr.bf16.mxu0 0
        %1813 = vmatpush1.bf16.msra.mxu0 0
        %1814 = vmatprep.subr.bf16.mxu0 0
        %1815 = vmatpush1.bf16.msra.mxu0 0
        %1816 = vmatprep.subr.bf16.mxu0 0
        %1817 = vmatpush1.bf16.msra.mxu0 %v1798
        %1818 = vmatprep.subr.bf16.mxu0 0
        %1819 = vmatpush1.bf16.msra.mxu0 %v1797
        %1820 = vmatprep.subr.bf16.mxu0 0
        %1821 = vmatpush2.bf16.msra.mxu0 0
        %1822 = vmatprep.subr.bf16.mxu0 0
        %1823 = vmatpush2.bf16.msra.mxu0 0
        %1824 = vmatprep.subr.bf16.mxu0 0
        %1825 = vmatpush2.bf16.msra.mxu0 0
        %1826 = vmatprep.subr.bf16.mxu0 0
        %1827 = vmatpush2.bf16.msra.mxu0 0
        %1828 = vmatprep.subr.bf16.mxu0 0
        %1829 = vmatpush2.bf16.msra.mxu0 0
        %1830 = vmatprep.subr.bf16.mxu0 0
        %1831 = vmatpush2.bf16.msra.mxu0 0
        %1832 = vmatprep.subr.bf16.mxu0 0
        %1833 = vmatpush2.bf16.msra.mxu0 0
        %1834 = vmatprep.subr.bf16.mxu0 0
        %1835 = vmatpush2.bf16.msra.mxu0 0
        %1836 = vmatprep.mubr.bf16.mxu0 0
        %1837 = vmatmul.mubr.bf16.gmra.mxu0 %v1802
        %v1838 = vpop.f32.mrf.mxu0
        %v1839 = vadd.f32 0.0, %v1838
        %v1840 = vpop.f32.mrf.mxu0
        %v1841 = vpop.f32.mrf.mxu0
        %v1842 = vpop.f32.mrf.mxu0
        %1843 = vdwg.mxu0
        %v1844 = vadd.f32 %v1780, %v1839
        %v1846 = vlaneseq
        %v1847 = vshrl.u32 %v1846, 7
        %v1848 = vsub.s32 0, %v1847
        %v1849 = vrot.slane %v1656, %v1848
        %v1851 = vadd.f32 %v1844, %v1849
        %v1852 = vxor.u32 %v1851, 2147483648
        %v1853 = vmul.f32 %v1852, 1.442695
        %v1854 = vpow.pop %v1853
        %v1855 = vadd.f32 %v1854, 1.0
        %v1856 = vrcp.pop %v1855
        %v1857 = vmul.f32 1.0, %v1856
        %1859 = vrot.lane.b32.xlu0 %v1851, 32
        %v1860 = vpop.permute.xlu0 %1859
        %v1862 = vmul.f32 %v1857, %v1860
        %v1863 = vsub.f32 1.0, %v1857
        %v1864 = vmul.f32 %v1863, %v1641
        %v1865 = vadd.f32 %v1862, %v1864
        %v1866 = vld [vmem:[%s9] sm:$0xf]
        %v1867 = vld [vmem:[%s9 + $0x4] sm:$0xf]
        %v1868 = vld [vmem:[%s9 + $0x8] sm:$0xf]
        %v1869 = vld [vmem:[%s9 + $0xc] sm:$0xf]
        %v1870 = vpack.c.bf16 %v1865, %v1865
        %v1871 = vld [vmem:[%s10] sm:$0x1]
        %v1873 = vlaneseq
        %v1874 = vshrl.u32 %v1873, 7
        %v1875 = vsub.s32 0, %v1874
        %v1876 = vrot.slane %v1871, %v1875
        %1879 = vrot.lane.b32.xlu0 %v1870, 96
        %v1880 = vpop.permute.xlu0 %1879
        %v1885 = vunpack.c.l.b16 %v1866
        %v1886 = vunpack.c.l.b16 %v1867
        %v1887 = vunpack.c.l.b16 %v1868
        %v1888 = vunpack.c.l.b16 %v1869
        %v1889 = vpack.c.b16 %v1886, %v1885
        %v1890 = vpack.c.b16 %v1888, %v1887
        %v1894 = vsel %vm602, %v1880, 0
        %1896 = vmatprep.subr.bf16.mxu0 0
        %1897 = vmatpush1.bf16.msra.mxu0 0
        %1898 = vmatprep.subr.bf16.mxu0 0
        %1899 = vmatpush1.bf16.msra.mxu0 0
        %1900 = vmatprep.subr.bf16.mxu0 0
        %1901 = vmatpush1.bf16.msra.mxu0 0
        %1902 = vmatprep.subr.bf16.mxu0 0
        %1903 = vmatpush1.bf16.msra.mxu0 0
        %1904 = vmatprep.subr.bf16.mxu0 0
        %1905 = vmatpush1.bf16.msra.mxu0 0
        %1906 = vmatprep.subr.bf16.mxu0 0
        %1907 = vmatpush1.bf16.msra.mxu0 0
        %1908 = vmatprep.subr.bf16.mxu0 0
        %1909 = vmatpush1.bf16.msra.mxu0 %v1890
        %1910 = vmatprep.subr.bf16.mxu0 0
        %1911 = vmatpush1.bf16.msra.mxu0 %v1889
        %1912 = vmatprep.subr.bf16.mxu0 0
        %1913 = vmatpush2.bf16.msra.mxu0 0
        %1914 = vmatprep.subr.bf16.mxu0 0
        %1915 = vmatpush2.bf16.msra.mxu0 0
        %1916 = vmatprep.subr.bf16.mxu0 0
        %1917 = vmatpush2.bf16.msra.mxu0 0
        %1918 = vmatprep.subr.bf16.mxu0 0
        %1919 = vmatpush2.bf16.msra.mxu0 0
        %1920 = vmatprep.subr.bf16.mxu0 0
        %1921 = vmatpush2.bf16.msra.mxu0 0
        %1922 = vmatprep.subr.bf16.mxu0 0
        %1923 = vmatpush2.bf16.msra.mxu0 0
        %1924 = vmatprep.subr.bf16.mxu0 0
        %1925 = vmatpush2.bf16.msra.mxu0 0
        %1926 = vmatprep.subr.bf16.mxu0 0
        %1927 = vmatpush2.bf16.msra.mxu0 0
        %1928 = vmatprep.mubr.bf16.mxu0 0
        %1929 = vmatmul.mubr.bf16.gmra.mxu0 %v1894
        %v1930 = vpop.f32.mrf.mxu0
        %v1931 = vadd.f32 %v1876, %v1930
        %v1932 = vpop.f32.mrf.mxu0
        %v1933 = vpop.f32.mrf.mxu0
        %v1934 = vpop.f32.mrf.mxu0
        %1935 = vdwg.mxu0
        %v1936 = vmax.f32 %v1931, 0.0
        %s1937 = scalar_lea.vmem %s9, 16
        %v1938 = vld [vmem:[%s1937] sm:$0xf]
        %v1939 = vld [vmem:[%s1937 + $0x4] sm:$0xf]
        %v1940 = vld [vmem:[%s1937 + $0x8] sm:$0xf]
        %v1941 = vld [vmem:[%s1937 + $0xc] sm:$0xf]
        %v1942 = vpack.c.bf16 %v1936, %v1936
        %s1943 = scalar_lea.vmem %s10, 1
        %v1944 = vld [vmem:[%s1943] sm:$0x1]
        %v1946 = vlaneseq
        %v1947 = vshrl.u32 %v1946, 7
        %v1948 = vsub.s32 0, %v1947
        %v1949 = vrot.slane %v1944, %v1948
        %v1955 = vunpack.c.l.b16 %v1938
        %v1956 = vunpack.c.l.b16 %v1939
        %v1957 = vunpack.c.l.b16 %v1940
        %v1958 = vunpack.c.l.b16 %v1941
        %v1959 = vpack.c.b16 %v1956, %v1955
        %v1960 = vpack.c.b16 %v1958, %v1957
        %v1964 = vsel %vm602, %v1942, 0
        %1966 = vmatprep.subr.bf16.mxu0 0
        %1967 = vmatpush1.bf16.msra.mxu0 0
        %1968 = vmatprep.subr.bf16.mxu0 0
        %1969 = vmatpush1.bf16.msra.mxu0 0
        %1970 = vmatprep.subr.bf16.mxu0 0
        %1971 = vmatpush1.bf16.msra.mxu0 0
        %1972 = vmatprep.subr.bf16.mxu0 0
        %1973 = vmatpush1.bf16.msra.mxu0 0
        %1974 = vmatprep.subr.bf16.mxu0 0
        %1975 = vmatpush1.bf16.msra.mxu0 0
        %1976 = vmatprep.subr.bf16.mxu0 0
        %1977 = vmatpush1.bf16.msra.mxu0 0
        %1978 = vmatprep.subr.bf16.mxu0 0
        %1979 = vmatpush1.bf16.msra.mxu0 %v1960
        %1980 = vmatprep.subr.bf16.mxu0 0
        %1981 = vmatpush1.bf16.msra.mxu0 %v1959
        %1982 = vmatprep.subr.bf16.mxu0 0
        %1983 = vmatpush2.bf16.msra.mxu0 0
        %1984 = vmatprep.subr.bf16.mxu0 0
        %1985 = vmatpush2.bf16.msra.mxu0 0
        %1986 = vmatprep.subr.bf16.mxu0 0
        %1987 = vmatpush2.bf16.msra.mxu0 0
        %1988 = vmatprep.subr.bf16.mxu0 0
        %1989 = vmatpush2.bf16.msra.mxu0 0
        %1990 = vmatprep.subr.bf16.mxu0 0
        %1991 = vmatpush2.bf16.msra.mxu0 0
        %1992 = vmatprep.subr.bf16.mxu0 0
        %1993 = vmatpush2.bf16.msra.mxu0 0
        %1994 = vmatprep.subr.bf16.mxu0 0
        %1995 = vmatpush2.bf16.msra.mxu0 0
        %1996 = vmatprep.subr.bf16.mxu0 0
        %1997 = vmatpush2.bf16.msra.mxu0 0
        %1998 = vmatprep.mubr.bf16.mxu0 0
        %1999 = vmatmul.mubr.bf16.gmra.mxu0 %v1964
        %v2000 = vpop.f32.mrf.mxu0
        %v2001 = vadd.f32 %v1949, %v2000
        %v2002 = vpop.f32.mrf.mxu0
        %v2003 = vpop.f32.mrf.mxu0
        %v2004 = vpop.f32.mrf.mxu0
        %2005 = vdwg.mxu0
        %v2006 = vmax.f32 %v2001, 0.0
        %s2007 = scalar_lea.vmem %s9, 32
        %v2008 = vld [vmem:[%s2007] sm:$0xf]
        %v2009 = vld [vmem:[%s2007 + $0x4] sm:$0xf]
        %v2010 = vld [vmem:[%s2007 + $0x8] sm:$0xf]
        %v2011 = vld [vmem:[%s2007 + $0xc] sm:$0xf]
        %v2012 = vpack.c.bf16 %v2006, %v2006
        %s2013 = scalar_lea.vmem %s10, 2
        %v2014 = vld [vmem:[%s2013] sm:$0x1]
        %v2016 = vlaneseq
        %v2017 = vshrl.u32 %v2016, 7
        %v2018 = vsub.s32 0, %v2017
        %v2019 = vrot.slane %v2014, %v2018
        %v2025 = vunpack.c.l.b16 %v2008
        %v2026 = vunpack.c.l.b16 %v2009
        %v2027 = vunpack.c.l.b16 %v2010
        %v2028 = vunpack.c.l.b16 %v2011
        %v2029 = vpack.c.b16 %v2026, %v2025
        %v2030 = vpack.c.b16 %v2028, %v2027
        %v2034 = vsel %vm602, %v2012, 0
        %2036 = vmatprep.subr.bf16.mxu0 0
        %2037 = vmatpush1.bf16.msra.mxu0 0
        %2038 = vmatprep.subr.bf16.mxu0 0
        %2039 = vmatpush1.bf16.msra.mxu0 0
        %2040 = vmatprep.subr.bf16.mxu0 0
        %2041 = vmatpush1.bf16.msra.mxu0 0
        %2042 = vmatprep.subr.bf16.mxu0 0
        %2043 = vmatpush1.bf16.msra.mxu0 0
        %2044 = vmatprep.subr.bf16.mxu0 0
        %2045 = vmatpush1.bf16.msra.mxu0 0
        %2046 = vmatprep.subr.bf16.mxu0 0
        %2047 = vmatpush1.bf16.msra.mxu0 0
        %2048 = vmatprep.subr.bf16.mxu0 0
        %2049 = vmatpush1.bf16.msra.mxu0 %v2030
        %2050 = vmatprep.subr.bf16.mxu0 0
        %2051 = vmatpush1.bf16.msra.mxu0 %v2029
        %2052 = vmatprep.subr.bf16.mxu0 0
        %2053 = vmatpush2.bf16.msra.mxu0 0
        %2054 = vmatprep.subr.bf16.mxu0 0
        %2055 = vmatpush2.bf16.msra.mxu0 0
        %2056 = vmatprep.subr.bf16.mxu0 0
        %2057 = vmatpush2.bf16.msra.mxu0 0
        %2058 = vmatprep.subr.bf16.mxu0 0
        %2059 = vmatpush2.bf16.msra.mxu0 0
        %2060 = vmatprep.subr.bf16.mxu0 0
        %2061 = vmatpush2.bf16.msra.mxu0 0
        %2062 = vmatprep.subr.bf16.mxu0 0
        %2063 = vmatpush2.bf16.msra.mxu0 0
        %2064 = vmatprep.subr.bf16.mxu0 0
        %2065 = vmatpush2.bf16.msra.mxu0 0
        %2066 = vmatprep.subr.bf16.mxu0 0
        %2067 = vmatpush2.bf16.msra.mxu0 0
        %2068 = vmatprep.mubr.bf16.mxu0 0
        %2069 = vmatmul.mubr.bf16.gmra.mxu0 %v2034
        %v2070 = vpop.f32.mrf.mxu0
        %v2071 = vadd.f32 %v2019, %v2070
        %v2072 = vpop.f32.mrf.mxu0
        %v2073 = vpop.f32.mrf.mxu0
        %v2074 = vpop.f32.mrf.mxu0
        %2075 = vdwg.mxu0
        %v2076 = vmax.f32 %v2071, 0.0
        %2077 = vst.msk [vmem:[%s584] sm:$0xff] %vm602, %v2076
        %v2078 = vld [vmem:[%s11] sm:$0xf]
        %v2079 = vld [vmem:[%s11 + $0x4] sm:$0xf]
        %v2080 = vld [vmem:[%s11 + $0x8] sm:$0xf]
        %v2081 = vld [vmem:[%s11 + $0xc] sm:$0xf]
        %v2082 = vpack.c.bf16 %v2076, %v2076
        %v2083 = vld [vmem:[%s12] sm:$0x1]
        %v2085 = vlaneseq
        %v2086 = vshrl.u32 %v2085, 7
        %v2087 = vsub.s32 0, %v2086
        %v2088 = vrot.slane %v2083, %v2087
        %v2094 = vunpack.c.l.b16 %v2078
        %v2095 = vunpack.c.l.b16 %v2079
        %v2096 = vunpack.c.l.b16 %v2080
        %v2097 = vunpack.c.l.b16 %v2081
        %v2098 = vpack.c.b16 %v2095, %v2094
        %v2099 = vpack.c.b16 %v2097, %v2096
        %v2103 = vsel %vm602, %v2082, 0
        %2105 = vmatprep.subr.bf16.mxu0 0
        %2106 = vmatpush1.bf16.msra.mxu0 0
        %2107 = vmatprep.subr.bf16.mxu0 0
        %2108 = vmatpush1.bf16.msra.mxu0 0
        %2109 = vmatprep.subr.bf16.mxu0 0
        %2110 = vmatpush1.bf16.msra.mxu0 0
        %2111 = vmatprep.subr.bf16.mxu0 0
        %2112 = vmatpush1.bf16.msra.mxu0 0
        %2113 = vmatprep.subr.bf16.mxu0 0
        %2114 = vmatpush1.bf16.msra.mxu0 0
        %2115 = vmatprep.subr.bf16.mxu0 0
        %2116 = vmatpush1.bf16.msra.mxu0 0
        %2117 = vmatprep.subr.bf16.mxu0 0
        %2118 = vmatpush1.bf16.msra.mxu0 %v2099
        %2119 = vmatprep.subr.bf16.mxu0 0
        %2120 = vmatpush1.bf16.msra.mxu0 %v2098
        %2121 = vmatprep.subr.bf16.mxu0 0
        %2122 = vmatpush2.bf16.msra.mxu0 0
        %2123 = vmatprep.subr.bf16.mxu0 0
        %2124 = vmatpush2.bf16.msra.mxu0 0
        %2125 = vmatprep.subr.bf16.mxu0 0
        %2126 = vmatpush2.bf16.msra.mxu0 0
        %2127 = vmatprep.subr.bf16.mxu0 0
        %2128 = vmatpush2.bf16.msra.mxu0 0
        %2129 = vmatprep.subr.bf16.mxu0 0
        %2130 = vmatpush2.bf16.msra.mxu0 0
        %2131 = vmatprep.subr.bf16.mxu0 0
        %2132 = vmatpush2.bf16.msra.mxu0 0
        %2133 = vmatprep.subr.bf16.mxu0 0
        %2134 = vmatpush2.bf16.msra.mxu0 0
        %2135 = vmatprep.subr.bf16.mxu0 0
        %2136 = vmatpush2.bf16.msra.mxu0 0
        %2137 = vmatprep.mubr.bf16.mxu0 0
        %2138 = vmatmul.mubr.bf16.gmra.mxu0 %v2103
        %v2139 = vpop.f32.mrf.mxu0
        %v2140 = vadd.f32 %v2088, %v2139
        %v2141 = vpop.f32.mrf.mxu0
        %v2142 = vpop.f32.mrf.mxu0
        %v2143 = vpop.f32.mrf.mxu0
        %2144 = vdwg.mxu0
        %v2145 = vxor.u32 %v2140, 2147483648
        %v2146 = vmul.f32 %v2145, 1.442695
        %v2147 = vpow.pop %v2146
        %v2148 = vadd.f32 %v2147, 1.0
        %v2149 = vrcp.pop %v2148
        %v2150 = vmul.f32 1.0, %v2149
        %vm2151 = vcmask 130048
        %2152 = vst.msk [vmem:[%s571] sm:$0xff] %vm2151, %v2150
        %v2153 = vld [vmem:[%s13] sm:$0xf]
        %v2154 = vld [vmem:[%s13 + $0x4] sm:$0xf]
        %v2155 = vpack.c.bf16 %v2140, %v2140
        %v2156 = vld [vmem:[#allocation3] sm:$0x1]
        %v2158 = vlaneseq
        %v2159 = vshrl.u32 %v2158, 7
        %v2160 = vsub.s32 0, %v2159
        %v2161 = vrot.slane %v2156, %v2160
        %v2165 = vunpack.c.l.b16 %v2153
        %v2166 = vunpack.c.l.b16 %v2154
        %v2167 = vpack.c.b16 %v2166, %v2165
        %v2170 = vsel %vm2151, %v2155, 0
        %2172 = vmatprep.subr.bf16.mxu0 0
        %2173 = vmatpush1.bf16.msra.mxu0 0
        %2174 = vmatprep.subr.bf16.mxu0 0
        %2175 = vmatpush1.bf16.msra.mxu0 0
        %2176 = vmatprep.subr.bf16.mxu0 0
        %2177 = vmatpush1.bf16.msra.mxu0 0
        %2178 = vmatprep.subr.bf16.mxu0 0
        %2179 = vmatpush1.bf16.msra.mxu0 0
        %2180 = vmatprep.subr.bf16.mxu0 0
        %2181 = vmatpush1.bf16.msra.mxu0 0
        %2182 = vmatprep.subr.bf16.mxu0 0
        %2183 = vmatpush1.bf16.msra.mxu0 0
        %2184 = vmatprep.subr.bf16.mxu0 0
        %2185 = vmatpush1.bf16.msra.mxu0 0
        %2186 = vmatprep.subr.bf16.mxu0 0
        %2187 = vmatpush1.bf16.msra.mxu0 %v2167
        %2188 = vmatprep.subr.bf16.mxu0 0
        %2189 = vmatpush2.bf16.msra.mxu0 0
        %2190 = vmatprep.subr.bf16.mxu0 0
        %2191 = vmatpush2.bf16.msra.mxu0 0
        %2192 = vmatprep.subr.bf16.mxu0 0
        %2193 = vmatpush2.bf16.msra.mxu0 0
        %2194 = vmatprep.subr.bf16.mxu0 0
        %2195 = vmatpush2.bf16.msra.mxu0 0
        %2196 = vmatprep.subr.bf16.mxu0 0
        %2197 = vmatpush2.bf16.msra.mxu0 0
        %2198 = vmatprep.subr.bf16.mxu0 0
        %2199 = vmatpush2.bf16.msra.mxu0 0
        %2200 = vmatprep.subr.bf16.mxu0 0
        %2201 = vmatpush2.bf16.msra.mxu0 0
        %2202 = vmatprep.subr.bf16.mxu0 0
        %2203 = vmatpush2.bf16.msra.mxu0 0
        %2204 = vmatprep.mubr.bf16.mxu0 0
        %2205 = vmatmul.mubr.bf16.gmra.mxu0 %v2170
        %v2206 = vpop.f32.mrf.mxu0
        %v2207 = vadd.f32 %v2161, %v2206
        %v2208 = vpop.f32.mrf.mxu0
        %v2209 = vpop.f32.mrf.mxu0
        %v2210 = vpop.f32.mrf.mxu0
        %2211 = vdwg.mxu0
        %v2212 = vxor.u32 %v2207, 2147483648
        %v2213 = vmul.f32 %v2212, 1.442695
        %v2214 = vpow.pop %v2213
        %v2215 = vadd.f32 %v2214, 1.0
        %v2216 = vrcp.pop %v2215
        %v2217 = vmul.f32 1.0, %v2216
        %vm2218 = vcmask 7168
        %2219 = vst.msk [vmem:[%s600] sm:$0xff] %vm2218, %v2217
        %s2220 = sand.u32 %s375, 1
        %s2221 = scalar_lea.sflag [#allocation5], %s2220
        %s2222 = sand.u32 %s375, 1
        %s2223 = smul.addr %s2222, 8
        %s2224 = scalar_lea.vmem [#allocation4], %s2223
        %p2225 = scmp.lt.s32.totalorder %s37, 1
        %s2226 = scalar_select %p2225, %s37, 1
        %s2227 = smul.addr %s2226, 8
        %s2228 = scalar_lea.vmem %s16, %s2227
        %s2229 = sand.u32 %s427, 1
        %s2230 = scalar_lea.sflag [#allocation7], %s2229
        %s2231 = sand.u32 %s427, 1
        %s2232 = smul.addr %s2231, 8
        %s2233 = scalar_lea.vmem [#allocation6], %s2232
        // Predicated region
        $region81: #{decoder_forward.5} parent=79 // pred_check
          %p2234 = pneg %p385
        $region82: #{decoder_forward.5} parent=79 // pred_check_branch
          %2236 = sbr.rel (%p2234) target = $region84
        $region83: #{decoder_forward.5} parent=79 // pred_region
          %s2238 = ssub.s32 128, 128
          %2239 = vsyncadd %s2221, %s2238
          %s2240 = smul.addr %s37, 128
          %s2241 = scalar_lea.hbm %s15, %s2240
          %s2243 = sshll.u32 %s2224, 4
          %s2244 = int_to_ptr.vmem [resolvable:$true] %s2243
          %2246 = dma.vmem_to_hbm [thread:$0]  %s2244, 128, %s2241, %s2221
        $region84: #{decoder_forward.5} parent=79 // pred_fallthru
          _
        // Predicated region
        $region85: #{decoder_forward.5} parent=79 // pred_check
          %p2247 = pneg %p411
        $region86: #{decoder_forward.5} parent=79 // pred_check_branch
          %2249 = sbr.rel (%p2247) target = $region88
        $region87: #{decoder_forward.5} parent=79 // pred_region
          _
        $region88: #{decoder_forward.5} parent=79 // pred_fallthru
          _
        // Predicated region
        $region89: #{decoder_forward.5} parent=79 // pred_check
          %p2250 = pneg %p437
        $region90: #{decoder_forward.5} parent=79 // pred_check_branch
          %2252 = sbr.rel (%p2250) target = $region92
        $region91: #{decoder_forward.5} parent=79 // pred_region
          %s2254 = ssub.s32 128, 128
          %2255 = vsyncadd %s2230, %s2254
          %s2256 = smul.addr %s37, 128
          %s2257 = scalar_lea.hbm %s17, %s2256
          %s2259 = sshll.u32 %s2233, 4
          %s2260 = int_to_ptr.vmem [resolvable:$true] %s2259
          %2262 = dma.vmem_to_hbm [thread:$0]  %s2260, 128, %s2257, %s2230
        $region92: #{decoder_forward.5} parent=79 // pred_fallthru
          _
      $region80: #{decoder_forward.5} parent=5 // pred_fallthru
        _
      %p2263 = scmp.le.s32.totalorder 2, %s32
      // Predicated region
      $region93: #{decoder_forward.5} parent=5 // pred_check
        %p2264 = pneg %p2263
      $region94: #{decoder_forward.5} parent=5 // pred_check_branch
        %2266 = sbr.rel (%p2264) target = $region96
      $region95: #{decoder_forward.5} parent=5 // pred_region
        %s2267 = ssub.s32 %s32, 2
        // Predicated region
        $region97: #{decoder_forward.5} parent=95 // pred_check
          %p2268 = pneg %p391
        $region98: #{decoder_forward.5} parent=95 // pred_check_branch
          %2270 = sbr.rel (%p2268) target = $region100
        $region99: #{decoder_forward.5} parent=95 // pred_region
          %s2271 = sand.u32 %s376, 1
          %s2272 = scalar_lea.sflag [#allocation5], %s2271
          %s2273 = sand.u32 %s376, 1
          %s2274 = smul.addr %s2273, 8
          %s2275 = scalar_lea.vmem [#allocation4], %s2274
          %2276 = dma.done %s2272, 128
        $region100: #{decoder_forward.5} parent=95 // pred_fallthru
          _
        // Predicated region
        $region101: #{decoder_forward.5} parent=95 // pred_check
          %p2277 = pneg %p417
        $region102: #{decoder_forward.5} parent=95 // pred_check_branch
          %2279 = sbr.rel (%p2277) target = $region104
        $region103: #{decoder_forward.5} parent=95 // pred_region
          %p2280 = scmp.lt.s32.totalorder %s38, 1
          %s2281 = scalar_select %p2280, %s38, 1
          %s2282 = smul.addr %s2281, 8
          %s2283 = scalar_lea.vmem %s16, %s2282
        $region104: #{decoder_forward.5} parent=95 // pred_fallthru
          _
        // Predicated region
        $region105: #{decoder_forward.5} parent=95 // pred_check
          %p2284 = pneg %p443
        $region106: #{decoder_forward.5} parent=95 // pred_check_branch
          %2286 = sbr.rel (%p2284) target = $region108
        $region107: #{decoder_forward.5} parent=95 // pred_region
          %s2287 = sand.u32 %s428, 1
          %s2288 = scalar_lea.sflag [#allocation7], %s2287
          %s2289 = sand.u32 %s428, 1
          %s2290 = smul.addr %s2289, 8
          %s2291 = scalar_lea.vmem [#allocation6], %s2290
          %2292 = dma.done %s2288, 128
        $region108: #{decoder_forward.5} parent=95 // pred_fallthru
          _
      $region96: #{decoder_forward.5} parent=5 // pred_fallthru
        _
    $region6: #{decoder_forward.5} parent=1 // loop_footer
      %s36 = sadd.s32 1, %s32
    $region7: #{decoder_forward.5} parent=1 // loop_footer_branch
      %31 = sbr.rel target = $region3
    $region8: #{decoder_forward.5} parent=1 // loop_exit
      _
    %2293 = vsyncpa [#allocation5], 1
    %s2294 = scalar_lea.sflag [#allocation5], 1
    %2295 = vsyncpa %s2294, 1
    %2296 = vsyncpa [#allocation7], 1
    %s2297 = scalar_lea.sflag [#allocation7], 1
    %2298 = vsyncpa %s2297, 1

</llo_original>
